<compile_context>
chip_gen: v5e
topology: v5e:2x2
jax: 0.10.0
libtpu: 0.0.40
codegen_flags: <defaults>
</compile_context>

<pallas_src>
import functools

import jax
import jax.numpy as jnp
from jax.experimental import pallas as pl
from jax.experimental.pallas import tpu as pltpu


# ---------------------------------------------------------------------------
# In-kernel helpers
# ---------------------------------------------------------------------------

_SQRT_2_OVER_PI = 0.7978845608028654


def _gelu(x):
    # tanh-approximate GELU; lowers cleanly to the TPU EUP.  The pure-JAX
    # reference below uses the same formula.
    # TODO(synk): PyTorch nn.GELU() default is the exact erf form.
    return 0.5 * x * (1.0 + jnp.tanh(_SQRT_2_OVER_PI * (x + 0.044715 * x * x * x)))


def _layernorm(x, gamma, beta, eps=1e-5):
    mu = jnp.mean(x, axis=-1, keepdims=True)
    xc = x - mu
    var = jnp.mean(xc * xc, axis=-1, keepdims=True)
    return xc * jax.lax.rsqrt(var + eps) * gamma + beta


def _round_up(n, m):
    return -(-n // m) * m


# ---------------------------------------------------------------------------
# Fused encoder kernel: one grid step == one batch item's full forward
# ---------------------------------------------------------------------------

def _encoder_kernel(x_ref, pe_w_ref, pe_b_ref,
                    w_in_ref, b_in_ref, sg_g_ref, sg_b_ref, w_seq_ref,
                    w_out_ref, b_out_ref, pn_g_ref, pn_b_ref,
                    bn_w_ref, bn_b_ref, o_ref, *, depth, ones_row):
    x = x_ref[0]                                                    # (Sp, P)

    # patch-embed linear
    h = jnp.dot(x, pe_w_ref[...],
                preferred_element_type=jnp.float32) + pe_b_ref[...]  # (Sp, D)

    g_width = sg_g_ref.shape[-1]                                     # dim_ff // 2
    # Hoisted constants for the SGU bias fold (row `ones_row` of the gate is set
    # to 1.0 so the bias column of the augmented w_seq acts as the Conv1d bias).
    row_ids = jax.lax.broadcasted_iota(jnp.int32, (x.shape[0], g_width), 0)
    is_ones_row = row_ids == ones_row

    for l in range(depth):                                           # static unroll
        # proj_in + GELU
        u = _gelu(jnp.dot(h, w_in_ref[l],
                          preferred_element_type=jnp.float32) + b_in_ref[l])
        # SpatialGatingUnit: chunk -> LN(gate) -> seq-mix (Conv1d k=1) -> gate*res
        res = u[:, :g_width]
        gate = _layernorm(u[:, g_width:], sg_g_ref[l], sg_b_ref[l])
        gate = jnp.where(is_ones_row, 1.0, gate)                     # bias-ones row
        gate = jnp.dot(w_seq_ref[l], gate,
                       preferred_element_type=jnp.float32)           # (Sp, G)
        # proj_out
        y = jnp.dot(gate * res, w_out_ref[l],
                    preferred_element_type=jnp.float32) + b_out_ref[l]
        # PostNorm then Residual
        y = _layernorm(y, pn_g_ref[l], pn_b_ref[l])
        h = y + h

    # bottleneck + GELU (Dropout(0) == Identity)
    out = jnp.dot(h, bn_w_ref[...],
                  preferred_element_type=jnp.float32) + bn_b_ref[...]
    o_ref[0] = _gelu(out).astype(o_ref.dtype)


# ---------------------------------------------------------------------------
# Wrapper: full gMLP_Encoder forward (eval mode)
# ---------------------------------------------------------------------------

def _patchify(x, patch_f, patch_t):
    # Rearrange('b (f p1) (t p2) -> b (f t) (p1 p2)') -- pure layout plumbing.
    B, FF, TT = x.shape
    f, t = FF // patch_f, TT // patch_t
    x = x.reshape(B, f, patch_f, t, patch_t)
    x = jnp.transpose(x, (0, 1, 3, 2, 4))
    return x.reshape(B, f * t, patch_f * patch_t)


def gmlp_encoder_forward(x, params, *, patch_f, patch_t):
    xp = _patchify(x, patch_f, patch_t)                       # (B, S, p1*p2)
    B, S, P = xp.shape
    D = params["pe_w"].shape[1]
    E = params["bn_w"].shape[1]
    layers = params["layers"]
    L = len(layers)
    F = layers[0]["w_in"].shape[1]
    G = F // 2

    # Sublane-pad the sequence axis; always leave >= 1 spare row so the Conv1d
    # bias can be folded into the augmented (Sp, Sp) seq-mix weight.
    s_pad = _round_up(S + 1, 8)
    xp = jnp.pad(xp, ((0, 0), (0, s_pad - S), (0, 0)))

    stack = lambda name: jnp.stack([p[name] for p in layers])
    w_in, b_in = stack("w_in"), stack("b_in")                 # (L,D,F), (L,1,F)
    sg_g, sg_b = stack("sgu_gamma"), stack("sgu_beta")        # (L,1,G)
    w_out, b_out = stack("w_out"), stack("b_out")             # (L,G,D), (L,1,D)
    pn_g, pn_b = stack("pn_gamma"), stack("pn_beta")          # (L,1,D)

    def aug_seq(p):
        # Zero-padded (Sp, Sp) seq-mix weight; padded COLUMNS are zero so padded
        # gate rows never contaminate real rows.  Column S carries the Conv1d
        # bias (kernel injects a ones row at position S).
        w = jnp.zeros((s_pad, s_pad), xp.dtype)
        w = w.at[:S, :S].set(p["w_seq"])
        w = w.at[:S, S].set(p["b_seq"][:, 0])
        return w

    w_seq = jnp.stack([aug_seq(p) for p in layers])           # (L, Sp, Sp)

    def resident(shape):
        return pl.BlockSpec(shape, lambda b: (0,) * len(shape))

    out = pl.pallas_call(
        functools.partial(_encoder_kernel, depth=L, ones_row=S),
        out_shape=jax.ShapeDtypeStruct((B, s_pad, E), x.dtype),
        grid=(B,),
        in_specs=[
            pl.BlockSpec((1, s_pad, P), lambda b: (b, 0, 0)),  # per-batch slab
            resident((P, D)), resident((1, D)),                # patch-embed
            resident((L, D, F)), resident((L, 1, F)),          # proj_in
            resident((L, 1, G)), resident((L, 1, G)),          # SGU LayerNorm
            resident((L, s_pad, s_pad)),                       # SGU seq-mix (+bias)
            resident((L, G, D)), resident((L, 1, D)),          # proj_out
            resident((L, 1, D)), resident((L, 1, D)),          # PostNorm
            resident((D, E)), resident((1, E)),                # bottleneck
        ],
        out_specs=pl.BlockSpec((1, s_pad, E), lambda b: (b, 0, 0)),
        compiler_params=pltpu.CompilerParams(
            dimension_semantics=("parallel",),      # v7x: one batch item per TC
            vmem_limit_bytes=32 * 1024 * 1024,      # safe on 64 MiB v7x
        ),
    )(xp, params["pe_w"], params["pe_b"], w_in, b_in, sg_g, sg_b, w_seq,
      w_out, b_out, pn_g, pn_b, params["bn_w"], params["bn_b"])

    # eval mode: stochastic depth (dropout_layers) keeps every layer.
    return out[:, :S, :]


# ---------------------------------------------------------------------------
# Deterministic synthetic parameters + pure-JAX reference
# ---------------------------------------------------------------------------

def init_params(key, *, patch_dim, dim, dim_ff, seq_len, embed_dim, depth):
    g = dim_ff // 2

    def linear(k, fan_in, fan_out):
        lim = 1.0 / (fan_in ** 0.5)
        kw, kb = jax.random.split(k)
        w = jax.random.uniform(kw, (fan_in, fan_out), jnp.float32, -lim, lim)
        b = jax.random.uniform(kb, (1, fan_out), jnp.float32, -lim, lim)
        return w, b

    keys = jax.random.split(key, depth + 2)
    pe_w, pe_b = linear(keys[0], patch_dim, dim)
    bn_w, bn_b = linear(keys[1], dim, embed_dim)

    init_eps = 1e-3 / seq_len                  # SGU init from the PyTorch module
    layers = []
    for i in range(depth):
        k1, k2, k3 = jax.random.split(keys[2 + i], 3)
        w_in, b_in = linear(k1, dim, dim_ff)
        w_out, b_out = linear(k2, g, dim)
        layers.append(dict(
            w_in=w_in, b_in=b_in,
            sgu_gamma=jnp.ones((1, g), jnp.float32),
            sgu_beta=jnp.zeros((1, g), jnp.float32),
            w_seq=jax.random.uniform(k3, (seq_len, seq_len), jnp.float32,
                                     -init_eps, init_eps),
            b_seq=jnp.ones((seq_len, 1), jnp.float32),
            w_out=w_out, b_out=b_out,
            pn_gamma=jnp.ones((1, dim), jnp.float32),
            pn_beta=jnp.zeros((1, dim), jnp.float32),
        ))
    return dict(pe_w=pe_w, pe_b=pe_b, bn_w=bn_w, bn_b=bn_b, layers=layers)


def encoder_reference(x, params, *, patch_f, patch_t):
    hi = jax.lax.Precision.HIGHEST
    xp = _patchify(x, patch_f, patch_t)
    h = jnp.dot(xp, params["pe_w"], precision=hi) + params["pe_b"]
    for p in params["layers"]:
        u = _gelu(jnp.dot(h, p["w_in"], precision=hi) + p["b_in"])
        g = u.shape[-1] // 2
        res, gate = u[..., :g], u[..., g:]
        gate = _layernorm(gate, p["sgu_gamma"], p["sgu_beta"])
        gate = jnp.einsum("ij,bjd->bid", p["w_seq"], gate, precision=hi) + p["b_seq"]
        y = jnp.dot(gate * res, p["w_out"], precision=hi) + p["b_out"]
        y = _layernorm(y, p["pn_gamma"], p["pn_beta"])
        h = y + h
    return _gelu(jnp.dot(h, params["bn_w"], precision=hi) + params["bn_b"])


if __name__ == "__main__":
    # Module defaults: input_res=[40, 98], patch_res=[40, 1], dim=64,
    # embed_dim=4, depth=6, ff_mult=4 -> dim_ff=256, num_patches=98.
    spec_f, spec_t = 40, 98
    patch_f, patch_t = 40, 1
    dim, ff_mult, embed_dim, depth = 64, 4, 4, 6
    batch = 2

    key = jax.random.PRNGKey(0)
    k_x, k_p = jax.random.split(key)
    x = jax.random.normal(k_x, (batch, spec_f, spec_t), dtype=jnp.float32)

    num_patches = (spec_f // patch_f) * (spec_t // patch_t)
    params = init_params(
        k_p, patch_dim=patch_f * patch_t, dim=dim, dim_ff=ff_mult * dim,
        seq_len=num_patches, embed_dim=embed_dim, depth=depth)

    fwd = jax.jit(functools.partial(gmlp_encoder_forward,
                                    patch_f=patch_f, patch_t=patch_t))
    out = fwd(x, params)
    jax.block_until_ready(out)

    ref = encoder_reference(x, params, patch_f=patch_f, patch_t=patch_t)
    assert out.shape == (batch, num_patches, embed_dim), out.shape
    assert jnp.allclose(out, ref, atol=2e-3, rtol=2e-3), \
        float(jnp.max(jnp.abs(out - ref)))

    print("KERNEL_OK")
</pallas_src>

<mosaic_0001>
module attributes {stable_mosaic.version = 11 : i64} {
  func.func @_encoder_kernel(%arg0: i32, %arg1: memref<1x104x40xf32, #tpu.memory_space<vmem>>, %arg2: memref<40x64xf32, #tpu.memory_space<vmem>>, %arg3: memref<1x64xf32, #tpu.memory_space<vmem>>, %arg4: memref<6x64x256xf32, #tpu.memory_space<vmem>>, %arg5: memref<6x1x256xf32, #tpu.memory_space<vmem>>, %arg6: memref<6x1x128xf32, #tpu.memory_space<vmem>>, %arg7: memref<6x1x128xf32, #tpu.memory_space<vmem>>, %arg8: memref<6x104x104xf32, #tpu.memory_space<vmem>>, %arg9: memref<6x128x64xf32, #tpu.memory_space<vmem>>, %arg10: memref<6x1x64xf32, #tpu.memory_space<vmem>>, %arg11: memref<6x1x64xf32, #tpu.memory_space<vmem>>, %arg12: memref<6x1x64xf32, #tpu.memory_space<vmem>>, %arg13: memref<64x4xf32, #tpu.memory_space<vmem>>, %arg14: memref<1x4xf32, #tpu.memory_space<vmem>>, %arg15: memref<1x104x4xf32, #tpu.memory_space<vmem>>) attributes {dimension_semantics = [#tpu.dimension_semantics<parallel>], iteration_bounds = array<i64: 2>, scalar_prefetch = 0 : i64, scratch_operands = 0 : i64, tpu.core_type = #tpu.core_type<tc>, window_params = [{transform_indices = @transform_0, window_bounds = array<i64: 1, 104, 40>}, {pipeline_mode = #tpu.pipeline_mode<synchronous>, transform_indices = @transform_1, window_bounds = array<i64: 40, 64>}, {pipeline_mode = #tpu.pipeline_mode<synchronous>, transform_indices = @transform_2, window_bounds = array<i64: 1, 64>}, {pipeline_mode = #tpu.pipeline_mode<synchronous>, transform_indices = @transform_3, window_bounds = array<i64: 6, 64, 256>}, {pipeline_mode = #tpu.pipeline_mode<synchronous>, transform_indices = @transform_4, window_bounds = array<i64: 6, 1, 256>}, {pipeline_mode = #tpu.pipeline_mode<synchronous>, transform_indices = @transform_5, window_bounds = array<i64: 6, 1, 128>}, {pipeline_mode = #tpu.pipeline_mode<synchronous>, transform_indices = @transform_6, window_bounds = array<i64: 6, 1, 128>}, {pipeline_mode = #tpu.pipeline_mode<synchronous>, transform_indices = @transform_7, window_bounds = array<i64: 6, 104, 104>}, {pipeline_mode = #tpu.pipeline_mode<synchronous>, transform_indices = @transform_8, window_bounds = array<i64: 6, 128, 64>}, {pipeline_mode = #tpu.pipeline_mode<synchronous>, transform_indices = @transform_9, window_bounds = array<i64: 6, 1, 64>}, {pipeline_mode = #tpu.pipeline_mode<synchronous>, transform_indices = @transform_10, window_bounds = array<i64: 6, 1, 64>}, {pipeline_mode = #tpu.pipeline_mode<synchronous>, transform_indices = @transform_11, window_bounds = array<i64: 6, 1, 64>}, {pipeline_mode = #tpu.pipeline_mode<synchronous>, transform_indices = @transform_12, window_bounds = array<i64: 64, 4>}, {pipeline_mode = #tpu.pipeline_mode<synchronous>, transform_indices = @transform_13, window_bounds = array<i64: 1, 4>}, {transform_indices = @transform_14, window_bounds = array<i64: 1, 104, 4>}]} {
    %c0 = arith.constant 0 : index
    %c0_0 = arith.constant 0 : index
    %c0_1 = arith.constant 0 : index
    %0 = vector.load %arg1[%c0, %c0_0, %c0_1] : memref<1x104x40xf32, #tpu.memory_space<vmem>>, vector<1x104x40xf32>
    %1 = vector.shape_cast %0 : vector<1x104x40xf32> to vector<104x40xf32>
    %c0_2 = arith.constant 0 : index
    %c0_3 = arith.constant 0 : index
    %2 = vector.load %arg2[%c0_2, %c0_3] : memref<40x64xf32, #tpu.memory_space<vmem>>, vector<40x64xf32>
    %cst = arith.constant dense<0.000000e+00> : vector<104x64xf32>
    %3 = tpu.matmul %1, %2, %cst {dimension_numbers = #tpu.dot_dimension_numbers<[1], [0], [0], [1], [0, 0, 1, 1], [], []>} : vector<104x40xf32>, vector<40x64xf32>, vector<104x64xf32> -> vector<104x64xf32>
    %c0_4 = arith.constant 0 : index
    %c0_5 = arith.constant 0 : index
    %4 = vector.load %arg3[%c0_4, %c0_5] : memref<1x64xf32, #tpu.memory_space<vmem>>, vector<1x64xf32>
    %5 = vector.broadcast %4 : vector<1x64xf32> to vector<104x64xf32>
    %6 = arith.addf %3, %5 : vector<104x64xf32>
    %7 = tpu.iota {dimensions = array<i32: 0>} : vector<104x128xi32>
    %c98_i32 = arith.constant 98 : i32
    %8 = vector.broadcast %c98_i32 : i32 to vector<104x128xi32>
    %9 = arith.cmpi eq, %7, %8 : vector<104x128xi32>
    %c0_6 = arith.constant 0 : index
    %c0_7 = arith.constant 0 : index
    %c0_8 = arith.constant 0 : index
    %10 = vector.load %arg4[%c0_6, %c0_7, %c0_8] : memref<6x64x256xf32, #tpu.memory_space<vmem>>, vector<1x64x256xf32>
    %11 = vector.shape_cast %10 : vector<1x64x256xf32> to vector<64x256xf32>
    %cst_9 = arith.constant dense<0.000000e+00> : vector<104x256xf32>
    %12 = tpu.matmul %6, %11, %cst_9 {dimension_numbers = #tpu.dot_dimension_numbers<[1], [0], [0], [1], [0, 0, 1, 1], [], []>} : vector<104x64xf32>, vector<64x256xf32>, vector<104x256xf32> -> vector<104x256xf32>
    %c0_10 = arith.constant 0 : index
    %c0_11 = arith.constant 0 : index
    %c0_12 = arith.constant 0 : index
    %13 = vector.load %arg5[%c0_10, %c0_11, %c0_12] : memref<6x1x256xf32, #tpu.memory_space<vmem>>, vector<1x1x256xf32>
    %14 = vector.shape_cast %13 : vector<1x1x256xf32> to vector<1x256xf32>
    %15 = vector.broadcast %14 : vector<1x256xf32> to vector<104x256xf32>
    %16 = arith.addf %12, %15 : vector<104x256xf32>
    %cst_13 = arith.constant 5.000000e-01 : f32
    %17 = vector.broadcast %cst_13 : f32 to vector<104x256xf32>
    %18 = arith.mulf %17, %16 : vector<104x256xf32>
    %cst_14 = arith.constant 4.471500e-02 : f32
    %19 = vector.broadcast %cst_14 : f32 to vector<104x256xf32>
    %20 = arith.mulf %19, %16 : vector<104x256xf32>
    %21 = arith.mulf %20, %16 : vector<104x256xf32>
    %22 = arith.mulf %21, %16 : vector<104x256xf32>
    %23 = arith.addf %16, %22 : vector<104x256xf32>
    %cst_15 = arith.constant 0.797884583 : f32
    %24 = vector.broadcast %cst_15 : f32 to vector<104x256xf32>
    %25 = arith.mulf %24, %23 : vector<104x256xf32>
    %26 = math.tanh %25 : vector<104x256xf32>
    %cst_16 = arith.constant 1.000000e+00 : f32
    %27 = vector.broadcast %cst_16 : f32 to vector<104x256xf32>
    %28 = arith.addf %27, %26 : vector<104x256xf32>
    %29 = arith.mulf %18, %28 : vector<104x256xf32>
    %30 = vector.extract_strided_slice %29 {offsets = [0, 0], sizes = [104, 128], strides = [1, 1]} : vector<104x256xf32> to vector<104x128xf32>
    %31 = vector.extract_strided_slice %29 {offsets = [0, 128], sizes = [104, 128], strides = [1, 1]} : vector<104x256xf32> to vector<104x128xf32>
    %c0_17 = arith.constant 0 : index
    %c0_18 = arith.constant 0 : index
    %c0_19 = arith.constant 0 : index
    %32 = vector.load %arg6[%c0_17, %c0_18, %c0_19] : memref<6x1x128xf32, #tpu.memory_space<vmem>>, vector<1x1x128xf32>
    %33 = vector.shape_cast %32 : vector<1x1x128xf32> to vector<1x128xf32>
    %c0_20 = arith.constant 0 : index
    %c0_21 = arith.constant 0 : index
    %c0_22 = arith.constant 0 : index
    %34 = vector.load %arg7[%c0_20, %c0_21, %c0_22] : memref<6x1x128xf32, #tpu.memory_space<vmem>>, vector<1x1x128xf32>
    %35 = vector.shape_cast %34 : vector<1x1x128xf32> to vector<1x128xf32>
    %cst_23 = arith.constant dense<0.000000e+00> : vector<104xf32>
    %36 = vector.multi_reduction <add>, %31, %cst_23 [1] : vector<104x128xf32> to vector<104xf32>
    %37 = vector.shape_cast %36 : vector<104xf32> to vector<104x1xf32>
    %cst_24 = arith.constant 1.280000e+02 : f32
    %38 = vector.broadcast %cst_24 : f32 to vector<104x1xf32>
    %39 = arith.divf %37, %38 : vector<104x1xf32>
    %40 = vector.broadcast %39 : vector<104x1xf32> to vector<104x128xf32>
    %41 = arith.subf %31, %40 : vector<104x128xf32>
    %42 = arith.mulf %41, %41 : vector<104x128xf32>
    %cst_25 = arith.constant dense<0.000000e+00> : vector<104xf32>
    %43 = vector.multi_reduction <add>, %42, %cst_25 [1] : vector<104x128xf32> to vector<104xf32>
    %44 = vector.shape_cast %43 : vector<104xf32> to vector<104x1xf32>
    %cst_26 = arith.constant 1.280000e+02 : f32
    %45 = vector.broadcast %cst_26 : f32 to vector<104x1xf32>
    %46 = arith.divf %44, %45 : vector<104x1xf32>
    %cst_27 = arith.constant 9.99999974E-6 : f32
    %47 = vector.broadcast %cst_27 : f32 to vector<104x1xf32>
    %48 = arith.addf %46, %47 : vector<104x1xf32>
    %49 = math.rsqrt %48 : vector<104x1xf32>
    %50 = vector.broadcast %49 : vector<104x1xf32> to vector<104x128xf32>
    %51 = arith.mulf %41, %50 : vector<104x128xf32>
    %52 = vector.broadcast %33 : vector<1x128xf32> to vector<104x128xf32>
    %53 = arith.mulf %51, %52 : vector<104x128xf32>
    %54 = vector.broadcast %35 : vector<1x128xf32> to vector<104x128xf32>
    %55 = arith.addf %53, %54 : vector<104x128xf32>
    %cst_28 = arith.constant 1.000000e+00 : f32
    %56 = vector.broadcast %cst_28 : f32 to vector<104x128xf32>
    %57 = arith.select %9, %56, %55 : vector<104x128xi1>, vector<104x128xf32>
    %c0_29 = arith.constant 0 : index
    %c0_30 = arith.constant 0 : index
    %c0_31 = arith.constant 0 : index
    %58 = vector.load %arg8[%c0_29, %c0_30, %c0_31] : memref<6x104x104xf32, #tpu.memory_space<vmem>>, vector<1x104x104xf32>
    %59 = vector.shape_cast %58 : vector<1x104x104xf32> to vector<104x104xf32>
    %cst_32 = arith.constant dense<0.000000e+00> : vector<104x128xf32>
    %60 = tpu.matmul %59, %57, %cst_32 {dimension_numbers = #tpu.dot_dimension_numbers<[1], [0], [0], [1], [0, 0, 1, 1], [], []>} : vector<104x104xf32>, vector<104x128xf32>, vector<104x128xf32> -> vector<104x128xf32>
    %61 = arith.mulf %60, %30 : vector<104x128xf32>
    %c0_33 = arith.constant 0 : index
    %c0_34 = arith.constant 0 : index
    %c0_35 = arith.constant 0 : index
    %62 = vector.load %arg9[%c0_33, %c0_34, %c0_35] : memref<6x128x64xf32, #tpu.memory_space<vmem>>, vector<1x128x64xf32>
    %63 = vector.shape_cast %62 : vector<1x128x64xf32> to vector<128x64xf32>
    %cst_36 = arith.constant dense<0.000000e+00> : vector<104x64xf32>
    %64 = tpu.matmul %61, %63, %cst_36 {dimension_numbers = #tpu.dot_dimension_numbers<[1], [0], [0], [1], [0, 0, 1, 1], [], []>} : vector<104x128xf32>, vector<128x64xf32>, vector<104x64xf32> -> vector<104x64xf32>
    %c0_37 = arith.constant 0 : index
    %c0_38 = arith.constant 0 : index
    %c0_39 = arith.constant 0 : index
    %65 = vector.load %arg10[%c0_37, %c0_38, %c0_39] : memref<6x1x64xf32, #tpu.memory_space<vmem>>, vector<1x1x64xf32>
    %66 = vector.shape_cast %65 : vector<1x1x64xf32> to vector<1x64xf32>
    %67 = vector.broadcast %66 : vector<1x64xf32> to vector<104x64xf32>
    %68 = arith.addf %64, %67 : vector<104x64xf32>
    %c0_40 = arith.constant 0 : index
    %c0_41 = arith.constant 0 : index
    %c0_42 = arith.constant 0 : index
    %69 = vector.load %arg11[%c0_40, %c0_41, %c0_42] : memref<6x1x64xf32, #tpu.memory_space<vmem>>, vector<1x1x64xf32>
    %70 = vector.shape_cast %69 : vector<1x1x64xf32> to vector<1x64xf32>
    %c0_43 = arith.constant 0 : index
    %c0_44 = arith.constant 0 : index
    %c0_45 = arith.constant 0 : index
    %71 = vector.load %arg12[%c0_43, %c0_44, %c0_45] : memref<6x1x64xf32, #tpu.memory_space<vmem>>, vector<1x1x64xf32>
    %72 = vector.shape_cast %71 : vector<1x1x64xf32> to vector<1x64xf32>
    %cst_46 = arith.constant dense<0.000000e+00> : vector<104xf32>
    %73 = vector.multi_reduction <add>, %68, %cst_46 [1] : vector<104x64xf32> to vector<104xf32>
    %74 = vector.shape_cast %73 : vector<104xf32> to vector<104x1xf32>
    %cst_47 = arith.constant 6.400000e+01 : f32
    %75 = vector.broadcast %cst_47 : f32 to vector<104x1xf32>
    %76 = arith.divf %74, %75 : vector<104x1xf32>
    %77 = vector.broadcast %76 : vector<104x1xf32> to vector<104x64xf32>
    %78 = arith.subf %68, %77 : vector<104x64xf32>
    %79 = arith.mulf %78, %78 : vector<104x64xf32>
    %cst_48 = arith.constant dense<0.000000e+00> : vector<104xf32>
    %80 = vector.multi_reduction <add>, %79, %cst_48 [1] : vector<104x64xf32> to vector<104xf32>
    %81 = vector.shape_cast %80 : vector<104xf32> to vector<104x1xf32>
    %cst_49 = arith.constant 6.400000e+01 : f32
    %82 = vector.broadcast %cst_49 : f32 to vector<104x1xf32>
    %83 = arith.divf %81, %82 : vector<104x1xf32>
    %cst_50 = arith.constant 9.99999974E-6 : f32
    %84 = vector.broadcast %cst_50 : f32 to vector<104x1xf32>
    %85 = arith.addf %83, %84 : vector<104x1xf32>
    %86 = math.rsqrt %85 : vector<104x1xf32>
    %87 = vector.broadcast %86 : vector<104x1xf32> to vector<104x64xf32>
    %88 = arith.mulf %78, %87 : vector<104x64xf32>
    %89 = vector.broadcast %70 : vector<1x64xf32> to vector<104x64xf32>
    %90 = arith.mulf %88, %89 : vector<104x64xf32>
    %91 = vector.broadcast %72 : vector<1x64xf32> to vector<104x64xf32>
    %92 = arith.addf %90, %91 : vector<104x64xf32>
    %93 = arith.addf %92, %6 : vector<104x64xf32>
    %c1 = arith.constant 1 : index
    %c0_51 = arith.constant 0 : index
    %c0_52 = arith.constant 0 : index
    %94 = vector.load %arg4[%c1, %c0_51, %c0_52] : memref<6x64x256xf32, #tpu.memory_space<vmem>>, vector<1x64x256xf32>
    %95 = vector.shape_cast %94 : vector<1x64x256xf32> to vector<64x256xf32>
    %cst_53 = arith.constant dense<0.000000e+00> : vector<104x256xf32>
    %96 = tpu.matmul %93, %95, %cst_53 {dimension_numbers = #tpu.dot_dimension_numbers<[1], [0], [0], [1], [0, 0, 1, 1], [], []>} : vector<104x64xf32>, vector<64x256xf32>, vector<104x256xf32> -> vector<104x256xf32>
    %c1_54 = arith.constant 1 : index
    %c0_55 = arith.constant 0 : index
    %c0_56 = arith.constant 0 : index
    %97 = vector.load %arg5[%c1_54, %c0_55, %c0_56] : memref<6x1x256xf32, #tpu.memory_space<vmem>>, vector<1x1x256xf32>
    %98 = vector.shape_cast %97 : vector<1x1x256xf32> to vector<1x256xf32>
    %99 = vector.broadcast %98 : vector<1x256xf32> to vector<104x256xf32>
    %100 = arith.addf %96, %99 : vector<104x256xf32>
    %cst_57 = arith.constant 5.000000e-01 : f32
    %101 = vector.broadcast %cst_57 : f32 to vector<104x256xf32>
    %102 = arith.mulf %101, %100 : vector<104x256xf32>
    %cst_58 = arith.constant 4.471500e-02 : f32
    %103 = vector.broadcast %cst_58 : f32 to vector<104x256xf32>
    %104 = arith.mulf %103, %100 : vector<104x256xf32>
    %105 = arith.mulf %104, %100 : vector<104x256xf32>
    %106 = arith.mulf %105, %100 : vector<104x256xf32>
    %107 = arith.addf %100, %106 : vector<104x256xf32>
    %cst_59 = arith.constant 0.797884583 : f32
    %108 = vector.broadcast %cst_59 : f32 to vector<104x256xf32>
    %109 = arith.mulf %108, %107 : vector<104x256xf32>
    %110 = math.tanh %109 : vector<104x256xf32>
    %cst_60 = arith.constant 1.000000e+00 : f32
    %111 = vector.broadcast %cst_60 : f32 to vector<104x256xf32>
    %112 = arith.addf %111, %110 : vector<104x256xf32>
    %113 = arith.mulf %102, %112 : vector<104x256xf32>
    %114 = vector.extract_strided_slice %113 {offsets = [0, 0], sizes = [104, 128], strides = [1, 1]} : vector<104x256xf32> to vector<104x128xf32>
    %115 = vector.extract_strided_slice %113 {offsets = [0, 128], sizes = [104, 128], strides = [1, 1]} : vector<104x256xf32> to vector<104x128xf32>
    %c1_61 = arith.constant 1 : index
    %c0_62 = arith.constant 0 : index
    %c0_63 = arith.constant 0 : index
    %116 = vector.load %arg6[%c1_61, %c0_62, %c0_63] : memref<6x1x128xf32, #tpu.memory_space<vmem>>, vector<1x1x128xf32>
    %117 = vector.shape_cast %116 : vector<1x1x128xf32> to vector<1x128xf32>
    %c1_64 = arith.constant 1 : index
    %c0_65 = arith.constant 0 : index
    %c0_66 = arith.constant 0 : index
    %118 = vector.load %arg7[%c1_64, %c0_65, %c0_66] : memref<6x1x128xf32, #tpu.memory_space<vmem>>, vector<1x1x128xf32>
    %119 = vector.shape_cast %118 : vector<1x1x128xf32> to vector<1x128xf32>
    %cst_67 = arith.constant dense<0.000000e+00> : vector<104xf32>
    %120 = vector.multi_reduction <add>, %115, %cst_67 [1] : vector<104x128xf32> to vector<104xf32>
    %121 = vector.shape_cast %120 : vector<104xf32> to vector<104x1xf32>
    %cst_68 = arith.constant 1.280000e+02 : f32
    %122 = vector.broadcast %cst_68 : f32 to vector<104x1xf32>
    %123 = arith.divf %121, %122 : vector<104x1xf32>
    %124 = vector.broadcast %123 : vector<104x1xf32> to vector<104x128xf32>
    %125 = arith.subf %115, %124 : vector<104x128xf32>
    %126 = arith.mulf %125, %125 : vector<104x128xf32>
    %cst_69 = arith.constant dense<0.000000e+00> : vector<104xf32>
    %127 = vector.multi_reduction <add>, %126, %cst_69 [1] : vector<104x128xf32> to vector<104xf32>
    %128 = vector.shape_cast %127 : vector<104xf32> to vector<104x1xf32>
    %cst_70 = arith.constant 1.280000e+02 : f32
    %129 = vector.broadcast %cst_70 : f32 to vector<104x1xf32>
    %130 = arith.divf %128, %129 : vector<104x1xf32>
    %cst_71 = arith.constant 9.99999974E-6 : f32
    %131 = vector.broadcast %cst_71 : f32 to vector<104x1xf32>
    %132 = arith.addf %130, %131 : vector<104x1xf32>
    %133 = math.rsqrt %132 : vector<104x1xf32>
    %134 = vector.broadcast %133 : vector<104x1xf32> to vector<104x128xf32>
    %135 = arith.mulf %125, %134 : vector<104x128xf32>
    %136 = vector.broadcast %117 : vector<1x128xf32> to vector<104x128xf32>
    %137 = arith.mulf %135, %136 : vector<104x128xf32>
    %138 = vector.broadcast %119 : vector<1x128xf32> to vector<104x128xf32>
    %139 = arith.addf %137, %138 : vector<104x128xf32>
    %cst_72 = arith.constant 1.000000e+00 : f32
    %140 = vector.broadcast %cst_72 : f32 to vector<104x128xf32>
    %141 = arith.select %9, %140, %139 : vector<104x128xi1>, vector<104x128xf32>
    %c1_73 = arith.constant 1 : index
    %c0_74 = arith.constant 0 : index
    %c0_75 = arith.constant 0 : index
    %142 = vector.load %arg8[%c1_73, %c0_74, %c0_75] : memref<6x104x104xf32, #tpu.memory_space<vmem>>, vector<1x104x104xf32>
    %143 = vector.shape_cast %142 : vector<1x104x104xf32> to vector<104x104xf32>
    %cst_76 = arith.constant dense<0.000000e+00> : vector<104x128xf32>
    %144 = tpu.matmul %143, %141, %cst_76 {dimension_numbers = #tpu.dot_dimension_numbers<[1], [0], [0], [1], [0, 0, 1, 1], [], []>} : vector<104x104xf32>, vector<104x128xf32>, vector<104x128xf32> -> vector<104x128xf32>
    %145 = arith.mulf %144, %114 : vector<104x128xf32>
    %c1_77 = arith.constant 1 : index
    %c0_78 = arith.constant 0 : index
    %c0_79 = arith.constant 0 : index
    %146 = vector.load %arg9[%c1_77, %c0_78, %c0_79] : memref<6x128x64xf32, #tpu.memory_space<vmem>>, vector<1x128x64xf32>
    %147 = vector.shape_cast %146 : vector<1x128x64xf32> to vector<128x64xf32>
    %cst_80 = arith.constant dense<0.000000e+00> : vector<104x64xf32>
    %148 = tpu.matmul %145, %147, %cst_80 {dimension_numbers = #tpu.dot_dimension_numbers<[1], [0], [0], [1], [0, 0, 1, 1], [], []>} : vector<104x128xf32>, vector<128x64xf32>, vector<104x64xf32> -> vector<104x64xf32>
    %c1_81 = arith.constant 1 : index
    %c0_82 = arith.constant 0 : index
    %c0_83 = arith.constant 0 : index
    %149 = vector.load %arg10[%c1_81, %c0_82, %c0_83] : memref<6x1x64xf32, #tpu.memory_space<vmem>>, vector<1x1x64xf32>
    %150 = vector.shape_cast %149 : vector<1x1x64xf32> to vector<1x64xf32>
    %151 = vector.broadcast %150 : vector<1x64xf32> to vector<104x64xf32>
    %152 = arith.addf %148, %151 : vector<104x64xf32>
    %c1_84 = arith.constant 1 : index
    %c0_85 = arith.constant 0 : index
    %c0_86 = arith.constant 0 : index
    %153 = vector.load %arg11[%c1_84, %c0_85, %c0_86] : memref<6x1x64xf32, #tpu.memory_space<vmem>>, vector<1x1x64xf32>
    %154 = vector.shape_cast %153 : vector<1x1x64xf32> to vector<1x64xf32>
    %c1_87 = arith.constant 1 : index
    %c0_88 = arith.constant 0 : index
    %c0_89 = arith.constant 0 : index
    %155 = vector.load %arg12[%c1_87, %c0_88, %c0_89] : memref<6x1x64xf32, #tpu.memory_space<vmem>>, vector<1x1x64xf32>
    %156 = vector.shape_cast %155 : vector<1x1x64xf32> to vector<1x64xf32>
    %cst_90 = arith.constant dense<0.000000e+00> : vector<104xf32>
    %157 = vector.multi_reduction <add>, %152, %cst_90 [1] : vector<104x64xf32> to vector<104xf32>
    %158 = vector.shape_cast %157 : vector<104xf32> to vector<104x1xf32>
    %cst_91 = arith.constant 6.400000e+01 : f32
    %159 = vector.broadcast %cst_91 : f32 to vector<104x1xf32>
    %160 = arith.divf %158, %159 : vector<104x1xf32>
    %161 = vector.broadcast %160 : vector<104x1xf32> to vector<104x64xf32>
    %162 = arith.subf %152, %161 : vector<104x64xf32>
    %163 = arith.mulf %162, %162 : vector<104x64xf32>
    %cst_92 = arith.constant dense<0.000000e+00> : vector<104xf32>
    %164 = vector.multi_reduction <add>, %163, %cst_92 [1] : vector<104x64xf32> to vector<104xf32>
    %165 = vector.shape_cast %164 : vector<104xf32> to vector<104x1xf32>
    %cst_93 = arith.constant 6.400000e+01 : f32
    %166 = vector.broadcast %cst_93 : f32 to vector<104x1xf32>
    %167 = arith.divf %165, %166 : vector<104x1xf32>
    %cst_94 = arith.constant 9.99999974E-6 : f32
    %168 = vector.broadcast %cst_94 : f32 to vector<104x1xf32>
    %169 = arith.addf %167, %168 : vector<104x1xf32>
    %170 = math.rsqrt %169 : vector<104x1xf32>
    %171 = vector.broadcast %170 : vector<104x1xf32> to vector<104x64xf32>
    %172 = arith.mulf %162, %171 : vector<104x64xf32>
    %173 = vector.broadcast %154 : vector<1x64xf32> to vector<104x64xf32>
    %174 = arith.mulf %172, %173 : vector<104x64xf32>
    %175 = vector.broadcast %156 : vector<1x64xf32> to vector<104x64xf32>
    %176 = arith.addf %174, %175 : vector<104x64xf32>
    %177 = arith.addf %176, %93 : vector<104x64xf32>
    %c2 = arith.constant 2 : index
    %c0_95 = arith.constant 0 : index
    %c0_96 = arith.constant 0 : index
    %178 = vector.load %arg4[%c2, %c0_95, %c0_96] : memref<6x64x256xf32, #tpu.memory_space<vmem>>, vector<1x64x256xf32>
    %179 = vector.shape_cast %178 : vector<1x64x256xf32> to vector<64x256xf32>
    %cst_97 = arith.constant dense<0.000000e+00> : vector<104x256xf32>
    %180 = tpu.matmul %177, %179, %cst_97 {dimension_numbers = #tpu.dot_dimension_numbers<[1], [0], [0], [1], [0, 0, 1, 1], [], []>} : vector<104x64xf32>, vector<64x256xf32>, vector<104x256xf32> -> vector<104x256xf32>
    %c2_98 = arith.constant 2 : index
    %c0_99 = arith.constant 0 : index
    %c0_100 = arith.constant 0 : index
    %181 = vector.load %arg5[%c2_98, %c0_99, %c0_100] : memref<6x1x256xf32, #tpu.memory_space<vmem>>, vector<1x1x256xf32>
    %182 = vector.shape_cast %181 : vector<1x1x256xf32> to vector<1x256xf32>
    %183 = vector.broadcast %182 : vector<1x256xf32> to vector<104x256xf32>
    %184 = arith.addf %180, %183 : vector<104x256xf32>
    %cst_101 = arith.constant 5.000000e-01 : f32
    %185 = vector.broadcast %cst_101 : f32 to vector<104x256xf32>
    %186 = arith.mulf %185, %184 : vector<104x256xf32>
    %cst_102 = arith.constant 4.471500e-02 : f32
    %187 = vector.broadcast %cst_102 : f32 to vector<104x256xf32>
    %188 = arith.mulf %187, %184 : vector<104x256xf32>
    %189 = arith.mulf %188, %184 : vector<104x256xf32>
    %190 = arith.mulf %189, %184 : vector<104x256xf32>
    %191 = arith.addf %184, %190 : vector<104x256xf32>
    %cst_103 = arith.constant 0.797884583 : f32
    %192 = vector.broadcast %cst_103 : f32 to vector<104x256xf32>
    %193 = arith.mulf %192, %191 : vector<104x256xf32>
    %194 = math.tanh %193 : vector<104x256xf32>
    %cst_104 = arith.constant 1.000000e+00 : f32
    %195 = vector.broadcast %cst_104 : f32 to vector<104x256xf32>
    %196 = arith.addf %195, %194 : vector<104x256xf32>
    %197 = arith.mulf %186, %196 : vector<104x256xf32>
    %198 = vector.extract_strided_slice %197 {offsets = [0, 0], sizes = [104, 128], strides = [1, 1]} : vector<104x256xf32> to vector<104x128xf32>
    %199 = vector.extract_strided_slice %197 {offsets = [0, 128], sizes = [104, 128], strides = [1, 1]} : vector<104x256xf32> to vector<104x128xf32>
    %c2_105 = arith.constant 2 : index
    %c0_106 = arith.constant 0 : index
    %c0_107 = arith.constant 0 : index
    %200 = vector.load %arg6[%c2_105, %c0_106, %c0_107] : memref<6x1x128xf32, #tpu.memory_space<vmem>>, vector<1x1x128xf32>
    %201 = vector.shape_cast %200 : vector<1x1x128xf32> to vector<1x128xf32>
    %c2_108 = arith.constant 2 : index
    %c0_109 = arith.constant 0 : index
    %c0_110 = arith.constant 0 : index
    %202 = vector.load %arg7[%c2_108, %c0_109, %c0_110] : memref<6x1x128xf32, #tpu.memory_space<vmem>>, vector<1x1x128xf32>
    %203 = vector.shape_cast %202 : vector<1x1x128xf32> to vector<1x128xf32>
    %cst_111 = arith.constant dense<0.000000e+00> : vector<104xf32>
    %204 = vector.multi_reduction <add>, %199, %cst_111 [1] : vector<104x128xf32> to vector<104xf32>
    %205 = vector.shape_cast %204 : vector<104xf32> to vector<104x1xf32>
    %cst_112 = arith.constant 1.280000e+02 : f32
    %206 = vector.broadcast %cst_112 : f32 to vector<104x1xf32>
    %207 = arith.divf %205, %206 : vector<104x1xf32>
    %208 = vector.broadcast %207 : vector<104x1xf32> to vector<104x128xf32>
    %209 = arith.subf %199, %208 : vector<104x128xf32>
    %210 = arith.mulf %209, %209 : vector<104x128xf32>
    %cst_113 = arith.constant dense<0.000000e+00> : vector<104xf32>
    %211 = vector.multi_reduction <add>, %210, %cst_113 [1] : vector<104x128xf32> to vector<104xf32>
    %212 = vector.shape_cast %211 : vector<104xf32> to vector<104x1xf32>
    %cst_114 = arith.constant 1.280000e+02 : f32
    %213 = vector.broadcast %cst_114 : f32 to vector<104x1xf32>
    %214 = arith.divf %212, %213 : vector<104x1xf32>
    %cst_115 = arith.constant 9.99999974E-6 : f32
    %215 = vector.broadcast %cst_115 : f32 to vector<104x1xf32>
    %216 = arith.addf %214, %215 : vector<104x1xf32>
    %217 = math.rsqrt %216 : vector<104x1xf32>
    %218 = vector.broadcast %217 : vector<104x1xf32> to vector<104x128xf32>
    %219 = arith.mulf %209, %218 : vector<104x128xf32>
    %220 = vector.broadcast %201 : vector<1x128xf32> to vector<104x128xf32>
    %221 = arith.mulf %219, %220 : vector<104x128xf32>
    %222 = vector.broadcast %203 : vector<1x128xf32> to vector<104x128xf32>
    %223 = arith.addf %221, %222 : vector<104x128xf32>
    %cst_116 = arith.constant 1.000000e+00 : f32
    %224 = vector.broadcast %cst_116 : f32 to vector<104x128xf32>
    %225 = arith.select %9, %224, %223 : vector<104x128xi1>, vector<104x128xf32>
    %c2_117 = arith.constant 2 : index
    %c0_118 = arith.constant 0 : index
    %c0_119 = arith.constant 0 : index
    %226 = vector.load %arg8[%c2_117, %c0_118, %c0_119] : memref<6x104x104xf32, #tpu.memory_space<vmem>>, vector<1x104x104xf32>
    %227 = vector.shape_cast %226 : vector<1x104x104xf32> to vector<104x104xf32>
    %cst_120 = arith.constant dense<0.000000e+00> : vector<104x128xf32>
    %228 = tpu.matmul %227, %225, %cst_120 {dimension_numbers = #tpu.dot_dimension_numbers<[1], [0], [0], [1], [0, 0, 1, 1], [], []>} : vector<104x104xf32>, vector<104x128xf32>, vector<104x128xf32> -> vector<104x128xf32>
    %229 = arith.mulf %228, %198 : vector<104x128xf32>
    %c2_121 = arith.constant 2 : index
    %c0_122 = arith.constant 0 : index
    %c0_123 = arith.constant 0 : index
    %230 = vector.load %arg9[%c2_121, %c0_122, %c0_123] : memref<6x128x64xf32, #tpu.memory_space<vmem>>, vector<1x128x64xf32>
    %231 = vector.shape_cast %230 : vector<1x128x64xf32> to vector<128x64xf32>
    %cst_124 = arith.constant dense<0.000000e+00> : vector<104x64xf32>
    %232 = tpu.matmul %229, %231, %cst_124 {dimension_numbers = #tpu.dot_dimension_numbers<[1], [0], [0], [1], [0, 0, 1, 1], [], []>} : vector<104x128xf32>, vector<128x64xf32>, vector<104x64xf32> -> vector<104x64xf32>
    %c2_125 = arith.constant 2 : index
    %c0_126 = arith.constant 0 : index
    %c0_127 = arith.constant 0 : index
    %233 = vector.load %arg10[%c2_125, %c0_126, %c0_127] : memref<6x1x64xf32, #tpu.memory_space<vmem>>, vector<1x1x64xf32>
    %234 = vector.shape_cast %233 : vector<1x1x64xf32> to vector<1x64xf32>
    %235 = vector.broadcast %234 : vector<1x64xf32> to vector<104x64xf32>
    %236 = arith.addf %232, %235 : vector<104x64xf32>
    %c2_128 = arith.constant 2 : index
    %c0_129 = arith.constant 0 : index
    %c0_130 = arith.constant 0 : index
    %237 = vector.load %arg11[%c2_128, %c0_129, %c0_130] : memref<6x1x64xf32, #tpu.memory_space<vmem>>, vector<1x1x64xf32>
    %238 = vector.shape_cast %237 : vector<1x1x64xf32> to vector<1x64xf32>
    %c2_131 = arith.constant 2 : index
    %c0_132 = arith.constant 0 : index
    %c0_133 = arith.constant 0 : index
    %239 = vector.load %arg12[%c2_131, %c0_132, %c0_133] : memref<6x1x64xf32, #tpu.memory_space<vmem>>, vector<1x1x64xf32>
    %240 = vector.shape_cast %239 : vector<1x1x64xf32> to vector<1x64xf32>
    %cst_134 = arith.constant dense<0.000000e+00> : vector<104xf32>
    %241 = vector.multi_reduction <add>, %236, %cst_134 [1] : vector<104x64xf32> to vector<104xf32>
    %242 = vector.shape_cast %241 : vector<104xf32> to vector<104x1xf32>
    %cst_135 = arith.constant 6.400000e+01 : f32
    %243 = vector.broadcast %cst_135 : f32 to vector<104x1xf32>
    %244 = arith.divf %242, %243 : vector<104x1xf32>
    %245 = vector.broadcast %244 : vector<104x1xf32> to vector<104x64xf32>
    %246 = arith.subf %236, %245 : vector<104x64xf32>
    %247 = arith.mulf %246, %246 : vector<104x64xf32>
    %cst_136 = arith.constant dense<0.000000e+00> : vector<104xf32>
    %248 = vector.multi_reduction <add>, %247, %cst_136 [1] : vector<104x64xf32> to vector<104xf32>
    %249 = vector.shape_cast %248 : vector<104xf32> to vector<104x1xf32>
    %cst_137 = arith.constant 6.400000e+01 : f32
    %250 = vector.broadcast %cst_137 : f32 to vector<104x1xf32>
    %251 = arith.divf %249, %250 : vector<104x1xf32>
    %cst_138 = arith.constant 9.99999974E-6 : f32
    %252 = vector.broadcast %cst_138 : f32 to vector<104x1xf32>
    %253 = arith.addf %251, %252 : vector<104x1xf32>
    %254 = math.rsqrt %253 : vector<104x1xf32>
    %255 = vector.broadcast %254 : vector<104x1xf32> to vector<104x64xf32>
    %256 = arith.mulf %246, %255 : vector<104x64xf32>
    %257 = vector.broadcast %238 : vector<1x64xf32> to vector<104x64xf32>
    %258 = arith.mulf %256, %257 : vector<104x64xf32>
    %259 = vector.broadcast %240 : vector<1x64xf32> to vector<104x64xf32>
    %260 = arith.addf %258, %259 : vector<104x64xf32>
    %261 = arith.addf %260, %177 : vector<104x64xf32>
    %c3 = arith.constant 3 : index
    %c0_139 = arith.constant 0 : index
    %c0_140 = arith.constant 0 : index
    %262 = vector.load %arg4[%c3, %c0_139, %c0_140] : memref<6x64x256xf32, #tpu.memory_space<vmem>>, vector<1x64x256xf32>
    %263 = vector.shape_cast %262 : vector<1x64x256xf32> to vector<64x256xf32>
    %cst_141 = arith.constant dense<0.000000e+00> : vector<104x256xf32>
    %264 = tpu.matmul %261, %263, %cst_141 {dimension_numbers = #tpu.dot_dimension_numbers<[1], [0], [0], [1], [0, 0, 1, 1], [], []>} : vector<104x64xf32>, vector<64x256xf32>, vector<104x256xf32> -> vector<104x256xf32>
    %c3_142 = arith.constant 3 : index
    %c0_143 = arith.constant 0 : index
    %c0_144 = arith.constant 0 : index
    %265 = vector.load %arg5[%c3_142, %c0_143, %c0_144] : memref<6x1x256xf32, #tpu.memory_space<vmem>>, vector<1x1x256xf32>
    %266 = vector.shape_cast %265 : vector<1x1x256xf32> to vector<1x256xf32>
    %267 = vector.broadcast %266 : vector<1x256xf32> to vector<104x256xf32>
    %268 = arith.addf %264, %267 : vector<104x256xf32>
    %cst_145 = arith.constant 5.000000e-01 : f32
    %269 = vector.broadcast %cst_145 : f32 to vector<104x256xf32>
    %270 = arith.mulf %269, %268 : vector<104x256xf32>
    %cst_146 = arith.constant 4.471500e-02 : f32
    %271 = vector.broadcast %cst_146 : f32 to vector<104x256xf32>
    %272 = arith.mulf %271, %268 : vector<104x256xf32>
    %273 = arith.mulf %272, %268 : vector<104x256xf32>
    %274 = arith.mulf %273, %268 : vector<104x256xf32>
    %275 = arith.addf %268, %274 : vector<104x256xf32>
    %cst_147 = arith.constant 0.797884583 : f32
    %276 = vector.broadcast %cst_147 : f32 to vector<104x256xf32>
    %277 = arith.mulf %276, %275 : vector<104x256xf32>
    %278 = math.tanh %277 : vector<104x256xf32>
    %cst_148 = arith.constant 1.000000e+00 : f32
    %279 = vector.broadcast %cst_148 : f32 to vector<104x256xf32>
    %280 = arith.addf %279, %278 : vector<104x256xf32>
    %281 = arith.mulf %270, %280 : vector<104x256xf32>
    %282 = vector.extract_strided_slice %281 {offsets = [0, 0], sizes = [104, 128], strides = [1, 1]} : vector<104x256xf32> to vector<104x128xf32>
    %283 = vector.extract_strided_slice %281 {offsets = [0, 128], sizes = [104, 128], strides = [1, 1]} : vector<104x256xf32> to vector<104x128xf32>
    %c3_149 = arith.constant 3 : index
    %c0_150 = arith.constant 0 : index
    %c0_151 = arith.constant 0 : index
    %284 = vector.load %arg6[%c3_149, %c0_150, %c0_151] : memref<6x1x128xf32, #tpu.memory_space<vmem>>, vector<1x1x128xf32>
    %285 = vector.shape_cast %284 : vector<1x1x128xf32> to vector<1x128xf32>
    %c3_152 = arith.constant 3 : index
    %c0_153 = arith.constant 0 : index
    %c0_154 = arith.constant 0 : index
    %286 = vector.load %arg7[%c3_152, %c0_153, %c0_154] : memref<6x1x128xf32, #tpu.memory_space<vmem>>, vector<1x1x128xf32>
    %287 = vector.shape_cast %286 : vector<1x1x128xf32> to vector<1x128xf32>
    %cst_155 = arith.constant dense<0.000000e+00> : vector<104xf32>
    %288 = vector.multi_reduction <add>, %283, %cst_155 [1] : vector<104x128xf32> to vector<104xf32>
    %289 = vector.shape_cast %288 : vector<104xf32> to vector<104x1xf32>
    %cst_156 = arith.constant 1.280000e+02 : f32
    %290 = vector.broadcast %cst_156 : f32 to vector<104x1xf32>
    %291 = arith.divf %289, %290 : vector<104x1xf32>
    %292 = vector.broadcast %291 : vector<104x1xf32> to vector<104x128xf32>
    %293 = arith.subf %283, %292 : vector<104x128xf32>
    %294 = arith.mulf %293, %293 : vector<104x128xf32>
    %cst_157 = arith.constant dense<0.000000e+00> : vector<104xf32>
    %295 = vector.multi_reduction <add>, %294, %cst_157 [1] : vector<104x128xf32> to vector<104xf32>
    %296 = vector.shape_cast %295 : vector<104xf32> to vector<104x1xf32>
    %cst_158 = arith.constant 1.280000e+02 : f32
    %297 = vector.broadcast %cst_158 : f32 to vector<104x1xf32>
    %298 = arith.divf %296, %297 : vector<104x1xf32>
    %cst_159 = arith.constant 9.99999974E-6 : f32
    %299 = vector.broadcast %cst_159 : f32 to vector<104x1xf32>
    %300 = arith.addf %298, %299 : vector<104x1xf32>
    %301 = math.rsqrt %300 : vector<104x1xf32>
    %302 = vector.broadcast %301 : vector<104x1xf32> to vector<104x128xf32>
    %303 = arith.mulf %293, %302 : vector<104x128xf32>
    %304 = vector.broadcast %285 : vector<1x128xf32> to vector<104x128xf32>
    %305 = arith.mulf %303, %304 : vector<104x128xf32>
    %306 = vector.broadcast %287 : vector<1x128xf32> to vector<104x128xf32>
    %307 = arith.addf %305, %306 : vector<104x128xf32>
    %cst_160 = arith.constant 1.000000e+00 : f32
    %308 = vector.broadcast %cst_160 : f32 to vector<104x128xf32>
    %309 = arith.select %9, %308, %307 : vector<104x128xi1>, vector<104x128xf32>
    %c3_161 = arith.constant 3 : index
    %c0_162 = arith.constant 0 : index
    %c0_163 = arith.constant 0 : index
    %310 = vector.load %arg8[%c3_161, %c0_162, %c0_163] : memref<6x104x104xf32, #tpu.memory_space<vmem>>, vector<1x104x104xf32>
    %311 = vector.shape_cast %310 : vector<1x104x104xf32> to vector<104x104xf32>
    %cst_164 = arith.constant dense<0.000000e+00> : vector<104x128xf32>
    %312 = tpu.matmul %311, %309, %cst_164 {dimension_numbers = #tpu.dot_dimension_numbers<[1], [0], [0], [1], [0, 0, 1, 1], [], []>} : vector<104x104xf32>, vector<104x128xf32>, vector<104x128xf32> -> vector<104x128xf32>
    %313 = arith.mulf %312, %282 : vector<104x128xf32>
    %c3_165 = arith.constant 3 : index
    %c0_166 = arith.constant 0 : index
    %c0_167 = arith.constant 0 : index
    %314 = vector.load %arg9[%c3_165, %c0_166, %c0_167] : memref<6x128x64xf32, #tpu.memory_space<vmem>>, vector<1x128x64xf32>
    %315 = vector.shape_cast %314 : vector<1x128x64xf32> to vector<128x64xf32>
    %cst_168 = arith.constant dense<0.000000e+00> : vector<104x64xf32>
    %316 = tpu.matmul %313, %315, %cst_168 {dimension_numbers = #tpu.dot_dimension_numbers<[1], [0], [0], [1], [0, 0, 1, 1], [], []>} : vector<104x128xf32>, vector<128x64xf32>, vector<104x64xf32> -> vector<104x64xf32>
    %c3_169 = arith.constant 3 : index
    %c0_170 = arith.constant 0 : index
    %c0_171 = arith.constant 0 : index
    %317 = vector.load %arg10[%c3_169, %c0_170, %c0_171] : memref<6x1x64xf32, #tpu.memory_space<vmem>>, vector<1x1x64xf32>
    %318 = vector.shape_cast %317 : vector<1x1x64xf32> to vector<1x64xf32>
    %319 = vector.broadcast %318 : vector<1x64xf32> to vector<104x64xf32>
    %320 = arith.addf %316, %319 : vector<104x64xf32>
    %c3_172 = arith.constant 3 : index
    %c0_173 = arith.constant 0 : index
    %c0_174 = arith.constant 0 : index
    %321 = vector.load %arg11[%c3_172, %c0_173, %c0_174] : memref<6x1x64xf32, #tpu.memory_space<vmem>>, vector<1x1x64xf32>
    %322 = vector.shape_cast %321 : vector<1x1x64xf32> to vector<1x64xf32>
    %c3_175 = arith.constant 3 : index
    %c0_176 = arith.constant 0 : index
    %c0_177 = arith.constant 0 : index
    %323 = vector.load %arg12[%c3_175, %c0_176, %c0_177] : memref<6x1x64xf32, #tpu.memory_space<vmem>>, vector<1x1x64xf32>
    %324 = vector.shape_cast %323 : vector<1x1x64xf32> to vector<1x64xf32>
    %cst_178 = arith.constant dense<0.000000e+00> : vector<104xf32>
    %325 = vector.multi_reduction <add>, %320, %cst_178 [1] : vector<104x64xf32> to vector<104xf32>
    %326 = vector.shape_cast %325 : vector<104xf32> to vector<104x1xf32>
    %cst_179 = arith.constant 6.400000e+01 : f32
    %327 = vector.broadcast %cst_179 : f32 to vector<104x1xf32>
    %328 = arith.divf %326, %327 : vector<104x1xf32>
    %329 = vector.broadcast %328 : vector<104x1xf32> to vector<104x64xf32>
    %330 = arith.subf %320, %329 : vector<104x64xf32>
    %331 = arith.mulf %330, %330 : vector<104x64xf32>
    %cst_180 = arith.constant dense<0.000000e+00> : vector<104xf32>
    %332 = vector.multi_reduction <add>, %331, %cst_180 [1] : vector<104x64xf32> to vector<104xf32>
    %333 = vector.shape_cast %332 : vector<104xf32> to vector<104x1xf32>
    %cst_181 = arith.constant 6.400000e+01 : f32
    %334 = vector.broadcast %cst_181 : f32 to vector<104x1xf32>
    %335 = arith.divf %333, %334 : vector<104x1xf32>
    %cst_182 = arith.constant 9.99999974E-6 : f32
    %336 = vector.broadcast %cst_182 : f32 to vector<104x1xf32>
    %337 = arith.addf %335, %336 : vector<104x1xf32>
    %338 = math.rsqrt %337 : vector<104x1xf32>
    %339 = vector.broadcast %338 : vector<104x1xf32> to vector<104x64xf32>
    %340 = arith.mulf %330, %339 : vector<104x64xf32>
    %341 = vector.broadcast %322 : vector<1x64xf32> to vector<104x64xf32>
    %342 = arith.mulf %340, %341 : vector<104x64xf32>
    %343 = vector.broadcast %324 : vector<1x64xf32> to vector<104x64xf32>
    %344 = arith.addf %342, %343 : vector<104x64xf32>
    %345 = arith.addf %344, %261 : vector<104x64xf32>
    %c4 = arith.constant 4 : index
    %c0_183 = arith.constant 0 : index
    %c0_184 = arith.constant 0 : index
    %346 = vector.load %arg4[%c4, %c0_183, %c0_184] : memref<6x64x256xf32, #tpu.memory_space<vmem>>, vector<1x64x256xf32>
    %347 = vector.shape_cast %346 : vector<1x64x256xf32> to vector<64x256xf32>
    %cst_185 = arith.constant dense<0.000000e+00> : vector<104x256xf32>
    %348 = tpu.matmul %345, %347, %cst_185 {dimension_numbers = #tpu.dot_dimension_numbers<[1], [0], [0], [1], [0, 0, 1, 1], [], []>} : vector<104x64xf32>, vector<64x256xf32>, vector<104x256xf32> -> vector<104x256xf32>
    %c4_186 = arith.constant 4 : index
    %c0_187 = arith.constant 0 : index
    %c0_188 = arith.constant 0 : index
    %349 = vector.load %arg5[%c4_186, %c0_187, %c0_188] : memref<6x1x256xf32, #tpu.memory_space<vmem>>, vector<1x1x256xf32>
    %350 = vector.shape_cast %349 : vector<1x1x256xf32> to vector<1x256xf32>
    %351 = vector.broadcast %350 : vector<1x256xf32> to vector<104x256xf32>
    %352 = arith.addf %348, %351 : vector<104x256xf32>
    %cst_189 = arith.constant 5.000000e-01 : f32
    %353 = vector.broadcast %cst_189 : f32 to vector<104x256xf32>
    %354 = arith.mulf %353, %352 : vector<104x256xf32>
    %cst_190 = arith.constant 4.471500e-02 : f32
    %355 = vector.broadcast %cst_190 : f32 to vector<104x256xf32>
    %356 = arith.mulf %355, %352 : vector<104x256xf32>
    %357 = arith.mulf %356, %352 : vector<104x256xf32>
    %358 = arith.mulf %357, %352 : vector<104x256xf32>
    %359 = arith.addf %352, %358 : vector<104x256xf32>
    %cst_191 = arith.constant 0.797884583 : f32
    %360 = vector.broadcast %cst_191 : f32 to vector<104x256xf32>
    %361 = arith.mulf %360, %359 : vector<104x256xf32>
    %362 = math.tanh %361 : vector<104x256xf32>
    %cst_192 = arith.constant 1.000000e+00 : f32
    %363 = vector.broadcast %cst_192 : f32 to vector<104x256xf32>
    %364 = arith.addf %363, %362 : vector<104x256xf32>
    %365 = arith.mulf %354, %364 : vector<104x256xf32>
    %366 = vector.extract_strided_slice %365 {offsets = [0, 0], sizes = [104, 128], strides = [1, 1]} : vector<104x256xf32> to vector<104x128xf32>
    %367 = vector.extract_strided_slice %365 {offsets = [0, 128], sizes = [104, 128], strides = [1, 1]} : vector<104x256xf32> to vector<104x128xf32>
    %c4_193 = arith.constant 4 : index
    %c0_194 = arith.constant 0 : index
    %c0_195 = arith.constant 0 : index
    %368 = vector.load %arg6[%c4_193, %c0_194, %c0_195] : memref<6x1x128xf32, #tpu.memory_space<vmem>>, vector<1x1x128xf32>
    %369 = vector.shape_cast %368 : vector<1x1x128xf32> to vector<1x128xf32>
    %c4_196 = arith.constant 4 : index
    %c0_197 = arith.constant 0 : index
    %c0_198 = arith.constant 0 : index
    %370 = vector.load %arg7[%c4_196, %c0_197, %c0_198] : memref<6x1x128xf32, #tpu.memory_space<vmem>>, vector<1x1x128xf32>
    %371 = vector.shape_cast %370 : vector<1x1x128xf32> to vector<1x128xf32>
    %cst_199 = arith.constant dense<0.000000e+00> : vector<104xf32>
    %372 = vector.multi_reduction <add>, %367, %cst_199 [1] : vector<104x128xf32> to vector<104xf32>
    %373 = vector.shape_cast %372 : vector<104xf32> to vector<104x1xf32>
    %cst_200 = arith.constant 1.280000e+02 : f32
    %374 = vector.broadcast %cst_200 : f32 to vector<104x1xf32>
    %375 = arith.divf %373, %374 : vector<104x1xf32>
    %376 = vector.broadcast %375 : vector<104x1xf32> to vector<104x128xf32>
    %377 = arith.subf %367, %376 : vector<104x128xf32>
    %378 = arith.mulf %377, %377 : vector<104x128xf32>
    %cst_201 = arith.constant dense<0.000000e+00> : vector<104xf32>
    %379 = vector.multi_reduction <add>, %378, %cst_201 [1] : vector<104x128xf32> to vector<104xf32>
    %380 = vector.shape_cast %379 : vector<104xf32> to vector<104x1xf32>
    %cst_202 = arith.constant 1.280000e+02 : f32
    %381 = vector.broadcast %cst_202 : f32 to vector<104x1xf32>
    %382 = arith.divf %380, %381 : vector<104x1xf32>
    %cst_203 = arith.constant 9.99999974E-6 : f32
    %383 = vector.broadcast %cst_203 : f32 to vector<104x1xf32>
    %384 = arith.addf %382, %383 : vector<104x1xf32>
    %385 = math.rsqrt %384 : vector<104x1xf32>
    %386 = vector.broadcast %385 : vector<104x1xf32> to vector<104x128xf32>
    %387 = arith.mulf %377, %386 : vector<104x128xf32>
    %388 = vector.broadcast %369 : vector<1x128xf32> to vector<104x128xf32>
    %389 = arith.mulf %387, %388 : vector<104x128xf32>
    %390 = vector.broadcast %371 : vector<1x128xf32> to vector<104x128xf32>
    %391 = arith.addf %389, %390 : vector<104x128xf32>
    %cst_204 = arith.constant 1.000000e+00 : f32
    %392 = vector.broadcast %cst_204 : f32 to vector<104x128xf32>
    %393 = arith.select %9, %392, %391 : vector<104x128xi1>, vector<104x128xf32>
    %c4_205 = arith.constant 4 : index
    %c0_206 = arith.constant 0 : index
    %c0_207 = arith.constant 0 : index
    %394 = vector.load %arg8[%c4_205, %c0_206, %c0_207] : memref<6x104x104xf32, #tpu.memory_space<vmem>>, vector<1x104x104xf32>
    %395 = vector.shape_cast %394 : vector<1x104x104xf32> to vector<104x104xf32>
    %cst_208 = arith.constant dense<0.000000e+00> : vector<104x128xf32>
    %396 = tpu.matmul %395, %393, %cst_208 {dimension_numbers = #tpu.dot_dimension_numbers<[1], [0], [0], [1], [0, 0, 1, 1], [], []>} : vector<104x104xf32>, vector<104x128xf32>, vector<104x128xf32> -> vector<104x128xf32>
    %397 = arith.mulf %396, %366 : vector<104x128xf32>
    %c4_209 = arith.constant 4 : index
    %c0_210 = arith.constant 0 : index
    %c0_211 = arith.constant 0 : index
    %398 = vector.load %arg9[%c4_209, %c0_210, %c0_211] : memref<6x128x64xf32, #tpu.memory_space<vmem>>, vector<1x128x64xf32>
    %399 = vector.shape_cast %398 : vector<1x128x64xf32> to vector<128x64xf32>
    %cst_212 = arith.constant dense<0.000000e+00> : vector<104x64xf32>
    %400 = tpu.matmul %397, %399, %cst_212 {dimension_numbers = #tpu.dot_dimension_numbers<[1], [0], [0], [1], [0, 0, 1, 1], [], []>} : vector<104x128xf32>, vector<128x64xf32>, vector<104x64xf32> -> vector<104x64xf32>
    %c4_213 = arith.constant 4 : index
    %c0_214 = arith.constant 0 : index
    %c0_215 = arith.constant 0 : index
    %401 = vector.load %arg10[%c4_213, %c0_214, %c0_215] : memref<6x1x64xf32, #tpu.memory_space<vmem>>, vector<1x1x64xf32>
    %402 = vector.shape_cast %401 : vector<1x1x64xf32> to vector<1x64xf32>
    %403 = vector.broadcast %402 : vector<1x64xf32> to vector<104x64xf32>
    %404 = arith.addf %400, %403 : vector<104x64xf32>
    %c4_216 = arith.constant 4 : index
    %c0_217 = arith.constant 0 : index
    %c0_218 = arith.constant 0 : index
    %405 = vector.load %arg11[%c4_216, %c0_217, %c0_218] : memref<6x1x64xf32, #tpu.memory_space<vmem>>, vector<1x1x64xf32>
    %406 = vector.shape_cast %405 : vector<1x1x64xf32> to vector<1x64xf32>
    %c4_219 = arith.constant 4 : index
    %c0_220 = arith.constant 0 : index
    %c0_221 = arith.constant 0 : index
    %407 = vector.load %arg12[%c4_219, %c0_220, %c0_221] : memref<6x1x64xf32, #tpu.memory_space<vmem>>, vector<1x1x64xf32>
    %408 = vector.shape_cast %407 : vector<1x1x64xf32> to vector<1x64xf32>
    %cst_222 = arith.constant dense<0.000000e+00> : vector<104xf32>
    %409 = vector.multi_reduction <add>, %404, %cst_222 [1] : vector<104x64xf32> to vector<104xf32>
    %410 = vector.shape_cast %409 : vector<104xf32> to vector<104x1xf32>
    %cst_223 = arith.constant 6.400000e+01 : f32
    %411 = vector.broadcast %cst_223 : f32 to vector<104x1xf32>
    %412 = arith.divf %410, %411 : vector<104x1xf32>
    %413 = vector.broadcast %412 : vector<104x1xf32> to vector<104x64xf32>
    %414 = arith.subf %404, %413 : vector<104x64xf32>
    %415 = arith.mulf %414, %414 : vector<104x64xf32>
    %cst_224 = arith.constant dense<0.000000e+00> : vector<104xf32>
    %416 = vector.multi_reduction <add>, %415, %cst_224 [1] : vector<104x64xf32> to vector<104xf32>
    %417 = vector.shape_cast %416 : vector<104xf32> to vector<104x1xf32>
    %cst_225 = arith.constant 6.400000e+01 : f32
    %418 = vector.broadcast %cst_225 : f32 to vector<104x1xf32>
    %419 = arith.divf %417, %418 : vector<104x1xf32>
    %cst_226 = arith.constant 9.99999974E-6 : f32
    %420 = vector.broadcast %cst_226 : f32 to vector<104x1xf32>
    %421 = arith.addf %419, %420 : vector<104x1xf32>
    %422 = math.rsqrt %421 : vector<104x1xf32>
    %423 = vector.broadcast %422 : vector<104x1xf32> to vector<104x64xf32>
    %424 = arith.mulf %414, %423 : vector<104x64xf32>
    %425 = vector.broadcast %406 : vector<1x64xf32> to vector<104x64xf32>
    %426 = arith.mulf %424, %425 : vector<104x64xf32>
    %427 = vector.broadcast %408 : vector<1x64xf32> to vector<104x64xf32>
    %428 = arith.addf %426, %427 : vector<104x64xf32>
    %429 = arith.addf %428, %345 : vector<104x64xf32>
    %c5 = arith.constant 5 : index
    %c0_227 = arith.constant 0 : index
    %c0_228 = arith.constant 0 : index
    %430 = vector.load %arg4[%c5, %c0_227, %c0_228] : memref<6x64x256xf32, #tpu.memory_space<vmem>>, vector<1x64x256xf32>
    %431 = vector.shape_cast %430 : vector<1x64x256xf32> to vector<64x256xf32>
    %cst_229 = arith.constant dense<0.000000e+00> : vector<104x256xf32>
    %432 = tpu.matmul %429, %431, %cst_229 {dimension_numbers = #tpu.dot_dimension_numbers<[1], [0], [0], [1], [0, 0, 1, 1], [], []>} : vector<104x64xf32>, vector<64x256xf32>, vector<104x256xf32> -> vector<104x256xf32>
    %c5_230 = arith.constant 5 : index
    %c0_231 = arith.constant 0 : index
    %c0_232 = arith.constant 0 : index
    %433 = vector.load %arg5[%c5_230, %c0_231, %c0_232] : memref<6x1x256xf32, #tpu.memory_space<vmem>>, vector<1x1x256xf32>
    %434 = vector.shape_cast %433 : vector<1x1x256xf32> to vector<1x256xf32>
    %435 = vector.broadcast %434 : vector<1x256xf32> to vector<104x256xf32>
    %436 = arith.addf %432, %435 : vector<104x256xf32>
    %cst_233 = arith.constant 5.000000e-01 : f32
    %437 = vector.broadcast %cst_233 : f32 to vector<104x256xf32>
    %438 = arith.mulf %437, %436 : vector<104x256xf32>
    %cst_234 = arith.constant 4.471500e-02 : f32
    %439 = vector.broadcast %cst_234 : f32 to vector<104x256xf32>
    %440 = arith.mulf %439, %436 : vector<104x256xf32>
    %441 = arith.mulf %440, %436 : vector<104x256xf32>
    %442 = arith.mulf %441, %436 : vector<104x256xf32>
    %443 = arith.addf %436, %442 : vector<104x256xf32>
    %cst_235 = arith.constant 0.797884583 : f32
    %444 = vector.broadcast %cst_235 : f32 to vector<104x256xf32>
    %445 = arith.mulf %444, %443 : vector<104x256xf32>
    %446 = math.tanh %445 : vector<104x256xf32>
    %cst_236 = arith.constant 1.000000e+00 : f32
    %447 = vector.broadcast %cst_236 : f32 to vector<104x256xf32>
    %448 = arith.addf %447, %446 : vector<104x256xf32>
    %449 = arith.mulf %438, %448 : vector<104x256xf32>
    %450 = vector.extract_strided_slice %449 {offsets = [0, 0], sizes = [104, 128], strides = [1, 1]} : vector<104x256xf32> to vector<104x128xf32>
    %451 = vector.extract_strided_slice %449 {offsets = [0, 128], sizes = [104, 128], strides = [1, 1]} : vector<104x256xf32> to vector<104x128xf32>
    %c5_237 = arith.constant 5 : index
    %c0_238 = arith.constant 0 : index
    %c0_239 = arith.constant 0 : index
    %452 = vector.load %arg6[%c5_237, %c0_238, %c0_239] : memref<6x1x128xf32, #tpu.memory_space<vmem>>, vector<1x1x128xf32>
    %453 = vector.shape_cast %452 : vector<1x1x128xf32> to vector<1x128xf32>
    %c5_240 = arith.constant 5 : index
    %c0_241 = arith.constant 0 : index
    %c0_242 = arith.constant 0 : index
    %454 = vector.load %arg7[%c5_240, %c0_241, %c0_242] : memref<6x1x128xf32, #tpu.memory_space<vmem>>, vector<1x1x128xf32>
    %455 = vector.shape_cast %454 : vector<1x1x128xf32> to vector<1x128xf32>
    %cst_243 = arith.constant dense<0.000000e+00> : vector<104xf32>
    %456 = vector.multi_reduction <add>, %451, %cst_243 [1] : vector<104x128xf32> to vector<104xf32>
    %457 = vector.shape_cast %456 : vector<104xf32> to vector<104x1xf32>
    %cst_244 = arith.constant 1.280000e+02 : f32
    %458 = vector.broadcast %cst_244 : f32 to vector<104x1xf32>
    %459 = arith.divf %457, %458 : vector<104x1xf32>
    %460 = vector.broadcast %459 : vector<104x1xf32> to vector<104x128xf32>
    %461 = arith.subf %451, %460 : vector<104x128xf32>
    %462 = arith.mulf %461, %461 : vector<104x128xf32>
    %cst_245 = arith.constant dense<0.000000e+00> : vector<104xf32>
    %463 = vector.multi_reduction <add>, %462, %cst_245 [1] : vector<104x128xf32> to vector<104xf32>
    %464 = vector.shape_cast %463 : vector<104xf32> to vector<104x1xf32>
    %cst_246 = arith.constant 1.280000e+02 : f32
    %465 = vector.broadcast %cst_246 : f32 to vector<104x1xf32>
    %466 = arith.divf %464, %465 : vector<104x1xf32>
    %cst_247 = arith.constant 9.99999974E-6 : f32
    %467 = vector.broadcast %cst_247 : f32 to vector<104x1xf32>
    %468 = arith.addf %466, %467 : vector<104x1xf32>
    %469 = math.rsqrt %468 : vector<104x1xf32>
    %470 = vector.broadcast %469 : vector<104x1xf32> to vector<104x128xf32>
    %471 = arith.mulf %461, %470 : vector<104x128xf32>
    %472 = vector.broadcast %453 : vector<1x128xf32> to vector<104x128xf32>
    %473 = arith.mulf %471, %472 : vector<104x128xf32>
    %474 = vector.broadcast %455 : vector<1x128xf32> to vector<104x128xf32>
    %475 = arith.addf %473, %474 : vector<104x128xf32>
    %cst_248 = arith.constant 1.000000e+00 : f32
    %476 = vector.broadcast %cst_248 : f32 to vector<104x128xf32>
    %477 = arith.select %9, %476, %475 : vector<104x128xi1>, vector<104x128xf32>
    %c5_249 = arith.constant 5 : index
    %c0_250 = arith.constant 0 : index
    %c0_251 = arith.constant 0 : index
    %478 = vector.load %arg8[%c5_249, %c0_250, %c0_251] : memref<6x104x104xf32, #tpu.memory_space<vmem>>, vector<1x104x104xf32>
    %479 = vector.shape_cast %478 : vector<1x104x104xf32> to vector<104x104xf32>
    %cst_252 = arith.constant dense<0.000000e+00> : vector<104x128xf32>
    %480 = tpu.matmul %479, %477, %cst_252 {dimension_numbers = #tpu.dot_dimension_numbers<[1], [0], [0], [1], [0, 0, 1, 1], [], []>} : vector<104x104xf32>, vector<104x128xf32>, vector<104x128xf32> -> vector<104x128xf32>
    %481 = arith.mulf %480, %450 : vector<104x128xf32>
    %c5_253 = arith.constant 5 : index
    %c0_254 = arith.constant 0 : index
    %c0_255 = arith.constant 0 : index
    %482 = vector.load %arg9[%c5_253, %c0_254, %c0_255] : memref<6x128x64xf32, #tpu.memory_space<vmem>>, vector<1x128x64xf32>
    %483 = vector.shape_cast %482 : vector<1x128x64xf32> to vector<128x64xf32>
    %cst_256 = arith.constant dense<0.000000e+00> : vector<104x64xf32>
    %484 = tpu.matmul %481, %483, %cst_256 {dimension_numbers = #tpu.dot_dimension_numbers<[1], [0], [0], [1], [0, 0, 1, 1], [], []>} : vector<104x128xf32>, vector<128x64xf32>, vector<104x64xf32> -> vector<104x64xf32>
    %c5_257 = arith.constant 5 : index
    %c0_258 = arith.constant 0 : index
    %c0_259 = arith.constant 0 : index
    %485 = vector.load %arg10[%c5_257, %c0_258, %c0_259] : memref<6x1x64xf32, #tpu.memory_space<vmem>>, vector<1x1x64xf32>
    %486 = vector.shape_cast %485 : vector<1x1x64xf32> to vector<1x64xf32>
    %487 = vector.broadcast %486 : vector<1x64xf32> to vector<104x64xf32>
    %488 = arith.addf %484, %487 : vector<104x64xf32>
    %c5_260 = arith.constant 5 : index
    %c0_261 = arith.constant 0 : index
    %c0_262 = arith.constant 0 : index
    %489 = vector.load %arg11[%c5_260, %c0_261, %c0_262] : memref<6x1x64xf32, #tpu.memory_space<vmem>>, vector<1x1x64xf32>
    %490 = vector.shape_cast %489 : vector<1x1x64xf32> to vector<1x64xf32>
    %c5_263 = arith.constant 5 : index
    %c0_264 = arith.constant 0 : index
    %c0_265 = arith.constant 0 : index
    %491 = vector.load %arg12[%c5_263, %c0_264, %c0_265] : memref<6x1x64xf32, #tpu.memory_space<vmem>>, vector<1x1x64xf32>
    %492 = vector.shape_cast %491 : vector<1x1x64xf32> to vector<1x64xf32>
    %cst_266 = arith.constant dense<0.000000e+00> : vector<104xf32>
    %493 = vector.multi_reduction <add>, %488, %cst_266 [1] : vector<104x64xf32> to vector<104xf32>
    %494 = vector.shape_cast %493 : vector<104xf32> to vector<104x1xf32>
    %cst_267 = arith.constant 6.400000e+01 : f32
    %495 = vector.broadcast %cst_267 : f32 to vector<104x1xf32>
    %496 = arith.divf %494, %495 : vector<104x1xf32>
    %497 = vector.broadcast %496 : vector<104x1xf32> to vector<104x64xf32>
    %498 = arith.subf %488, %497 : vector<104x64xf32>
    %499 = arith.mulf %498, %498 : vector<104x64xf32>
    %cst_268 = arith.constant dense<0.000000e+00> : vector<104xf32>
    %500 = vector.multi_reduction <add>, %499, %cst_268 [1] : vector<104x64xf32> to vector<104xf32>
    %501 = vector.shape_cast %500 : vector<104xf32> to vector<104x1xf32>
    %cst_269 = arith.constant 6.400000e+01 : f32
    %502 = vector.broadcast %cst_269 : f32 to vector<104x1xf32>
    %503 = arith.divf %501, %502 : vector<104x1xf32>
    %cst_270 = arith.constant 9.99999974E-6 : f32
    %504 = vector.broadcast %cst_270 : f32 to vector<104x1xf32>
    %505 = arith.addf %503, %504 : vector<104x1xf32>
    %506 = math.rsqrt %505 : vector<104x1xf32>
    %507 = vector.broadcast %506 : vector<104x1xf32> to vector<104x64xf32>
    %508 = arith.mulf %498, %507 : vector<104x64xf32>
    %509 = vector.broadcast %490 : vector<1x64xf32> to vector<104x64xf32>
    %510 = arith.mulf %508, %509 : vector<104x64xf32>
    %511 = vector.broadcast %492 : vector<1x64xf32> to vector<104x64xf32>
    %512 = arith.addf %510, %511 : vector<104x64xf32>
    %513 = arith.addf %512, %429 : vector<104x64xf32>
    %c0_271 = arith.constant 0 : index
    %c0_272 = arith.constant 0 : index
    %514 = vector.load %arg13[%c0_271, %c0_272] : memref<64x4xf32, #tpu.memory_space<vmem>>, vector<64x4xf32>
    %cst_273 = arith.constant dense<0.000000e+00> : vector<104x4xf32>
    %515 = tpu.matmul %513, %514, %cst_273 {dimension_numbers = #tpu.dot_dimension_numbers<[1], [0], [0], [1], [0, 0, 1, 1], [], []>} : vector<104x64xf32>, vector<64x4xf32>, vector<104x4xf32> -> vector<104x4xf32>
    %c0_274 = arith.constant 0 : index
    %c0_275 = arith.constant 0 : index
    %516 = vector.load %arg14[%c0_274, %c0_275] : memref<1x4xf32, #tpu.memory_space<vmem>>, vector<1x4xf32>
    %517 = vector.broadcast %516 : vector<1x4xf32> to vector<104x4xf32>
    %518 = arith.addf %515, %517 : vector<104x4xf32>
    %cst_276 = arith.constant 5.000000e-01 : f32
    %519 = vector.broadcast %cst_276 : f32 to vector<104x4xf32>
    %520 = arith.mulf %519, %518 : vector<104x4xf32>
    %cst_277 = arith.constant 4.471500e-02 : f32
    %521 = vector.broadcast %cst_277 : f32 to vector<104x4xf32>
    %522 = arith.mulf %521, %518 : vector<104x4xf32>
    %523 = arith.mulf %522, %518 : vector<104x4xf32>
    %524 = arith.mulf %523, %518 : vector<104x4xf32>
    %525 = arith.addf %518, %524 : vector<104x4xf32>
    %cst_278 = arith.constant 0.797884583 : f32
    %526 = vector.broadcast %cst_278 : f32 to vector<104x4xf32>
    %527 = arith.mulf %526, %525 : vector<104x4xf32>
    %528 = math.tanh %527 : vector<104x4xf32>
    %cst_279 = arith.constant 1.000000e+00 : f32
    %529 = vector.broadcast %cst_279 : f32 to vector<104x4xf32>
    %530 = arith.addf %529, %528 : vector<104x4xf32>
    %531 = arith.mulf %520, %530 : vector<104x4xf32>
    %c0_280 = arith.constant 0 : index
    %c0_281 = arith.constant 0 : index
    %c0_282 = arith.constant 0 : index
    %532 = vector.load %arg15[%c0_280, %c0_281, %c0_282] : memref<1x104x4xf32, #tpu.memory_space<vmem>>, vector<1x104x4xf32>
    %533 = vector.shape_cast %532 : vector<1x104x4xf32> to vector<104x4xf32>
    %534 = vector.shape_cast %531 : vector<104x4xf32> to vector<1x104x4xf32>
    tpu.vector_store %arg15[%c0_280, %c0_281, %c0_282], %534 {strides = array<i32>} : memref<1x104x4xf32, #tpu.memory_space<vmem>>, vector<1x104x4xf32>,
    return
  }
  func.func @transform_0(%arg0: i32) -> (i32, i32, i32) {
    %c0_i32 = arith.constant 0 : i32
    %c0_i32_0 = arith.constant 0 : i32
    %c0_i32_1 = arith.constant 0 : i32
    return %arg0, %c0_i32, %c0_i32_0 : i32, i32, i32
  }
  func.func @transform_1(%arg0: i32) -> (i32, i32) {
    %c0_i32 = arith.constant 0 : i32
    %c0_i32_0 = arith.constant 0 : i32
    %c0_i32_1 = arith.constant 0 : i32
    return %c0_i32, %c0_i32_0 : i32, i32
  }
  func.func @transform_2(%arg0: i32) -> (i32, i32) {
    %c0_i32 = arith.constant 0 : i32
    %c0_i32_0 = arith.constant 0 : i32
    %c0_i32_1 = arith.constant 0 : i32
    return %c0_i32, %c0_i32_0 : i32, i32
  }
  func.func @transform_3(%arg0: i32) -> (i32, i32, i32) {
    %c0_i32 = arith.constant 0 : i32
    %c0_i32_0 = arith.constant 0 : i32
    %c0_i32_1 = arith.constant 0 : i32
    %c0_i32_2 = arith.constant 0 : i32
    return %c0_i32, %c0_i32_0, %c0_i32_1 : i32, i32, i32
  }
  func.func @transform_4(%arg0: i32) -> (i32, i32, i32) {
    %c0_i32 = arith.constant 0 : i32
    %c0_i32_0 = arith.constant 0 : i32
    %c0_i32_1 = arith.constant 0 : i32
    %c0_i32_2 = arith.constant 0 : i32
    return %c0_i32, %c0_i32_0, %c0_i32_1 : i32, i32, i32
  }
  func.func @transform_5(%arg0: i32) -> (i32, i32, i32) {
    %c0_i32 = arith.constant 0 : i32
    %c0_i32_0 = arith.constant 0 : i32
    %c0_i32_1 = arith.constant 0 : i32
    %c0_i32_2 = arith.constant 0 : i32
    return %c0_i32, %c0_i32_0, %c0_i32_1 : i32, i32, i32
  }
  func.func @transform_6(%arg0: i32) -> (i32, i32, i32) {
    %c0_i32 = arith.constant 0 : i32
    %c0_i32_0 = arith.constant 0 : i32
    %c0_i32_1 = arith.constant 0 : i32
    %c0_i32_2 = arith.constant 0 : i32
    return %c0_i32, %c0_i32_0, %c0_i32_1 : i32, i32, i32
  }
  func.func @transform_7(%arg0: i32) -> (i32, i32, i32) {
    %c0_i32 = arith.constant 0 : i32
    %c0_i32_0 = arith.constant 0 : i32
    %c0_i32_1 = arith.constant 0 : i32
    %c0_i32_2 = arith.constant 0 : i32
    return %c0_i32, %c0_i32_0, %c0_i32_1 : i32, i32, i32
  }
  func.func @transform_8(%arg0: i32) -> (i32, i32, i32) {
    %c0_i32 = arith.constant 0 : i32
    %c0_i32_0 = arith.constant 0 : i32
    %c0_i32_1 = arith.constant 0 : i32
    %c0_i32_2 = arith.constant 0 : i32
    return %c0_i32, %c0_i32_0, %c0_i32_1 : i32, i32, i32
  }
  func.func @transform_9(%arg0: i32) -> (i32, i32, i32) {
    %c0_i32 = arith.constant 0 : i32
    %c0_i32_0 = arith.constant 0 : i32
    %c0_i32_1 = arith.constant 0 : i32
    %c0_i32_2 = arith.constant 0 : i32
    return %c0_i32, %c0_i32_0, %c0_i32_1 : i32, i32, i32
  }
  func.func @transform_10(%arg0: i32) -> (i32, i32, i32) {
    %c0_i32 = arith.constant 0 : i32
    %c0_i32_0 = arith.constant 0 : i32
    %c0_i32_1 = arith.constant 0 : i32
    %c0_i32_2 = arith.constant 0 : i32
    return %c0_i32, %c0_i32_0, %c0_i32_1 : i32, i32, i32
  }
  func.func @transform_11(%arg0: i32) -> (i32, i32, i32) {
    %c0_i32 = arith.constant 0 : i32
    %c0_i32_0 = arith.constant 0 : i32
    %c0_i32_1 = arith.constant 0 : i32
    %c0_i32_2 = arith.constant 0 : i32
    return %c0_i32, %c0_i32_0, %c0_i32_1 : i32, i32, i32
  }
  func.func @transform_12(%arg0: i32) -> (i32, i32) {
    %c0_i32 = arith.constant 0 : i32
    %c0_i32_0 = arith.constant 0 : i32
    %c0_i32_1 = arith.constant 0 : i32
    return %c0_i32, %c0_i32_0 : i32, i32
  }
  func.func @transform_13(%arg0: i32) -> (i32, i32) {
    %c0_i32 = arith.constant 0 : i32
    %c0_i32_0 = arith.constant 0 : i32
    %c0_i32_1 = arith.constant 0 : i32
    return %c0_i32, %c0_i32_0 : i32, i32
  }
  func.func @transform_14(%arg0: i32) -> (i32, i32, i32) {
    %c0_i32 = arith.constant 0 : i32
    %c0_i32_0 = arith.constant 0 : i32
    %c0_i32_1 = arith.constant 0 : i32
    return %arg0, %c0_i32, %c0_i32_0 : i32, i32, i32
  }
}

</mosaic_0001>

<llo_original>
// kernel: gmlp_encoder_forward.1
$region0: #{gmlp_encoder_forward.1}
  #allocation0 [shape = 'u32[]', space=smem, size = 0x4, offset = 0x4, fixed_abs, tag = 'smem constant byte address 0x4 - core index']
  #allocation1 [shape = 'u32[72,128]{1,0:T(1,128)}', space=vmem, size = 0x9000, scoped, tag = 'internal scratch']
  %s0 = inlined_call_operand.vmem [shape: f32[2,104,40], index: 0, kind: input, shape index: {}]
  %s1 = inlined_call_operand.vmem [shape: f32[40,64], index: 1, kind: input, shape index: {}]
  %s2 = inlined_call_operand.vmem [shape: f32[1,64], index: 2, kind: input, shape index: {}]
  %s3 = inlined_call_operand.vmem [shape: f32[6,64,256], index: 3, kind: input, shape index: {}]
  %s4 = inlined_call_operand.vmem [shape: f32[6,1,256], index: 4, kind: input, shape index: {}]
  %s5 = inlined_call_operand.vmem [shape: f32[6,1,128], index: 5, kind: input, shape index: {}]
  %s6 = inlined_call_operand.vmem [shape: f32[6,1,128], index: 6, kind: input, shape index: {}]
  %s7 = inlined_call_operand.vmem [shape: f32[6,104,104], index: 7, kind: input, shape index: {}]
  %s8 = inlined_call_operand.vmem [shape: f32[6,128,64], index: 8, kind: input, shape index: {}]
  %s9 = inlined_call_operand.vmem [shape: f32[6,1,64], index: 9, kind: input, shape index: {}]
  %s10 = inlined_call_operand.vmem [shape: f32[6,1,64], index: 10, kind: input, shape index: {}]
  %s11 = inlined_call_operand.vmem [shape: f32[6,1,64], index: 11, kind: input, shape index: {}]
  %s12 = inlined_call_operand.vmem [shape: f32[64,4], index: 12, kind: input, shape index: {}]
  %s13 = inlined_call_operand.vmem [shape: f32[1,4], index: 13, kind: input, shape index: {}]
  %s14 = inlined_call_operand.vmem [shape: f32[2,104,4], index: 14, kind: output, shape index: {}]
  %s15 = sld [smem:[#allocation0]]
  $region89: #{gmlp_encoder_forward.1} parent=0
    _
  %s17 = ssub.s32 1, %s15
  %s18 = scalar_select 0, %s17, %s15
  loop: start=0, step=1, limit=4
  $region2: #{gmlp_encoder_forward.1} parent=0 // loop_pre_header
    _
  $region3: #{gmlp_encoder_forward.1} parent=0 // loop_header
    %s20 = sphi 0, %s24
    %p21 = scmp.ge.s32.totalorder %s20, 4
    %s30 = sphi 0, %s32
    %s33 = sphi 0, %s30
    %s34 = sphi 0, %s33
    %s50 = sphi 0, %s34
    %s54 = sphi 0, %s54
    %s56 = sphi 0, %s54
    %s57 = sphi 0, %s56
    %s71 = sphi 0, %s57
    %s75 = sphi 0, %s75
    %s77 = sphi 0, %s75
    %s78 = sphi 0, %s77
    %s92 = sphi 0, %s78
    %s96 = sphi 0, %s96
    %s98 = sphi 0, %s96
    %s99 = sphi 0, %s98
    %s113 = sphi 0, %s99
    %s117 = sphi 0, %s117
    %s119 = sphi 0, %s117
    %s120 = sphi 0, %s119
    %s134 = sphi 0, %s120
    %s138 = sphi 0, %s138
    %s140 = sphi 0, %s138
    %s141 = sphi 0, %s140
    %s155 = sphi 0, %s141
    %s159 = sphi 0, %s159
    %s161 = sphi 0, %s159
    %s162 = sphi 0, %s161
    %s176 = sphi 0, %s162
    %s180 = sphi 0, %s180
    %s182 = sphi 0, %s180
    %s183 = sphi 0, %s182
    %s197 = sphi 0, %s183
    %s201 = sphi 0, %s201
    %s203 = sphi 0, %s201
    %s204 = sphi 0, %s203
    %s218 = sphi 0, %s204
    %s222 = sphi 0, %s222
    %s224 = sphi 0, %s222
    %s225 = sphi 0, %s224
    %s239 = sphi 0, %s225
    %s243 = sphi 0, %s243
    %s245 = sphi 0, %s243
    %s246 = sphi 0, %s245
    %s260 = sphi 0, %s246
    %s264 = sphi 0, %s264
    %s266 = sphi 0, %s264
    %s267 = sphi 0, %s266
    %s281 = sphi 0, %s267
    %s285 = sphi 0, %s285
    %s287 = sphi 0, %s285
    %s288 = sphi 0, %s287
    %s302 = sphi 0, %s288
    %s306 = sphi 0, %s306
    %s308 = sphi 0, %s306
    %s309 = sphi 0, %s308
    %s323 = sphi 0, %s309
    %s329 = sphi 0, %s331
    %s332 = sphi 0, %s329
    %s333 = sphi 0, %s332
    %s349 = sphi 0, %s333
  $region4: #{gmlp_encoder_forward.1} parent=0 // loop_header_branch
    %23 = sbr.rel (%p21) target = $region8
  $region5: #{gmlp_encoder_forward.1} parent=0 // loop_body
    %s25 = ssub.s32 %s20, 1
    %s26 = ssub.s32 %s20, 2
    %s27 = sadd.s32 %s20, 1
    %s28 = ssub.s32 %s20, %s27
    %p29 = scmp.eq.s32.totalorder %s28, 0
    %s31 = sadd.s32 %s30, 1
    %s32 = scalar_select %p29, %s30, %s31
    %p35 = pneg %p29
    %p36 = scmp.eq.s32.totalorder %s20, 1
    %p37 = por %p35, %p36
    %p38 = scmp.ne.s32.totalorder %s30, %s33
    %p39 = scmp.eq.s32.totalorder %s20, 0
    %p40 = por %p38, %p39
    %p41 = scmp.ne.s32.totalorder %s30, %s33
    %p42 = scmp.eq.s32.totalorder %s25, 1
    %p43 = por %p41, %p42
    %p44 = scmp.ne.s32.totalorder %s33, %s34
    %p45 = scmp.eq.s32.totalorder %s25, 0
    %p46 = por %p44, %p45
    %p47 = scmp.ne.s32.totalorder %s33, %s34
    %p48 = scmp.eq.s32.totalorder %s26, 1
    %p49 = por %p47, %p48
    %p51 = scmp.ne.s32.totalorder %s34, %s50
    %p52 = scmp.eq.s32.totalorder %s26, 0
    %p53 = por %p51, %p52
    %s55 = sadd.s32 %s54, 1
    %p58 = scmp.eq.s32.totalorder %s20, 1
    %p59 = scmp.ne.s32.totalorder %s54, %s56
    %p60 = scmp.eq.s32.totalorder %s20, 0
    %p61 = por %p59, %p60
    %p62 = scmp.ne.s32.totalorder %s54, %s56
    %p63 = scmp.eq.s32.totalorder %s25, 1
    %p64 = por %p62, %p63
    %p65 = scmp.ne.s32.totalorder %s56, %s57
    %p66 = scmp.eq.s32.totalorder %s25, 0
    %p67 = por %p65, %p66
    %p68 = scmp.ne.s32.totalorder %s56, %s57
    %p69 = scmp.eq.s32.totalorder %s26, 1
    %p70 = por %p68, %p69
    %p72 = scmp.ne.s32.totalorder %s57, %s71
    %p73 = scmp.eq.s32.totalorder %s26, 0
    %p74 = por %p72, %p73
    %s76 = sadd.s32 %s75, 1
    %p79 = scmp.eq.s32.totalorder %s20, 1
    %p80 = scmp.ne.s32.totalorder %s75, %s77
    %p81 = scmp.eq.s32.totalorder %s20, 0
    %p82 = por %p80, %p81
    %p83 = scmp.ne.s32.totalorder %s75, %s77
    %p84 = scmp.eq.s32.totalorder %s25, 1
    %p85 = por %p83, %p84
    %p86 = scmp.ne.s32.totalorder %s77, %s78
    %p87 = scmp.eq.s32.totalorder %s25, 0
    %p88 = por %p86, %p87
    %p89 = scmp.ne.s32.totalorder %s77, %s78
    %p90 = scmp.eq.s32.totalorder %s26, 1
    %p91 = por %p89, %p90
    %p93 = scmp.ne.s32.totalorder %s78, %s92
    %p94 = scmp.eq.s32.totalorder %s26, 0
    %p95 = por %p93, %p94
    %s97 = sadd.s32 %s96, 1
    %p100 = scmp.eq.s32.totalorder %s20, 1
    %p101 = scmp.ne.s32.totalorder %s96, %s98
    %p102 = scmp.eq.s32.totalorder %s20, 0
    %p103 = por %p101, %p102
    %p104 = scmp.ne.s32.totalorder %s96, %s98
    %p105 = scmp.eq.s32.totalorder %s25, 1
    %p106 = por %p104, %p105
    %p107 = scmp.ne.s32.totalorder %s98, %s99
    %p108 = scmp.eq.s32.totalorder %s25, 0
    %p109 = por %p107, %p108
    %p110 = scmp.ne.s32.totalorder %s98, %s99
    %p111 = scmp.eq.s32.totalorder %s26, 1
    %p112 = por %p110, %p111
    %p114 = scmp.ne.s32.totalorder %s99, %s113
    %p115 = scmp.eq.s32.totalorder %s26, 0
    %p116 = por %p114, %p115
    %s118 = sadd.s32 %s117, 1
    %p121 = scmp.eq.s32.totalorder %s20, 1
    %p122 = scmp.ne.s32.totalorder %s117, %s119
    %p123 = scmp.eq.s32.totalorder %s20, 0
    %p124 = por %p122, %p123
    %p125 = scmp.ne.s32.totalorder %s117, %s119
    %p126 = scmp.eq.s32.totalorder %s25, 1
    %p127 = por %p125, %p126
    %p128 = scmp.ne.s32.totalorder %s119, %s120
    %p129 = scmp.eq.s32.totalorder %s25, 0
    %p130 = por %p128, %p129
    %p131 = scmp.ne.s32.totalorder %s119, %s120
    %p132 = scmp.eq.s32.totalorder %s26, 1
    %p133 = por %p131, %p132
    %p135 = scmp.ne.s32.totalorder %s120, %s134
    %p136 = scmp.eq.s32.totalorder %s26, 0
    %p137 = por %p135, %p136
    %s139 = sadd.s32 %s138, 1
    %p142 = scmp.eq.s32.totalorder %s20, 1
    %p143 = scmp.ne.s32.totalorder %s138, %s140
    %p144 = scmp.eq.s32.totalorder %s20, 0
    %p145 = por %p143, %p144
    %p146 = scmp.ne.s32.totalorder %s138, %s140
    %p147 = scmp.eq.s32.totalorder %s25, 1
    %p148 = por %p146, %p147
    %p149 = scmp.ne.s32.totalorder %s140, %s141
    %p150 = scmp.eq.s32.totalorder %s25, 0
    %p151 = por %p149, %p150
    %p152 = scmp.ne.s32.totalorder %s140, %s141
    %p153 = scmp.eq.s32.totalorder %s26, 1
    %p154 = por %p152, %p153
    %p156 = scmp.ne.s32.totalorder %s141, %s155
    %p157 = scmp.eq.s32.totalorder %s26, 0
    %p158 = por %p156, %p157
    %s160 = sadd.s32 %s159, 1
    %p163 = scmp.eq.s32.totalorder %s20, 1
    %p164 = scmp.ne.s32.totalorder %s159, %s161
    %p165 = scmp.eq.s32.totalorder %s20, 0
    %p166 = por %p164, %p165
    %p167 = scmp.ne.s32.totalorder %s159, %s161
    %p168 = scmp.eq.s32.totalorder %s25, 1
    %p169 = por %p167, %p168
    %p170 = scmp.ne.s32.totalorder %s161, %s162
    %p171 = scmp.eq.s32.totalorder %s25, 0
    %p172 = por %p170, %p171
    %p173 = scmp.ne.s32.totalorder %s161, %s162
    %p174 = scmp.eq.s32.totalorder %s26, 1
    %p175 = por %p173, %p174
    %p177 = scmp.ne.s32.totalorder %s162, %s176
    %p178 = scmp.eq.s32.totalorder %s26, 0
    %p179 = por %p177, %p178
    %s181 = sadd.s32 %s180, 1
    %p184 = scmp.eq.s32.totalorder %s20, 1
    %p185 = scmp.ne.s32.totalorder %s180, %s182
    %p186 = scmp.eq.s32.totalorder %s20, 0
    %p187 = por %p185, %p186
    %p188 = scmp.ne.s32.totalorder %s180, %s182
    %p189 = scmp.eq.s32.totalorder %s25, 1
    %p190 = por %p188, %p189
    %p191 = scmp.ne.s32.totalorder %s182, %s183
    %p192 = scmp.eq.s32.totalorder %s25, 0
    %p193 = por %p191, %p192
    %p194 = scmp.ne.s32.totalorder %s182, %s183
    %p195 = scmp.eq.s32.totalorder %s26, 1
    %p196 = por %p194, %p195
    %p198 = scmp.ne.s32.totalorder %s183, %s197
    %p199 = scmp.eq.s32.totalorder %s26, 0
    %p200 = por %p198, %p199
    %s202 = sadd.s32 %s201, 1
    %p205 = scmp.eq.s32.totalorder %s20, 1
    %p206 = scmp.ne.s32.totalorder %s201, %s203
    %p207 = scmp.eq.s32.totalorder %s20, 0
    %p208 = por %p206, %p207
    %p209 = scmp.ne.s32.totalorder %s201, %s203
    %p210 = scmp.eq.s32.totalorder %s25, 1
    %p211 = por %p209, %p210
    %p212 = scmp.ne.s32.totalorder %s203, %s204
    %p213 = scmp.eq.s32.totalorder %s25, 0
    %p214 = por %p212, %p213
    %p215 = scmp.ne.s32.totalorder %s203, %s204
    %p216 = scmp.eq.s32.totalorder %s26, 1
    %p217 = por %p215, %p216
    %p219 = scmp.ne.s32.totalorder %s204, %s218
    %p220 = scmp.eq.s32.totalorder %s26, 0
    %p221 = por %p219, %p220
    %s223 = sadd.s32 %s222, 1
    %p226 = scmp.eq.s32.totalorder %s20, 1
    %p227 = scmp.ne.s32.totalorder %s222, %s224
    %p228 = scmp.eq.s32.totalorder %s20, 0
    %p229 = por %p227, %p228
    %p230 = scmp.ne.s32.totalorder %s222, %s224
    %p231 = scmp.eq.s32.totalorder %s25, 1
    %p232 = por %p230, %p231
    %p233 = scmp.ne.s32.totalorder %s224, %s225
    %p234 = scmp.eq.s32.totalorder %s25, 0
    %p235 = por %p233, %p234
    %p236 = scmp.ne.s32.totalorder %s224, %s225
    %p237 = scmp.eq.s32.totalorder %s26, 1
    %p238 = por %p236, %p237
    %p240 = scmp.ne.s32.totalorder %s225, %s239
    %p241 = scmp.eq.s32.totalorder %s26, 0
    %p242 = por %p240, %p241
    %s244 = sadd.s32 %s243, 1
    %p247 = scmp.eq.s32.totalorder %s20, 1
    %p248 = scmp.ne.s32.totalorder %s243, %s245
    %p249 = scmp.eq.s32.totalorder %s20, 0
    %p250 = por %p248, %p249
    %p251 = scmp.ne.s32.totalorder %s243, %s245
    %p252 = scmp.eq.s32.totalorder %s25, 1
    %p253 = por %p251, %p252
    %p254 = scmp.ne.s32.totalorder %s245, %s246
    %p255 = scmp.eq.s32.totalorder %s25, 0
    %p256 = por %p254, %p255
    %p257 = scmp.ne.s32.totalorder %s245, %s246
    %p258 = scmp.eq.s32.totalorder %s26, 1
    %p259 = por %p257, %p258
    %p261 = scmp.ne.s32.totalorder %s246, %s260
    %p262 = scmp.eq.s32.totalorder %s26, 0
    %p263 = por %p261, %p262
    %s265 = sadd.s32 %s264, 1
    %p268 = scmp.eq.s32.totalorder %s20, 1
    %p269 = scmp.ne.s32.totalorder %s264, %s266
    %p270 = scmp.eq.s32.totalorder %s20, 0
    %p271 = por %p269, %p270
    %p272 = scmp.ne.s32.totalorder %s264, %s266
    %p273 = scmp.eq.s32.totalorder %s25, 1
    %p274 = por %p272, %p273
    %p275 = scmp.ne.s32.totalorder %s266, %s267
    %p276 = scmp.eq.s32.totalorder %s25, 0
    %p277 = por %p275, %p276
    %p278 = scmp.ne.s32.totalorder %s266, %s267
    %p279 = scmp.eq.s32.totalorder %s26, 1
    %p280 = por %p278, %p279
    %p282 = scmp.ne.s32.totalorder %s267, %s281
    %p283 = scmp.eq.s32.totalorder %s26, 0
    %p284 = por %p282, %p283
    %s286 = sadd.s32 %s285, 1
    %p289 = scmp.eq.s32.totalorder %s20, 1
    %p290 = scmp.ne.s32.totalorder %s285, %s287
    %p291 = scmp.eq.s32.totalorder %s20, 0
    %p292 = por %p290, %p291
    %p293 = scmp.ne.s32.totalorder %s285, %s287
    %p294 = scmp.eq.s32.totalorder %s25, 1
    %p295 = por %p293, %p294
    %p296 = scmp.ne.s32.totalorder %s287, %s288
    %p297 = scmp.eq.s32.totalorder %s25, 0
    %p298 = por %p296, %p297
    %p299 = scmp.ne.s32.totalorder %s287, %s288
    %p300 = scmp.eq.s32.totalorder %s26, 1
    %p301 = por %p299, %p300
    %p303 = scmp.ne.s32.totalorder %s288, %s302
    %p304 = scmp.eq.s32.totalorder %s26, 0
    %p305 = por %p303, %p304
    %s307 = sadd.s32 %s306, 1
    %p310 = scmp.eq.s32.totalorder %s20, 1
    %p311 = scmp.ne.s32.totalorder %s306, %s308
    %p312 = scmp.eq.s32.totalorder %s20, 0
    %p313 = por %p311, %p312
    %p314 = scmp.ne.s32.totalorder %s306, %s308
    %p315 = scmp.eq.s32.totalorder %s25, 1
    %p316 = por %p314, %p315
    %p317 = scmp.ne.s32.totalorder %s308, %s309
    %p318 = scmp.eq.s32.totalorder %s25, 0
    %p319 = por %p317, %p318
    %p320 = scmp.ne.s32.totalorder %s308, %s309
    %p321 = scmp.eq.s32.totalorder %s26, 1
    %p322 = por %p320, %p321
    %p324 = scmp.ne.s32.totalorder %s309, %s323
    %p325 = scmp.eq.s32.totalorder %s26, 0
    %p326 = por %p324, %p325
    %s327 = ssub.s32 %s20, %s27
    %p328 = scmp.eq.s32.totalorder %s327, 0
    %s330 = sadd.s32 %s329, 1
    %s331 = scalar_select %p328, %s329, %s330
    %p334 = pneg %p328
    %p335 = scmp.eq.s32.totalorder %s20, 1
    %p336 = por %p334, %p335
    %p337 = scmp.ne.s32.totalorder %s329, %s332
    %p338 = scmp.eq.s32.totalorder %s20, 0
    %p339 = por %p337, %p338
    %p340 = scmp.ne.s32.totalorder %s329, %s332
    %p341 = scmp.eq.s32.totalorder %s25, 1
    %p342 = por %p340, %p341
    %p343 = scmp.ne.s32.totalorder %s332, %s333
    %p344 = scmp.eq.s32.totalorder %s25, 0
    %p345 = por %p343, %p344
    %p346 = scmp.ne.s32.totalorder %s332, %s333
    %p347 = scmp.eq.s32.totalorder %s26, 1
    %p348 = por %p346, %p347
    %p350 = scmp.ne.s32.totalorder %s333, %s349
    %p351 = scmp.eq.s32.totalorder %s26, 0
    %p352 = por %p350, %p351
    %p353 = scmp.le.s32.totalorder 1, %s20
    %p354 = scmp.lt.s32.totalorder %s20, 3
    %p355 = pnand %p353, %p354
    %p356 = pneg %p355
    // Predicated region
    $region9: #{gmlp_encoder_forward.1} parent=5 // pred_check
      _
    $region10: #{gmlp_encoder_forward.1} parent=5 // pred_check_branch
      %358 = sbr.rel (%p355) target = $region12
    $region11: #{gmlp_encoder_forward.1} parent=5 // pred_region
      %s359 = ssub.s32 %s20, 1
      // Predicated region
      $region13: #{gmlp_encoder_forward.1} parent=11 // pred_check
        %p360 = pneg %p67
      $region14: #{gmlp_encoder_forward.1} parent=11 // pred_check_branch
        %362 = sbr.rel (%p360) target = $region16
      $region15: #{gmlp_encoder_forward.1} parent=11 // pred_region
        _
      $region16: #{gmlp_encoder_forward.1} parent=11 // pred_fallthru
        _
      // Predicated region
      $region17: #{gmlp_encoder_forward.1} parent=11 // pred_check
        %p363 = pneg %p88
      $region18: #{gmlp_encoder_forward.1} parent=11 // pred_check_branch
        %365 = sbr.rel (%p363) target = $region20
      $region19: #{gmlp_encoder_forward.1} parent=11 // pred_region
        _
      $region20: #{gmlp_encoder_forward.1} parent=11 // pred_fallthru
        _
      // Predicated region
      $region21: #{gmlp_encoder_forward.1} parent=11 // pred_check
        %p366 = pneg %p109
      $region22: #{gmlp_encoder_forward.1} parent=11 // pred_check_branch
        %368 = sbr.rel (%p366) target = $region24
      $region23: #{gmlp_encoder_forward.1} parent=11 // pred_region
        _
      $region24: #{gmlp_encoder_forward.1} parent=11 // pred_fallthru
        _
      // Predicated region
      $region25: #{gmlp_encoder_forward.1} parent=11 // pred_check
        %p369 = pneg %p130
      $region26: #{gmlp_encoder_forward.1} parent=11 // pred_check_branch
        %371 = sbr.rel (%p369) target = $region28
      $region27: #{gmlp_encoder_forward.1} parent=11 // pred_region
        _
      $region28: #{gmlp_encoder_forward.1} parent=11 // pred_fallthru
        _
      // Predicated region
      $region29: #{gmlp_encoder_forward.1} parent=11 // pred_check
        %p372 = pneg %p151
      $region30: #{gmlp_encoder_forward.1} parent=11 // pred_check_branch
        %374 = sbr.rel (%p372) target = $region32
      $region31: #{gmlp_encoder_forward.1} parent=11 // pred_region
        _
      $region32: #{gmlp_encoder_forward.1} parent=11 // pred_fallthru
        _
      // Predicated region
      $region33: #{gmlp_encoder_forward.1} parent=11 // pred_check
        %p375 = pneg %p172
      $region34: #{gmlp_encoder_forward.1} parent=11 // pred_check_branch
        %377 = sbr.rel (%p375) target = $region36
      $region35: #{gmlp_encoder_forward.1} parent=11 // pred_region
        _
      $region36: #{gmlp_encoder_forward.1} parent=11 // pred_fallthru
        _
      // Predicated region
      $region37: #{gmlp_encoder_forward.1} parent=11 // pred_check
        %p378 = pneg %p193
      $region38: #{gmlp_encoder_forward.1} parent=11 // pred_check_branch
        %380 = sbr.rel (%p378) target = $region40
      $region39: #{gmlp_encoder_forward.1} parent=11 // pred_region
        _
      $region40: #{gmlp_encoder_forward.1} parent=11 // pred_fallthru
        _
      // Predicated region
      $region41: #{gmlp_encoder_forward.1} parent=11 // pred_check
        %p381 = pneg %p214
      $region42: #{gmlp_encoder_forward.1} parent=11 // pred_check_branch
        %383 = sbr.rel (%p381) target = $region44
      $region43: #{gmlp_encoder_forward.1} parent=11 // pred_region
        _
      $region44: #{gmlp_encoder_forward.1} parent=11 // pred_fallthru
        _
      // Predicated region
      $region45: #{gmlp_encoder_forward.1} parent=11 // pred_check
        %p384 = pneg %p235
      $region46: #{gmlp_encoder_forward.1} parent=11 // pred_check_branch
        %386 = sbr.rel (%p384) target = $region48
      $region47: #{gmlp_encoder_forward.1} parent=11 // pred_region
        _
      $region48: #{gmlp_encoder_forward.1} parent=11 // pred_fallthru
        _
      // Predicated region
      $region49: #{gmlp_encoder_forward.1} parent=11 // pred_check
        %p387 = pneg %p256
      $region50: #{gmlp_encoder_forward.1} parent=11 // pred_check_branch
        %389 = sbr.rel (%p387) target = $region52
      $region51: #{gmlp_encoder_forward.1} parent=11 // pred_region
        _
      $region52: #{gmlp_encoder_forward.1} parent=11 // pred_fallthru
        _
      // Predicated region
      $region53: #{gmlp_encoder_forward.1} parent=11 // pred_check
        %p390 = pneg %p277
      $region54: #{gmlp_encoder_forward.1} parent=11 // pred_check_branch
        %392 = sbr.rel (%p390) target = $region56
      $region55: #{gmlp_encoder_forward.1} parent=11 // pred_region
        _
      $region56: #{gmlp_encoder_forward.1} parent=11 // pred_fallthru
        _
      // Predicated region
      $region57: #{gmlp_encoder_forward.1} parent=11 // pred_check
        %p393 = pneg %p298
      $region58: #{gmlp_encoder_forward.1} parent=11 // pred_check_branch
        %395 = sbr.rel (%p393) target = $region60
      $region59: #{gmlp_encoder_forward.1} parent=11 // pred_region
        _
      $region60: #{gmlp_encoder_forward.1} parent=11 // pred_fallthru
        _
      // Predicated region
      $region61: #{gmlp_encoder_forward.1} parent=11 // pred_check
        %p396 = pneg %p319
      $region62: #{gmlp_encoder_forward.1} parent=11 // pred_check_branch
        %398 = sbr.rel (%p396) target = $region64
      $region63: #{gmlp_encoder_forward.1} parent=11 // pred_region
        _
      $region64: #{gmlp_encoder_forward.1} parent=11 // pred_fallthru
        _
    $region12: #{gmlp_encoder_forward.1} parent=5 // pred_fallthru
      _
    %p399 = scmp.lt.s32.totalorder %s20, 2
    // Predicated region
    $region65: #{gmlp_encoder_forward.1} parent=5 // pred_check
      %p400 = pneg %p399
    $region66: #{gmlp_encoder_forward.1} parent=5 // pred_check_branch
      %402 = sbr.rel (%p400) target = $region68
    $region67: #{gmlp_encoder_forward.1} parent=5 // pred_region
      // Predicated region
      $region69: #{gmlp_encoder_forward.1} parent=67 // pred_check
        %p403 = pneg %p40
      $region70: #{gmlp_encoder_forward.1} parent=67 // pred_check_branch
        %405 = sbr.rel (%p403) target = $region72
      $region71: #{gmlp_encoder_forward.1} parent=67 // pred_region
        %p406 = scmp.lt.s32.totalorder %s20, 1
        %s407 = scalar_select %p406, %s20, 1
        %s408 = smul.addr %s407, 13
        %s409 = smul.addr %s408, 8
        %s410 = scalar_lea.vmem %s0, %s409
      $region72: #{gmlp_encoder_forward.1} parent=67 // pred_fallthru
        _
    $region68: #{gmlp_encoder_forward.1} parent=5 // pred_fallthru
      _
    %p411 = scmp.le.s32.totalorder 1, %s20
    %p412 = scmp.lt.s32.totalorder %s20, 3
    %p413 = pnand %p411, %p412
    %p414 = pneg %p413
    // Predicated region
    $region73: #{gmlp_encoder_forward.1} parent=5 // pred_check
      _
    $region74: #{gmlp_encoder_forward.1} parent=5 // pred_check_branch
      %416 = sbr.rel (%p413) target = $region76
    $region75: #{gmlp_encoder_forward.1} parent=5 // pred_region
      %s417 = ssub.s32 %s20, 1
      %p418 = scmp.lt.s32.totalorder %s25, 1
      %s419 = scalar_select %p418, %s25, 1
      %s420 = smul.addr %s419, 13
      %s421 = smul.addr %s420, 8
      %s422 = scalar_lea.vmem %s0, %s421
      %p423 = pneg %p46
      %p424 = pneg %p43
      %p425 = pneg %p67
      %p426 = pneg %p64
      %p427 = pneg %p88
      %p428 = pneg %p85
      %p429 = pneg %p109
      %p430 = pneg %p106
      %p431 = pneg %p130
      %p432 = pneg %p127
      %p433 = pneg %p151
      %p434 = pneg %p148
      %p435 = pneg %p172
      %p436 = pneg %p169
      %p437 = pneg %p193
      %p438 = pneg %p190
      %p439 = pneg %p214
      %p440 = pneg %p211
      %p441 = pneg %p235
      %p442 = pneg %p232
      %p443 = pneg %p256
      %p444 = pneg %p253
      %p445 = pneg %p277
      %p446 = pneg %p274
      %p447 = pneg %p298
      %p448 = pneg %p295
      %p449 = pneg %p319
      %p450 = pneg %p316
      %p451 = pneg %p345
      %p452 = pneg %p342
      %p453 = scmp.lt.s32.totalorder %s25, 1
      %s454 = scalar_select %p453, %s25, 1
      %s455 = smul.addr %s454, 13
      %s456 = smul.addr %s455, 8
      %s457 = scalar_lea.vmem %s14, %s456
      %p458 = scmp.lt.s32.totalorder %s25, 1
      %s459 = scalar_select %p458, %s25, 1
      %s460 = smul.addr %s459, 13
      %s461 = smul.addr %s460, 8
      %s462 = scalar_lea.vmem %s0, %s461
      %p463 = scmp.lt.s32.totalorder %s25, 1
      %s464 = scalar_select %p463, %s25, 1
      %s465 = smul.addr %s464, 13
      %s466 = smul.addr %s465, 8
      %s467 = scalar_lea.vmem %s14, %s466
      %v468 = vld [vmem:[%s462] sm:$0xff]
      %v469 = vld [vmem:[%s462 + $0x8] sm:$0xff]
      %v470 = vld [vmem:[%s462 + $0x10] sm:$0xff]
      %v471 = vld [vmem:[%s462 + $0x18] sm:$0xff]
      %v472 = vld [vmem:[%s462 + $0x20] sm:$0xff]
      %v473 = vld [vmem:[%s462 + $0x28] sm:$0xff]
      %v474 = vld [vmem:[%s462 + $0x30] sm:$0xff]
      %v475 = vld [vmem:[%s462 + $0x38] sm:$0xff]
      %v476 = vld [vmem:[%s462 + $0x40] sm:$0xff]
      %v477 = vld [vmem:[%s462 + $0x48] sm:$0xff]
      %v478 = vld [vmem:[%s462 + $0x50] sm:$0xff]
      %v479 = vld [vmem:[%s462 + $0x58] sm:$0xff]
      %v480 = vld [vmem:[%s462 + $0x60] sm:$0xff]
      %v481 = vld [vmem:[%s1] sm:$0xff]
      %v482 = vld [vmem:[%s1 + $0x8] sm:$0xff]
      %v483 = vld [vmem:[%s1 + $0x10] sm:$0xff]
      %v484 = vld [vmem:[%s1 + $0x18] sm:$0xff]
      %v485 = vld [vmem:[%s1 + $0x20] sm:$0xff]
      %v486 = vld [vmem:[%s2] sm:$0x1]
      %v488 = vperm.slane %v486, 0
      %vm490 = vcmask 326656
      %v492 = vsel %vm490, %v468, 0
      %v495 = vsel %vm490, %v469, 0
      %v498 = vsel %vm490, %v470, 0
      %v501 = vsel %vm490, %v471, 0
      %v504 = vsel %vm490, %v472, 0
      %v507 = vsel %vm490, %v473, 0
      %v510 = vsel %vm490, %v474, 0
      %v513 = vsel %vm490, %v475, 0
      %v516 = vsel %vm490, %v476, 0
      %v519 = vsel %vm490, %v477, 0
      %v522 = vsel %vm490, %v478, 0
      %v525 = vsel %vm490, %v479, 0
      %v528 = vsel %vm490, %v480, 0
      %530 = vmatpush.msra.mxu0 0.0
      %531 = vmatpush.msra.mxu0 0.0
      %532 = vmatpush.msra.mxu0 0.0
      %533 = vmatpush.msra.mxu0 0.0
      %534 = vmatpush.msra.mxu0 0.0
      %535 = vmatpush.msra.mxu0 0.0
      %536 = vmatpush.msra.mxu0 0.0
      %537 = vmatpush.msra.mxu0 0.0
      %538 = vmatpush.msra.mxu0 0.0
      %539 = vmatpush.msra.mxu0 0.0
      %540 = vmatpush.msra.mxu0 0.0
      %541 = vmatpush.msra.mxu0 %v485
      %542 = vmatpush.msra.mxu0 %v484
      %543 = vmatpush.msra.mxu0 %v483
      %544 = vmatpush.msra.mxu0 %v482
      %545 = vmatpush.msra.mxu0 %v481
      %546 = vmatmul.f32.gmra.mxu0 %v492
      %v547 = vpop.f32.mrf.mxu0
      %v548 = vadd.f32 %v488, %v547
      %549 = vmatmul.f32.gmra.mxu0 %v495
      %v550 = vpop.f32.mrf.mxu0
      %v551 = vadd.f32 %v488, %v550
      %552 = vmatmul.f32.gmra.mxu0 %v498
      %v553 = vpop.f32.mrf.mxu0
      %v554 = vadd.f32 %v488, %v553
      %555 = vmatmul.f32.gmra.mxu0 %v501
      %v556 = vpop.f32.mrf.mxu0
      %v557 = vadd.f32 %v488, %v556
      %558 = vmatmul.f32.gmra.mxu0 %v504
      %v559 = vpop.f32.mrf.mxu0
      %v560 = vadd.f32 %v488, %v559
      %561 = vmatmul.f32.gmra.mxu0 %v507
      %v562 = vpop.f32.mrf.mxu0
      %v563 = vadd.f32 %v488, %v562
      %564 = vmatmul.f32.gmra.mxu0 %v510
      %v565 = vpop.f32.mrf.mxu0
      %v566 = vadd.f32 %v488, %v565
      %567 = vmatmul.f32.gmra.mxu0 %v513
      %v568 = vpop.f32.mrf.mxu0
      %v569 = vadd.f32 %v488, %v568
      %570 = vmatmul.f32.gmra.mxu0 %v516
      %v571 = vpop.f32.mrf.mxu0
      %v572 = vadd.f32 %v488, %v571
      %573 = vmatmul.f32.gmra.mxu0 %v519
      %v574 = vpop.f32.mrf.mxu0
      %v575 = vadd.f32 %v488, %v574
      %576 = vmatmul.f32.gmra.mxu0 %v522
      %v577 = vpop.f32.mrf.mxu0
      %v578 = vadd.f32 %v488, %v577
      %579 = vmatmul.f32.gmra.mxu0 %v525
      %v580 = vpop.f32.mrf.mxu0
      %v581 = vadd.f32 %v488, %v580
      %582 = vmatmul.f32.gmra.mxu0 %v528
      %v583 = vpop.f32.mrf.mxu0
      %v584 = vadd.f32 %v488, %v583
      %585 = vdwg.mxu0
      %v586 = vlaneseq
      %v587 = vshrl.u32 %v586, 7
      %v588 = vadd.s32 %v587, 8
      %v589 = vadd.s32 %v587, 16
      %v590 = vadd.s32 %v587, 24
      %v591 = vadd.s32 %v587, 32
      %v592 = vadd.s32 %v587, 40
      %v593 = vadd.s32 %v587, 48
      %v594 = vadd.s32 %v587, 56
      %v595 = vadd.s32 %v587, 64
      %v596 = vadd.s32 %v587, 72
      %v597 = vadd.s32 %v587, 80
      %v598 = vadd.s32 %v587, 88
      %v599 = vadd.s32 %v587, 96
      %vm600 = vcmp.eq.s32.totalorder %v587, 98
      %vm601 = vcmp.eq.s32.totalorder %v588, 98
      %vm602 = vcmp.eq.s32.totalorder %v589, 98
      %vm603 = vcmp.eq.s32.totalorder %v590, 98
      %vm604 = vcmp.eq.s32.totalorder %v591, 98
      %vm605 = vcmp.eq.s32.totalorder %v592, 98
      %vm606 = vcmp.eq.s32.totalorder %v593, 98
      %vm607 = vcmp.eq.s32.totalorder %v594, 98
      %vm608 = vcmp.eq.s32.totalorder %v595, 98
      %vm609 = vcmp.eq.s32.totalorder %v596, 98
      %vm610 = vcmp.eq.s32.totalorder %v597, 98
      %vm611 = vcmp.eq.s32.totalorder %v598, 98
      %vm612 = vcmp.eq.s32.totalorder %v599, 98
      %v613 = vld [vmem:[%s3] sm:$0xff]
      %v614 = vld [vmem:[%s3 + $0x8] sm:$0xff]
      %v615 = vld [vmem:[%s3 + $0x10] sm:$0xff]
      %v616 = vld [vmem:[%s3 + $0x18] sm:$0xff]
      %v617 = vld [vmem:[%s3 + $0x20] sm:$0xff]
      %v618 = vld [vmem:[%s3 + $0x28] sm:$0xff]
      %v619 = vld [vmem:[%s3 + $0x30] sm:$0xff]
      %v620 = vld [vmem:[%s3 + $0x38] sm:$0xff]
      %v621 = vld [vmem:[%s3 + $0x40] sm:$0xff]
      %v622 = vld [vmem:[%s3 + $0x48] sm:$0xff]
      %v623 = vld [vmem:[%s3 + $0x50] sm:$0xff]
      %v624 = vld [vmem:[%s3 + $0x58] sm:$0xff]
      %v625 = vld [vmem:[%s3 + $0x60] sm:$0xff]
      %v626 = vld [vmem:[%s3 + $0x68] sm:$0xff]
      %v627 = vld [vmem:[%s3 + $0x70] sm:$0xff]
      %v628 = vld [vmem:[%s3 + $0x78] sm:$0xff]
      %v629 = vld [vmem:[%s4] sm:$0x3]
      %v631 = vperm.slane %v629, 0
      %v632 = vperm.slane %v629, 1
      %vm635 = vcmask 523264
      %v637 = vsel %vm635, %v548, 0
      %v640 = vsel %vm635, %v551, 0
      %v643 = vsel %vm635, %v554, 0
      %v646 = vsel %vm635, %v557, 0
      %v649 = vsel %vm635, %v560, 0
      %v652 = vsel %vm635, %v563, 0
      %v655 = vsel %vm635, %v566, 0
      %v658 = vsel %vm635, %v569, 0
      %v661 = vsel %vm635, %v572, 0
      %v664 = vsel %vm635, %v575, 0
      %v667 = vsel %vm635, %v578, 0
      %v670 = vsel %vm635, %v581, 0
      %v673 = vsel %vm635, %v584, 0
      %675 = vmatpush.msra.mxu0 0.0
      %676 = vmatpush.msra.mxu0 0.0
      %677 = vmatpush.msra.mxu0 0.0
      %678 = vmatpush.msra.mxu0 0.0
      %679 = vmatpush.msra.mxu0 0.0
      %680 = vmatpush.msra.mxu0 0.0
      %681 = vmatpush.msra.mxu0 0.0
      %682 = vmatpush.msra.mxu0 0.0
      %683 = vmatpush.msra.mxu0 %v627
      %684 = vmatpush.msra.mxu0 %v625
      %685 = vmatpush.msra.mxu0 %v623
      %686 = vmatpush.msra.mxu0 %v621
      %687 = vmatpush.msra.mxu0 %v619
      %688 = vmatpush.msra.mxu0 %v617
      %689 = vmatpush.msra.mxu0 %v615
      %690 = vmatpush.msra.mxu0 %v613
      %691 = vmatmul.f32.gmra.mxu0 %v637
      %v692 = vpop.f32.mrf.mxu0
      %v693 = vadd.f32 %v631, %v692
      %694 = vmatmul.f32.gmra.mxu0 %v640
      %v695 = vpop.f32.mrf.mxu0
      %v696 = vadd.f32 %v631, %v695
      %697 = vmatmul.f32.gmra.mxu0 %v643
      %v698 = vpop.f32.mrf.mxu0
      %v699 = vadd.f32 %v631, %v698
      %700 = vmatmul.f32.gmra.mxu0 %v646
      %v701 = vpop.f32.mrf.mxu0
      %v702 = vadd.f32 %v631, %v701
      %703 = vmatmul.f32.gmra.mxu0 %v649
      %v704 = vpop.f32.mrf.mxu0
      %v705 = vadd.f32 %v631, %v704
      %706 = vmatmul.f32.gmra.mxu0 %v652
      %v707 = vpop.f32.mrf.mxu0
      %v708 = vadd.f32 %v631, %v707
      %709 = vmatmul.f32.gmra.mxu0 %v655
      %v710 = vpop.f32.mrf.mxu0
      %v711 = vadd.f32 %v631, %v710
      %712 = vmatmul.f32.gmra.mxu0 %v658
      %v713 = vpop.f32.mrf.mxu0
      %v714 = vadd.f32 %v631, %v713
      %715 = vmatmul.f32.gmra.mxu0 %v661
      %v716 = vpop.f32.mrf.mxu0
      %v717 = vadd.f32 %v631, %v716
      %718 = vmatmul.f32.gmra.mxu0 %v664
      %v719 = vpop.f32.mrf.mxu0
      %v720 = vadd.f32 %v631, %v719
      %721 = vmatmul.f32.gmra.mxu0 %v667
      %v722 = vpop.f32.mrf.mxu0
      %v723 = vadd.f32 %v631, %v722
      %724 = vmatmul.f32.gmra.mxu0 %v670
      %v725 = vpop.f32.mrf.mxu0
      %v726 = vadd.f32 %v631, %v725
      %727 = vmatmul.f32.gmra.mxu0 %v673
      %v728 = vpop.f32.mrf.mxu0
      %v729 = vadd.f32 %v631, %v728
      %730 = vdwg.mxu0
      %731 = vmatpush.msra.mxu0 0.0
      %732 = vmatpush.msra.mxu0 0.0
      %733 = vmatpush.msra.mxu0 0.0
      %734 = vmatpush.msra.mxu0 0.0
      %735 = vmatpush.msra.mxu0 0.0
      %736 = vmatpush.msra.mxu0 0.0
      %737 = vmatpush.msra.mxu0 0.0
      %738 = vmatpush.msra.mxu0 0.0
      %739 = vmatpush.msra.mxu0 %v628
      %740 = vmatpush.msra.mxu0 %v626
      %741 = vmatpush.msra.mxu0 %v624
      %742 = vmatpush.msra.mxu0 %v622
      %743 = vmatpush.msra.mxu0 %v620
      %744 = vmatpush.msra.mxu0 %v618
      %745 = vmatpush.msra.mxu0 %v616
      %746 = vmatpush.msra.mxu0 %v614
      %747 = vmatmul.f32.gmra.mxu0 %v637
      %v748 = vpop.f32.mrf.mxu0
      %v749 = vadd.f32 %v632, %v748
      %750 = vmatmul.f32.gmra.mxu0 %v640
      %v751 = vpop.f32.mrf.mxu0
      %v752 = vadd.f32 %v632, %v751
      %753 = vmatmul.f32.gmra.mxu0 %v643
      %v754 = vpop.f32.mrf.mxu0
      %v755 = vadd.f32 %v632, %v754
      %756 = vmatmul.f32.gmra.mxu0 %v646
      %v757 = vpop.f32.mrf.mxu0
      %v758 = vadd.f32 %v632, %v757
      %759 = vmatmul.f32.gmra.mxu0 %v649
      %v760 = vpop.f32.mrf.mxu0
      %v761 = vadd.f32 %v632, %v760
      %762 = vmatmul.f32.gmra.mxu0 %v652
      %v763 = vpop.f32.mrf.mxu0
      %v764 = vadd.f32 %v632, %v763
      %765 = vmatmul.f32.gmra.mxu0 %v655
      %v766 = vpop.f32.mrf.mxu0
      %v767 = vadd.f32 %v632, %v766
      %768 = vmatmul.f32.gmra.mxu0 %v658
      %v769 = vpop.f32.mrf.mxu0
      %v770 = vadd.f32 %v632, %v769
      %771 = vmatmul.f32.gmra.mxu0 %v661
      %v772 = vpop.f32.mrf.mxu0
      %v773 = vadd.f32 %v632, %v772
      %774 = vmatmul.f32.gmra.mxu0 %v664
      %v775 = vpop.f32.mrf.mxu0
      %v776 = vadd.f32 %v632, %v775
      %777 = vmatmul.f32.gmra.mxu0 %v667
      %v778 = vpop.f32.mrf.mxu0
      %v779 = vadd.f32 %v632, %v778
      %780 = vmatmul.f32.gmra.mxu0 %v670
      %v781 = vpop.f32.mrf.mxu0
      %v782 = vadd.f32 %v632, %v781
      %783 = vmatmul.f32.gmra.mxu0 %v673
      %v784 = vpop.f32.mrf.mxu0
      %v785 = vadd.f32 %v632, %v784
      %786 = vdwg.mxu0
      %v787 = vmul.f32 %v693, 0.5
      %v788 = vmul.f32 %v749, 0.5
      %v789 = vmul.f32 %v696, 0.5
      %v790 = vmul.f32 %v752, 0.5
      %v791 = vmul.f32 %v699, 0.5
      %v792 = vmul.f32 %v755, 0.5
      %v793 = vmul.f32 %v702, 0.5
      %v794 = vmul.f32 %v758, 0.5
      %v795 = vmul.f32 %v705, 0.5
      %v796 = vmul.f32 %v761, 0.5
      %v797 = vmul.f32 %v708, 0.5
      %v798 = vmul.f32 %v764, 0.5
      %v799 = vmul.f32 %v711, 0.5
      %v800 = vmul.f32 %v767, 0.5
      %v801 = vmul.f32 %v714, 0.5
      %v802 = vmul.f32 %v770, 0.5
      %v803 = vmul.f32 %v717, 0.5
      %v804 = vmul.f32 %v773, 0.5
      %v805 = vmul.f32 %v720, 0.5
      %v806 = vmul.f32 %v776, 0.5
      %v807 = vmul.f32 %v723, 0.5
      %v808 = vmul.f32 %v779, 0.5
      %v809 = vmul.f32 %v726, 0.5
      %v810 = vmul.f32 %v782, 0.5
      %v811 = vmul.f32 %v729, 0.5
      %v812 = vmul.f32 %v785, 0.5
      %v813 = vmul.f32 %v693, 0.044715
      %v814 = vmul.f32 %v749, 0.044715
      %v815 = vmul.f32 %v696, 0.044715
      %v816 = vmul.f32 %v752, 0.044715
      %v817 = vmul.f32 %v699, 0.044715
      %v818 = vmul.f32 %v755, 0.044715
      %v819 = vmul.f32 %v702, 0.044715
      %v820 = vmul.f32 %v758, 0.044715
      %v821 = vmul.f32 %v705, 0.044715
      %v822 = vmul.f32 %v761, 0.044715
      %v823 = vmul.f32 %v708, 0.044715
      %v824 = vmul.f32 %v764, 0.044715
      %v825 = vmul.f32 %v711, 0.044715
      %v826 = vmul.f32 %v767, 0.044715
      %v827 = vmul.f32 %v714, 0.044715
      %v828 = vmul.f32 %v770, 0.044715
      %v829 = vmul.f32 %v717, 0.044715
      %v830 = vmul.f32 %v773, 0.044715
      %v831 = vmul.f32 %v720, 0.044715
      %v832 = vmul.f32 %v776, 0.044715
      %v833 = vmul.f32 %v723, 0.044715
      %v834 = vmul.f32 %v779, 0.044715
      %v835 = vmul.f32 %v726, 0.044715
      %v836 = vmul.f32 %v782, 0.044715
      %v837 = vmul.f32 %v729, 0.044715
      %v838 = vmul.f32 %v785, 0.044715
      %v839 = vmul.f32 %v813, %v693
      %v840 = vmul.f32 %v814, %v749
      %v841 = vmul.f32 %v815, %v696
      %v842 = vmul.f32 %v816, %v752
      %v843 = vmul.f32 %v817, %v699
      %v844 = vmul.f32 %v818, %v755
      %v845 = vmul.f32 %v819, %v702
      %v846 = vmul.f32 %v820, %v758
      %v847 = vmul.f32 %v821, %v705
      %v848 = vmul.f32 %v822, %v761
      %v849 = vmul.f32 %v823, %v708
      %v850 = vmul.f32 %v824, %v764
      %v851 = vmul.f32 %v825, %v711
      %v852 = vmul.f32 %v826, %v767
      %v853 = vmul.f32 %v827, %v714
      %v854 = vmul.f32 %v828, %v770
      %v855 = vmul.f32 %v829, %v717
      %v856 = vmul.f32 %v830, %v773
      %v857 = vmul.f32 %v831, %v720
      %v858 = vmul.f32 %v832, %v776
      %v859 = vmul.f32 %v833, %v723
      %v860 = vmul.f32 %v834, %v779
      %v861 = vmul.f32 %v835, %v726
      %v862 = vmul.f32 %v836, %v782
      %v863 = vmul.f32 %v837, %v729
      %v864 = vmul.f32 %v838, %v785
      %v865 = vmul.f32 %v839, %v693
      %v866 = vmul.f32 %v840, %v749
      %v867 = vmul.f32 %v841, %v696
      %v868 = vmul.f32 %v842, %v752
      %v869 = vmul.f32 %v843, %v699
      %v870 = vmul.f32 %v844, %v755
      %v871 = vmul.f32 %v845, %v702
      %v872 = vmul.f32 %v846, %v758
      %v873 = vmul.f32 %v847, %v705
      %v874 = vmul.f32 %v848, %v761
      %v875 = vmul.f32 %v849, %v708
      %v876 = vmul.f32 %v850, %v764
      %v877 = vmul.f32 %v851, %v711
      %v878 = vmul.f32 %v852, %v767
      %v879 = vmul.f32 %v853, %v714
      %v880 = vmul.f32 %v854, %v770
      %v881 = vmul.f32 %v855, %v717
      %v882 = vmul.f32 %v856, %v773
      %v883 = vmul.f32 %v857, %v720
      %v884 = vmul.f32 %v858, %v776
      %v885 = vmul.f32 %v859, %v723
      %v886 = vmul.f32 %v860, %v779
      %v887 = vmul.f32 %v861, %v726
      %v888 = vmul.f32 %v862, %v782
      %v889 = vmul.f32 %v863, %v729
      %v890 = vmul.f32 %v864, %v785
      %v891 = vadd.f32 %v693, %v865
      %v892 = vadd.f32 %v749, %v866
      %v893 = vadd.f32 %v696, %v867
      %v894 = vadd.f32 %v752, %v868
      %v895 = vadd.f32 %v699, %v869
      %v896 = vadd.f32 %v755, %v870
      %v897 = vadd.f32 %v702, %v871
      %v898 = vadd.f32 %v758, %v872
      %v899 = vadd.f32 %v705, %v873
      %v900 = vadd.f32 %v761, %v874
      %v901 = vadd.f32 %v708, %v875
      %v902 = vadd.f32 %v764, %v876
      %v903 = vadd.f32 %v711, %v877
      %v904 = vadd.f32 %v767, %v878
      %v905 = vadd.f32 %v714, %v879
      %v906 = vadd.f32 %v770, %v880
      %v907 = vadd.f32 %v717, %v881
      %v908 = vadd.f32 %v773, %v882
      %v909 = vadd.f32 %v720, %v883
      %v910 = vadd.f32 %v776, %v884
      %v911 = vadd.f32 %v723, %v885
      %v912 = vadd.f32 %v779, %v886
      %v913 = vadd.f32 %v726, %v887
      %v914 = vadd.f32 %v782, %v888
      %v915 = vadd.f32 %v729, %v889
      %v916 = vadd.f32 %v785, %v890
      %v917 = vmul.f32 %v891, 0.7978846
      %v918 = vmul.f32 %v892, 0.7978846
      %v919 = vmul.f32 %v893, 0.7978846
      %v920 = vmul.f32 %v894, 0.7978846
      %v921 = vmul.f32 %v895, 0.7978846
      %v922 = vmul.f32 %v896, 0.7978846
      %v923 = vmul.f32 %v897, 0.7978846
      %v924 = vmul.f32 %v898, 0.7978846
      %v925 = vmul.f32 %v899, 0.7978846
      %v926 = vmul.f32 %v900, 0.7978846
      %v927 = vmul.f32 %v901, 0.7978846
      %v928 = vmul.f32 %v902, 0.7978846
      %v929 = vmul.f32 %v903, 0.7978846
      %v930 = vmul.f32 %v904, 0.7978846
      %v931 = vmul.f32 %v905, 0.7978846
      %v932 = vmul.f32 %v906, 0.7978846
      %v933 = vmul.f32 %v907, 0.7978846
      %v934 = vmul.f32 %v908, 0.7978846
      %v935 = vmul.f32 %v909, 0.7978846
      %v936 = vmul.f32 %v910, 0.7978846
      %v937 = vmul.f32 %v911, 0.7978846
      %v938 = vmul.f32 %v912, 0.7978846
      %v939 = vmul.f32 %v913, 0.7978846
      %v940 = vmul.f32 %v914, 0.7978846
      %v941 = vmul.f32 %v915, 0.7978846
      %v942 = vmul.f32 %v916, 0.7978846
      %v943 = vtanh.pop %v917
      %v944 = vtanh.pop %v918
      %v945 = vtanh.pop %v919
      %v946 = vtanh.pop %v920
      %v947 = vtanh.pop %v921
      %v948 = vtanh.pop %v922
      %v949 = vtanh.pop %v923
      %v950 = vtanh.pop %v924
      %v951 = vtanh.pop %v925
      %v952 = vtanh.pop %v926
      %v953 = vtanh.pop %v927
      %v954 = vtanh.pop %v928
      %v955 = vtanh.pop %v929
      %v956 = vtanh.pop %v930
      %v957 = vtanh.pop %v931
      %v958 = vtanh.pop %v932
      %v959 = vtanh.pop %v933
      %v960 = vtanh.pop %v934
      %v961 = vtanh.pop %v935
      %v962 = vtanh.pop %v936
      %v963 = vtanh.pop %v937
      %v964 = vtanh.pop %v938
      %v965 = vtanh.pop %v939
      %v966 = vtanh.pop %v940
      %v967 = vtanh.pop %v941
      %v968 = vtanh.pop %v942
      %v969 = vadd.f32 %v943, 1.0
      %v970 = vadd.f32 %v944, 1.0
      %v971 = vadd.f32 %v945, 1.0
      %v972 = vadd.f32 %v946, 1.0
      %v973 = vadd.f32 %v947, 1.0
      %v974 = vadd.f32 %v948, 1.0
      %v975 = vadd.f32 %v949, 1.0
      %v976 = vadd.f32 %v950, 1.0
      %v977 = vadd.f32 %v951, 1.0
      %v978 = vadd.f32 %v952, 1.0
      %v979 = vadd.f32 %v953, 1.0
      %v980 = vadd.f32 %v954, 1.0
      %v981 = vadd.f32 %v955, 1.0
      %v982 = vadd.f32 %v956, 1.0
      %v983 = vadd.f32 %v957, 1.0
      %v984 = vadd.f32 %v958, 1.0
      %v985 = vadd.f32 %v959, 1.0
      %v986 = vadd.f32 %v960, 1.0
      %v987 = vadd.f32 %v961, 1.0
      %v988 = vadd.f32 %v962, 1.0
      %v989 = vadd.f32 %v963, 1.0
      %v990 = vadd.f32 %v964, 1.0
      %v991 = vadd.f32 %v965, 1.0
      %v992 = vadd.f32 %v966, 1.0
      %v993 = vadd.f32 %v967, 1.0
      %v994 = vadd.f32 %v968, 1.0
      %v995 = vmul.f32 %v787, %v969
      %v996 = vmul.f32 %v788, %v970
      %v997 = vmul.f32 %v789, %v971
      %v998 = vmul.f32 %v790, %v972
      %v999 = vmul.f32 %v791, %v973
      %v1000 = vmul.f32 %v792, %v974
      %v1001 = vmul.f32 %v793, %v975
      %v1002 = vmul.f32 %v794, %v976
      %v1003 = vmul.f32 %v795, %v977
      %v1004 = vmul.f32 %v796, %v978
      %v1005 = vmul.f32 %v797, %v979
      %v1006 = vmul.f32 %v798, %v980
      %v1007 = vmul.f32 %v799, %v981
      %v1008 = vmul.f32 %v800, %v982
      %v1009 = vmul.f32 %v801, %v983
      %v1010 = vmul.f32 %v802, %v984
      %v1011 = vmul.f32 %v803, %v985
      %v1012 = vmul.f32 %v804, %v986
      %v1013 = vmul.f32 %v805, %v987
      %v1014 = vmul.f32 %v806, %v988
      %v1015 = vmul.f32 %v807, %v989
      %v1016 = vmul.f32 %v808, %v990
      %v1017 = vmul.f32 %v809, %v991
      %v1018 = vmul.f32 %v810, %v992
      %v1019 = vmul.f32 %v811, %v993
      %v1020 = vmul.f32 %v812, %v994
      %v1021 = vld [vmem:[%s5] sm:$0x1]
      %v1022 = vld [vmem:[%s6] sm:$0x1]
      %1023 = vadd.xlane.f32.xlu0 %v996
      %v1024 = vpop.xlane.xlu0 %1023
      %1025 = vadd.xlane.f32.xlu0 %v998
      %v1026 = vpop.xlane.xlu0 %1025
      %1027 = vadd.xlane.f32.xlu0 %v1000
      %v1028 = vpop.xlane.xlu0 %1027
      %1029 = vadd.xlane.f32.xlu0 %v1002
      %v1030 = vpop.xlane.xlu0 %1029
      %1031 = vadd.xlane.f32.xlu0 %v1004
      %v1032 = vpop.xlane.xlu0 %1031
      %1033 = vadd.xlane.f32.xlu0 %v1006
      %v1034 = vpop.xlane.xlu0 %1033
      %1035 = vadd.xlane.f32.xlu0 %v1008
      %v1036 = vpop.xlane.xlu0 %1035
      %1037 = vadd.xlane.f32.xlu0 %v1010
      %v1038 = vpop.xlane.xlu0 %1037
      %1039 = vadd.xlane.f32.xlu0 %v1012
      %v1040 = vpop.xlane.xlu0 %1039
      %1041 = vadd.xlane.f32.xlu0 %v1014
      %v1042 = vpop.xlane.xlu0 %1041
      %1043 = vadd.xlane.f32.xlu0 %v1016
      %v1044 = vpop.xlane.xlu0 %1043
      %1045 = vadd.xlane.f32.xlu0 %v1018
      %v1046 = vpop.xlane.xlu0 %1045
      %1047 = vadd.xlane.f32.xlu0 %v1020
      %v1048 = vpop.xlane.xlu0 %1047
      %v1049 = vrcp.pop 128.0
      %v1050 = vmul.f32 128.0, %v1049
      %v1051 = vsub.f32 1.0, %v1050
      %v1052 = vmul.f32 %v1049, %v1051
      %v1053 = vadd.f32 %v1049, %v1052
      %vm1054 = vweird.f32 %v1049
      %v1055 = vsel %vm1054, %v1049, %v1053
      %v1056 = vmul.f32 %v1024, %v1055
      %v1057 = vmul.f32 %v1026, %v1055
      %v1058 = vmul.f32 %v1028, %v1055
      %v1059 = vmul.f32 %v1030, %v1055
      %v1060 = vmul.f32 %v1032, %v1055
      %v1061 = vmul.f32 %v1034, %v1055
      %v1062 = vmul.f32 %v1036, %v1055
      %v1063 = vmul.f32 %v1038, %v1055
      %v1064 = vmul.f32 %v1040, %v1055
      %v1065 = vmul.f32 %v1042, %v1055
      %v1066 = vmul.f32 %v1044, %v1055
      %v1067 = vmul.f32 %v1046, %v1055
      %v1068 = vmul.f32 %v1048, %v1055
      %v1069 = vsub.f32 %v996, %v1056
      %v1070 = vsub.f32 %v998, %v1057
      %v1071 = vsub.f32 %v1000, %v1058
      %v1072 = vsub.f32 %v1002, %v1059
      %v1073 = vsub.f32 %v1004, %v1060
      %v1074 = vsub.f32 %v1006, %v1061
      %v1075 = vsub.f32 %v1008, %v1062
      %v1076 = vsub.f32 %v1010, %v1063
      %v1077 = vsub.f32 %v1012, %v1064
      %v1078 = vsub.f32 %v1014, %v1065
      %v1079 = vsub.f32 %v1016, %v1066
      %v1080 = vsub.f32 %v1018, %v1067
      %v1081 = vsub.f32 %v1020, %v1068
      %v1082 = vmul.f32 %v1069, %v1069
      %v1083 = vmul.f32 %v1070, %v1070
      %v1084 = vmul.f32 %v1071, %v1071
      %v1085 = vmul.f32 %v1072, %v1072
      %v1086 = vmul.f32 %v1073, %v1073
      %v1087 = vmul.f32 %v1074, %v1074
      %v1088 = vmul.f32 %v1075, %v1075
      %v1089 = vmul.f32 %v1076, %v1076
      %v1090 = vmul.f32 %v1077, %v1077
      %v1091 = vmul.f32 %v1078, %v1078
      %v1092 = vmul.f32 %v1079, %v1079
      %v1093 = vmul.f32 %v1080, %v1080
      %v1094 = vmul.f32 %v1081, %v1081
      %1095 = vadd.xlane.f32.xlu0 %v1082
      %v1096 = vpop.xlane.xlu0 %1095
      %1097 = vadd.xlane.f32.xlu0 %v1083
      %v1098 = vpop.xlane.xlu0 %1097
      %1099 = vadd.xlane.f32.xlu0 %v1084
      %v1100 = vpop.xlane.xlu0 %1099
      %1101 = vadd.xlane.f32.xlu0 %v1085
      %v1102 = vpop.xlane.xlu0 %1101
      %1103 = vadd.xlane.f32.xlu0 %v1086
      %v1104 = vpop.xlane.xlu0 %1103
      %1105 = vadd.xlane.f32.xlu0 %v1087
      %v1106 = vpop.xlane.xlu0 %1105
      %1107 = vadd.xlane.f32.xlu0 %v1088
      %v1108 = vpop.xlane.xlu0 %1107
      %1109 = vadd.xlane.f32.xlu0 %v1089
      %v1110 = vpop.xlane.xlu0 %1109
      %1111 = vadd.xlane.f32.xlu0 %v1090
      %v1112 = vpop.xlane.xlu0 %1111
      %1113 = vadd.xlane.f32.xlu0 %v1091
      %v1114 = vpop.xlane.xlu0 %1113
      %1115 = vadd.xlane.f32.xlu0 %v1092
      %v1116 = vpop.xlane.xlu0 %1115
      %1117 = vadd.xlane.f32.xlu0 %v1093
      %v1118 = vpop.xlane.xlu0 %1117
      %1119 = vadd.xlane.f32.xlu0 %v1094
      %v1120 = vpop.xlane.xlu0 %1119
      %v1121 = vmul.f32 %v1096, %v1055
      %v1122 = vmul.f32 %v1098, %v1055
      %v1123 = vmul.f32 %v1100, %v1055
      %v1124 = vmul.f32 %v1102, %v1055
      %v1125 = vmul.f32 %v1104, %v1055
      %v1126 = vmul.f32 %v1106, %v1055
      %v1127 = vmul.f32 %v1108, %v1055
      %v1128 = vmul.f32 %v1110, %v1055
      %v1129 = vmul.f32 %v1112, %v1055
      %v1130 = vmul.f32 %v1114, %v1055
      %v1131 = vmul.f32 %v1116, %v1055
      %v1132 = vmul.f32 %v1118, %v1055
      %v1133 = vmul.f32 %v1120, %v1055
      %v1134 = vadd.f32 %v1121, 1e-05
      %v1135 = vadd.f32 %v1122, 1e-05
      %v1136 = vadd.f32 %v1123, 1e-05
      %v1137 = vadd.f32 %v1124, 1e-05
      %v1138 = vadd.f32 %v1125, 1e-05
      %v1139 = vadd.f32 %v1126, 1e-05
      %v1140 = vadd.f32 %v1127, 1e-05
      %v1141 = vadd.f32 %v1128, 1e-05
      %v1142 = vadd.f32 %v1129, 1e-05
      %v1143 = vadd.f32 %v1130, 1e-05
      %v1144 = vadd.f32 %v1131, 1e-05
      %v1145 = vadd.f32 %v1132, 1e-05
      %v1146 = vadd.f32 %v1133, 1e-05
      %v1147 = vrsqrt.pop %v1134
      %v1148 = vmul.f32 %v1147, %v1134
      %v1149 = vmul.f32 %v1148, %v1147
      %v1150 = vmul.f32 0.5, %v1149
      %v1151 = vsub.f32 1.5, %v1150
      %v1152 = vmul.f32 %v1147, %v1151
      %vm1153 = vweird.f32 %v1134
      %vm1154 = vweird.f32 %v1147
      %vm1155 = vmor %vm1153, %vm1154
      %v1156 = vsel %vm1155, %v1147, %v1152
      %v1157 = vrsqrt.pop %v1135
      %v1158 = vmul.f32 %v1157, %v1135
      %v1159 = vmul.f32 %v1158, %v1157
      %v1160 = vmul.f32 0.5, %v1159
      %v1161 = vsub.f32 1.5, %v1160
      %v1162 = vmul.f32 %v1157, %v1161
      %vm1163 = vweird.f32 %v1135
      %vm1164 = vweird.f32 %v1157
      %vm1165 = vmor %vm1163, %vm1164
      %v1166 = vsel %vm1165, %v1157, %v1162
      %v1167 = vrsqrt.pop %v1136
      %v1168 = vmul.f32 %v1167, %v1136
      %v1169 = vmul.f32 %v1168, %v1167
      %v1170 = vmul.f32 0.5, %v1169
      %v1171 = vsub.f32 1.5, %v1170
      %v1172 = vmul.f32 %v1167, %v1171
      %vm1173 = vweird.f32 %v1136
      %vm1174 = vweird.f32 %v1167
      %vm1175 = vmor %vm1173, %vm1174
      %v1176 = vsel %vm1175, %v1167, %v1172
      %v1177 = vrsqrt.pop %v1137
      %v1178 = vmul.f32 %v1177, %v1137
      %v1179 = vmul.f32 %v1178, %v1177
      %v1180 = vmul.f32 0.5, %v1179
      %v1181 = vsub.f32 1.5, %v1180
      %v1182 = vmul.f32 %v1177, %v1181
      %vm1183 = vweird.f32 %v1137
      %vm1184 = vweird.f32 %v1177
      %vm1185 = vmor %vm1183, %vm1184
      %v1186 = vsel %vm1185, %v1177, %v1182
      %v1187 = vrsqrt.pop %v1138
      %v1188 = vmul.f32 %v1187, %v1138
      %v1189 = vmul.f32 %v1188, %v1187
      %v1190 = vmul.f32 0.5, %v1189
      %v1191 = vsub.f32 1.5, %v1190
      %v1192 = vmul.f32 %v1187, %v1191
      %vm1193 = vweird.f32 %v1138
      %vm1194 = vweird.f32 %v1187
      %vm1195 = vmor %vm1193, %vm1194
      %v1196 = vsel %vm1195, %v1187, %v1192
      %v1197 = vrsqrt.pop %v1139
      %v1198 = vmul.f32 %v1197, %v1139
      %v1199 = vmul.f32 %v1198, %v1197
      %v1200 = vmul.f32 0.5, %v1199
      %v1201 = vsub.f32 1.5, %v1200
      %v1202 = vmul.f32 %v1197, %v1201
      %vm1203 = vweird.f32 %v1139
      %vm1204 = vweird.f32 %v1197
      %vm1205 = vmor %vm1203, %vm1204
      %v1206 = vsel %vm1205, %v1197, %v1202
      %v1207 = vrsqrt.pop %v1140
      %v1208 = vmul.f32 %v1207, %v1140
      %v1209 = vmul.f32 %v1208, %v1207
      %v1210 = vmul.f32 0.5, %v1209
      %v1211 = vsub.f32 1.5, %v1210
      %v1212 = vmul.f32 %v1207, %v1211
      %vm1213 = vweird.f32 %v1140
      %vm1214 = vweird.f32 %v1207
      %vm1215 = vmor %vm1213, %vm1214
      %v1216 = vsel %vm1215, %v1207, %v1212
      %v1217 = vrsqrt.pop %v1141
      %v1218 = vmul.f32 %v1217, %v1141
      %v1219 = vmul.f32 %v1218, %v1217
      %v1220 = vmul.f32 0.5, %v1219
      %v1221 = vsub.f32 1.5, %v1220
      %v1222 = vmul.f32 %v1217, %v1221
      %vm1223 = vweird.f32 %v1141
      %vm1224 = vweird.f32 %v1217
      %vm1225 = vmor %vm1223, %vm1224
      %v1226 = vsel %vm1225, %v1217, %v1222
      %v1227 = vrsqrt.pop %v1142
      %v1228 = vmul.f32 %v1227, %v1142
      %v1229 = vmul.f32 %v1228, %v1227
      %v1230 = vmul.f32 0.5, %v1229
      %v1231 = vsub.f32 1.5, %v1230
      %v1232 = vmul.f32 %v1227, %v1231
      %vm1233 = vweird.f32 %v1142
      %vm1234 = vweird.f32 %v1227
      %vm1235 = vmor %vm1233, %vm1234
      %v1236 = vsel %vm1235, %v1227, %v1232
      %v1237 = vrsqrt.pop %v1143
      %v1238 = vmul.f32 %v1237, %v1143
      %v1239 = vmul.f32 %v1238, %v1237
      %v1240 = vmul.f32 0.5, %v1239
      %v1241 = vsub.f32 1.5, %v1240
      %v1242 = vmul.f32 %v1237, %v1241
      %vm1243 = vweird.f32 %v1143
      %vm1244 = vweird.f32 %v1237
      %vm1245 = vmor %vm1243, %vm1244
      %v1246 = vsel %vm1245, %v1237, %v1242
      %v1247 = vrsqrt.pop %v1144
      %v1248 = vmul.f32 %v1247, %v1144
      %v1249 = vmul.f32 %v1248, %v1247
      %v1250 = vmul.f32 0.5, %v1249
      %v1251 = vsub.f32 1.5, %v1250
      %v1252 = vmul.f32 %v1247, %v1251
      %vm1253 = vweird.f32 %v1144
      %vm1254 = vweird.f32 %v1247
      %vm1255 = vmor %vm1253, %vm1254
      %v1256 = vsel %vm1255, %v1247, %v1252
      %v1257 = vrsqrt.pop %v1145
      %v1258 = vmul.f32 %v1257, %v1145
      %v1259 = vmul.f32 %v1258, %v1257
      %v1260 = vmul.f32 0.5, %v1259
      %v1261 = vsub.f32 1.5, %v1260
      %v1262 = vmul.f32 %v1257, %v1261
      %vm1263 = vweird.f32 %v1145
      %vm1264 = vweird.f32 %v1257
      %vm1265 = vmor %vm1263, %vm1264
      %v1266 = vsel %vm1265, %v1257, %v1262
      %v1267 = vrsqrt.pop %v1146
      %v1268 = vmul.f32 %v1267, %v1146
      %v1269 = vmul.f32 %v1268, %v1267
      %v1270 = vmul.f32 0.5, %v1269
      %v1271 = vsub.f32 1.5, %v1270
      %v1272 = vmul.f32 %v1267, %v1271
      %vm1273 = vweird.f32 %v1146
      %vm1274 = vweird.f32 %v1267
      %vm1275 = vmor %vm1273, %vm1274
      %v1276 = vsel %vm1275, %v1267, %v1272
      %v1277 = vmul.f32 %v1069, %v1156
      %v1278 = vmul.f32 %v1070, %v1166
      %v1279 = vmul.f32 %v1071, %v1176
      %v1280 = vmul.f32 %v1072, %v1186
      %v1281 = vmul.f32 %v1073, %v1196
      %v1282 = vmul.f32 %v1074, %v1206
      %v1283 = vmul.f32 %v1075, %v1216
      %v1284 = vmul.f32 %v1076, %v1226
      %v1285 = vmul.f32 %v1077, %v1236
      %v1286 = vmul.f32 %v1078, %v1246
      %v1287 = vmul.f32 %v1079, %v1256
      %v1288 = vmul.f32 %v1080, %v1266
      %v1289 = vmul.f32 %v1081, %v1276
      %v1291 = vperm.slane %v1021, 0
      %v1293 = vmul.f32 %v1277, %v1291
      %v1294 = vmul.f32 %v1278, %v1291
      %v1295 = vmul.f32 %v1279, %v1291
      %v1296 = vmul.f32 %v1280, %v1291
      %v1297 = vmul.f32 %v1281, %v1291
      %v1298 = vmul.f32 %v1282, %v1291
      %v1299 = vmul.f32 %v1283, %v1291
      %v1300 = vmul.f32 %v1284, %v1291
      %v1301 = vmul.f32 %v1285, %v1291
      %v1302 = vmul.f32 %v1286, %v1291
      %v1303 = vmul.f32 %v1287, %v1291
      %v1304 = vmul.f32 %v1288, %v1291
      %v1305 = vmul.f32 %v1289, %v1291
      %v1307 = vperm.slane %v1022, 0
      %v1309 = vadd.f32 %v1293, %v1307
      %v1310 = vadd.f32 %v1294, %v1307
      %v1311 = vadd.f32 %v1295, %v1307
      %v1312 = vadd.f32 %v1296, %v1307
      %v1313 = vadd.f32 %v1297, %v1307
      %v1314 = vadd.f32 %v1298, %v1307
      %v1315 = vadd.f32 %v1299, %v1307
      %v1316 = vadd.f32 %v1300, %v1307
      %v1317 = vadd.f32 %v1301, %v1307
      %v1318 = vadd.f32 %v1302, %v1307
      %v1319 = vadd.f32 %v1303, %v1307
      %v1320 = vadd.f32 %v1304, %v1307
      %v1321 = vadd.f32 %v1305, %v1307
      %v1322 = vsel %vm600, 1.0, %v1309
      %v1323 = vsel %vm601, 1.0, %v1310
      %v1324 = vsel %vm602, 1.0, %v1311
      %v1325 = vsel %vm603, 1.0, %v1312
      %v1326 = vsel %vm604, 1.0, %v1313
      %v1327 = vsel %vm605, 1.0, %v1314
      %v1328 = vsel %vm606, 1.0, %v1315
      %v1329 = vsel %vm607, 1.0, %v1316
      %v1330 = vsel %vm608, 1.0, %v1317
      %v1331 = vsel %vm609, 1.0, %v1318
      %v1332 = vsel %vm610, 1.0, %v1319
      %v1333 = vsel %vm611, 1.0, %v1320
      %v1334 = vsel %vm612, 1.0, %v1321
      %v1335 = vld [vmem:[%s7] sm:$0xff]
      %v1336 = vld [vmem:[%s7 + $0x8] sm:$0xff]
      %v1337 = vld [vmem:[%s7 + $0x10] sm:$0xff]
      %v1338 = vld [vmem:[%s7 + $0x18] sm:$0xff]
      %v1339 = vld [vmem:[%s7 + $0x20] sm:$0xff]
      %v1340 = vld [vmem:[%s7 + $0x28] sm:$0xff]
      %v1341 = vld [vmem:[%s7 + $0x30] sm:$0xff]
      %v1342 = vld [vmem:[%s7 + $0x38] sm:$0xff]
      %v1343 = vld [vmem:[%s7 + $0x40] sm:$0xff]
      %v1344 = vld [vmem:[%s7 + $0x48] sm:$0xff]
      %v1345 = vld [vmem:[%s7 + $0x50] sm:$0xff]
      %v1346 = vld [vmem:[%s7 + $0x58] sm:$0xff]
      %v1347 = vld [vmem:[%s7 + $0x60] sm:$0xff]
      %vm1348 = vcmask 850944
      %v1350 = vsel %vm1348, %v1335, 0
      %v1353 = vsel %vm1348, %v1336, 0
      %v1356 = vsel %vm1348, %v1337, 0
      %v1359 = vsel %vm1348, %v1338, 0
      %v1362 = vsel %vm1348, %v1339, 0
      %v1365 = vsel %vm1348, %v1340, 0
      %v1368 = vsel %vm1348, %v1341, 0
      %v1371 = vsel %vm1348, %v1342, 0
      %v1374 = vsel %vm1348, %v1343, 0
      %v1377 = vsel %vm1348, %v1344, 0
      %v1380 = vsel %vm1348, %v1345, 0
      %v1383 = vsel %vm1348, %v1346, 0
      %v1386 = vsel %vm1348, %v1347, 0
      %1388 = vmatpush.msra.mxu0 0.0
      %1389 = vmatpush.msra.mxu0 0.0
      %1390 = vmatpush.msra.mxu0 0.0
      %1391 = vmatpush.msra.mxu0 %v1334
      %1392 = vmatpush.msra.mxu0 %v1333
      %1393 = vmatpush.msra.mxu0 %v1332
      %1394 = vmatpush.msra.mxu0 %v1331
      %1395 = vmatpush.msra.mxu0 %v1330
      %1396 = vmatpush.msra.mxu0 %v1329
      %1397 = vmatpush.msra.mxu0 %v1328
      %1398 = vmatpush.msra.mxu0 %v1327
      %1399 = vmatpush.msra.mxu0 %v1326
      %1400 = vmatpush.msra.mxu0 %v1325
      %1401 = vmatpush.msra.mxu0 %v1324
      %1402 = vmatpush.msra.mxu0 %v1323
      %1403 = vmatpush.msra.mxu0 %v1322
      %1404 = vmatmul.f32.gmra.mxu0 %v1350
      %v1405 = vpop.f32.mrf.mxu0
      %v1406 = vadd.f32 0.0, %v1405
      %1407 = vmatmul.f32.gmra.mxu0 %v1353
      %v1408 = vpop.f32.mrf.mxu0
      %v1409 = vadd.f32 0.0, %v1408
      %1410 = vmatmul.f32.gmra.mxu0 %v1356
      %v1411 = vpop.f32.mrf.mxu0
      %v1412 = vadd.f32 0.0, %v1411
      %1413 = vmatmul.f32.gmra.mxu0 %v1359
      %v1414 = vpop.f32.mrf.mxu0
      %v1415 = vadd.f32 0.0, %v1414
      %1416 = vmatmul.f32.gmra.mxu0 %v1362
      %v1417 = vpop.f32.mrf.mxu0
      %v1418 = vadd.f32 0.0, %v1417
      %1419 = vmatmul.f32.gmra.mxu0 %v1365
      %v1420 = vpop.f32.mrf.mxu0
      %v1421 = vadd.f32 0.0, %v1420
      %1422 = vmatmul.f32.gmra.mxu0 %v1368
      %v1423 = vpop.f32.mrf.mxu0
      %v1424 = vadd.f32 0.0, %v1423
      %1425 = vmatmul.f32.gmra.mxu0 %v1371
      %v1426 = vpop.f32.mrf.mxu0
      %v1427 = vadd.f32 0.0, %v1426
      %1428 = vmatmul.f32.gmra.mxu0 %v1374
      %v1429 = vpop.f32.mrf.mxu0
      %v1430 = vadd.f32 0.0, %v1429
      %1431 = vmatmul.f32.gmra.mxu0 %v1377
      %v1432 = vpop.f32.mrf.mxu0
      %v1433 = vadd.f32 0.0, %v1432
      %1434 = vmatmul.f32.gmra.mxu0 %v1380
      %v1435 = vpop.f32.mrf.mxu0
      %v1436 = vadd.f32 0.0, %v1435
      %1437 = vmatmul.f32.gmra.mxu0 %v1383
      %v1438 = vpop.f32.mrf.mxu0
      %v1439 = vadd.f32 0.0, %v1438
      %1440 = vmatmul.f32.gmra.mxu0 %v1386
      %v1441 = vpop.f32.mrf.mxu0
      %v1442 = vadd.f32 0.0, %v1441
      %1443 = vdwg.mxu0
      %v1444 = vmul.f32 %v1406, %v995
      %v1445 = vmul.f32 %v1409, %v997
      %v1446 = vmul.f32 %v1412, %v999
      %v1447 = vmul.f32 %v1415, %v1001
      %v1448 = vmul.f32 %v1418, %v1003
      %v1449 = vmul.f32 %v1421, %v1005
      %v1450 = vmul.f32 %v1424, %v1007
      %v1451 = vmul.f32 %v1427, %v1009
      %v1452 = vmul.f32 %v1430, %v1011
      %v1453 = vmul.f32 %v1433, %v1013
      %v1454 = vmul.f32 %v1436, %v1015
      %v1455 = vmul.f32 %v1439, %v1017
      %v1456 = vmul.f32 %v1442, %v1019
      %v1457 = vld [vmem:[%s8] sm:$0xff]
      %v1458 = vld [vmem:[%s8 + $0x8] sm:$0xff]
      %v1459 = vld [vmem:[%s8 + $0x10] sm:$0xff]
      %v1460 = vld [vmem:[%s8 + $0x18] sm:$0xff]
      %v1461 = vld [vmem:[%s8 + $0x20] sm:$0xff]
      %v1462 = vld [vmem:[%s8 + $0x28] sm:$0xff]
      %v1463 = vld [vmem:[%s8 + $0x30] sm:$0xff]
      %v1464 = vld [vmem:[%s8 + $0x38] sm:$0xff]
      %v1465 = vld [vmem:[%s8 + $0x40] sm:$0xff]
      %v1466 = vld [vmem:[%s8 + $0x48] sm:$0xff]
      %v1467 = vld [vmem:[%s8 + $0x50] sm:$0xff]
      %v1468 = vld [vmem:[%s8 + $0x58] sm:$0xff]
      %v1469 = vld [vmem:[%s8 + $0x60] sm:$0xff]
      %v1470 = vld [vmem:[%s8 + $0x68] sm:$0xff]
      %v1471 = vld [vmem:[%s8 + $0x70] sm:$0xff]
      %v1472 = vld [vmem:[%s8 + $0x78] sm:$0xff]
      %v1473 = vld [vmem:[%s9] sm:$0x1]
      %v1475 = vperm.slane %v1473, 0
      %1477 = vmatpush.msra.mxu0 %v1472
      %1478 = vmatpush.msra.mxu0 %v1471
      %1479 = vmatpush.msra.mxu0 %v1470
      %1480 = vmatpush.msra.mxu0 %v1469
      %1481 = vmatpush.msra.mxu0 %v1468
      %1482 = vmatpush.msra.mxu0 %v1467
      %1483 = vmatpush.msra.mxu0 %v1466
      %1484 = vmatpush.msra.mxu0 %v1465
      %1485 = vmatpush.msra.mxu0 %v1464
      %1486 = vmatpush.msra.mxu0 %v1463
      %1487 = vmatpush.msra.mxu0 %v1462
      %1488 = vmatpush.msra.mxu0 %v1461
      %1489 = vmatpush.msra.mxu0 %v1460
      %1490 = vmatpush.msra.mxu0 %v1459
      %1491 = vmatpush.msra.mxu0 %v1458
      %1492 = vmatpush.msra.mxu0 %v1457
      %1493 = vmatmul.f32.gmra.mxu0 %v1444
      %v1494 = vpop.f32.mrf.mxu0
      %v1495 = vadd.f32 %v1475, %v1494
      %1496 = vmatmul.f32.gmra.mxu0 %v1445
      %v1497 = vpop.f32.mrf.mxu0
      %v1498 = vadd.f32 %v1475, %v1497
      %1499 = vmatmul.f32.gmra.mxu0 %v1446
      %v1500 = vpop.f32.mrf.mxu0
      %v1501 = vadd.f32 %v1475, %v1500
      %1502 = vmatmul.f32.gmra.mxu0 %v1447
      %v1503 = vpop.f32.mrf.mxu0
      %v1504 = vadd.f32 %v1475, %v1503
      %1505 = vmatmul.f32.gmra.mxu0 %v1448
      %v1506 = vpop.f32.mrf.mxu0
      %v1507 = vadd.f32 %v1475, %v1506
      %1508 = vmatmul.f32.gmra.mxu0 %v1449
      %v1509 = vpop.f32.mrf.mxu0
      %v1510 = vadd.f32 %v1475, %v1509
      %1511 = vmatmul.f32.gmra.mxu0 %v1450
      %v1512 = vpop.f32.mrf.mxu0
      %v1513 = vadd.f32 %v1475, %v1512
      %1514 = vmatmul.f32.gmra.mxu0 %v1451
      %v1515 = vpop.f32.mrf.mxu0
      %v1516 = vadd.f32 %v1475, %v1515
      %1517 = vmatmul.f32.gmra.mxu0 %v1452
      %v1518 = vpop.f32.mrf.mxu0
      %v1519 = vadd.f32 %v1475, %v1518
      %1520 = vmatmul.f32.gmra.mxu0 %v1453
      %v1521 = vpop.f32.mrf.mxu0
      %v1522 = vadd.f32 %v1475, %v1521
      %1523 = vmatmul.f32.gmra.mxu0 %v1454
      %v1524 = vpop.f32.mrf.mxu0
      %v1525 = vadd.f32 %v1475, %v1524
      %1526 = vmatmul.f32.gmra.mxu0 %v1455
      %v1527 = vpop.f32.mrf.mxu0
      %v1528 = vadd.f32 %v1475, %v1527
      %1529 = vmatmul.f32.gmra.mxu0 %v1456
      %v1530 = vpop.f32.mrf.mxu0
      %v1531 = vadd.f32 %v1475, %v1530
      %1532 = vdwg.mxu0
      %v1533 = vld [vmem:[%s10] sm:$0x1]
      %v1534 = vld [vmem:[%s11] sm:$0x1]
      %v1535 = vsel %vm635, %v1495, 0.0
      %1536 = vadd.xlane.f32.xlu0 %v1535
      %v1537 = vpop.xlane.xlu0 %1536
      %v1538 = vsel %vm635, %v1498, 0.0
      %1539 = vadd.xlane.f32.xlu0 %v1538
      %v1540 = vpop.xlane.xlu0 %1539
      %v1541 = vsel %vm635, %v1501, 0.0
      %1542 = vadd.xlane.f32.xlu0 %v1541
      %v1543 = vpop.xlane.xlu0 %1542
      %v1544 = vsel %vm635, %v1504, 0.0
      %1545 = vadd.xlane.f32.xlu0 %v1544
      %v1546 = vpop.xlane.xlu0 %1545
      %v1547 = vsel %vm635, %v1507, 0.0
      %1548 = vadd.xlane.f32.xlu0 %v1547
      %v1549 = vpop.xlane.xlu0 %1548
      %v1550 = vsel %vm635, %v1510, 0.0
      %1551 = vadd.xlane.f32.xlu0 %v1550
      %v1552 = vpop.xlane.xlu0 %1551
      %v1553 = vsel %vm635, %v1513, 0.0
      %1554 = vadd.xlane.f32.xlu0 %v1553
      %v1555 = vpop.xlane.xlu0 %1554
      %v1556 = vsel %vm635, %v1516, 0.0
      %1557 = vadd.xlane.f32.xlu0 %v1556
      %v1558 = vpop.xlane.xlu0 %1557
      %v1559 = vsel %vm635, %v1519, 0.0
      %1560 = vadd.xlane.f32.xlu0 %v1559
      %v1561 = vpop.xlane.xlu0 %1560
      %v1562 = vsel %vm635, %v1522, 0.0
      %1563 = vadd.xlane.f32.xlu0 %v1562
      %v1564 = vpop.xlane.xlu0 %1563
      %v1565 = vsel %vm635, %v1525, 0.0
      %1566 = vadd.xlane.f32.xlu0 %v1565
      %v1567 = vpop.xlane.xlu0 %1566
      %v1568 = vsel %vm635, %v1528, 0.0
      %1569 = vadd.xlane.f32.xlu0 %v1568
      %v1570 = vpop.xlane.xlu0 %1569
      %v1571 = vsel %vm635, %v1531, 0.0
      %1572 = vadd.xlane.f32.xlu0 %v1571
      %v1573 = vpop.xlane.xlu0 %1572
      %v1574 = vrcp.pop 64.0
      %v1575 = vmul.f32 64.0, %v1574
      %v1576 = vsub.f32 1.0, %v1575
      %v1577 = vmul.f32 %v1574, %v1576
      %v1578 = vadd.f32 %v1574, %v1577
      %vm1579 = vweird.f32 %v1574
      %v1580 = vsel %vm1579, %v1574, %v1578
      %v1581 = vmul.f32 %v1537, %v1580
      %v1582 = vmul.f32 %v1540, %v1580
      %v1583 = vmul.f32 %v1543, %v1580
      %v1584 = vmul.f32 %v1546, %v1580
      %v1585 = vmul.f32 %v1549, %v1580
      %v1586 = vmul.f32 %v1552, %v1580
      %v1587 = vmul.f32 %v1555, %v1580
      %v1588 = vmul.f32 %v1558, %v1580
      %v1589 = vmul.f32 %v1561, %v1580
      %v1590 = vmul.f32 %v1564, %v1580
      %v1591 = vmul.f32 %v1567, %v1580
      %v1592 = vmul.f32 %v1570, %v1580
      %v1593 = vmul.f32 %v1573, %v1580
      %v1594 = vsub.f32 %v1495, %v1581
      %v1595 = vsub.f32 %v1498, %v1582
      %v1596 = vsub.f32 %v1501, %v1583
      %v1597 = vsub.f32 %v1504, %v1584
      %v1598 = vsub.f32 %v1507, %v1585
      %v1599 = vsub.f32 %v1510, %v1586
      %v1600 = vsub.f32 %v1513, %v1587
      %v1601 = vsub.f32 %v1516, %v1588
      %v1602 = vsub.f32 %v1519, %v1589
      %v1603 = vsub.f32 %v1522, %v1590
      %v1604 = vsub.f32 %v1525, %v1591
      %v1605 = vsub.f32 %v1528, %v1592
      %v1606 = vsub.f32 %v1531, %v1593
      %v1607 = vmul.f32 %v1594, %v1594
      %v1608 = vmul.f32 %v1595, %v1595
      %v1609 = vmul.f32 %v1596, %v1596
      %v1610 = vmul.f32 %v1597, %v1597
      %v1611 = vmul.f32 %v1598, %v1598
      %v1612 = vmul.f32 %v1599, %v1599
      %v1613 = vmul.f32 %v1600, %v1600
      %v1614 = vmul.f32 %v1601, %v1601
      %v1615 = vmul.f32 %v1602, %v1602
      %v1616 = vmul.f32 %v1603, %v1603
      %v1617 = vmul.f32 %v1604, %v1604
      %v1618 = vmul.f32 %v1605, %v1605
      %v1619 = vmul.f32 %v1606, %v1606
      %v1620 = vsel %vm635, %v1607, 0.0
      %1621 = vadd.xlane.f32.xlu0 %v1620
      %v1622 = vpop.xlane.xlu0 %1621
      %v1623 = vsel %vm635, %v1608, 0.0
      %1624 = vadd.xlane.f32.xlu0 %v1623
      %v1625 = vpop.xlane.xlu0 %1624
      %v1626 = vsel %vm635, %v1609, 0.0
      %1627 = vadd.xlane.f32.xlu0 %v1626
      %v1628 = vpop.xlane.xlu0 %1627
      %v1629 = vsel %vm635, %v1610, 0.0
      %1630 = vadd.xlane.f32.xlu0 %v1629
      %v1631 = vpop.xlane.xlu0 %1630
      %v1632 = vsel %vm635, %v1611, 0.0
      %1633 = vadd.xlane.f32.xlu0 %v1632
      %v1634 = vpop.xlane.xlu0 %1633
      %v1635 = vsel %vm635, %v1612, 0.0
      %1636 = vadd.xlane.f32.xlu0 %v1635
      %v1637 = vpop.xlane.xlu0 %1636
      %v1638 = vsel %vm635, %v1613, 0.0
      %1639 = vadd.xlane.f32.xlu0 %v1638
      %v1640 = vpop.xlane.xlu0 %1639
      %v1641 = vsel %vm635, %v1614, 0.0
      %1642 = vadd.xlane.f32.xlu0 %v1641
      %v1643 = vpop.xlane.xlu0 %1642
      %v1644 = vsel %vm635, %v1615, 0.0
      %1645 = vadd.xlane.f32.xlu0 %v1644
      %v1646 = vpop.xlane.xlu0 %1645
      %v1647 = vsel %vm635, %v1616, 0.0
      %1648 = vadd.xlane.f32.xlu0 %v1647
      %v1649 = vpop.xlane.xlu0 %1648
      %v1650 = vsel %vm635, %v1617, 0.0
      %1651 = vadd.xlane.f32.xlu0 %v1650
      %v1652 = vpop.xlane.xlu0 %1651
      %v1653 = vsel %vm635, %v1618, 0.0
      %1654 = vadd.xlane.f32.xlu0 %v1653
      %v1655 = vpop.xlane.xlu0 %1654
      %v1656 = vsel %vm635, %v1619, 0.0
      %1657 = vadd.xlane.f32.xlu0 %v1656
      %v1658 = vpop.xlane.xlu0 %1657
      %v1659 = vmul.f32 %v1622, %v1580
      %v1660 = vmul.f32 %v1625, %v1580
      %v1661 = vmul.f32 %v1628, %v1580
      %v1662 = vmul.f32 %v1631, %v1580
      %v1663 = vmul.f32 %v1634, %v1580
      %v1664 = vmul.f32 %v1637, %v1580
      %v1665 = vmul.f32 %v1640, %v1580
      %v1666 = vmul.f32 %v1643, %v1580
      %v1667 = vmul.f32 %v1646, %v1580
      %v1668 = vmul.f32 %v1649, %v1580
      %v1669 = vmul.f32 %v1652, %v1580
      %v1670 = vmul.f32 %v1655, %v1580
      %v1671 = vmul.f32 %v1658, %v1580
      %v1672 = vadd.f32 %v1659, 1e-05
      %v1673 = vadd.f32 %v1660, 1e-05
      %v1674 = vadd.f32 %v1661, 1e-05
      %v1675 = vadd.f32 %v1662, 1e-05
      %v1676 = vadd.f32 %v1663, 1e-05
      %v1677 = vadd.f32 %v1664, 1e-05
      %v1678 = vadd.f32 %v1665, 1e-05
      %v1679 = vadd.f32 %v1666, 1e-05
      %v1680 = vadd.f32 %v1667, 1e-05
      %v1681 = vadd.f32 %v1668, 1e-05
      %v1682 = vadd.f32 %v1669, 1e-05
      %v1683 = vadd.f32 %v1670, 1e-05
      %v1684 = vadd.f32 %v1671, 1e-05
      %v1685 = vrsqrt.pop %v1672
      %v1686 = vmul.f32 %v1685, %v1672
      %v1687 = vmul.f32 %v1686, %v1685
      %v1688 = vmul.f32 0.5, %v1687
      %v1689 = vsub.f32 1.5, %v1688
      %v1690 = vmul.f32 %v1685, %v1689
      %vm1691 = vweird.f32 %v1672
      %vm1692 = vweird.f32 %v1685
      %vm1693 = vmor %vm1691, %vm1692
      %v1694 = vsel %vm1693, %v1685, %v1690
      %v1695 = vrsqrt.pop %v1673
      %v1696 = vmul.f32 %v1695, %v1673
      %v1697 = vmul.f32 %v1696, %v1695
      %v1698 = vmul.f32 0.5, %v1697
      %v1699 = vsub.f32 1.5, %v1698
      %v1700 = vmul.f32 %v1695, %v1699
      %vm1701 = vweird.f32 %v1673
      %vm1702 = vweird.f32 %v1695
      %vm1703 = vmor %vm1701, %vm1702
      %v1704 = vsel %vm1703, %v1695, %v1700
      %v1705 = vrsqrt.pop %v1674
      %v1706 = vmul.f32 %v1705, %v1674
      %v1707 = vmul.f32 %v1706, %v1705
      %v1708 = vmul.f32 0.5, %v1707
      %v1709 = vsub.f32 1.5, %v1708
      %v1710 = vmul.f32 %v1705, %v1709
      %vm1711 = vweird.f32 %v1674
      %vm1712 = vweird.f32 %v1705
      %vm1713 = vmor %vm1711, %vm1712
      %v1714 = vsel %vm1713, %v1705, %v1710
      %v1715 = vrsqrt.pop %v1675
      %v1716 = vmul.f32 %v1715, %v1675
      %v1717 = vmul.f32 %v1716, %v1715
      %v1718 = vmul.f32 0.5, %v1717
      %v1719 = vsub.f32 1.5, %v1718
      %v1720 = vmul.f32 %v1715, %v1719
      %vm1721 = vweird.f32 %v1675
      %vm1722 = vweird.f32 %v1715
      %vm1723 = vmor %vm1721, %vm1722
      %v1724 = vsel %vm1723, %v1715, %v1720
      %v1725 = vrsqrt.pop %v1676
      %v1726 = vmul.f32 %v1725, %v1676
      %v1727 = vmul.f32 %v1726, %v1725
      %v1728 = vmul.f32 0.5, %v1727
      %v1729 = vsub.f32 1.5, %v1728
      %v1730 = vmul.f32 %v1725, %v1729
      %vm1731 = vweird.f32 %v1676
      %vm1732 = vweird.f32 %v1725
      %vm1733 = vmor %vm1731, %vm1732
      %v1734 = vsel %vm1733, %v1725, %v1730
      %v1735 = vrsqrt.pop %v1677
      %v1736 = vmul.f32 %v1735, %v1677
      %v1737 = vmul.f32 %v1736, %v1735
      %v1738 = vmul.f32 0.5, %v1737
      %v1739 = vsub.f32 1.5, %v1738
      %v1740 = vmul.f32 %v1735, %v1739
      %vm1741 = vweird.f32 %v1677
      %vm1742 = vweird.f32 %v1735
      %vm1743 = vmor %vm1741, %vm1742
      %v1744 = vsel %vm1743, %v1735, %v1740
      %v1745 = vrsqrt.pop %v1678
      %v1746 = vmul.f32 %v1745, %v1678
      %v1747 = vmul.f32 %v1746, %v1745
      %v1748 = vmul.f32 0.5, %v1747
      %v1749 = vsub.f32 1.5, %v1748
      %v1750 = vmul.f32 %v1745, %v1749
      %vm1751 = vweird.f32 %v1678
      %vm1752 = vweird.f32 %v1745
      %vm1753 = vmor %vm1751, %vm1752
      %v1754 = vsel %vm1753, %v1745, %v1750
      %v1755 = vrsqrt.pop %v1679
      %v1756 = vmul.f32 %v1755, %v1679
      %v1757 = vmul.f32 %v1756, %v1755
      %v1758 = vmul.f32 0.5, %v1757
      %v1759 = vsub.f32 1.5, %v1758
      %v1760 = vmul.f32 %v1755, %v1759
      %vm1761 = vweird.f32 %v1679
      %vm1762 = vweird.f32 %v1755
      %vm1763 = vmor %vm1761, %vm1762
      %v1764 = vsel %vm1763, %v1755, %v1760
      %v1765 = vrsqrt.pop %v1680
      %v1766 = vmul.f32 %v1765, %v1680
      %v1767 = vmul.f32 %v1766, %v1765
      %v1768 = vmul.f32 0.5, %v1767
      %v1769 = vsub.f32 1.5, %v1768
      %v1770 = vmul.f32 %v1765, %v1769
      %vm1771 = vweird.f32 %v1680
      %vm1772 = vweird.f32 %v1765
      %vm1773 = vmor %vm1771, %vm1772
      %v1774 = vsel %vm1773, %v1765, %v1770
      %v1775 = vrsqrt.pop %v1681
      %v1776 = vmul.f32 %v1775, %v1681
      %v1777 = vmul.f32 %v1776, %v1775
      %v1778 = vmul.f32 0.5, %v1777
      %v1779 = vsub.f32 1.5, %v1778
      %v1780 = vmul.f32 %v1775, %v1779
      %vm1781 = vweird.f32 %v1681
      %vm1782 = vweird.f32 %v1775
      %vm1783 = vmor %vm1781, %vm1782
      %v1784 = vsel %vm1783, %v1775, %v1780
      %v1785 = vrsqrt.pop %v1682
      %v1786 = vmul.f32 %v1785, %v1682
      %v1787 = vmul.f32 %v1786, %v1785
      %v1788 = vmul.f32 0.5, %v1787
      %v1789 = vsub.f32 1.5, %v1788
      %v1790 = vmul.f32 %v1785, %v1789
      %vm1791 = vweird.f32 %v1682
      %vm1792 = vweird.f32 %v1785
      %vm1793 = vmor %vm1791, %vm1792
      %v1794 = vsel %vm1793, %v1785, %v1790
      %v1795 = vrsqrt.pop %v1683
      %v1796 = vmul.f32 %v1795, %v1683
      %v1797 = vmul.f32 %v1796, %v1795
      %v1798 = vmul.f32 0.5, %v1797
      %v1799 = vsub.f32 1.5, %v1798
      %v1800 = vmul.f32 %v1795, %v1799
      %vm1801 = vweird.f32 %v1683
      %vm1802 = vweird.f32 %v1795
      %vm1803 = vmor %vm1801, %vm1802
      %v1804 = vsel %vm1803, %v1795, %v1800
      %v1805 = vrsqrt.pop %v1684
      %v1806 = vmul.f32 %v1805, %v1684
      %v1807 = vmul.f32 %v1806, %v1805
      %v1808 = vmul.f32 0.5, %v1807
      %v1809 = vsub.f32 1.5, %v1808
      %v1810 = vmul.f32 %v1805, %v1809
      %vm1811 = vweird.f32 %v1684
      %vm1812 = vweird.f32 %v1805
      %vm1813 = vmor %vm1811, %vm1812
      %v1814 = vsel %vm1813, %v1805, %v1810
      %v1815 = vmul.f32 %v1594, %v1694
      %v1816 = vmul.f32 %v1595, %v1704
      %v1817 = vmul.f32 %v1596, %v1714
      %v1818 = vmul.f32 %v1597, %v1724
      %v1819 = vmul.f32 %v1598, %v1734
      %v1820 = vmul.f32 %v1599, %v1744
      %v1821 = vmul.f32 %v1600, %v1754
      %v1822 = vmul.f32 %v1601, %v1764
      %v1823 = vmul.f32 %v1602, %v1774
      %v1824 = vmul.f32 %v1603, %v1784
      %v1825 = vmul.f32 %v1604, %v1794
      %v1826 = vmul.f32 %v1605, %v1804
      %v1827 = vmul.f32 %v1606, %v1814
      %v1829 = vperm.slane %v1533, 0
      %v1831 = vmul.f32 %v1815, %v1829
      %v1832 = vmul.f32 %v1816, %v1829
      %v1833 = vmul.f32 %v1817, %v1829
      %v1834 = vmul.f32 %v1818, %v1829
      %v1835 = vmul.f32 %v1819, %v1829
      %v1836 = vmul.f32 %v1820, %v1829
      %v1837 = vmul.f32 %v1821, %v1829
      %v1838 = vmul.f32 %v1822, %v1829
      %v1839 = vmul.f32 %v1823, %v1829
      %v1840 = vmul.f32 %v1824, %v1829
      %v1841 = vmul.f32 %v1825, %v1829
      %v1842 = vmul.f32 %v1826, %v1829
      %v1843 = vmul.f32 %v1827, %v1829
      %v1845 = vperm.slane %v1534, 0
      %v1847 = vadd.f32 %v1831, %v1845
      %v1848 = vadd.f32 %v1832, %v1845
      %v1849 = vadd.f32 %v1833, %v1845
      %v1850 = vadd.f32 %v1834, %v1845
      %v1851 = vadd.f32 %v1835, %v1845
      %v1852 = vadd.f32 %v1836, %v1845
      %v1853 = vadd.f32 %v1837, %v1845
      %v1854 = vadd.f32 %v1838, %v1845
      %v1855 = vadd.f32 %v1839, %v1845
      %v1856 = vadd.f32 %v1840, %v1845
      %v1857 = vadd.f32 %v1841, %v1845
      %v1858 = vadd.f32 %v1842, %v1845
      %v1859 = vadd.f32 %v1843, %v1845
      %v1860 = vadd.f32 %v1847, %v548
      %v1861 = vadd.f32 %v1848, %v551
      %v1862 = vadd.f32 %v1849, %v554
      %v1863 = vadd.f32 %v1850, %v557
      %v1864 = vadd.f32 %v1851, %v560
      %v1865 = vadd.f32 %v1852, %v563
      %v1866 = vadd.f32 %v1853, %v566
      %v1867 = vadd.f32 %v1854, %v569
      %v1868 = vadd.f32 %v1855, %v572
      %v1869 = vadd.f32 %v1856, %v575
      %v1870 = vadd.f32 %v1857, %v578
      %v1871 = vadd.f32 %v1858, %v581
      %v1872 = vadd.f32 %v1859, %v584
      %s1873 = scalar_lea.vmem %s3, 128
      %v1874 = vld [vmem:[%s1873] sm:$0xff]
      %v1875 = vld [vmem:[%s1873 + $0x8] sm:$0xff]
      %v1876 = vld [vmem:[%s1873 + $0x10] sm:$0xff]
      %v1877 = vld [vmem:[%s1873 + $0x18] sm:$0xff]
      %v1878 = vld [vmem:[%s1873 + $0x20] sm:$0xff]
      %v1879 = vld [vmem:[%s1873 + $0x28] sm:$0xff]
      %v1880 = vld [vmem:[%s1873 + $0x30] sm:$0xff]
      %v1881 = vld [vmem:[%s1873 + $0x38] sm:$0xff]
      %v1882 = vld [vmem:[%s1873 + $0x40] sm:$0xff]
      %v1883 = vld [vmem:[%s1873 + $0x48] sm:$0xff]
      %v1884 = vld [vmem:[%s1873 + $0x50] sm:$0xff]
      %v1885 = vld [vmem:[%s1873 + $0x58] sm:$0xff]
      %v1886 = vld [vmem:[%s1873 + $0x60] sm:$0xff]
      %v1887 = vld [vmem:[%s1873 + $0x68] sm:$0xff]
      %v1888 = vld [vmem:[%s1873 + $0x70] sm:$0xff]
      %v1889 = vld [vmem:[%s1873 + $0x78] sm:$0xff]
      %s1890 = scalar_lea.vmem %s4, 2
      %v1891 = vld [vmem:[%s1890] sm:$0x3]
      %v1893 = vperm.slane %v1891, 0
      %v1894 = vperm.slane %v1891, 1
      %v1898 = vsel %vm635, %v1860, 0
      %v1901 = vsel %vm635, %v1861, 0
      %v1904 = vsel %vm635, %v1862, 0
      %v1907 = vsel %vm635, %v1863, 0
      %v1910 = vsel %vm635, %v1864, 0
      %v1913 = vsel %vm635, %v1865, 0
      %v1916 = vsel %vm635, %v1866, 0
      %v1919 = vsel %vm635, %v1867, 0
      %v1922 = vsel %vm635, %v1868, 0
      %v1925 = vsel %vm635, %v1869, 0
      %v1928 = vsel %vm635, %v1870, 0
      %v1931 = vsel %vm635, %v1871, 0
      %v1934 = vsel %vm635, %v1872, 0
      %1936 = vmatpush.msra.mxu0 0.0
      %1937 = vmatpush.msra.mxu0 0.0
      %1938 = vmatpush.msra.mxu0 0.0
      %1939 = vmatpush.msra.mxu0 0.0
      %1940 = vmatpush.msra.mxu0 0.0
      %1941 = vmatpush.msra.mxu0 0.0
      %1942 = vmatpush.msra.mxu0 0.0
      %1943 = vmatpush.msra.mxu0 0.0
      %1944 = vmatpush.msra.mxu0 %v1888
      %1945 = vmatpush.msra.mxu0 %v1886
      %1946 = vmatpush.msra.mxu0 %v1884
      %1947 = vmatpush.msra.mxu0 %v1882
      %1948 = vmatpush.msra.mxu0 %v1880
      %1949 = vmatpush.msra.mxu0 %v1878
      %1950 = vmatpush.msra.mxu0 %v1876
      %1951 = vmatpush.msra.mxu0 %v1874
      %1952 = vmatmul.f32.gmra.mxu0 %v1898
      %v1953 = vpop.f32.mrf.mxu0
      %v1954 = vadd.f32 %v1893, %v1953
      %1955 = vmatmul.f32.gmra.mxu0 %v1901
      %v1956 = vpop.f32.mrf.mxu0
      %v1957 = vadd.f32 %v1893, %v1956
      %1958 = vmatmul.f32.gmra.mxu0 %v1904
      %v1959 = vpop.f32.mrf.mxu0
      %v1960 = vadd.f32 %v1893, %v1959
      %1961 = vmatmul.f32.gmra.mxu0 %v1907
      %v1962 = vpop.f32.mrf.mxu0
      %v1963 = vadd.f32 %v1893, %v1962
      %1964 = vmatmul.f32.gmra.mxu0 %v1910
      %v1965 = vpop.f32.mrf.mxu0
      %v1966 = vadd.f32 %v1893, %v1965
      %1967 = vmatmul.f32.gmra.mxu0 %v1913
      %v1968 = vpop.f32.mrf.mxu0
      %v1969 = vadd.f32 %v1893, %v1968
      %1970 = vmatmul.f32.gmra.mxu0 %v1916
      %v1971 = vpop.f32.mrf.mxu0
      %v1972 = vadd.f32 %v1893, %v1971
      %1973 = vmatmul.f32.gmra.mxu0 %v1919
      %v1974 = vpop.f32.mrf.mxu0
      %v1975 = vadd.f32 %v1893, %v1974
      %1976 = vmatmul.f32.gmra.mxu0 %v1922
      %v1977 = vpop.f32.mrf.mxu0
      %v1978 = vadd.f32 %v1893, %v1977
      %1979 = vmatmul.f32.gmra.mxu0 %v1925
      %v1980 = vpop.f32.mrf.mxu0
      %v1981 = vadd.f32 %v1893, %v1980
      %1982 = vmatmul.f32.gmra.mxu0 %v1928
      %v1983 = vpop.f32.mrf.mxu0
      %v1984 = vadd.f32 %v1893, %v1983
      %1985 = vmatmul.f32.gmra.mxu0 %v1931
      %v1986 = vpop.f32.mrf.mxu0
      %v1987 = vadd.f32 %v1893, %v1986
      %1988 = vmatmul.f32.gmra.mxu0 %v1934
      %v1989 = vpop.f32.mrf.mxu0
      %v1990 = vadd.f32 %v1893, %v1989
      %1991 = vdwg.mxu0
      %1992 = vmatpush.msra.mxu0 0.0
      %1993 = vmatpush.msra.mxu0 0.0
      %1994 = vmatpush.msra.mxu0 0.0
      %1995 = vmatpush.msra.mxu0 0.0
      %1996 = vmatpush.msra.mxu0 0.0
      %1997 = vmatpush.msra.mxu0 0.0
      %1998 = vmatpush.msra.mxu0 0.0
      %1999 = vmatpush.msra.mxu0 0.0
      %2000 = vmatpush.msra.mxu0 %v1889
      %2001 = vmatpush.msra.mxu0 %v1887
      %2002 = vmatpush.msra.mxu0 %v1885
      %2003 = vmatpush.msra.mxu0 %v1883
      %2004 = vmatpush.msra.mxu0 %v1881
      %2005 = vmatpush.msra.mxu0 %v1879
      %2006 = vmatpush.msra.mxu0 %v1877
      %2007 = vmatpush.msra.mxu0 %v1875
      %2008 = vmatmul.f32.gmra.mxu0 %v1898
      %v2009 = vpop.f32.mrf.mxu0
      %v2010 = vadd.f32 %v1894, %v2009
      %2011 = vmatmul.f32.gmra.mxu0 %v1901
      %v2012 = vpop.f32.mrf.mxu0
      %v2013 = vadd.f32 %v1894, %v2012
      %2014 = vmatmul.f32.gmra.mxu0 %v1904
      %v2015 = vpop.f32.mrf.mxu0
      %v2016 = vadd.f32 %v1894, %v2015
      %2017 = vmatmul.f32.gmra.mxu0 %v1907
      %v2018 = vpop.f32.mrf.mxu0
      %v2019 = vadd.f32 %v1894, %v2018
      %2020 = vmatmul.f32.gmra.mxu0 %v1910
      %v2021 = vpop.f32.mrf.mxu0
      %v2022 = vadd.f32 %v1894, %v2021
      %2023 = vmatmul.f32.gmra.mxu0 %v1913
      %v2024 = vpop.f32.mrf.mxu0
      %v2025 = vadd.f32 %v1894, %v2024
      %2026 = vmatmul.f32.gmra.mxu0 %v1916
      %v2027 = vpop.f32.mrf.mxu0
      %v2028 = vadd.f32 %v1894, %v2027
      %2029 = vmatmul.f32.gmra.mxu0 %v1919
      %v2030 = vpop.f32.mrf.mxu0
      %v2031 = vadd.f32 %v1894, %v2030
      %2032 = vmatmul.f32.gmra.mxu0 %v1922
      %v2033 = vpop.f32.mrf.mxu0
      %v2034 = vadd.f32 %v1894, %v2033
      %2035 = vmatmul.f32.gmra.mxu0 %v1925
      %v2036 = vpop.f32.mrf.mxu0
      %v2037 = vadd.f32 %v1894, %v2036
      %2038 = vmatmul.f32.gmra.mxu0 %v1928
      %v2039 = vpop.f32.mrf.mxu0
      %v2040 = vadd.f32 %v1894, %v2039
      %2041 = vmatmul.f32.gmra.mxu0 %v1931
      %v2042 = vpop.f32.mrf.mxu0
      %v2043 = vadd.f32 %v1894, %v2042
      %2044 = vmatmul.f32.gmra.mxu0 %v1934
      %v2045 = vpop.f32.mrf.mxu0
      %v2046 = vadd.f32 %v1894, %v2045
      %2047 = vdwg.mxu0
      %v2048 = vmul.f32 %v1954, 0.5
      %v2049 = vmul.f32 %v2010, 0.5
      %v2050 = vmul.f32 %v1957, 0.5
      %v2051 = vmul.f32 %v2013, 0.5
      %v2052 = vmul.f32 %v1960, 0.5
      %v2053 = vmul.f32 %v2016, 0.5
      %v2054 = vmul.f32 %v1963, 0.5
      %v2055 = vmul.f32 %v2019, 0.5
      %v2056 = vmul.f32 %v1966, 0.5
      %v2057 = vmul.f32 %v2022, 0.5
      %v2058 = vmul.f32 %v1969, 0.5
      %v2059 = vmul.f32 %v2025, 0.5
      %v2060 = vmul.f32 %v1972, 0.5
      %v2061 = vmul.f32 %v2028, 0.5
      %v2062 = vmul.f32 %v1975, 0.5
      %v2063 = vmul.f32 %v2031, 0.5
      %v2064 = vmul.f32 %v1978, 0.5
      %v2065 = vmul.f32 %v2034, 0.5
      %v2066 = vmul.f32 %v1981, 0.5
      %v2067 = vmul.f32 %v2037, 0.5
      %v2068 = vmul.f32 %v1984, 0.5
      %v2069 = vmul.f32 %v2040, 0.5
      %v2070 = vmul.f32 %v1987, 0.5
      %v2071 = vmul.f32 %v2043, 0.5
      %v2072 = vmul.f32 %v1990, 0.5
      %v2073 = vmul.f32 %v2046, 0.5
      %v2074 = vmul.f32 %v1954, 0.044715
      %v2075 = vmul.f32 %v2010, 0.044715
      %v2076 = vmul.f32 %v1957, 0.044715
      %v2077 = vmul.f32 %v2013, 0.044715
      %v2078 = vmul.f32 %v1960, 0.044715
      %v2079 = vmul.f32 %v2016, 0.044715
      %v2080 = vmul.f32 %v1963, 0.044715
      %v2081 = vmul.f32 %v2019, 0.044715
      %v2082 = vmul.f32 %v1966, 0.044715
      %v2083 = vmul.f32 %v2022, 0.044715
      %v2084 = vmul.f32 %v1969, 0.044715
      %v2085 = vmul.f32 %v2025, 0.044715
      %v2086 = vmul.f32 %v1972, 0.044715
      %v2087 = vmul.f32 %v2028, 0.044715
      %v2088 = vmul.f32 %v1975, 0.044715
      %v2089 = vmul.f32 %v2031, 0.044715
      %v2090 = vmul.f32 %v1978, 0.044715
      %v2091 = vmul.f32 %v2034, 0.044715
      %v2092 = vmul.f32 %v1981, 0.044715
      %v2093 = vmul.f32 %v2037, 0.044715
      %v2094 = vmul.f32 %v1984, 0.044715
      %v2095 = vmul.f32 %v2040, 0.044715
      %v2096 = vmul.f32 %v1987, 0.044715
      %v2097 = vmul.f32 %v2043, 0.044715
      %v2098 = vmul.f32 %v1990, 0.044715
      %v2099 = vmul.f32 %v2046, 0.044715
      %v2100 = vmul.f32 %v2074, %v1954
      %v2101 = vmul.f32 %v2075, %v2010
      %v2102 = vmul.f32 %v2076, %v1957
      %v2103 = vmul.f32 %v2077, %v2013
      %v2104 = vmul.f32 %v2078, %v1960
      %v2105 = vmul.f32 %v2079, %v2016
      %v2106 = vmul.f32 %v2080, %v1963
      %v2107 = vmul.f32 %v2081, %v2019
      %v2108 = vmul.f32 %v2082, %v1966
      %v2109 = vmul.f32 %v2083, %v2022
      %v2110 = vmul.f32 %v2084, %v1969
      %v2111 = vmul.f32 %v2085, %v2025
      %v2112 = vmul.f32 %v2086, %v1972
      %v2113 = vmul.f32 %v2087, %v2028
      %v2114 = vmul.f32 %v2088, %v1975
      %v2115 = vmul.f32 %v2089, %v2031
      %v2116 = vmul.f32 %v2090, %v1978
      %v2117 = vmul.f32 %v2091, %v2034
      %v2118 = vmul.f32 %v2092, %v1981
      %v2119 = vmul.f32 %v2093, %v2037
      %v2120 = vmul.f32 %v2094, %v1984
      %v2121 = vmul.f32 %v2095, %v2040
      %v2122 = vmul.f32 %v2096, %v1987
      %v2123 = vmul.f32 %v2097, %v2043
      %v2124 = vmul.f32 %v2098, %v1990
      %v2125 = vmul.f32 %v2099, %v2046
      %v2126 = vmul.f32 %v2100, %v1954
      %v2127 = vmul.f32 %v2101, %v2010
      %v2128 = vmul.f32 %v2102, %v1957
      %v2129 = vmul.f32 %v2103, %v2013
      %v2130 = vmul.f32 %v2104, %v1960
      %v2131 = vmul.f32 %v2105, %v2016
      %v2132 = vmul.f32 %v2106, %v1963
      %v2133 = vmul.f32 %v2107, %v2019
      %v2134 = vmul.f32 %v2108, %v1966
      %v2135 = vmul.f32 %v2109, %v2022
      %v2136 = vmul.f32 %v2110, %v1969
      %v2137 = vmul.f32 %v2111, %v2025
      %v2138 = vmul.f32 %v2112, %v1972
      %v2139 = vmul.f32 %v2113, %v2028
      %v2140 = vmul.f32 %v2114, %v1975
      %v2141 = vmul.f32 %v2115, %v2031
      %v2142 = vmul.f32 %v2116, %v1978
      %v2143 = vmul.f32 %v2117, %v2034
      %v2144 = vmul.f32 %v2118, %v1981
      %v2145 = vmul.f32 %v2119, %v2037
      %v2146 = vmul.f32 %v2120, %v1984
      %v2147 = vmul.f32 %v2121, %v2040
      %v2148 = vmul.f32 %v2122, %v1987
      %v2149 = vmul.f32 %v2123, %v2043
      %v2150 = vmul.f32 %v2124, %v1990
      %v2151 = vmul.f32 %v2125, %v2046
      %v2152 = vadd.f32 %v1954, %v2126
      %v2153 = vadd.f32 %v2010, %v2127
      %v2154 = vadd.f32 %v1957, %v2128
      %v2155 = vadd.f32 %v2013, %v2129
      %v2156 = vadd.f32 %v1960, %v2130
      %v2157 = vadd.f32 %v2016, %v2131
      %v2158 = vadd.f32 %v1963, %v2132
      %v2159 = vadd.f32 %v2019, %v2133
      %v2160 = vadd.f32 %v1966, %v2134
      %v2161 = vadd.f32 %v2022, %v2135
      %v2162 = vadd.f32 %v1969, %v2136
      %v2163 = vadd.f32 %v2025, %v2137
      %v2164 = vadd.f32 %v1972, %v2138
      %v2165 = vadd.f32 %v2028, %v2139
      %v2166 = vadd.f32 %v1975, %v2140
      %v2167 = vadd.f32 %v2031, %v2141
      %v2168 = vadd.f32 %v1978, %v2142
      %v2169 = vadd.f32 %v2034, %v2143
      %v2170 = vadd.f32 %v1981, %v2144
      %v2171 = vadd.f32 %v2037, %v2145
      %v2172 = vadd.f32 %v1984, %v2146
      %v2173 = vadd.f32 %v2040, %v2147
      %v2174 = vadd.f32 %v1987, %v2148
      %v2175 = vadd.f32 %v2043, %v2149
      %v2176 = vadd.f32 %v1990, %v2150
      %v2177 = vadd.f32 %v2046, %v2151
      %v2178 = vmul.f32 %v2152, 0.7978846
      %v2179 = vmul.f32 %v2153, 0.7978846
      %v2180 = vmul.f32 %v2154, 0.7978846
      %v2181 = vmul.f32 %v2155, 0.7978846
      %v2182 = vmul.f32 %v2156, 0.7978846
      %v2183 = vmul.f32 %v2157, 0.7978846
      %v2184 = vmul.f32 %v2158, 0.7978846
      %v2185 = vmul.f32 %v2159, 0.7978846
      %v2186 = vmul.f32 %v2160, 0.7978846
      %v2187 = vmul.f32 %v2161, 0.7978846
      %v2188 = vmul.f32 %v2162, 0.7978846
      %v2189 = vmul.f32 %v2163, 0.7978846
      %v2190 = vmul.f32 %v2164, 0.7978846
      %v2191 = vmul.f32 %v2165, 0.7978846
      %v2192 = vmul.f32 %v2166, 0.7978846
      %v2193 = vmul.f32 %v2167, 0.7978846
      %v2194 = vmul.f32 %v2168, 0.7978846
      %v2195 = vmul.f32 %v2169, 0.7978846
      %v2196 = vmul.f32 %v2170, 0.7978846
      %v2197 = vmul.f32 %v2171, 0.7978846
      %v2198 = vmul.f32 %v2172, 0.7978846
      %v2199 = vmul.f32 %v2173, 0.7978846
      %v2200 = vmul.f32 %v2174, 0.7978846
      %v2201 = vmul.f32 %v2175, 0.7978846
      %v2202 = vmul.f32 %v2176, 0.7978846
      %v2203 = vmul.f32 %v2177, 0.7978846
      %v2204 = vtanh.pop %v2178
      %v2205 = vtanh.pop %v2179
      %v2206 = vtanh.pop %v2180
      %v2207 = vtanh.pop %v2181
      %v2208 = vtanh.pop %v2182
      %v2209 = vtanh.pop %v2183
      %v2210 = vtanh.pop %v2184
      %v2211 = vtanh.pop %v2185
      %v2212 = vtanh.pop %v2186
      %v2213 = vtanh.pop %v2187
      %v2214 = vtanh.pop %v2188
      %v2215 = vtanh.pop %v2189
      %v2216 = vtanh.pop %v2190
      %v2217 = vtanh.pop %v2191
      %v2218 = vtanh.pop %v2192
      %v2219 = vtanh.pop %v2193
      %v2220 = vtanh.pop %v2194
      %v2221 = vtanh.pop %v2195
      %v2222 = vtanh.pop %v2196
      %v2223 = vtanh.pop %v2197
      %v2224 = vtanh.pop %v2198
      %v2225 = vtanh.pop %v2199
      %v2226 = vtanh.pop %v2200
      %v2227 = vtanh.pop %v2201
      %v2228 = vtanh.pop %v2202
      %v2229 = vtanh.pop %v2203
      %v2230 = vadd.f32 %v2204, 1.0
      %v2231 = vadd.f32 %v2205, 1.0
      %v2232 = vadd.f32 %v2206, 1.0
      %v2233 = vadd.f32 %v2207, 1.0
      %v2234 = vadd.f32 %v2208, 1.0
      %v2235 = vadd.f32 %v2209, 1.0
      %v2236 = vadd.f32 %v2210, 1.0
      %v2237 = vadd.f32 %v2211, 1.0
      %v2238 = vadd.f32 %v2212, 1.0
      %v2239 = vadd.f32 %v2213, 1.0
      %v2240 = vadd.f32 %v2214, 1.0
      %v2241 = vadd.f32 %v2215, 1.0
      %v2242 = vadd.f32 %v2216, 1.0
      %v2243 = vadd.f32 %v2217, 1.0
      %v2244 = vadd.f32 %v2218, 1.0
      %v2245 = vadd.f32 %v2219, 1.0
      %v2246 = vadd.f32 %v2220, 1.0
      %v2247 = vadd.f32 %v2221, 1.0
      %v2248 = vadd.f32 %v2222, 1.0
      %v2249 = vadd.f32 %v2223, 1.0
      %v2250 = vadd.f32 %v2224, 1.0
      %v2251 = vadd.f32 %v2225, 1.0
      %v2252 = vadd.f32 %v2226, 1.0
      %v2253 = vadd.f32 %v2227, 1.0
      %v2254 = vadd.f32 %v2228, 1.0
      %v2255 = vadd.f32 %v2229, 1.0
      %v2256 = vmul.f32 %v2048, %v2230
      %v2257 = vmul.f32 %v2049, %v2231
      %v2258 = vmul.f32 %v2050, %v2232
      %v2259 = vmul.f32 %v2051, %v2233
      %v2260 = vmul.f32 %v2052, %v2234
      %v2261 = vmul.f32 %v2053, %v2235
      %v2262 = vmul.f32 %v2054, %v2236
      %v2263 = vmul.f32 %v2055, %v2237
      %v2264 = vmul.f32 %v2056, %v2238
      %v2265 = vmul.f32 %v2057, %v2239
      %v2266 = vmul.f32 %v2058, %v2240
      %v2267 = vmul.f32 %v2059, %v2241
      %v2268 = vmul.f32 %v2060, %v2242
      %v2269 = vmul.f32 %v2061, %v2243
      %v2270 = vmul.f32 %v2062, %v2244
      %v2271 = vmul.f32 %v2063, %v2245
      %v2272 = vmul.f32 %v2064, %v2246
      %v2273 = vmul.f32 %v2065, %v2247
      %v2274 = vmul.f32 %v2066, %v2248
      %v2275 = vmul.f32 %v2067, %v2249
      %v2276 = vmul.f32 %v2068, %v2250
      %v2277 = vmul.f32 %v2069, %v2251
      %v2278 = vmul.f32 %v2070, %v2252
      %v2279 = vmul.f32 %v2071, %v2253
      %v2280 = vmul.f32 %v2072, %v2254
      %v2281 = vmul.f32 %v2073, %v2255
      %s2282 = scalar_lea.vmem %s5, 1
      %v2283 = vld [vmem:[%s2282] sm:$0x1]
      %s2284 = scalar_lea.vmem %s6, 1
      %v2285 = vld [vmem:[%s2284] sm:$0x1]
      %2286 = vadd.xlane.f32.xlu0 %v2257
      %v2287 = vpop.xlane.xlu0 %2286
      %2288 = vadd.xlane.f32.xlu0 %v2259
      %v2289 = vpop.xlane.xlu0 %2288
      %2290 = vadd.xlane.f32.xlu0 %v2261
      %v2291 = vpop.xlane.xlu0 %2290
      %2292 = vadd.xlane.f32.xlu0 %v2263
      %v2293 = vpop.xlane.xlu0 %2292
      %2294 = vadd.xlane.f32.xlu0 %v2265
      %v2295 = vpop.xlane.xlu0 %2294
      %2296 = vadd.xlane.f32.xlu0 %v2267
      %v2297 = vpop.xlane.xlu0 %2296
      %2298 = vadd.xlane.f32.xlu0 %v2269
      %v2299 = vpop.xlane.xlu0 %2298
      %2300 = vadd.xlane.f32.xlu0 %v2271
      %v2301 = vpop.xlane.xlu0 %2300
      %2302 = vadd.xlane.f32.xlu0 %v2273
      %v2303 = vpop.xlane.xlu0 %2302
      %2304 = vadd.xlane.f32.xlu0 %v2275
      %v2305 = vpop.xlane.xlu0 %2304
      %2306 = vadd.xlane.f32.xlu0 %v2277
      %v2307 = vpop.xlane.xlu0 %2306
      %2308 = vadd.xlane.f32.xlu0 %v2279
      %v2309 = vpop.xlane.xlu0 %2308
      %2310 = vadd.xlane.f32.xlu0 %v2281
      %v2311 = vpop.xlane.xlu0 %2310
      %v2312 = vmul.f32 %v2287, %v1055
      %v2313 = vmul.f32 %v2289, %v1055
      %v2314 = vmul.f32 %v2291, %v1055
      %v2315 = vmul.f32 %v2293, %v1055
      %v2316 = vmul.f32 %v2295, %v1055
      %v2317 = vmul.f32 %v2297, %v1055
      %v2318 = vmul.f32 %v2299, %v1055
      %v2319 = vmul.f32 %v2301, %v1055
      %v2320 = vmul.f32 %v2303, %v1055
      %v2321 = vmul.f32 %v2305, %v1055
      %v2322 = vmul.f32 %v2307, %v1055
      %v2323 = vmul.f32 %v2309, %v1055
      %v2324 = vmul.f32 %v2311, %v1055
      %v2325 = vsub.f32 %v2257, %v2312
      %v2326 = vsub.f32 %v2259, %v2313
      %v2327 = vsub.f32 %v2261, %v2314
      %v2328 = vsub.f32 %v2263, %v2315
      %v2329 = vsub.f32 %v2265, %v2316
      %v2330 = vsub.f32 %v2267, %v2317
      %v2331 = vsub.f32 %v2269, %v2318
      %v2332 = vsub.f32 %v2271, %v2319
      %v2333 = vsub.f32 %v2273, %v2320
      %v2334 = vsub.f32 %v2275, %v2321
      %v2335 = vsub.f32 %v2277, %v2322
      %v2336 = vsub.f32 %v2279, %v2323
      %v2337 = vsub.f32 %v2281, %v2324
      %v2338 = vmul.f32 %v2325, %v2325
      %v2339 = vmul.f32 %v2326, %v2326
      %v2340 = vmul.f32 %v2327, %v2327
      %v2341 = vmul.f32 %v2328, %v2328
      %v2342 = vmul.f32 %v2329, %v2329
      %v2343 = vmul.f32 %v2330, %v2330
      %v2344 = vmul.f32 %v2331, %v2331
      %v2345 = vmul.f32 %v2332, %v2332
      %v2346 = vmul.f32 %v2333, %v2333
      %v2347 = vmul.f32 %v2334, %v2334
      %v2348 = vmul.f32 %v2335, %v2335
      %v2349 = vmul.f32 %v2336, %v2336
      %v2350 = vmul.f32 %v2337, %v2337
      %2351 = vadd.xlane.f32.xlu0 %v2338
      %v2352 = vpop.xlane.xlu0 %2351
      %2353 = vadd.xlane.f32.xlu0 %v2339
      %v2354 = vpop.xlane.xlu0 %2353
      %2355 = vadd.xlane.f32.xlu0 %v2340
      %v2356 = vpop.xlane.xlu0 %2355
      %2357 = vadd.xlane.f32.xlu0 %v2341
      %v2358 = vpop.xlane.xlu0 %2357
      %2359 = vadd.xlane.f32.xlu0 %v2342
      %v2360 = vpop.xlane.xlu0 %2359
      %2361 = vadd.xlane.f32.xlu0 %v2343
      %v2362 = vpop.xlane.xlu0 %2361
      %2363 = vadd.xlane.f32.xlu0 %v2344
      %v2364 = vpop.xlane.xlu0 %2363
      %2365 = vadd.xlane.f32.xlu0 %v2345
      %v2366 = vpop.xlane.xlu0 %2365
      %2367 = vadd.xlane.f32.xlu0 %v2346
      %v2368 = vpop.xlane.xlu0 %2367
      %2369 = vadd.xlane.f32.xlu0 %v2347
      %v2370 = vpop.xlane.xlu0 %2369
      %2371 = vadd.xlane.f32.xlu0 %v2348
      %v2372 = vpop.xlane.xlu0 %2371
      %2373 = vadd.xlane.f32.xlu0 %v2349
      %v2374 = vpop.xlane.xlu0 %2373
      %2375 = vadd.xlane.f32.xlu0 %v2350
      %v2376 = vpop.xlane.xlu0 %2375
      %v2377 = vmul.f32 %v2352, %v1055
      %v2378 = vmul.f32 %v2354, %v1055
      %v2379 = vmul.f32 %v2356, %v1055
      %v2380 = vmul.f32 %v2358, %v1055
      %v2381 = vmul.f32 %v2360, %v1055
      %v2382 = vmul.f32 %v2362, %v1055
      %v2383 = vmul.f32 %v2364, %v1055
      %v2384 = vmul.f32 %v2366, %v1055
      %v2385 = vmul.f32 %v2368, %v1055
      %v2386 = vmul.f32 %v2370, %v1055
      %v2387 = vmul.f32 %v2372, %v1055
      %v2388 = vmul.f32 %v2374, %v1055
      %v2389 = vmul.f32 %v2376, %v1055
      %v2390 = vadd.f32 %v2377, 1e-05
      %v2391 = vadd.f32 %v2378, 1e-05
      %v2392 = vadd.f32 %v2379, 1e-05
      %v2393 = vadd.f32 %v2380, 1e-05
      %v2394 = vadd.f32 %v2381, 1e-05
      %v2395 = vadd.f32 %v2382, 1e-05
      %v2396 = vadd.f32 %v2383, 1e-05
      %v2397 = vadd.f32 %v2384, 1e-05
      %v2398 = vadd.f32 %v2385, 1e-05
      %v2399 = vadd.f32 %v2386, 1e-05
      %v2400 = vadd.f32 %v2387, 1e-05
      %v2401 = vadd.f32 %v2388, 1e-05
      %v2402 = vadd.f32 %v2389, 1e-05
      %v2403 = vrsqrt.pop %v2390
      %v2404 = vmul.f32 %v2403, %v2390
      %v2405 = vmul.f32 %v2404, %v2403
      %v2406 = vmul.f32 0.5, %v2405
      %v2407 = vsub.f32 1.5, %v2406
      %v2408 = vmul.f32 %v2403, %v2407
      %vm2409 = vweird.f32 %v2390
      %vm2410 = vweird.f32 %v2403
      %vm2411 = vmor %vm2409, %vm2410
      %v2412 = vsel %vm2411, %v2403, %v2408
      %v2413 = vrsqrt.pop %v2391
      %v2414 = vmul.f32 %v2413, %v2391
      %v2415 = vmul.f32 %v2414, %v2413
      %v2416 = vmul.f32 0.5, %v2415
      %v2417 = vsub.f32 1.5, %v2416
      %v2418 = vmul.f32 %v2413, %v2417
      %vm2419 = vweird.f32 %v2391
      %vm2420 = vweird.f32 %v2413
      %vm2421 = vmor %vm2419, %vm2420
      %v2422 = vsel %vm2421, %v2413, %v2418
      %v2423 = vrsqrt.pop %v2392
      %v2424 = vmul.f32 %v2423, %v2392
      %v2425 = vmul.f32 %v2424, %v2423
      %v2426 = vmul.f32 0.5, %v2425
      %v2427 = vsub.f32 1.5, %v2426
      %v2428 = vmul.f32 %v2423, %v2427
      %vm2429 = vweird.f32 %v2392
      %vm2430 = vweird.f32 %v2423
      %vm2431 = vmor %vm2429, %vm2430
      %v2432 = vsel %vm2431, %v2423, %v2428
      %v2433 = vrsqrt.pop %v2393
      %v2434 = vmul.f32 %v2433, %v2393
      %v2435 = vmul.f32 %v2434, %v2433
      %v2436 = vmul.f32 0.5, %v2435
      %v2437 = vsub.f32 1.5, %v2436
      %v2438 = vmul.f32 %v2433, %v2437
      %vm2439 = vweird.f32 %v2393
      %vm2440 = vweird.f32 %v2433
      %vm2441 = vmor %vm2439, %vm2440
      %v2442 = vsel %vm2441, %v2433, %v2438
      %v2443 = vrsqrt.pop %v2394
      %v2444 = vmul.f32 %v2443, %v2394
      %v2445 = vmul.f32 %v2444, %v2443
      %v2446 = vmul.f32 0.5, %v2445
      %v2447 = vsub.f32 1.5, %v2446
      %v2448 = vmul.f32 %v2443, %v2447
      %vm2449 = vweird.f32 %v2394
      %vm2450 = vweird.f32 %v2443
      %vm2451 = vmor %vm2449, %vm2450
      %v2452 = vsel %vm2451, %v2443, %v2448
      %v2453 = vrsqrt.pop %v2395
      %v2454 = vmul.f32 %v2453, %v2395
      %v2455 = vmul.f32 %v2454, %v2453
      %v2456 = vmul.f32 0.5, %v2455
      %v2457 = vsub.f32 1.5, %v2456
      %v2458 = vmul.f32 %v2453, %v2457
      %vm2459 = vweird.f32 %v2395
      %vm2460 = vweird.f32 %v2453
      %vm2461 = vmor %vm2459, %vm2460
      %v2462 = vsel %vm2461, %v2453, %v2458
      %v2463 = vrsqrt.pop %v2396
      %v2464 = vmul.f32 %v2463, %v2396
      %v2465 = vmul.f32 %v2464, %v2463
      %v2466 = vmul.f32 0.5, %v2465
      %v2467 = vsub.f32 1.5, %v2466
      %v2468 = vmul.f32 %v2463, %v2467
      %vm2469 = vweird.f32 %v2396
      %vm2470 = vweird.f32 %v2463
      %vm2471 = vmor %vm2469, %vm2470
      %v2472 = vsel %vm2471, %v2463, %v2468
      %v2473 = vrsqrt.pop %v2397
      %v2474 = vmul.f32 %v2473, %v2397
      %v2475 = vmul.f32 %v2474, %v2473
      %v2476 = vmul.f32 0.5, %v2475
      %v2477 = vsub.f32 1.5, %v2476
      %v2478 = vmul.f32 %v2473, %v2477
      %vm2479 = vweird.f32 %v2397
      %vm2480 = vweird.f32 %v2473
      %vm2481 = vmor %vm2479, %vm2480
      %v2482 = vsel %vm2481, %v2473, %v2478
      %v2483 = vrsqrt.pop %v2398
      %v2484 = vmul.f32 %v2483, %v2398
      %v2485 = vmul.f32 %v2484, %v2483
      %v2486 = vmul.f32 0.5, %v2485
      %v2487 = vsub.f32 1.5, %v2486
      %v2488 = vmul.f32 %v2483, %v2487
      %vm2489 = vweird.f32 %v2398
      %vm2490 = vweird.f32 %v2483
      %vm2491 = vmor %vm2489, %vm2490
      %v2492 = vsel %vm2491, %v2483, %v2488
      %v2493 = vrsqrt.pop %v2399
      %v2494 = vmul.f32 %v2493, %v2399
      %v2495 = vmul.f32 %v2494, %v2493
      %v2496 = vmul.f32 0.5, %v2495
      %v2497 = vsub.f32 1.5, %v2496
      %v2498 = vmul.f32 %v2493, %v2497
      %vm2499 = vweird.f32 %v2399
      %vm2500 = vweird.f32 %v2493
      %vm2501 = vmor %vm2499, %vm2500
      %v2502 = vsel %vm2501, %v2493, %v2498
      %v2503 = vrsqrt.pop %v2400
      %v2504 = vmul.f32 %v2503, %v2400
      %v2505 = vmul.f32 %v2504, %v2503
      %v2506 = vmul.f32 0.5, %v2505
      %v2507 = vsub.f32 1.5, %v2506
      %v2508 = vmul.f32 %v2503, %v2507
      %vm2509 = vweird.f32 %v2400
      %vm2510 = vweird.f32 %v2503
      %vm2511 = vmor %vm2509, %vm2510
      %v2512 = vsel %vm2511, %v2503, %v2508
      %v2513 = vrsqrt.pop %v2401
      %v2514 = vmul.f32 %v2513, %v2401
      %v2515 = vmul.f32 %v2514, %v2513
      %v2516 = vmul.f32 0.5, %v2515
      %v2517 = vsub.f32 1.5, %v2516
      %v2518 = vmul.f32 %v2513, %v2517
      %vm2519 = vweird.f32 %v2401
      %vm2520 = vweird.f32 %v2513
      %vm2521 = vmor %vm2519, %vm2520
      %v2522 = vsel %vm2521, %v2513, %v2518
      %v2523 = vrsqrt.pop %v2402
      %v2524 = vmul.f32 %v2523, %v2402
      %v2525 = vmul.f32 %v2524, %v2523
      %v2526 = vmul.f32 0.5, %v2525
      %v2527 = vsub.f32 1.5, %v2526
      %v2528 = vmul.f32 %v2523, %v2527
      %vm2529 = vweird.f32 %v2402
      %vm2530 = vweird.f32 %v2523
      %vm2531 = vmor %vm2529, %vm2530
      %v2532 = vsel %vm2531, %v2523, %v2528
      %v2533 = vmul.f32 %v2325, %v2412
      %v2534 = vmul.f32 %v2326, %v2422
      %v2535 = vmul.f32 %v2327, %v2432
      %v2536 = vmul.f32 %v2328, %v2442
      %v2537 = vmul.f32 %v2329, %v2452
      %v2538 = vmul.f32 %v2330, %v2462
      %v2539 = vmul.f32 %v2331, %v2472
      %v2540 = vmul.f32 %v2332, %v2482
      %v2541 = vmul.f32 %v2333, %v2492
      %v2542 = vmul.f32 %v2334, %v2502
      %v2543 = vmul.f32 %v2335, %v2512
      %v2544 = vmul.f32 %v2336, %v2522
      %v2545 = vmul.f32 %v2337, %v2532
      %v2547 = vperm.slane %v2283, 0
      %v2549 = vmul.f32 %v2533, %v2547
      %v2550 = vmul.f32 %v2534, %v2547
      %v2551 = vmul.f32 %v2535, %v2547
      %v2552 = vmul.f32 %v2536, %v2547
      %v2553 = vmul.f32 %v2537, %v2547
      %v2554 = vmul.f32 %v2538, %v2547
      %v2555 = vmul.f32 %v2539, %v2547
      %v2556 = vmul.f32 %v2540, %v2547
      %v2557 = vmul.f32 %v2541, %v2547
      %v2558 = vmul.f32 %v2542, %v2547
      %v2559 = vmul.f32 %v2543, %v2547
      %v2560 = vmul.f32 %v2544, %v2547
      %v2561 = vmul.f32 %v2545, %v2547
      %v2563 = vperm.slane %v2285, 0
      %v2565 = vadd.f32 %v2549, %v2563
      %v2566 = vadd.f32 %v2550, %v2563
      %v2567 = vadd.f32 %v2551, %v2563
      %v2568 = vadd.f32 %v2552, %v2563
      %v2569 = vadd.f32 %v2553, %v2563
      %v2570 = vadd.f32 %v2554, %v2563
      %v2571 = vadd.f32 %v2555, %v2563
      %v2572 = vadd.f32 %v2556, %v2563
      %v2573 = vadd.f32 %v2557, %v2563
      %v2574 = vadd.f32 %v2558, %v2563
      %v2575 = vadd.f32 %v2559, %v2563
      %v2576 = vadd.f32 %v2560, %v2563
      %v2577 = vadd.f32 %v2561, %v2563
      %v2578 = vsel %vm600, 1.0, %v2565
      %v2579 = vsel %vm601, 1.0, %v2566
      %v2580 = vsel %vm602, 1.0, %v2567
      %v2581 = vsel %vm603, 1.0, %v2568
      %v2582 = vsel %vm604, 1.0, %v2569
      %v2583 = vsel %vm605, 1.0, %v2570
      %v2584 = vsel %vm606, 1.0, %v2571
      %v2585 = vsel %vm607, 1.0, %v2572
      %v2586 = vsel %vm608, 1.0, %v2573
      %v2587 = vsel %vm609, 1.0, %v2574
      %v2588 = vsel %vm610, 1.0, %v2575
      %v2589 = vsel %vm611, 1.0, %v2576
      %v2590 = vsel %vm612, 1.0, %v2577
      %s2591 = scalar_lea.vmem %s7, 104
      %v2592 = vld [vmem:[%s2591] sm:$0xff]
      %v2593 = vld [vmem:[%s2591 + $0x8] sm:$0xff]
      %v2594 = vld [vmem:[%s2591 + $0x10] sm:$0xff]
      %v2595 = vld [vmem:[%s2591 + $0x18] sm:$0xff]
      %v2596 = vld [vmem:[%s2591 + $0x20] sm:$0xff]
      %v2597 = vld [vmem:[%s2591 + $0x28] sm:$0xff]
      %v2598 = vld [vmem:[%s2591 + $0x30] sm:$0xff]
      %v2599 = vld [vmem:[%s2591 + $0x38] sm:$0xff]
      %v2600 = vld [vmem:[%s2591 + $0x40] sm:$0xff]
      %v2601 = vld [vmem:[%s2591 + $0x48] sm:$0xff]
      %v2602 = vld [vmem:[%s2591 + $0x50] sm:$0xff]
      %v2603 = vld [vmem:[%s2591 + $0x58] sm:$0xff]
      %v2604 = vld [vmem:[%s2591 + $0x60] sm:$0xff]
      %v2606 = vsel %vm1348, %v2592, 0
      %v2609 = vsel %vm1348, %v2593, 0
      %v2612 = vsel %vm1348, %v2594, 0
      %v2615 = vsel %vm1348, %v2595, 0
      %v2618 = vsel %vm1348, %v2596, 0
      %v2621 = vsel %vm1348, %v2597, 0
      %v2624 = vsel %vm1348, %v2598, 0
      %v2627 = vsel %vm1348, %v2599, 0
      %v2630 = vsel %vm1348, %v2600, 0
      %v2633 = vsel %vm1348, %v2601, 0
      %v2636 = vsel %vm1348, %v2602, 0
      %v2639 = vsel %vm1348, %v2603, 0
      %v2642 = vsel %vm1348, %v2604, 0
      %2644 = vmatpush.msra.mxu0 0.0
      %2645 = vmatpush.msra.mxu0 0.0
      %2646 = vmatpush.msra.mxu0 0.0
      %2647 = vmatpush.msra.mxu0 %v2590
      %2648 = vmatpush.msra.mxu0 %v2589
      %2649 = vmatpush.msra.mxu0 %v2588
      %2650 = vmatpush.msra.mxu0 %v2587
      %2651 = vmatpush.msra.mxu0 %v2586
      %2652 = vmatpush.msra.mxu0 %v2585
      %2653 = vmatpush.msra.mxu0 %v2584
      %2654 = vmatpush.msra.mxu0 %v2583
      %2655 = vmatpush.msra.mxu0 %v2582
      %2656 = vmatpush.msra.mxu0 %v2581
      %2657 = vmatpush.msra.mxu0 %v2580
      %2658 = vmatpush.msra.mxu0 %v2579
      %2659 = vmatpush.msra.mxu0 %v2578
      %2660 = vmatmul.f32.gmra.mxu0 %v2606
      %v2661 = vpop.f32.mrf.mxu0
      %v2662 = vadd.f32 0.0, %v2661
      %2663 = vmatmul.f32.gmra.mxu0 %v2609
      %v2664 = vpop.f32.mrf.mxu0
      %v2665 = vadd.f32 0.0, %v2664
      %2666 = vmatmul.f32.gmra.mxu0 %v2612
      %v2667 = vpop.f32.mrf.mxu0
      %v2668 = vadd.f32 0.0, %v2667
      %2669 = vmatmul.f32.gmra.mxu0 %v2615
      %v2670 = vpop.f32.mrf.mxu0
      %v2671 = vadd.f32 0.0, %v2670
      %2672 = vmatmul.f32.gmra.mxu0 %v2618
      %v2673 = vpop.f32.mrf.mxu0
      %v2674 = vadd.f32 0.0, %v2673
      %2675 = vmatmul.f32.gmra.mxu0 %v2621
      %v2676 = vpop.f32.mrf.mxu0
      %v2677 = vadd.f32 0.0, %v2676
      %2678 = vmatmul.f32.gmra.mxu0 %v2624
      %v2679 = vpop.f32.mrf.mxu0
      %v2680 = vadd.f32 0.0, %v2679
      %2681 = vmatmul.f32.gmra.mxu0 %v2627
      %v2682 = vpop.f32.mrf.mxu0
      %v2683 = vadd.f32 0.0, %v2682
      %2684 = vmatmul.f32.gmra.mxu0 %v2630
      %v2685 = vpop.f32.mrf.mxu0
      %v2686 = vadd.f32 0.0, %v2685
      %2687 = vmatmul.f32.gmra.mxu0 %v2633
      %v2688 = vpop.f32.mrf.mxu0
      %v2689 = vadd.f32 0.0, %v2688
      %2690 = vmatmul.f32.gmra.mxu0 %v2636
      %v2691 = vpop.f32.mrf.mxu0
      %v2692 = vadd.f32 0.0, %v2691
      %2693 = vmatmul.f32.gmra.mxu0 %v2639
      %v2694 = vpop.f32.mrf.mxu0
      %v2695 = vadd.f32 0.0, %v2694
      %2696 = vmatmul.f32.gmra.mxu0 %v2642
      %v2697 = vpop.f32.mrf.mxu0
      %v2698 = vadd.f32 0.0, %v2697
      %2699 = vdwg.mxu0
      %v2700 = vmul.f32 %v2662, %v2256
      %v2701 = vmul.f32 %v2665, %v2258
      %v2702 = vmul.f32 %v2668, %v2260
      %v2703 = vmul.f32 %v2671, %v2262
      %v2704 = vmul.f32 %v2674, %v2264
      %v2705 = vmul.f32 %v2677, %v2266
      %v2706 = vmul.f32 %v2680, %v2268
      %v2707 = vmul.f32 %v2683, %v2270
      %v2708 = vmul.f32 %v2686, %v2272
      %v2709 = vmul.f32 %v2689, %v2274
      %v2710 = vmul.f32 %v2692, %v2276
      %v2711 = vmul.f32 %v2695, %v2278
      %v2712 = vmul.f32 %v2698, %v2280
      %s2713 = scalar_lea.vmem %s8, 128
      %v2714 = vld [vmem:[%s2713] sm:$0xff]
      %v2715 = vld [vmem:[%s2713 + $0x8] sm:$0xff]
      %v2716 = vld [vmem:[%s2713 + $0x10] sm:$0xff]
      %v2717 = vld [vmem:[%s2713 + $0x18] sm:$0xff]
      %v2718 = vld [vmem:[%s2713 + $0x20] sm:$0xff]
      %v2719 = vld [vmem:[%s2713 + $0x28] sm:$0xff]
      %v2720 = vld [vmem:[%s2713 + $0x30] sm:$0xff]
      %v2721 = vld [vmem:[%s2713 + $0x38] sm:$0xff]
      %v2722 = vld [vmem:[%s2713 + $0x40] sm:$0xff]
      %v2723 = vld [vmem:[%s2713 + $0x48] sm:$0xff]
      %v2724 = vld [vmem:[%s2713 + $0x50] sm:$0xff]
      %v2725 = vld [vmem:[%s2713 + $0x58] sm:$0xff]
      %v2726 = vld [vmem:[%s2713 + $0x60] sm:$0xff]
      %v2727 = vld [vmem:[%s2713 + $0x68] sm:$0xff]
      %v2728 = vld [vmem:[%s2713 + $0x70] sm:$0xff]
      %v2729 = vld [vmem:[%s2713 + $0x78] sm:$0xff]
      %s2730 = scalar_lea.vmem %s9, 1
      %v2731 = vld [vmem:[%s2730] sm:$0x1]
      %v2733 = vperm.slane %v2731, 0
      %2735 = vmatpush.msra.mxu0 %v2729
      %2736 = vmatpush.msra.mxu0 %v2728
      %2737 = vmatpush.msra.mxu0 %v2727
      %2738 = vmatpush.msra.mxu0 %v2726
      %2739 = vmatpush.msra.mxu0 %v2725
      %2740 = vmatpush.msra.mxu0 %v2724
      %2741 = vmatpush.msra.mxu0 %v2723
      %2742 = vmatpush.msra.mxu0 %v2722
      %2743 = vmatpush.msra.mxu0 %v2721
      %2744 = vmatpush.msra.mxu0 %v2720
      %2745 = vmatpush.msra.mxu0 %v2719
      %2746 = vmatpush.msra.mxu0 %v2718
      %2747 = vmatpush.msra.mxu0 %v2717
      %2748 = vmatpush.msra.mxu0 %v2716
      %2749 = vmatpush.msra.mxu0 %v2715
      %2750 = vmatpush.msra.mxu0 %v2714
      %2751 = vmatmul.f32.gmra.mxu0 %v2700
      %v2752 = vpop.f32.mrf.mxu0
      %v2753 = vadd.f32 %v2733, %v2752
      %2754 = vmatmul.f32.gmra.mxu0 %v2701
      %v2755 = vpop.f32.mrf.mxu0
      %v2756 = vadd.f32 %v2733, %v2755
      %2757 = vmatmul.f32.gmra.mxu0 %v2702
      %v2758 = vpop.f32.mrf.mxu0
      %v2759 = vadd.f32 %v2733, %v2758
      %2760 = vmatmul.f32.gmra.mxu0 %v2703
      %v2761 = vpop.f32.mrf.mxu0
      %v2762 = vadd.f32 %v2733, %v2761
      %2763 = vmatmul.f32.gmra.mxu0 %v2704
      %v2764 = vpop.f32.mrf.mxu0
      %v2765 = vadd.f32 %v2733, %v2764
      %2766 = vmatmul.f32.gmra.mxu0 %v2705
      %v2767 = vpop.f32.mrf.mxu0
      %v2768 = vadd.f32 %v2733, %v2767
      %2769 = vmatmul.f32.gmra.mxu0 %v2706
      %v2770 = vpop.f32.mrf.mxu0
      %v2771 = vadd.f32 %v2733, %v2770
      %2772 = vmatmul.f32.gmra.mxu0 %v2707
      %v2773 = vpop.f32.mrf.mxu0
      %v2774 = vadd.f32 %v2733, %v2773
      %2775 = vmatmul.f32.gmra.mxu0 %v2708
      %v2776 = vpop.f32.mrf.mxu0
      %v2777 = vadd.f32 %v2733, %v2776
      %2778 = vmatmul.f32.gmra.mxu0 %v2709
      %v2779 = vpop.f32.mrf.mxu0
      %v2780 = vadd.f32 %v2733, %v2779
      %2781 = vmatmul.f32.gmra.mxu0 %v2710
      %v2782 = vpop.f32.mrf.mxu0
      %v2783 = vadd.f32 %v2733, %v2782
      %2784 = vmatmul.f32.gmra.mxu0 %v2711
      %v2785 = vpop.f32.mrf.mxu0
      %v2786 = vadd.f32 %v2733, %v2785
      %2787 = vmatmul.f32.gmra.mxu0 %v2712
      %v2788 = vpop.f32.mrf.mxu0
      %v2789 = vadd.f32 %v2733, %v2788
      %2790 = vdwg.mxu0
      %s2791 = scalar_lea.vmem %s10, 1
      %v2792 = vld [vmem:[%s2791] sm:$0x1]
      %s2793 = scalar_lea.vmem %s11, 1
      %v2794 = vld [vmem:[%s2793] sm:$0x1]
      %v2795 = vsel %vm635, %v2753, 0.0
      %2796 = vadd.xlane.f32.xlu0 %v2795
      %v2797 = vpop.xlane.xlu0 %2796
      %v2798 = vsel %vm635, %v2756, 0.0
      %2799 = vadd.xlane.f32.xlu0 %v2798
      %v2800 = vpop.xlane.xlu0 %2799
      %v2801 = vsel %vm635, %v2759, 0.0
      %2802 = vadd.xlane.f32.xlu0 %v2801
      %v2803 = vpop.xlane.xlu0 %2802
      %v2804 = vsel %vm635, %v2762, 0.0
      %2805 = vadd.xlane.f32.xlu0 %v2804
      %v2806 = vpop.xlane.xlu0 %2805
      %v2807 = vsel %vm635, %v2765, 0.0
      %2808 = vadd.xlane.f32.xlu0 %v2807
      %v2809 = vpop.xlane.xlu0 %2808
      %v2810 = vsel %vm635, %v2768, 0.0
      %2811 = vadd.xlane.f32.xlu0 %v2810
      %v2812 = vpop.xlane.xlu0 %2811
      %v2813 = vsel %vm635, %v2771, 0.0
      %2814 = vadd.xlane.f32.xlu0 %v2813
      %v2815 = vpop.xlane.xlu0 %2814
      %v2816 = vsel %vm635, %v2774, 0.0
      %2817 = vadd.xlane.f32.xlu0 %v2816
      %v2818 = vpop.xlane.xlu0 %2817
      %v2819 = vsel %vm635, %v2777, 0.0
      %2820 = vadd.xlane.f32.xlu0 %v2819
      %v2821 = vpop.xlane.xlu0 %2820
      %v2822 = vsel %vm635, %v2780, 0.0
      %2823 = vadd.xlane.f32.xlu0 %v2822
      %v2824 = vpop.xlane.xlu0 %2823
      %v2825 = vsel %vm635, %v2783, 0.0
      %2826 = vadd.xlane.f32.xlu0 %v2825
      %v2827 = vpop.xlane.xlu0 %2826
      %v2828 = vsel %vm635, %v2786, 0.0
      %2829 = vadd.xlane.f32.xlu0 %v2828
      %v2830 = vpop.xlane.xlu0 %2829
      %v2831 = vsel %vm635, %v2789, 0.0
      %2832 = vadd.xlane.f32.xlu0 %v2831
      %v2833 = vpop.xlane.xlu0 %2832
      %v2834 = vmul.f32 %v2797, %v1580
      %v2835 = vmul.f32 %v2800, %v1580
      %v2836 = vmul.f32 %v2803, %v1580
      %v2837 = vmul.f32 %v2806, %v1580
      %v2838 = vmul.f32 %v2809, %v1580
      %v2839 = vmul.f32 %v2812, %v1580
      %v2840 = vmul.f32 %v2815, %v1580
      %v2841 = vmul.f32 %v2818, %v1580
      %v2842 = vmul.f32 %v2821, %v1580
      %v2843 = vmul.f32 %v2824, %v1580
      %v2844 = vmul.f32 %v2827, %v1580
      %v2845 = vmul.f32 %v2830, %v1580
      %v2846 = vmul.f32 %v2833, %v1580
      %v2847 = vsub.f32 %v2753, %v2834
      %v2848 = vsub.f32 %v2756, %v2835
      %v2849 = vsub.f32 %v2759, %v2836
      %v2850 = vsub.f32 %v2762, %v2837
      %v2851 = vsub.f32 %v2765, %v2838
      %v2852 = vsub.f32 %v2768, %v2839
      %v2853 = vsub.f32 %v2771, %v2840
      %v2854 = vsub.f32 %v2774, %v2841
      %v2855 = vsub.f32 %v2777, %v2842
      %v2856 = vsub.f32 %v2780, %v2843
      %v2857 = vsub.f32 %v2783, %v2844
      %v2858 = vsub.f32 %v2786, %v2845
      %v2859 = vsub.f32 %v2789, %v2846
      %v2860 = vmul.f32 %v2847, %v2847
      %v2861 = vmul.f32 %v2848, %v2848
      %v2862 = vmul.f32 %v2849, %v2849
      %v2863 = vmul.f32 %v2850, %v2850
      %v2864 = vmul.f32 %v2851, %v2851
      %v2865 = vmul.f32 %v2852, %v2852
      %v2866 = vmul.f32 %v2853, %v2853
      %v2867 = vmul.f32 %v2854, %v2854
      %v2868 = vmul.f32 %v2855, %v2855
      %v2869 = vmul.f32 %v2856, %v2856
      %v2870 = vmul.f32 %v2857, %v2857
      %v2871 = vmul.f32 %v2858, %v2858
      %v2872 = vmul.f32 %v2859, %v2859
      %v2873 = vsel %vm635, %v2860, 0.0
      %2874 = vadd.xlane.f32.xlu0 %v2873
      %v2875 = vpop.xlane.xlu0 %2874
      %v2876 = vsel %vm635, %v2861, 0.0
      %2877 = vadd.xlane.f32.xlu0 %v2876
      %v2878 = vpop.xlane.xlu0 %2877
      %v2879 = vsel %vm635, %v2862, 0.0
      %2880 = vadd.xlane.f32.xlu0 %v2879
      %v2881 = vpop.xlane.xlu0 %2880
      %v2882 = vsel %vm635, %v2863, 0.0
      %2883 = vadd.xlane.f32.xlu0 %v2882
      %v2884 = vpop.xlane.xlu0 %2883
      %v2885 = vsel %vm635, %v2864, 0.0
      %2886 = vadd.xlane.f32.xlu0 %v2885
      %v2887 = vpop.xlane.xlu0 %2886
      %v2888 = vsel %vm635, %v2865, 0.0
      %2889 = vadd.xlane.f32.xlu0 %v2888
      %v2890 = vpop.xlane.xlu0 %2889
      %v2891 = vsel %vm635, %v2866, 0.0
      %2892 = vadd.xlane.f32.xlu0 %v2891
      %v2893 = vpop.xlane.xlu0 %2892
      %v2894 = vsel %vm635, %v2867, 0.0
      %2895 = vadd.xlane.f32.xlu0 %v2894
      %v2896 = vpop.xlane.xlu0 %2895
      %v2897 = vsel %vm635, %v2868, 0.0
      %2898 = vadd.xlane.f32.xlu0 %v2897
      %v2899 = vpop.xlane.xlu0 %2898
      %v2900 = vsel %vm635, %v2869, 0.0
      %2901 = vadd.xlane.f32.xlu0 %v2900
      %v2902 = vpop.xlane.xlu0 %2901
      %v2903 = vsel %vm635, %v2870, 0.0
      %2904 = vadd.xlane.f32.xlu0 %v2903
      %v2905 = vpop.xlane.xlu0 %2904
      %v2906 = vsel %vm635, %v2871, 0.0
      %2907 = vadd.xlane.f32.xlu0 %v2906
      %v2908 = vpop.xlane.xlu0 %2907
      %v2909 = vsel %vm635, %v2872, 0.0
      %2910 = vadd.xlane.f32.xlu0 %v2909
      %v2911 = vpop.xlane.xlu0 %2910
      %v2912 = vmul.f32 %v2875, %v1580
      %v2913 = vmul.f32 %v2878, %v1580
      %v2914 = vmul.f32 %v2881, %v1580
      %v2915 = vmul.f32 %v2884, %v1580
      %v2916 = vmul.f32 %v2887, %v1580
      %v2917 = vmul.f32 %v2890, %v1580
      %v2918 = vmul.f32 %v2893, %v1580
      %v2919 = vmul.f32 %v2896, %v1580
      %v2920 = vmul.f32 %v2899, %v1580
      %v2921 = vmul.f32 %v2902, %v1580
      %v2922 = vmul.f32 %v2905, %v1580
      %v2923 = vmul.f32 %v2908, %v1580
      %v2924 = vmul.f32 %v2911, %v1580
      %v2925 = vadd.f32 %v2912, 1e-05
      %v2926 = vadd.f32 %v2913, 1e-05
      %v2927 = vadd.f32 %v2914, 1e-05
      %v2928 = vadd.f32 %v2915, 1e-05
      %v2929 = vadd.f32 %v2916, 1e-05
      %v2930 = vadd.f32 %v2917, 1e-05
      %v2931 = vadd.f32 %v2918, 1e-05
      %v2932 = vadd.f32 %v2919, 1e-05
      %v2933 = vadd.f32 %v2920, 1e-05
      %v2934 = vadd.f32 %v2921, 1e-05
      %v2935 = vadd.f32 %v2922, 1e-05
      %v2936 = vadd.f32 %v2923, 1e-05
      %v2937 = vadd.f32 %v2924, 1e-05
      %v2938 = vrsqrt.pop %v2925
      %v2939 = vmul.f32 %v2938, %v2925
      %v2940 = vmul.f32 %v2939, %v2938
      %v2941 = vmul.f32 0.5, %v2940
      %v2942 = vsub.f32 1.5, %v2941
      %v2943 = vmul.f32 %v2938, %v2942
      %vm2944 = vweird.f32 %v2925
      %vm2945 = vweird.f32 %v2938
      %vm2946 = vmor %vm2944, %vm2945
      %v2947 = vsel %vm2946, %v2938, %v2943
      %v2948 = vrsqrt.pop %v2926
      %v2949 = vmul.f32 %v2948, %v2926
      %v2950 = vmul.f32 %v2949, %v2948
      %v2951 = vmul.f32 0.5, %v2950
      %v2952 = vsub.f32 1.5, %v2951
      %v2953 = vmul.f32 %v2948, %v2952
      %vm2954 = vweird.f32 %v2926
      %vm2955 = vweird.f32 %v2948
      %vm2956 = vmor %vm2954, %vm2955
      %v2957 = vsel %vm2956, %v2948, %v2953
      %v2958 = vrsqrt.pop %v2927
      %v2959 = vmul.f32 %v2958, %v2927
      %v2960 = vmul.f32 %v2959, %v2958
      %v2961 = vmul.f32 0.5, %v2960
      %v2962 = vsub.f32 1.5, %v2961
      %v2963 = vmul.f32 %v2958, %v2962
      %vm2964 = vweird.f32 %v2927
      %vm2965 = vweird.f32 %v2958
      %vm2966 = vmor %vm2964, %vm2965
      %v2967 = vsel %vm2966, %v2958, %v2963
      %v2968 = vrsqrt.pop %v2928
      %v2969 = vmul.f32 %v2968, %v2928
      %v2970 = vmul.f32 %v2969, %v2968
      %v2971 = vmul.f32 0.5, %v2970
      %v2972 = vsub.f32 1.5, %v2971
      %v2973 = vmul.f32 %v2968, %v2972
      %vm2974 = vweird.f32 %v2928
      %vm2975 = vweird.f32 %v2968
      %vm2976 = vmor %vm2974, %vm2975
      %v2977 = vsel %vm2976, %v2968, %v2973
      %v2978 = vrsqrt.pop %v2929
      %v2979 = vmul.f32 %v2978, %v2929
      %v2980 = vmul.f32 %v2979, %v2978
      %v2981 = vmul.f32 0.5, %v2980
      %v2982 = vsub.f32 1.5, %v2981
      %v2983 = vmul.f32 %v2978, %v2982
      %vm2984 = vweird.f32 %v2929
      %vm2985 = vweird.f32 %v2978
      %vm2986 = vmor %vm2984, %vm2985
      %v2987 = vsel %vm2986, %v2978, %v2983
      %v2988 = vrsqrt.pop %v2930
      %v2989 = vmul.f32 %v2988, %v2930
      %v2990 = vmul.f32 %v2989, %v2988
      %v2991 = vmul.f32 0.5, %v2990
      %v2992 = vsub.f32 1.5, %v2991
      %v2993 = vmul.f32 %v2988, %v2992
      %vm2994 = vweird.f32 %v2930
      %vm2995 = vweird.f32 %v2988
      %vm2996 = vmor %vm2994, %vm2995
      %v2997 = vsel %vm2996, %v2988, %v2993
      %v2998 = vrsqrt.pop %v2931
      %v2999 = vmul.f32 %v2998, %v2931
      %v3000 = vmul.f32 %v2999, %v2998
      %v3001 = vmul.f32 0.5, %v3000
      %v3002 = vsub.f32 1.5, %v3001
      %v3003 = vmul.f32 %v2998, %v3002
      %vm3004 = vweird.f32 %v2931
      %vm3005 = vweird.f32 %v2998
      %vm3006 = vmor %vm3004, %vm3005
      %v3007 = vsel %vm3006, %v2998, %v3003
      %v3008 = vrsqrt.pop %v2932
      %v3009 = vmul.f32 %v3008, %v2932
      %v3010 = vmul.f32 %v3009, %v3008
      %v3011 = vmul.f32 0.5, %v3010
      %v3012 = vsub.f32 1.5, %v3011
      %v3013 = vmul.f32 %v3008, %v3012
      %vm3014 = vweird.f32 %v2932
      %vm3015 = vweird.f32 %v3008
      %vm3016 = vmor %vm3014, %vm3015
      %v3017 = vsel %vm3016, %v3008, %v3013
      %v3018 = vrsqrt.pop %v2933
      %v3019 = vmul.f32 %v3018, %v2933
      %v3020 = vmul.f32 %v3019, %v3018
      %v3021 = vmul.f32 0.5, %v3020
      %v3022 = vsub.f32 1.5, %v3021
      %v3023 = vmul.f32 %v3018, %v3022
      %vm3024 = vweird.f32 %v2933
      %vm3025 = vweird.f32 %v3018
      %vm3026 = vmor %vm3024, %vm3025
      %v3027 = vsel %vm3026, %v3018, %v3023
      %v3028 = vrsqrt.pop %v2934
      %v3029 = vmul.f32 %v3028, %v2934
      %v3030 = vmul.f32 %v3029, %v3028
      %v3031 = vmul.f32 0.5, %v3030
      %v3032 = vsub.f32 1.5, %v3031
      %v3033 = vmul.f32 %v3028, %v3032
      %vm3034 = vweird.f32 %v2934
      %vm3035 = vweird.f32 %v3028
      %vm3036 = vmor %vm3034, %vm3035
      %v3037 = vsel %vm3036, %v3028, %v3033
      %v3038 = vrsqrt.pop %v2935
      %v3039 = vmul.f32 %v3038, %v2935
      %v3040 = vmul.f32 %v3039, %v3038
      %v3041 = vmul.f32 0.5, %v3040
      %v3042 = vsub.f32 1.5, %v3041
      %v3043 = vmul.f32 %v3038, %v3042
      %vm3044 = vweird.f32 %v2935
      %vm3045 = vweird.f32 %v3038
      %vm3046 = vmor %vm3044, %vm3045
      %v3047 = vsel %vm3046, %v3038, %v3043
      %v3048 = vrsqrt.pop %v2936
      %v3049 = vmul.f32 %v3048, %v2936
      %v3050 = vmul.f32 %v3049, %v3048
      %v3051 = vmul.f32 0.5, %v3050
      %v3052 = vsub.f32 1.5, %v3051
      %v3053 = vmul.f32 %v3048, %v3052
      %vm3054 = vweird.f32 %v2936
      %vm3055 = vweird.f32 %v3048
      %vm3056 = vmor %vm3054, %vm3055
      %v3057 = vsel %vm3056, %v3048, %v3053
      %v3058 = vrsqrt.pop %v2937
      %v3059 = vmul.f32 %v3058, %v2937
      %v3060 = vmul.f32 %v3059, %v3058
      %v3061 = vmul.f32 0.5, %v3060
      %v3062 = vsub.f32 1.5, %v3061
      %v3063 = vmul.f32 %v3058, %v3062
      %vm3064 = vweird.f32 %v2937
      %vm3065 = vweird.f32 %v3058
      %vm3066 = vmor %vm3064, %vm3065
      %v3067 = vsel %vm3066, %v3058, %v3063
      %v3068 = vmul.f32 %v2847, %v2947
      %v3069 = vmul.f32 %v2848, %v2957
      %v3070 = vmul.f32 %v2849, %v2967
      %v3071 = vmul.f32 %v2850, %v2977
      %v3072 = vmul.f32 %v2851, %v2987
      %v3073 = vmul.f32 %v2852, %v2997
      %v3074 = vmul.f32 %v2853, %v3007
      %v3075 = vmul.f32 %v2854, %v3017
      %v3076 = vmul.f32 %v2855, %v3027
      %v3077 = vmul.f32 %v2856, %v3037
      %v3078 = vmul.f32 %v2857, %v3047
      %v3079 = vmul.f32 %v2858, %v3057
      %v3080 = vmul.f32 %v2859, %v3067
      %v3082 = vperm.slane %v2792, 0
      %v3084 = vmul.f32 %v3068, %v3082
      %v3085 = vmul.f32 %v3069, %v3082
      %v3086 = vmul.f32 %v3070, %v3082
      %v3087 = vmul.f32 %v3071, %v3082
      %v3088 = vmul.f32 %v3072, %v3082
      %v3089 = vmul.f32 %v3073, %v3082
      %v3090 = vmul.f32 %v3074, %v3082
      %v3091 = vmul.f32 %v3075, %v3082
      %v3092 = vmul.f32 %v3076, %v3082
      %v3093 = vmul.f32 %v3077, %v3082
      %v3094 = vmul.f32 %v3078, %v3082
      %v3095 = vmul.f32 %v3079, %v3082
      %v3096 = vmul.f32 %v3080, %v3082
      %v3098 = vperm.slane %v2794, 0
      %v3100 = vadd.f32 %v3084, %v3098
      %v3101 = vadd.f32 %v3085, %v3098
      %v3102 = vadd.f32 %v3086, %v3098
      %v3103 = vadd.f32 %v3087, %v3098
      %v3104 = vadd.f32 %v3088, %v3098
      %v3105 = vadd.f32 %v3089, %v3098
      %v3106 = vadd.f32 %v3090, %v3098
      %v3107 = vadd.f32 %v3091, %v3098
      %v3108 = vadd.f32 %v3092, %v3098
      %v3109 = vadd.f32 %v3093, %v3098
      %v3110 = vadd.f32 %v3094, %v3098
      %v3111 = vadd.f32 %v3095, %v3098
      %v3112 = vadd.f32 %v3096, %v3098
      %v3113 = vadd.f32 %v3100, %v1860
      %v3114 = vadd.f32 %v3101, %v1861
      %v3115 = vadd.f32 %v3102, %v1862
      %v3116 = vadd.f32 %v3103, %v1863
      %v3117 = vadd.f32 %v3104, %v1864
      %v3118 = vadd.f32 %v3105, %v1865
      %v3119 = vadd.f32 %v3106, %v1866
      %v3120 = vadd.f32 %v3107, %v1867
      %v3121 = vadd.f32 %v3108, %v1868
      %v3122 = vadd.f32 %v3109, %v1869
      %v3123 = vadd.f32 %v3110, %v1870
      %v3124 = vadd.f32 %v3111, %v1871
      %v3125 = vadd.f32 %v3112, %v1872
      %s3126 = scalar_lea.vmem %s3, 256
      %v3127 = vld [vmem:[%s3126] sm:$0xff]
      %v3128 = vld [vmem:[%s3126 + $0x8] sm:$0xff]
      %v3129 = vld [vmem:[%s3126 + $0x10] sm:$0xff]
      %v3130 = vld [vmem:[%s3126 + $0x18] sm:$0xff]
      %v3131 = vld [vmem:[%s3126 + $0x20] sm:$0xff]
      %v3132 = vld [vmem:[%s3126 + $0x28] sm:$0xff]
      %v3133 = vld [vmem:[%s3126 + $0x30] sm:$0xff]
      %v3134 = vld [vmem:[%s3126 + $0x38] sm:$0xff]
      %v3135 = vld [vmem:[%s3126 + $0x40] sm:$0xff]
      %v3136 = vld [vmem:[%s3126 + $0x48] sm:$0xff]
      %v3137 = vld [vmem:[%s3126 + $0x50] sm:$0xff]
      %v3138 = vld [vmem:[%s3126 + $0x58] sm:$0xff]
      %v3139 = vld [vmem:[%s3126 + $0x60] sm:$0xff]
      %v3140 = vld [vmem:[%s3126 + $0x68] sm:$0xff]
      %v3141 = vld [vmem:[%s3126 + $0x70] sm:$0xff]
      %v3142 = vld [vmem:[%s3126 + $0x78] sm:$0xff]
      %s3143 = scalar_lea.vmem %s4, 4
      %v3144 = vld [vmem:[%s3143] sm:$0x3]
      %v3146 = vperm.slane %v3144, 0
      %v3147 = vperm.slane %v3144, 1
      %v3151 = vsel %vm635, %v3113, 0
      %v3154 = vsel %vm635, %v3114, 0
      %v3157 = vsel %vm635, %v3115, 0
      %v3160 = vsel %vm635, %v3116, 0
      %v3163 = vsel %vm635, %v3117, 0
      %v3166 = vsel %vm635, %v3118, 0
      %v3169 = vsel %vm635, %v3119, 0
      %v3172 = vsel %vm635, %v3120, 0
      %v3175 = vsel %vm635, %v3121, 0
      %v3178 = vsel %vm635, %v3122, 0
      %v3181 = vsel %vm635, %v3123, 0
      %v3184 = vsel %vm635, %v3124, 0
      %v3187 = vsel %vm635, %v3125, 0
      %3189 = vmatpush.msra.mxu0 0.0
      %3190 = vmatpush.msra.mxu0 0.0
      %3191 = vmatpush.msra.mxu0 0.0
      %3192 = vmatpush.msra.mxu0 0.0
      %3193 = vmatpush.msra.mxu0 0.0
      %3194 = vmatpush.msra.mxu0 0.0
      %3195 = vmatpush.msra.mxu0 0.0
      %3196 = vmatpush.msra.mxu0 0.0
      %3197 = vmatpush.msra.mxu0 %v3141
      %3198 = vmatpush.msra.mxu0 %v3139
      %3199 = vmatpush.msra.mxu0 %v3137
      %3200 = vmatpush.msra.mxu0 %v3135
      %3201 = vmatpush.msra.mxu0 %v3133
      %3202 = vmatpush.msra.mxu0 %v3131
      %3203 = vmatpush.msra.mxu0 %v3129
      %3204 = vmatpush.msra.mxu0 %v3127
      %3205 = vmatmul.f32.gmra.mxu0 %v3151
      %v3206 = vpop.f32.mrf.mxu0
      %v3207 = vadd.f32 %v3146, %v3206
      %3208 = vmatmul.f32.gmra.mxu0 %v3154
      %v3209 = vpop.f32.mrf.mxu0
      %v3210 = vadd.f32 %v3146, %v3209
      %3211 = vmatmul.f32.gmra.mxu0 %v3157
      %v3212 = vpop.f32.mrf.mxu0
      %v3213 = vadd.f32 %v3146, %v3212
      %3214 = vmatmul.f32.gmra.mxu0 %v3160
      %v3215 = vpop.f32.mrf.mxu0
      %v3216 = vadd.f32 %v3146, %v3215
      %3217 = vmatmul.f32.gmra.mxu0 %v3163
      %v3218 = vpop.f32.mrf.mxu0
      %v3219 = vadd.f32 %v3146, %v3218
      %3220 = vmatmul.f32.gmra.mxu0 %v3166
      %v3221 = vpop.f32.mrf.mxu0
      %v3222 = vadd.f32 %v3146, %v3221
      %3223 = vmatmul.f32.gmra.mxu0 %v3169
      %v3224 = vpop.f32.mrf.mxu0
      %v3225 = vadd.f32 %v3146, %v3224
      %3226 = vmatmul.f32.gmra.mxu0 %v3172
      %v3227 = vpop.f32.mrf.mxu0
      %v3228 = vadd.f32 %v3146, %v3227
      %3229 = vmatmul.f32.gmra.mxu0 %v3175
      %v3230 = vpop.f32.mrf.mxu0
      %v3231 = vadd.f32 %v3146, %v3230
      %3232 = vmatmul.f32.gmra.mxu0 %v3178
      %v3233 = vpop.f32.mrf.mxu0
      %v3234 = vadd.f32 %v3146, %v3233
      %3235 = vmatmul.f32.gmra.mxu0 %v3181
      %v3236 = vpop.f32.mrf.mxu0
      %v3237 = vadd.f32 %v3146, %v3236
      %3238 = vmatmul.f32.gmra.mxu0 %v3184
      %v3239 = vpop.f32.mrf.mxu0
      %v3240 = vadd.f32 %v3146, %v3239
      %3241 = vmatmul.f32.gmra.mxu0 %v3187
      %v3242 = vpop.f32.mrf.mxu0
      %v3243 = vadd.f32 %v3146, %v3242
      %3244 = vdwg.mxu0
      %3245 = vmatpush.msra.mxu0 0.0
      %3246 = vmatpush.msra.mxu0 0.0
      %3247 = vmatpush.msra.mxu0 0.0
      %3248 = vmatpush.msra.mxu0 0.0
      %3249 = vmatpush.msra.mxu0 0.0
      %3250 = vmatpush.msra.mxu0 0.0
      %3251 = vmatpush.msra.mxu0 0.0
      %3252 = vmatpush.msra.mxu0 0.0
      %3253 = vmatpush.msra.mxu0 %v3142
      %3254 = vmatpush.msra.mxu0 %v3140
      %3255 = vmatpush.msra.mxu0 %v3138
      %3256 = vmatpush.msra.mxu0 %v3136
      %3257 = vmatpush.msra.mxu0 %v3134
      %3258 = vmatpush.msra.mxu0 %v3132
      %3259 = vmatpush.msra.mxu0 %v3130
      %3260 = vmatpush.msra.mxu0 %v3128
      %3261 = vmatmul.f32.gmra.mxu0 %v3151
      %v3262 = vpop.f32.mrf.mxu0
      %v3263 = vadd.f32 %v3147, %v3262
      %3264 = vmatmul.f32.gmra.mxu0 %v3154
      %v3265 = vpop.f32.mrf.mxu0
      %v3266 = vadd.f32 %v3147, %v3265
      %3267 = vmatmul.f32.gmra.mxu0 %v3157
      %v3268 = vpop.f32.mrf.mxu0
      %v3269 = vadd.f32 %v3147, %v3268
      %3270 = vmatmul.f32.gmra.mxu0 %v3160
      %v3271 = vpop.f32.mrf.mxu0
      %v3272 = vadd.f32 %v3147, %v3271
      %3273 = vmatmul.f32.gmra.mxu0 %v3163
      %v3274 = vpop.f32.mrf.mxu0
      %v3275 = vadd.f32 %v3147, %v3274
      %3276 = vmatmul.f32.gmra.mxu0 %v3166
      %v3277 = vpop.f32.mrf.mxu0
      %v3278 = vadd.f32 %v3147, %v3277
      %3279 = vmatmul.f32.gmra.mxu0 %v3169
      %v3280 = vpop.f32.mrf.mxu0
      %v3281 = vadd.f32 %v3147, %v3280
      %3282 = vmatmul.f32.gmra.mxu0 %v3172
      %v3283 = vpop.f32.mrf.mxu0
      %v3284 = vadd.f32 %v3147, %v3283
      %3285 = vmatmul.f32.gmra.mxu0 %v3175
      %v3286 = vpop.f32.mrf.mxu0
      %v3287 = vadd.f32 %v3147, %v3286
      %3288 = vmatmul.f32.gmra.mxu0 %v3178
      %v3289 = vpop.f32.mrf.mxu0
      %v3290 = vadd.f32 %v3147, %v3289
      %3291 = vmatmul.f32.gmra.mxu0 %v3181
      %v3292 = vpop.f32.mrf.mxu0
      %v3293 = vadd.f32 %v3147, %v3292
      %3294 = vmatmul.f32.gmra.mxu0 %v3184
      %v3295 = vpop.f32.mrf.mxu0
      %v3296 = vadd.f32 %v3147, %v3295
      %3297 = vmatmul.f32.gmra.mxu0 %v3187
      %v3298 = vpop.f32.mrf.mxu0
      %v3299 = vadd.f32 %v3147, %v3298
      %3300 = vdwg.mxu0
      %v3301 = vmul.f32 %v3207, 0.5
      %v3302 = vmul.f32 %v3263, 0.5
      %v3303 = vmul.f32 %v3210, 0.5
      %v3304 = vmul.f32 %v3266, 0.5
      %v3305 = vmul.f32 %v3213, 0.5
      %v3306 = vmul.f32 %v3269, 0.5
      %v3307 = vmul.f32 %v3216, 0.5
      %v3308 = vmul.f32 %v3272, 0.5
      %v3309 = vmul.f32 %v3219, 0.5
      %v3310 = vmul.f32 %v3275, 0.5
      %v3311 = vmul.f32 %v3222, 0.5
      %v3312 = vmul.f32 %v3278, 0.5
      %v3313 = vmul.f32 %v3225, 0.5
      %v3314 = vmul.f32 %v3281, 0.5
      %v3315 = vmul.f32 %v3228, 0.5
      %v3316 = vmul.f32 %v3284, 0.5
      %v3317 = vmul.f32 %v3231, 0.5
      %v3318 = vmul.f32 %v3287, 0.5
      %v3319 = vmul.f32 %v3234, 0.5
      %v3320 = vmul.f32 %v3290, 0.5
      %v3321 = vmul.f32 %v3237, 0.5
      %v3322 = vmul.f32 %v3293, 0.5
      %v3323 = vmul.f32 %v3240, 0.5
      %v3324 = vmul.f32 %v3296, 0.5
      %v3325 = vmul.f32 %v3243, 0.5
      %v3326 = vmul.f32 %v3299, 0.5
      %v3327 = vmul.f32 %v3207, 0.044715
      %v3328 = vmul.f32 %v3263, 0.044715
      %v3329 = vmul.f32 %v3210, 0.044715
      %v3330 = vmul.f32 %v3266, 0.044715
      %v3331 = vmul.f32 %v3213, 0.044715
      %v3332 = vmul.f32 %v3269, 0.044715
      %v3333 = vmul.f32 %v3216, 0.044715
      %v3334 = vmul.f32 %v3272, 0.044715
      %v3335 = vmul.f32 %v3219, 0.044715
      %v3336 = vmul.f32 %v3275, 0.044715
      %v3337 = vmul.f32 %v3222, 0.044715
      %v3338 = vmul.f32 %v3278, 0.044715
      %v3339 = vmul.f32 %v3225, 0.044715
      %v3340 = vmul.f32 %v3281, 0.044715
      %v3341 = vmul.f32 %v3228, 0.044715
      %v3342 = vmul.f32 %v3284, 0.044715
      %v3343 = vmul.f32 %v3231, 0.044715
      %v3344 = vmul.f32 %v3287, 0.044715
      %v3345 = vmul.f32 %v3234, 0.044715
      %v3346 = vmul.f32 %v3290, 0.044715
      %v3347 = vmul.f32 %v3237, 0.044715
      %v3348 = vmul.f32 %v3293, 0.044715
      %v3349 = vmul.f32 %v3240, 0.044715
      %v3350 = vmul.f32 %v3296, 0.044715
      %v3351 = vmul.f32 %v3243, 0.044715
      %v3352 = vmul.f32 %v3299, 0.044715
      %v3353 = vmul.f32 %v3327, %v3207
      %v3354 = vmul.f32 %v3328, %v3263
      %v3355 = vmul.f32 %v3329, %v3210
      %v3356 = vmul.f32 %v3330, %v3266
      %v3357 = vmul.f32 %v3331, %v3213
      %v3358 = vmul.f32 %v3332, %v3269
      %v3359 = vmul.f32 %v3333, %v3216
      %v3360 = vmul.f32 %v3334, %v3272
      %v3361 = vmul.f32 %v3335, %v3219
      %v3362 = vmul.f32 %v3336, %v3275
      %v3363 = vmul.f32 %v3337, %v3222
      %v3364 = vmul.f32 %v3338, %v3278
      %v3365 = vmul.f32 %v3339, %v3225
      %v3366 = vmul.f32 %v3340, %v3281
      %v3367 = vmul.f32 %v3341, %v3228
      %v3368 = vmul.f32 %v3342, %v3284
      %v3369 = vmul.f32 %v3343, %v3231
      %v3370 = vmul.f32 %v3344, %v3287
      %v3371 = vmul.f32 %v3345, %v3234
      %v3372 = vmul.f32 %v3346, %v3290
      %v3373 = vmul.f32 %v3347, %v3237
      %v3374 = vmul.f32 %v3348, %v3293
      %v3375 = vmul.f32 %v3349, %v3240
      %v3376 = vmul.f32 %v3350, %v3296
      %v3377 = vmul.f32 %v3351, %v3243
      %v3378 = vmul.f32 %v3352, %v3299
      %v3379 = vmul.f32 %v3353, %v3207
      %v3380 = vmul.f32 %v3354, %v3263
      %v3381 = vmul.f32 %v3355, %v3210
      %v3382 = vmul.f32 %v3356, %v3266
      %v3383 = vmul.f32 %v3357, %v3213
      %v3384 = vmul.f32 %v3358, %v3269
      %v3385 = vmul.f32 %v3359, %v3216
      %v3386 = vmul.f32 %v3360, %v3272
      %v3387 = vmul.f32 %v3361, %v3219
      %v3388 = vmul.f32 %v3362, %v3275
      %v3389 = vmul.f32 %v3363, %v3222
      %v3390 = vmul.f32 %v3364, %v3278
      %v3391 = vmul.f32 %v3365, %v3225
      %v3392 = vmul.f32 %v3366, %v3281
      %v3393 = vmul.f32 %v3367, %v3228
      %v3394 = vmul.f32 %v3368, %v3284
      %v3395 = vmul.f32 %v3369, %v3231
      %v3396 = vmul.f32 %v3370, %v3287
      %v3397 = vmul.f32 %v3371, %v3234
      %v3398 = vmul.f32 %v3372, %v3290
      %v3399 = vmul.f32 %v3373, %v3237
      %v3400 = vmul.f32 %v3374, %v3293
      %v3401 = vmul.f32 %v3375, %v3240
      %v3402 = vmul.f32 %v3376, %v3296
      %v3403 = vmul.f32 %v3377, %v3243
      %v3404 = vmul.f32 %v3378, %v3299
      %v3405 = vadd.f32 %v3207, %v3379
      %v3406 = vadd.f32 %v3263, %v3380
      %v3407 = vadd.f32 %v3210, %v3381
      %v3408 = vadd.f32 %v3266, %v3382
      %v3409 = vadd.f32 %v3213, %v3383
      %v3410 = vadd.f32 %v3269, %v3384
      %v3411 = vadd.f32 %v3216, %v3385
      %v3412 = vadd.f32 %v3272, %v3386
      %v3413 = vadd.f32 %v3219, %v3387
      %v3414 = vadd.f32 %v3275, %v3388
      %v3415 = vadd.f32 %v3222, %v3389
      %v3416 = vadd.f32 %v3278, %v3390
      %v3417 = vadd.f32 %v3225, %v3391
      %v3418 = vadd.f32 %v3281, %v3392
      %v3419 = vadd.f32 %v3228, %v3393
      %v3420 = vadd.f32 %v3284, %v3394
      %v3421 = vadd.f32 %v3231, %v3395
      %v3422 = vadd.f32 %v3287, %v3396
      %v3423 = vadd.f32 %v3234, %v3397
      %v3424 = vadd.f32 %v3290, %v3398
      %v3425 = vadd.f32 %v3237, %v3399
      %v3426 = vadd.f32 %v3293, %v3400
      %v3427 = vadd.f32 %v3240, %v3401
      %v3428 = vadd.f32 %v3296, %v3402
      %v3429 = vadd.f32 %v3243, %v3403
      %v3430 = vadd.f32 %v3299, %v3404
      %v3431 = vmul.f32 %v3405, 0.7978846
      %v3432 = vmul.f32 %v3406, 0.7978846
      %v3433 = vmul.f32 %v3407, 0.7978846
      %v3434 = vmul.f32 %v3408, 0.7978846
      %v3435 = vmul.f32 %v3409, 0.7978846
      %v3436 = vmul.f32 %v3410, 0.7978846
      %v3437 = vmul.f32 %v3411, 0.7978846
      %v3438 = vmul.f32 %v3412, 0.7978846
      %v3439 = vmul.f32 %v3413, 0.7978846
      %v3440 = vmul.f32 %v3414, 0.7978846
      %v3441 = vmul.f32 %v3415, 0.7978846
      %v3442 = vmul.f32 %v3416, 0.7978846
      %v3443 = vmul.f32 %v3417, 0.7978846
      %v3444 = vmul.f32 %v3418, 0.7978846
      %v3445 = vmul.f32 %v3419, 0.7978846
      %v3446 = vmul.f32 %v3420, 0.7978846
      %v3447 = vmul.f32 %v3421, 0.7978846
      %v3448 = vmul.f32 %v3422, 0.7978846
      %v3449 = vmul.f32 %v3423, 0.7978846
      %v3450 = vmul.f32 %v3424, 0.7978846
      %v3451 = vmul.f32 %v3425, 0.7978846
      %v3452 = vmul.f32 %v3426, 0.7978846
      %v3453 = vmul.f32 %v3427, 0.7978846
      %v3454 = vmul.f32 %v3428, 0.7978846
      %v3455 = vmul.f32 %v3429, 0.7978846
      %v3456 = vmul.f32 %v3430, 0.7978846
      %v3457 = vtanh.pop %v3431
      %v3458 = vtanh.pop %v3432
      %v3459 = vtanh.pop %v3433
      %v3460 = vtanh.pop %v3434
      %v3461 = vtanh.pop %v3435
      %v3462 = vtanh.pop %v3436
      %v3463 = vtanh.pop %v3437
      %v3464 = vtanh.pop %v3438
      %v3465 = vtanh.pop %v3439
      %v3466 = vtanh.pop %v3440
      %v3467 = vtanh.pop %v3441
      %v3468 = vtanh.pop %v3442
      %v3469 = vtanh.pop %v3443
      %v3470 = vtanh.pop %v3444
      %v3471 = vtanh.pop %v3445
      %v3472 = vtanh.pop %v3446
      %v3473 = vtanh.pop %v3447
      %v3474 = vtanh.pop %v3448
      %v3475 = vtanh.pop %v3449
      %v3476 = vtanh.pop %v3450
      %v3477 = vtanh.pop %v3451
      %v3478 = vtanh.pop %v3452
      %v3479 = vtanh.pop %v3453
      %v3480 = vtanh.pop %v3454
      %v3481 = vtanh.pop %v3455
      %v3482 = vtanh.pop %v3456
      %v3483 = vadd.f32 %v3457, 1.0
      %v3484 = vadd.f32 %v3458, 1.0
      %v3485 = vadd.f32 %v3459, 1.0
      %v3486 = vadd.f32 %v3460, 1.0
      %v3487 = vadd.f32 %v3461, 1.0
      %v3488 = vadd.f32 %v3462, 1.0
      %v3489 = vadd.f32 %v3463, 1.0
      %v3490 = vadd.f32 %v3464, 1.0
      %v3491 = vadd.f32 %v3465, 1.0
      %v3492 = vadd.f32 %v3466, 1.0
      %v3493 = vadd.f32 %v3467, 1.0
      %v3494 = vadd.f32 %v3468, 1.0
      %v3495 = vadd.f32 %v3469, 1.0
      %v3496 = vadd.f32 %v3470, 1.0
      %v3497 = vadd.f32 %v3471, 1.0
      %v3498 = vadd.f32 %v3472, 1.0
      %v3499 = vadd.f32 %v3473, 1.0
      %v3500 = vadd.f32 %v3474, 1.0
      %v3501 = vadd.f32 %v3475, 1.0
      %v3502 = vadd.f32 %v3476, 1.0
      %v3503 = vadd.f32 %v3477, 1.0
      %v3504 = vadd.f32 %v3478, 1.0
      %v3505 = vadd.f32 %v3479, 1.0
      %v3506 = vadd.f32 %v3480, 1.0
      %v3507 = vadd.f32 %v3481, 1.0
      %v3508 = vadd.f32 %v3482, 1.0
      %v3509 = vmul.f32 %v3301, %v3483
      %v3510 = vmul.f32 %v3302, %v3484
      %v3511 = vmul.f32 %v3303, %v3485
      %v3512 = vmul.f32 %v3304, %v3486
      %v3513 = vmul.f32 %v3305, %v3487
      %v3514 = vmul.f32 %v3306, %v3488
      %v3515 = vmul.f32 %v3307, %v3489
      %v3516 = vmul.f32 %v3308, %v3490
      %v3517 = vmul.f32 %v3309, %v3491
      %v3518 = vmul.f32 %v3310, %v3492
      %v3519 = vmul.f32 %v3311, %v3493
      %v3520 = vmul.f32 %v3312, %v3494
      %v3521 = vmul.f32 %v3313, %v3495
      %v3522 = vmul.f32 %v3314, %v3496
      %v3523 = vmul.f32 %v3315, %v3497
      %v3524 = vmul.f32 %v3316, %v3498
      %v3525 = vmul.f32 %v3317, %v3499
      %v3526 = vmul.f32 %v3318, %v3500
      %v3527 = vmul.f32 %v3319, %v3501
      %v3528 = vmul.f32 %v3320, %v3502
      %v3529 = vmul.f32 %v3321, %v3503
      %v3530 = vmul.f32 %v3322, %v3504
      %v3531 = vmul.f32 %v3323, %v3505
      %v3532 = vmul.f32 %v3324, %v3506
      %v3533 = vmul.f32 %v3325, %v3507
      %v3534 = vmul.f32 %v3326, %v3508
      %s3535 = scalar_lea.vmem %s5, 2
      %v3536 = vld [vmem:[%s3535] sm:$0x1]
      %s3537 = scalar_lea.vmem %s6, 2
      %v3538 = vld [vmem:[%s3537] sm:$0x1]
      %3539 = vadd.xlane.f32.xlu0 %v3510
      %v3540 = vpop.xlane.xlu0 %3539
      %3541 = vadd.xlane.f32.xlu0 %v3512
      %v3542 = vpop.xlane.xlu0 %3541
      %3543 = vadd.xlane.f32.xlu0 %v3514
      %v3544 = vpop.xlane.xlu0 %3543
      %3545 = vadd.xlane.f32.xlu0 %v3516
      %v3546 = vpop.xlane.xlu0 %3545
      %3547 = vadd.xlane.f32.xlu0 %v3518
      %v3548 = vpop.xlane.xlu0 %3547
      %3549 = vadd.xlane.f32.xlu0 %v3520
      %v3550 = vpop.xlane.xlu0 %3549
      %3551 = vadd.xlane.f32.xlu0 %v3522
      %v3552 = vpop.xlane.xlu0 %3551
      %3553 = vadd.xlane.f32.xlu0 %v3524
      %v3554 = vpop.xlane.xlu0 %3553
      %3555 = vadd.xlane.f32.xlu0 %v3526
      %v3556 = vpop.xlane.xlu0 %3555
      %3557 = vadd.xlane.f32.xlu0 %v3528
      %v3558 = vpop.xlane.xlu0 %3557
      %3559 = vadd.xlane.f32.xlu0 %v3530
      %v3560 = vpop.xlane.xlu0 %3559
      %3561 = vadd.xlane.f32.xlu0 %v3532
      %v3562 = vpop.xlane.xlu0 %3561
      %3563 = vadd.xlane.f32.xlu0 %v3534
      %v3564 = vpop.xlane.xlu0 %3563
      %v3565 = vmul.f32 %v3540, %v1055
      %v3566 = vmul.f32 %v3542, %v1055
      %v3567 = vmul.f32 %v3544, %v1055
      %v3568 = vmul.f32 %v3546, %v1055
      %v3569 = vmul.f32 %v3548, %v1055
      %v3570 = vmul.f32 %v3550, %v1055
      %v3571 = vmul.f32 %v3552, %v1055
      %v3572 = vmul.f32 %v3554, %v1055
      %v3573 = vmul.f32 %v3556, %v1055
      %v3574 = vmul.f32 %v3558, %v1055
      %v3575 = vmul.f32 %v3560, %v1055
      %v3576 = vmul.f32 %v3562, %v1055
      %v3577 = vmul.f32 %v3564, %v1055
      %v3578 = vsub.f32 %v3510, %v3565
      %v3579 = vsub.f32 %v3512, %v3566
      %v3580 = vsub.f32 %v3514, %v3567
      %v3581 = vsub.f32 %v3516, %v3568
      %v3582 = vsub.f32 %v3518, %v3569
      %v3583 = vsub.f32 %v3520, %v3570
      %v3584 = vsub.f32 %v3522, %v3571
      %v3585 = vsub.f32 %v3524, %v3572
      %v3586 = vsub.f32 %v3526, %v3573
      %v3587 = vsub.f32 %v3528, %v3574
      %v3588 = vsub.f32 %v3530, %v3575
      %v3589 = vsub.f32 %v3532, %v3576
      %v3590 = vsub.f32 %v3534, %v3577
      %v3591 = vmul.f32 %v3578, %v3578
      %v3592 = vmul.f32 %v3579, %v3579
      %v3593 = vmul.f32 %v3580, %v3580
      %v3594 = vmul.f32 %v3581, %v3581
      %v3595 = vmul.f32 %v3582, %v3582
      %v3596 = vmul.f32 %v3583, %v3583
      %v3597 = vmul.f32 %v3584, %v3584
      %v3598 = vmul.f32 %v3585, %v3585
      %v3599 = vmul.f32 %v3586, %v3586
      %v3600 = vmul.f32 %v3587, %v3587
      %v3601 = vmul.f32 %v3588, %v3588
      %v3602 = vmul.f32 %v3589, %v3589
      %v3603 = vmul.f32 %v3590, %v3590
      %3604 = vadd.xlane.f32.xlu0 %v3591
      %v3605 = vpop.xlane.xlu0 %3604
      %3606 = vadd.xlane.f32.xlu0 %v3592
      %v3607 = vpop.xlane.xlu0 %3606
      %3608 = vadd.xlane.f32.xlu0 %v3593
      %v3609 = vpop.xlane.xlu0 %3608
      %3610 = vadd.xlane.f32.xlu0 %v3594
      %v3611 = vpop.xlane.xlu0 %3610
      %3612 = vadd.xlane.f32.xlu0 %v3595
      %v3613 = vpop.xlane.xlu0 %3612
      %3614 = vadd.xlane.f32.xlu0 %v3596
      %v3615 = vpop.xlane.xlu0 %3614
      %3616 = vadd.xlane.f32.xlu0 %v3597
      %v3617 = vpop.xlane.xlu0 %3616
      %3618 = vadd.xlane.f32.xlu0 %v3598
      %v3619 = vpop.xlane.xlu0 %3618
      %3620 = vadd.xlane.f32.xlu0 %v3599
      %v3621 = vpop.xlane.xlu0 %3620
      %3622 = vadd.xlane.f32.xlu0 %v3600
      %v3623 = vpop.xlane.xlu0 %3622
      %3624 = vadd.xlane.f32.xlu0 %v3601
      %v3625 = vpop.xlane.xlu0 %3624
      %3626 = vadd.xlane.f32.xlu0 %v3602
      %v3627 = vpop.xlane.xlu0 %3626
      %3628 = vadd.xlane.f32.xlu0 %v3603
      %v3629 = vpop.xlane.xlu0 %3628
      %v3630 = vmul.f32 %v3605, %v1055
      %v3631 = vmul.f32 %v3607, %v1055
      %v3632 = vmul.f32 %v3609, %v1055
      %v3633 = vmul.f32 %v3611, %v1055
      %v3634 = vmul.f32 %v3613, %v1055
      %v3635 = vmul.f32 %v3615, %v1055
      %v3636 = vmul.f32 %v3617, %v1055
      %v3637 = vmul.f32 %v3619, %v1055
      %v3638 = vmul.f32 %v3621, %v1055
      %v3639 = vmul.f32 %v3623, %v1055
      %v3640 = vmul.f32 %v3625, %v1055
      %v3641 = vmul.f32 %v3627, %v1055
      %v3642 = vmul.f32 %v3629, %v1055
      %v3643 = vadd.f32 %v3630, 1e-05
      %v3644 = vadd.f32 %v3631, 1e-05
      %v3645 = vadd.f32 %v3632, 1e-05
      %v3646 = vadd.f32 %v3633, 1e-05
      %v3647 = vadd.f32 %v3634, 1e-05
      %v3648 = vadd.f32 %v3635, 1e-05
      %v3649 = vadd.f32 %v3636, 1e-05
      %v3650 = vadd.f32 %v3637, 1e-05
      %v3651 = vadd.f32 %v3638, 1e-05
      %v3652 = vadd.f32 %v3639, 1e-05
      %v3653 = vadd.f32 %v3640, 1e-05
      %v3654 = vadd.f32 %v3641, 1e-05
      %v3655 = vadd.f32 %v3642, 1e-05
      %v3656 = vrsqrt.pop %v3643
      %v3657 = vmul.f32 %v3656, %v3643
      %v3658 = vmul.f32 %v3657, %v3656
      %v3659 = vmul.f32 0.5, %v3658
      %v3660 = vsub.f32 1.5, %v3659
      %v3661 = vmul.f32 %v3656, %v3660
      %vm3662 = vweird.f32 %v3643
      %vm3663 = vweird.f32 %v3656
      %vm3664 = vmor %vm3662, %vm3663
      %v3665 = vsel %vm3664, %v3656, %v3661
      %v3666 = vrsqrt.pop %v3644
      %v3667 = vmul.f32 %v3666, %v3644
      %v3668 = vmul.f32 %v3667, %v3666
      %v3669 = vmul.f32 0.5, %v3668
      %v3670 = vsub.f32 1.5, %v3669
      %v3671 = vmul.f32 %v3666, %v3670
      %vm3672 = vweird.f32 %v3644
      %vm3673 = vweird.f32 %v3666
      %vm3674 = vmor %vm3672, %vm3673
      %v3675 = vsel %vm3674, %v3666, %v3671
      %v3676 = vrsqrt.pop %v3645
      %v3677 = vmul.f32 %v3676, %v3645
      %v3678 = vmul.f32 %v3677, %v3676
      %v3679 = vmul.f32 0.5, %v3678
      %v3680 = vsub.f32 1.5, %v3679
      %v3681 = vmul.f32 %v3676, %v3680
      %vm3682 = vweird.f32 %v3645
      %vm3683 = vweird.f32 %v3676
      %vm3684 = vmor %vm3682, %vm3683
      %v3685 = vsel %vm3684, %v3676, %v3681
      %v3686 = vrsqrt.pop %v3646
      %v3687 = vmul.f32 %v3686, %v3646
      %v3688 = vmul.f32 %v3687, %v3686
      %v3689 = vmul.f32 0.5, %v3688
      %v3690 = vsub.f32 1.5, %v3689
      %v3691 = vmul.f32 %v3686, %v3690
      %vm3692 = vweird.f32 %v3646
      %vm3693 = vweird.f32 %v3686
      %vm3694 = vmor %vm3692, %vm3693
      %v3695 = vsel %vm3694, %v3686, %v3691
      %v3696 = vrsqrt.pop %v3647
      %v3697 = vmul.f32 %v3696, %v3647
      %v3698 = vmul.f32 %v3697, %v3696
      %v3699 = vmul.f32 0.5, %v3698
      %v3700 = vsub.f32 1.5, %v3699
      %v3701 = vmul.f32 %v3696, %v3700
      %vm3702 = vweird.f32 %v3647
      %vm3703 = vweird.f32 %v3696
      %vm3704 = vmor %vm3702, %vm3703
      %v3705 = vsel %vm3704, %v3696, %v3701
      %v3706 = vrsqrt.pop %v3648
      %v3707 = vmul.f32 %v3706, %v3648
      %v3708 = vmul.f32 %v3707, %v3706
      %v3709 = vmul.f32 0.5, %v3708
      %v3710 = vsub.f32 1.5, %v3709
      %v3711 = vmul.f32 %v3706, %v3710
      %vm3712 = vweird.f32 %v3648
      %vm3713 = vweird.f32 %v3706
      %vm3714 = vmor %vm3712, %vm3713
      %v3715 = vsel %vm3714, %v3706, %v3711
      %v3716 = vrsqrt.pop %v3649
      %v3717 = vmul.f32 %v3716, %v3649
      %v3718 = vmul.f32 %v3717, %v3716
      %v3719 = vmul.f32 0.5, %v3718
      %v3720 = vsub.f32 1.5, %v3719
      %v3721 = vmul.f32 %v3716, %v3720
      %vm3722 = vweird.f32 %v3649
      %vm3723 = vweird.f32 %v3716
      %vm3724 = vmor %vm3722, %vm3723
      %v3725 = vsel %vm3724, %v3716, %v3721
      %v3726 = vrsqrt.pop %v3650
      %v3727 = vmul.f32 %v3726, %v3650
      %v3728 = vmul.f32 %v3727, %v3726
      %v3729 = vmul.f32 0.5, %v3728
      %v3730 = vsub.f32 1.5, %v3729
      %v3731 = vmul.f32 %v3726, %v3730
      %vm3732 = vweird.f32 %v3650
      %vm3733 = vweird.f32 %v3726
      %vm3734 = vmor %vm3732, %vm3733
      %v3735 = vsel %vm3734, %v3726, %v3731
      %v3736 = vrsqrt.pop %v3651
      %v3737 = vmul.f32 %v3736, %v3651
      %v3738 = vmul.f32 %v3737, %v3736
      %v3739 = vmul.f32 0.5, %v3738
      %v3740 = vsub.f32 1.5, %v3739
      %v3741 = vmul.f32 %v3736, %v3740
      %vm3742 = vweird.f32 %v3651
      %vm3743 = vweird.f32 %v3736
      %vm3744 = vmor %vm3742, %vm3743
      %v3745 = vsel %vm3744, %v3736, %v3741
      %v3746 = vrsqrt.pop %v3652
      %v3747 = vmul.f32 %v3746, %v3652
      %v3748 = vmul.f32 %v3747, %v3746
      %v3749 = vmul.f32 0.5, %v3748
      %v3750 = vsub.f32 1.5, %v3749
      %v3751 = vmul.f32 %v3746, %v3750
      %vm3752 = vweird.f32 %v3652
      %vm3753 = vweird.f32 %v3746
      %vm3754 = vmor %vm3752, %vm3753
      %v3755 = vsel %vm3754, %v3746, %v3751
      %v3756 = vrsqrt.pop %v3653
      %v3757 = vmul.f32 %v3756, %v3653
      %v3758 = vmul.f32 %v3757, %v3756
      %v3759 = vmul.f32 0.5, %v3758
      %v3760 = vsub.f32 1.5, %v3759
      %v3761 = vmul.f32 %v3756, %v3760
      %vm3762 = vweird.f32 %v3653
      %vm3763 = vweird.f32 %v3756
      %vm3764 = vmor %vm3762, %vm3763
      %v3765 = vsel %vm3764, %v3756, %v3761
      %v3766 = vrsqrt.pop %v3654
      %v3767 = vmul.f32 %v3766, %v3654
      %v3768 = vmul.f32 %v3767, %v3766
      %v3769 = vmul.f32 0.5, %v3768
      %v3770 = vsub.f32 1.5, %v3769
      %v3771 = vmul.f32 %v3766, %v3770
      %vm3772 = vweird.f32 %v3654
      %vm3773 = vweird.f32 %v3766
      %vm3774 = vmor %vm3772, %vm3773
      %v3775 = vsel %vm3774, %v3766, %v3771
      %v3776 = vrsqrt.pop %v3655
      %v3777 = vmul.f32 %v3776, %v3655
      %v3778 = vmul.f32 %v3777, %v3776
      %v3779 = vmul.f32 0.5, %v3778
      %v3780 = vsub.f32 1.5, %v3779
      %v3781 = vmul.f32 %v3776, %v3780
      %vm3782 = vweird.f32 %v3655
      %vm3783 = vweird.f32 %v3776
      %vm3784 = vmor %vm3782, %vm3783
      %v3785 = vsel %vm3784, %v3776, %v3781
      %v3786 = vmul.f32 %v3578, %v3665
      %v3787 = vmul.f32 %v3579, %v3675
      %v3788 = vmul.f32 %v3580, %v3685
      %v3789 = vmul.f32 %v3581, %v3695
      %v3790 = vmul.f32 %v3582, %v3705
      %v3791 = vmul.f32 %v3583, %v3715
      %v3792 = vmul.f32 %v3584, %v3725
      %v3793 = vmul.f32 %v3585, %v3735
      %v3794 = vmul.f32 %v3586, %v3745
      %v3795 = vmul.f32 %v3587, %v3755
      %v3796 = vmul.f32 %v3588, %v3765
      %v3797 = vmul.f32 %v3589, %v3775
      %v3798 = vmul.f32 %v3590, %v3785
      %v3800 = vperm.slane %v3536, 0
      %v3802 = vmul.f32 %v3786, %v3800
      %v3803 = vmul.f32 %v3787, %v3800
      %v3804 = vmul.f32 %v3788, %v3800
      %v3805 = vmul.f32 %v3789, %v3800
      %v3806 = vmul.f32 %v3790, %v3800
      %v3807 = vmul.f32 %v3791, %v3800
      %v3808 = vmul.f32 %v3792, %v3800
      %v3809 = vmul.f32 %v3793, %v3800
      %v3810 = vmul.f32 %v3794, %v3800
      %v3811 = vmul.f32 %v3795, %v3800
      %v3812 = vmul.f32 %v3796, %v3800
      %v3813 = vmul.f32 %v3797, %v3800
      %v3814 = vmul.f32 %v3798, %v3800
      %v3816 = vperm.slane %v3538, 0
      %v3818 = vadd.f32 %v3802, %v3816
      %v3819 = vadd.f32 %v3803, %v3816
      %v3820 = vadd.f32 %v3804, %v3816
      %v3821 = vadd.f32 %v3805, %v3816
      %v3822 = vadd.f32 %v3806, %v3816
      %v3823 = vadd.f32 %v3807, %v3816
      %v3824 = vadd.f32 %v3808, %v3816
      %v3825 = vadd.f32 %v3809, %v3816
      %v3826 = vadd.f32 %v3810, %v3816
      %v3827 = vadd.f32 %v3811, %v3816
      %v3828 = vadd.f32 %v3812, %v3816
      %v3829 = vadd.f32 %v3813, %v3816
      %v3830 = vadd.f32 %v3814, %v3816
      %v3831 = vsel %vm600, 1.0, %v3818
      %v3832 = vsel %vm601, 1.0, %v3819
      %v3833 = vsel %vm602, 1.0, %v3820
      %v3834 = vsel %vm603, 1.0, %v3821
      %v3835 = vsel %vm604, 1.0, %v3822
      %v3836 = vsel %vm605, 1.0, %v3823
      %v3837 = vsel %vm606, 1.0, %v3824
      %v3838 = vsel %vm607, 1.0, %v3825
      %v3839 = vsel %vm608, 1.0, %v3826
      %v3840 = vsel %vm609, 1.0, %v3827
      %v3841 = vsel %vm610, 1.0, %v3828
      %v3842 = vsel %vm611, 1.0, %v3829
      %v3843 = vsel %vm612, 1.0, %v3830
      %s3844 = scalar_lea.vmem %s7, 208
      %v3845 = vld [vmem:[%s3844] sm:$0xff]
      %v3846 = vld [vmem:[%s3844 + $0x8] sm:$0xff]
      %v3847 = vld [vmem:[%s3844 + $0x10] sm:$0xff]
      %v3848 = vld [vmem:[%s3844 + $0x18] sm:$0xff]
      %v3849 = vld [vmem:[%s3844 + $0x20] sm:$0xff]
      %v3850 = vld [vmem:[%s3844 + $0x28] sm:$0xff]
      %v3851 = vld [vmem:[%s3844 + $0x30] sm:$0xff]
      %v3852 = vld [vmem:[%s3844 + $0x38] sm:$0xff]
      %v3853 = vld [vmem:[%s3844 + $0x40] sm:$0xff]
      %v3854 = vld [vmem:[%s3844 + $0x48] sm:$0xff]
      %v3855 = vld [vmem:[%s3844 + $0x50] sm:$0xff]
      %v3856 = vld [vmem:[%s3844 + $0x58] sm:$0xff]
      %v3857 = vld [vmem:[%s3844 + $0x60] sm:$0xff]
      %v3859 = vsel %vm1348, %v3845, 0
      %v3862 = vsel %vm1348, %v3846, 0
      %v3865 = vsel %vm1348, %v3847, 0
      %v3868 = vsel %vm1348, %v3848, 0
      %v3871 = vsel %vm1348, %v3849, 0
      %v3874 = vsel %vm1348, %v3850, 0
      %v3877 = vsel %vm1348, %v3851, 0
      %v3880 = vsel %vm1348, %v3852, 0
      %v3883 = vsel %vm1348, %v3853, 0
      %v3886 = vsel %vm1348, %v3854, 0
      %v3889 = vsel %vm1348, %v3855, 0
      %v3892 = vsel %vm1348, %v3856, 0
      %v3895 = vsel %vm1348, %v3857, 0
      %3897 = vmatpush.msra.mxu0 0.0
      %3898 = vmatpush.msra.mxu0 0.0
      %3899 = vmatpush.msra.mxu0 0.0
      %3900 = vmatpush.msra.mxu0 %v3843
      %3901 = vmatpush.msra.mxu0 %v3842
      %3902 = vmatpush.msra.mxu0 %v3841
      %3903 = vmatpush.msra.mxu0 %v3840
      %3904 = vmatpush.msra.mxu0 %v3839
      %3905 = vmatpush.msra.mxu0 %v3838
      %3906 = vmatpush.msra.mxu0 %v3837
      %3907 = vmatpush.msra.mxu0 %v3836
      %3908 = vmatpush.msra.mxu0 %v3835
      %3909 = vmatpush.msra.mxu0 %v3834
      %3910 = vmatpush.msra.mxu0 %v3833
      %3911 = vmatpush.msra.mxu0 %v3832
      %3912 = vmatpush.msra.mxu0 %v3831
      %3913 = vmatmul.f32.gmra.mxu0 %v3859
      %v3914 = vpop.f32.mrf.mxu0
      %v3915 = vadd.f32 0.0, %v3914
      %3916 = vmatmul.f32.gmra.mxu0 %v3862
      %v3917 = vpop.f32.mrf.mxu0
      %v3918 = vadd.f32 0.0, %v3917
      %3919 = vmatmul.f32.gmra.mxu0 %v3865
      %v3920 = vpop.f32.mrf.mxu0
      %v3921 = vadd.f32 0.0, %v3920
      %3922 = vmatmul.f32.gmra.mxu0 %v3868
      %v3923 = vpop.f32.mrf.mxu0
      %v3924 = vadd.f32 0.0, %v3923
      %3925 = vmatmul.f32.gmra.mxu0 %v3871
      %v3926 = vpop.f32.mrf.mxu0
      %v3927 = vadd.f32 0.0, %v3926
      %3928 = vmatmul.f32.gmra.mxu0 %v3874
      %v3929 = vpop.f32.mrf.mxu0
      %v3930 = vadd.f32 0.0, %v3929
      %3931 = vmatmul.f32.gmra.mxu0 %v3877
      %v3932 = vpop.f32.mrf.mxu0
      %v3933 = vadd.f32 0.0, %v3932
      %3934 = vmatmul.f32.gmra.mxu0 %v3880
      %v3935 = vpop.f32.mrf.mxu0
      %v3936 = vadd.f32 0.0, %v3935
      %3937 = vmatmul.f32.gmra.mxu0 %v3883
      %v3938 = vpop.f32.mrf.mxu0
      %v3939 = vadd.f32 0.0, %v3938
      %3940 = vmatmul.f32.gmra.mxu0 %v3886
      %v3941 = vpop.f32.mrf.mxu0
      %v3942 = vadd.f32 0.0, %v3941
      %3943 = vmatmul.f32.gmra.mxu0 %v3889
      %v3944 = vpop.f32.mrf.mxu0
      %v3945 = vadd.f32 0.0, %v3944
      %3946 = vmatmul.f32.gmra.mxu0 %v3892
      %v3947 = vpop.f32.mrf.mxu0
      %v3948 = vadd.f32 0.0, %v3947
      %3949 = vmatmul.f32.gmra.mxu0 %v3895
      %v3950 = vpop.f32.mrf.mxu0
      %v3951 = vadd.f32 0.0, %v3950
      %3952 = vdwg.mxu0
      %v3953 = vmul.f32 %v3915, %v3509
      %v3954 = vmul.f32 %v3918, %v3511
      %v3955 = vmul.f32 %v3921, %v3513
      %v3956 = vmul.f32 %v3924, %v3515
      %v3957 = vmul.f32 %v3927, %v3517
      %v3958 = vmul.f32 %v3930, %v3519
      %v3959 = vmul.f32 %v3933, %v3521
      %v3960 = vmul.f32 %v3936, %v3523
      %v3961 = vmul.f32 %v3939, %v3525
      %v3962 = vmul.f32 %v3942, %v3527
      %v3963 = vmul.f32 %v3945, %v3529
      %v3964 = vmul.f32 %v3948, %v3531
      %v3965 = vmul.f32 %v3951, %v3533
      %s3966 = scalar_lea.vmem %s8, 256
      %v3967 = vld [vmem:[%s3966] sm:$0xff]
      %v3968 = vld [vmem:[%s3966 + $0x8] sm:$0xff]
      %v3969 = vld [vmem:[%s3966 + $0x10] sm:$0xff]
      %v3970 = vld [vmem:[%s3966 + $0x18] sm:$0xff]
      %v3971 = vld [vmem:[%s3966 + $0x20] sm:$0xff]
      %v3972 = vld [vmem:[%s3966 + $0x28] sm:$0xff]
      %v3973 = vld [vmem:[%s3966 + $0x30] sm:$0xff]
      %v3974 = vld [vmem:[%s3966 + $0x38] sm:$0xff]
      %v3975 = vld [vmem:[%s3966 + $0x40] sm:$0xff]
      %v3976 = vld [vmem:[%s3966 + $0x48] sm:$0xff]
      %v3977 = vld [vmem:[%s3966 + $0x50] sm:$0xff]
      %v3978 = vld [vmem:[%s3966 + $0x58] sm:$0xff]
      %v3979 = vld [vmem:[%s3966 + $0x60] sm:$0xff]
      %v3980 = vld [vmem:[%s3966 + $0x68] sm:$0xff]
      %v3981 = vld [vmem:[%s3966 + $0x70] sm:$0xff]
      %v3982 = vld [vmem:[%s3966 + $0x78] sm:$0xff]
      %s3983 = scalar_lea.vmem %s9, 2
      %v3984 = vld [vmem:[%s3983] sm:$0x1]
      %v3986 = vperm.slane %v3984, 0
      %3988 = vmatpush.msra.mxu0 %v3982
      %3989 = vmatpush.msra.mxu0 %v3981
      %3990 = vmatpush.msra.mxu0 %v3980
      %3991 = vmatpush.msra.mxu0 %v3979
      %3992 = vmatpush.msra.mxu0 %v3978
      %3993 = vmatpush.msra.mxu0 %v3977
      %3994 = vmatpush.msra.mxu0 %v3976
      %3995 = vmatpush.msra.mxu0 %v3975
      %3996 = vmatpush.msra.mxu0 %v3974
      %3997 = vmatpush.msra.mxu0 %v3973
      %3998 = vmatpush.msra.mxu0 %v3972
      %3999 = vmatpush.msra.mxu0 %v3971
      %4000 = vmatpush.msra.mxu0 %v3970
      %4001 = vmatpush.msra.mxu0 %v3969
      %4002 = vmatpush.msra.mxu0 %v3968
      %4003 = vmatpush.msra.mxu0 %v3967
      %4004 = vmatmul.f32.gmra.mxu0 %v3953
      %v4005 = vpop.f32.mrf.mxu0
      %v4006 = vadd.f32 %v3986, %v4005
      %4007 = vmatmul.f32.gmra.mxu0 %v3954
      %v4008 = vpop.f32.mrf.mxu0
      %v4009 = vadd.f32 %v3986, %v4008
      %4010 = vmatmul.f32.gmra.mxu0 %v3955
      %v4011 = vpop.f32.mrf.mxu0
      %v4012 = vadd.f32 %v3986, %v4011
      %4013 = vmatmul.f32.gmra.mxu0 %v3956
      %v4014 = vpop.f32.mrf.mxu0
      %v4015 = vadd.f32 %v3986, %v4014
      %4016 = vmatmul.f32.gmra.mxu0 %v3957
      %v4017 = vpop.f32.mrf.mxu0
      %v4018 = vadd.f32 %v3986, %v4017
      %4019 = vmatmul.f32.gmra.mxu0 %v3958
      %v4020 = vpop.f32.mrf.mxu0
      %v4021 = vadd.f32 %v3986, %v4020
      %4022 = vmatmul.f32.gmra.mxu0 %v3959
      %v4023 = vpop.f32.mrf.mxu0
      %v4024 = vadd.f32 %v3986, %v4023
      %4025 = vmatmul.f32.gmra.mxu0 %v3960
      %v4026 = vpop.f32.mrf.mxu0
      %v4027 = vadd.f32 %v3986, %v4026
      %4028 = vmatmul.f32.gmra.mxu0 %v3961
      %v4029 = vpop.f32.mrf.mxu0
      %v4030 = vadd.f32 %v3986, %v4029
      %4031 = vmatmul.f32.gmra.mxu0 %v3962
      %v4032 = vpop.f32.mrf.mxu0
      %v4033 = vadd.f32 %v3986, %v4032
      %4034 = vmatmul.f32.gmra.mxu0 %v3963
      %v4035 = vpop.f32.mrf.mxu0
      %v4036 = vadd.f32 %v3986, %v4035
      %4037 = vmatmul.f32.gmra.mxu0 %v3964
      %v4038 = vpop.f32.mrf.mxu0
      %v4039 = vadd.f32 %v3986, %v4038
      %4040 = vmatmul.f32.gmra.mxu0 %v3965
      %v4041 = vpop.f32.mrf.mxu0
      %v4042 = vadd.f32 %v3986, %v4041
      %4043 = vdwg.mxu0
      %s4044 = scalar_lea.vmem %s10, 2
      %v4045 = vld [vmem:[%s4044] sm:$0x1]
      %s4046 = scalar_lea.vmem %s11, 2
      %v4047 = vld [vmem:[%s4046] sm:$0x1]
      %v4048 = vsel %vm635, %v4006, 0.0
      %4049 = vadd.xlane.f32.xlu0 %v4048
      %v4050 = vpop.xlane.xlu0 %4049
      %v4051 = vsel %vm635, %v4009, 0.0
      %4052 = vadd.xlane.f32.xlu0 %v4051
      %v4053 = vpop.xlane.xlu0 %4052
      %v4054 = vsel %vm635, %v4012, 0.0
      %4055 = vadd.xlane.f32.xlu0 %v4054
      %v4056 = vpop.xlane.xlu0 %4055
      %v4057 = vsel %vm635, %v4015, 0.0
      %4058 = vadd.xlane.f32.xlu0 %v4057
      %v4059 = vpop.xlane.xlu0 %4058
      %v4060 = vsel %vm635, %v4018, 0.0
      %4061 = vadd.xlane.f32.xlu0 %v4060
      %v4062 = vpop.xlane.xlu0 %4061
      %v4063 = vsel %vm635, %v4021, 0.0
      %4064 = vadd.xlane.f32.xlu0 %v4063
      %v4065 = vpop.xlane.xlu0 %4064
      %v4066 = vsel %vm635, %v4024, 0.0
      %4067 = vadd.xlane.f32.xlu0 %v4066
      %v4068 = vpop.xlane.xlu0 %4067
      %v4069 = vsel %vm635, %v4027, 0.0
      %4070 = vadd.xlane.f32.xlu0 %v4069
      %v4071 = vpop.xlane.xlu0 %4070
      %v4072 = vsel %vm635, %v4030, 0.0
      %4073 = vadd.xlane.f32.xlu0 %v4072
      %v4074 = vpop.xlane.xlu0 %4073
      %v4075 = vsel %vm635, %v4033, 0.0
      %4076 = vadd.xlane.f32.xlu0 %v4075
      %v4077 = vpop.xlane.xlu0 %4076
      %v4078 = vsel %vm635, %v4036, 0.0
      %4079 = vadd.xlane.f32.xlu0 %v4078
      %v4080 = vpop.xlane.xlu0 %4079
      %v4081 = vsel %vm635, %v4039, 0.0
      %4082 = vadd.xlane.f32.xlu0 %v4081
      %v4083 = vpop.xlane.xlu0 %4082
      %v4084 = vsel %vm635, %v4042, 0.0
      %4085 = vadd.xlane.f32.xlu0 %v4084
      %v4086 = vpop.xlane.xlu0 %4085
      %v4087 = vmul.f32 %v4050, %v1580
      %v4088 = vmul.f32 %v4053, %v1580
      %v4089 = vmul.f32 %v4056, %v1580
      %v4090 = vmul.f32 %v4059, %v1580
      %v4091 = vmul.f32 %v4062, %v1580
      %v4092 = vmul.f32 %v4065, %v1580
      %v4093 = vmul.f32 %v4068, %v1580
      %v4094 = vmul.f32 %v4071, %v1580
      %v4095 = vmul.f32 %v4074, %v1580
      %v4096 = vmul.f32 %v4077, %v1580
      %v4097 = vmul.f32 %v4080, %v1580
      %v4098 = vmul.f32 %v4083, %v1580
      %v4099 = vmul.f32 %v4086, %v1580
      %v4100 = vsub.f32 %v4006, %v4087
      %v4101 = vsub.f32 %v4009, %v4088
      %v4102 = vsub.f32 %v4012, %v4089
      %v4103 = vsub.f32 %v4015, %v4090
      %v4104 = vsub.f32 %v4018, %v4091
      %v4105 = vsub.f32 %v4021, %v4092
      %v4106 = vsub.f32 %v4024, %v4093
      %v4107 = vsub.f32 %v4027, %v4094
      %v4108 = vsub.f32 %v4030, %v4095
      %v4109 = vsub.f32 %v4033, %v4096
      %v4110 = vsub.f32 %v4036, %v4097
      %v4111 = vsub.f32 %v4039, %v4098
      %v4112 = vsub.f32 %v4042, %v4099
      %v4113 = vmul.f32 %v4100, %v4100
      %v4114 = vmul.f32 %v4101, %v4101
      %v4115 = vmul.f32 %v4102, %v4102
      %v4116 = vmul.f32 %v4103, %v4103
      %v4117 = vmul.f32 %v4104, %v4104
      %v4118 = vmul.f32 %v4105, %v4105
      %v4119 = vmul.f32 %v4106, %v4106
      %v4120 = vmul.f32 %v4107, %v4107
      %v4121 = vmul.f32 %v4108, %v4108
      %v4122 = vmul.f32 %v4109, %v4109
      %v4123 = vmul.f32 %v4110, %v4110
      %v4124 = vmul.f32 %v4111, %v4111
      %v4125 = vmul.f32 %v4112, %v4112
      %v4126 = vsel %vm635, %v4113, 0.0
      %4127 = vadd.xlane.f32.xlu0 %v4126
      %v4128 = vpop.xlane.xlu0 %4127
      %v4129 = vsel %vm635, %v4114, 0.0
      %4130 = vadd.xlane.f32.xlu0 %v4129
      %v4131 = vpop.xlane.xlu0 %4130
      %v4132 = vsel %vm635, %v4115, 0.0
      %4133 = vadd.xlane.f32.xlu0 %v4132
      %v4134 = vpop.xlane.xlu0 %4133
      %v4135 = vsel %vm635, %v4116, 0.0
      %4136 = vadd.xlane.f32.xlu0 %v4135
      %v4137 = vpop.xlane.xlu0 %4136
      %v4138 = vsel %vm635, %v4117, 0.0
      %4139 = vadd.xlane.f32.xlu0 %v4138
      %v4140 = vpop.xlane.xlu0 %4139
      %v4141 = vsel %vm635, %v4118, 0.0
      %4142 = vadd.xlane.f32.xlu0 %v4141
      %v4143 = vpop.xlane.xlu0 %4142
      %v4144 = vsel %vm635, %v4119, 0.0
      %4145 = vadd.xlane.f32.xlu0 %v4144
      %v4146 = vpop.xlane.xlu0 %4145
      %v4147 = vsel %vm635, %v4120, 0.0
      %4148 = vadd.xlane.f32.xlu0 %v4147
      %v4149 = vpop.xlane.xlu0 %4148
      %v4150 = vsel %vm635, %v4121, 0.0
      %4151 = vadd.xlane.f32.xlu0 %v4150
      %v4152 = vpop.xlane.xlu0 %4151
      %v4153 = vsel %vm635, %v4122, 0.0
      %4154 = vadd.xlane.f32.xlu0 %v4153
      %v4155 = vpop.xlane.xlu0 %4154
      %v4156 = vsel %vm635, %v4123, 0.0
      %4157 = vadd.xlane.f32.xlu0 %v4156
      %v4158 = vpop.xlane.xlu0 %4157
      %v4159 = vsel %vm635, %v4124, 0.0
      %4160 = vadd.xlane.f32.xlu0 %v4159
      %v4161 = vpop.xlane.xlu0 %4160
      %v4162 = vsel %vm635, %v4125, 0.0
      %4163 = vadd.xlane.f32.xlu0 %v4162
      %v4164 = vpop.xlane.xlu0 %4163
      %v4165 = vmul.f32 %v4128, %v1580
      %v4166 = vmul.f32 %v4131, %v1580
      %v4167 = vmul.f32 %v4134, %v1580
      %v4168 = vmul.f32 %v4137, %v1580
      %v4169 = vmul.f32 %v4140, %v1580
      %v4170 = vmul.f32 %v4143, %v1580
      %v4171 = vmul.f32 %v4146, %v1580
      %v4172 = vmul.f32 %v4149, %v1580
      %v4173 = vmul.f32 %v4152, %v1580
      %v4174 = vmul.f32 %v4155, %v1580
      %v4175 = vmul.f32 %v4158, %v1580
      %v4176 = vmul.f32 %v4161, %v1580
      %v4177 = vmul.f32 %v4164, %v1580
      %v4178 = vadd.f32 %v4165, 1e-05
      %v4179 = vadd.f32 %v4166, 1e-05
      %v4180 = vadd.f32 %v4167, 1e-05
      %v4181 = vadd.f32 %v4168, 1e-05
      %v4182 = vadd.f32 %v4169, 1e-05
      %v4183 = vadd.f32 %v4170, 1e-05
      %v4184 = vadd.f32 %v4171, 1e-05
      %v4185 = vadd.f32 %v4172, 1e-05
      %v4186 = vadd.f32 %v4173, 1e-05
      %v4187 = vadd.f32 %v4174, 1e-05
      %v4188 = vadd.f32 %v4175, 1e-05
      %v4189 = vadd.f32 %v4176, 1e-05
      %v4190 = vadd.f32 %v4177, 1e-05
      %v4191 = vrsqrt.pop %v4178
      %v4192 = vmul.f32 %v4191, %v4178
      %v4193 = vmul.f32 %v4192, %v4191
      %v4194 = vmul.f32 0.5, %v4193
      %v4195 = vsub.f32 1.5, %v4194
      %v4196 = vmul.f32 %v4191, %v4195
      %vm4197 = vweird.f32 %v4178
      %vm4198 = vweird.f32 %v4191
      %vm4199 = vmor %vm4197, %vm4198
      %v4200 = vsel %vm4199, %v4191, %v4196
      %v4201 = vrsqrt.pop %v4179
      %v4202 = vmul.f32 %v4201, %v4179
      %v4203 = vmul.f32 %v4202, %v4201
      %v4204 = vmul.f32 0.5, %v4203
      %v4205 = vsub.f32 1.5, %v4204
      %v4206 = vmul.f32 %v4201, %v4205
      %vm4207 = vweird.f32 %v4179
      %vm4208 = vweird.f32 %v4201
      %vm4209 = vmor %vm4207, %vm4208
      %v4210 = vsel %vm4209, %v4201, %v4206
      %v4211 = vrsqrt.pop %v4180
      %v4212 = vmul.f32 %v4211, %v4180
      %v4213 = vmul.f32 %v4212, %v4211
      %v4214 = vmul.f32 0.5, %v4213
      %v4215 = vsub.f32 1.5, %v4214
      %v4216 = vmul.f32 %v4211, %v4215
      %vm4217 = vweird.f32 %v4180
      %vm4218 = vweird.f32 %v4211
      %vm4219 = vmor %vm4217, %vm4218
      %v4220 = vsel %vm4219, %v4211, %v4216
      %v4221 = vrsqrt.pop %v4181
      %v4222 = vmul.f32 %v4221, %v4181
      %v4223 = vmul.f32 %v4222, %v4221
      %v4224 = vmul.f32 0.5, %v4223
      %v4225 = vsub.f32 1.5, %v4224
      %v4226 = vmul.f32 %v4221, %v4225
      %vm4227 = vweird.f32 %v4181
      %vm4228 = vweird.f32 %v4221
      %vm4229 = vmor %vm4227, %vm4228
      %v4230 = vsel %vm4229, %v4221, %v4226
      %v4231 = vrsqrt.pop %v4182
      %v4232 = vmul.f32 %v4231, %v4182
      %v4233 = vmul.f32 %v4232, %v4231
      %v4234 = vmul.f32 0.5, %v4233
      %v4235 = vsub.f32 1.5, %v4234
      %v4236 = vmul.f32 %v4231, %v4235
      %vm4237 = vweird.f32 %v4182
      %vm4238 = vweird.f32 %v4231
      %vm4239 = vmor %vm4237, %vm4238
      %v4240 = vsel %vm4239, %v4231, %v4236
      %v4241 = vrsqrt.pop %v4183
      %v4242 = vmul.f32 %v4241, %v4183
      %v4243 = vmul.f32 %v4242, %v4241
      %v4244 = vmul.f32 0.5, %v4243
      %v4245 = vsub.f32 1.5, %v4244
      %v4246 = vmul.f32 %v4241, %v4245
      %vm4247 = vweird.f32 %v4183
      %vm4248 = vweird.f32 %v4241
      %vm4249 = vmor %vm4247, %vm4248
      %v4250 = vsel %vm4249, %v4241, %v4246
      %v4251 = vrsqrt.pop %v4184
      %v4252 = vmul.f32 %v4251, %v4184
      %v4253 = vmul.f32 %v4252, %v4251
      %v4254 = vmul.f32 0.5, %v4253
      %v4255 = vsub.f32 1.5, %v4254
      %v4256 = vmul.f32 %v4251, %v4255
      %vm4257 = vweird.f32 %v4184
      %vm4258 = vweird.f32 %v4251
      %vm4259 = vmor %vm4257, %vm4258
      %v4260 = vsel %vm4259, %v4251, %v4256
      %v4261 = vrsqrt.pop %v4185
      %v4262 = vmul.f32 %v4261, %v4185
      %v4263 = vmul.f32 %v4262, %v4261
      %v4264 = vmul.f32 0.5, %v4263
      %v4265 = vsub.f32 1.5, %v4264
      %v4266 = vmul.f32 %v4261, %v4265
      %vm4267 = vweird.f32 %v4185
      %vm4268 = vweird.f32 %v4261
      %vm4269 = vmor %vm4267, %vm4268
      %v4270 = vsel %vm4269, %v4261, %v4266
      %v4271 = vrsqrt.pop %v4186
      %v4272 = vmul.f32 %v4271, %v4186
      %v4273 = vmul.f32 %v4272, %v4271
      %v4274 = vmul.f32 0.5, %v4273
      %v4275 = vsub.f32 1.5, %v4274
      %v4276 = vmul.f32 %v4271, %v4275
      %vm4277 = vweird.f32 %v4186
      %vm4278 = vweird.f32 %v4271
      %vm4279 = vmor %vm4277, %vm4278
      %v4280 = vsel %vm4279, %v4271, %v4276
      %v4281 = vrsqrt.pop %v4187
      %v4282 = vmul.f32 %v4281, %v4187
      %v4283 = vmul.f32 %v4282, %v4281
      %v4284 = vmul.f32 0.5, %v4283
      %v4285 = vsub.f32 1.5, %v4284
      %v4286 = vmul.f32 %v4281, %v4285
      %vm4287 = vweird.f32 %v4187
      %vm4288 = vweird.f32 %v4281
      %vm4289 = vmor %vm4287, %vm4288
      %v4290 = vsel %vm4289, %v4281, %v4286
      %v4291 = vrsqrt.pop %v4188
      %v4292 = vmul.f32 %v4291, %v4188
      %v4293 = vmul.f32 %v4292, %v4291
      %v4294 = vmul.f32 0.5, %v4293
      %v4295 = vsub.f32 1.5, %v4294
      %v4296 = vmul.f32 %v4291, %v4295
      %vm4297 = vweird.f32 %v4188
      %vm4298 = vweird.f32 %v4291
      %vm4299 = vmor %vm4297, %vm4298
      %v4300 = vsel %vm4299, %v4291, %v4296
      %v4301 = vrsqrt.pop %v4189
      %v4302 = vmul.f32 %v4301, %v4189
      %v4303 = vmul.f32 %v4302, %v4301
      %v4304 = vmul.f32 0.5, %v4303
      %v4305 = vsub.f32 1.5, %v4304
      %v4306 = vmul.f32 %v4301, %v4305
      %vm4307 = vweird.f32 %v4189
      %vm4308 = vweird.f32 %v4301
      %vm4309 = vmor %vm4307, %vm4308
      %v4310 = vsel %vm4309, %v4301, %v4306
      %v4311 = vrsqrt.pop %v4190
      %v4312 = vmul.f32 %v4311, %v4190
      %v4313 = vmul.f32 %v4312, %v4311
      %v4314 = vmul.f32 0.5, %v4313
      %v4315 = vsub.f32 1.5, %v4314
      %v4316 = vmul.f32 %v4311, %v4315
      %vm4317 = vweird.f32 %v4190
      %vm4318 = vweird.f32 %v4311
      %vm4319 = vmor %vm4317, %vm4318
      %v4320 = vsel %vm4319, %v4311, %v4316
      %v4321 = vmul.f32 %v4100, %v4200
      %v4322 = vmul.f32 %v4101, %v4210
      %v4323 = vmul.f32 %v4102, %v4220
      %v4324 = vmul.f32 %v4103, %v4230
      %v4325 = vmul.f32 %v4104, %v4240
      %v4326 = vmul.f32 %v4105, %v4250
      %v4327 = vmul.f32 %v4106, %v4260
      %v4328 = vmul.f32 %v4107, %v4270
      %v4329 = vmul.f32 %v4108, %v4280
      %v4330 = vmul.f32 %v4109, %v4290
      %v4331 = vmul.f32 %v4110, %v4300
      %v4332 = vmul.f32 %v4111, %v4310
      %v4333 = vmul.f32 %v4112, %v4320
      %v4335 = vperm.slane %v4045, 0
      %v4337 = vmul.f32 %v4321, %v4335
      %v4338 = vmul.f32 %v4322, %v4335
      %v4339 = vmul.f32 %v4323, %v4335
      %v4340 = vmul.f32 %v4324, %v4335
      %v4341 = vmul.f32 %v4325, %v4335
      %v4342 = vmul.f32 %v4326, %v4335
      %v4343 = vmul.f32 %v4327, %v4335
      %v4344 = vmul.f32 %v4328, %v4335
      %v4345 = vmul.f32 %v4329, %v4335
      %v4346 = vmul.f32 %v4330, %v4335
      %v4347 = vmul.f32 %v4331, %v4335
      %v4348 = vmul.f32 %v4332, %v4335
      %v4349 = vmul.f32 %v4333, %v4335
      %v4351 = vperm.slane %v4047, 0
      %v4353 = vadd.f32 %v4337, %v4351
      %v4354 = vadd.f32 %v4338, %v4351
      %v4355 = vadd.f32 %v4339, %v4351
      %v4356 = vadd.f32 %v4340, %v4351
      %v4357 = vadd.f32 %v4341, %v4351
      %v4358 = vadd.f32 %v4342, %v4351
      %v4359 = vadd.f32 %v4343, %v4351
      %v4360 = vadd.f32 %v4344, %v4351
      %v4361 = vadd.f32 %v4345, %v4351
      %v4362 = vadd.f32 %v4346, %v4351
      %v4363 = vadd.f32 %v4347, %v4351
      %v4364 = vadd.f32 %v4348, %v4351
      %v4365 = vadd.f32 %v4349, %v4351
      %v4366 = vadd.f32 %v4353, %v3113
      %v4367 = vadd.f32 %v4354, %v3114
      %v4368 = vadd.f32 %v4355, %v3115
      %v4369 = vadd.f32 %v4356, %v3116
      %v4370 = vadd.f32 %v4357, %v3117
      %v4371 = vadd.f32 %v4358, %v3118
      %v4372 = vadd.f32 %v4359, %v3119
      %v4373 = vadd.f32 %v4360, %v3120
      %v4374 = vadd.f32 %v4361, %v3121
      %v4375 = vadd.f32 %v4362, %v3122
      %v4376 = vadd.f32 %v4363, %v3123
      %v4377 = vadd.f32 %v4364, %v3124
      %v4378 = vadd.f32 %v4365, %v3125
      %s4379 = scalar_lea.vmem %s3, 384
      %v4380 = vld [vmem:[%s4379] sm:$0xff]
      %v4381 = vld [vmem:[%s4379 + $0x8] sm:$0xff]
      %v4382 = vld [vmem:[%s4379 + $0x10] sm:$0xff]
      %v4383 = vld [vmem:[%s4379 + $0x18] sm:$0xff]
      %v4384 = vld [vmem:[%s4379 + $0x20] sm:$0xff]
      %v4385 = vld [vmem:[%s4379 + $0x28] sm:$0xff]
      %v4386 = vld [vmem:[%s4379 + $0x30] sm:$0xff]
      %v4387 = vld [vmem:[%s4379 + $0x38] sm:$0xff]
      %v4388 = vld [vmem:[%s4379 + $0x40] sm:$0xff]
      %v4389 = vld [vmem:[%s4379 + $0x48] sm:$0xff]
      %v4390 = vld [vmem:[%s4379 + $0x50] sm:$0xff]
      %v4391 = vld [vmem:[%s4379 + $0x58] sm:$0xff]
      %v4392 = vld [vmem:[%s4379 + $0x60] sm:$0xff]
      %v4393 = vld [vmem:[%s4379 + $0x68] sm:$0xff]
      %v4394 = vld [vmem:[%s4379 + $0x70] sm:$0xff]
      %v4395 = vld [vmem:[%s4379 + $0x78] sm:$0xff]
      %s4396 = scalar_lea.vmem %s4, 6
      %v4397 = vld [vmem:[%s4396] sm:$0x3]
      %v4399 = vperm.slane %v4397, 0
      %v4400 = vperm.slane %v4397, 1
      %v4404 = vsel %vm635, %v4366, 0
      %v4407 = vsel %vm635, %v4367, 0
      %v4410 = vsel %vm635, %v4368, 0
      %v4413 = vsel %vm635, %v4369, 0
      %v4416 = vsel %vm635, %v4370, 0
      %v4419 = vsel %vm635, %v4371, 0
      %v4422 = vsel %vm635, %v4372, 0
      %v4425 = vsel %vm635, %v4373, 0
      %v4428 = vsel %vm635, %v4374, 0
      %v4431 = vsel %vm635, %v4375, 0
      %v4434 = vsel %vm635, %v4376, 0
      %v4437 = vsel %vm635, %v4377, 0
      %v4440 = vsel %vm635, %v4378, 0
      %4442 = vmatpush.msra.mxu0 0.0
      %4443 = vmatpush.msra.mxu0 0.0
      %4444 = vmatpush.msra.mxu0 0.0
      %4445 = vmatpush.msra.mxu0 0.0
      %4446 = vmatpush.msra.mxu0 0.0
      %4447 = vmatpush.msra.mxu0 0.0
      %4448 = vmatpush.msra.mxu0 0.0
      %4449 = vmatpush.msra.mxu0 0.0
      %4450 = vmatpush.msra.mxu0 %v4394
      %4451 = vmatpush.msra.mxu0 %v4392
      %4452 = vmatpush.msra.mxu0 %v4390
      %4453 = vmatpush.msra.mxu0 %v4388
      %4454 = vmatpush.msra.mxu0 %v4386
      %4455 = vmatpush.msra.mxu0 %v4384
      %4456 = vmatpush.msra.mxu0 %v4382
      %4457 = vmatpush.msra.mxu0 %v4380
      %4458 = vmatmul.f32.gmra.mxu0 %v4404
      %v4459 = vpop.f32.mrf.mxu0
      %v4460 = vadd.f32 %v4399, %v4459
      %4461 = vmatmul.f32.gmra.mxu0 %v4407
      %v4462 = vpop.f32.mrf.mxu0
      %v4463 = vadd.f32 %v4399, %v4462
      %4464 = vmatmul.f32.gmra.mxu0 %v4410
      %v4465 = vpop.f32.mrf.mxu0
      %v4466 = vadd.f32 %v4399, %v4465
      %4467 = vmatmul.f32.gmra.mxu0 %v4413
      %v4468 = vpop.f32.mrf.mxu0
      %v4469 = vadd.f32 %v4399, %v4468
      %4470 = vmatmul.f32.gmra.mxu0 %v4416
      %v4471 = vpop.f32.mrf.mxu0
      %v4472 = vadd.f32 %v4399, %v4471
      %4473 = vmatmul.f32.gmra.mxu0 %v4419
      %v4474 = vpop.f32.mrf.mxu0
      %v4475 = vadd.f32 %v4399, %v4474
      %4476 = vmatmul.f32.gmra.mxu0 %v4422
      %v4477 = vpop.f32.mrf.mxu0
      %v4478 = vadd.f32 %v4399, %v4477
      %4479 = vmatmul.f32.gmra.mxu0 %v4425
      %v4480 = vpop.f32.mrf.mxu0
      %v4481 = vadd.f32 %v4399, %v4480
      %4482 = vmatmul.f32.gmra.mxu0 %v4428
      %v4483 = vpop.f32.mrf.mxu0
      %v4484 = vadd.f32 %v4399, %v4483
      %4485 = vmatmul.f32.gmra.mxu0 %v4431
      %v4486 = vpop.f32.mrf.mxu0
      %v4487 = vadd.f32 %v4399, %v4486
      %4488 = vmatmul.f32.gmra.mxu0 %v4434
      %v4489 = vpop.f32.mrf.mxu0
      %v4490 = vadd.f32 %v4399, %v4489
      %4491 = vmatmul.f32.gmra.mxu0 %v4437
      %v4492 = vpop.f32.mrf.mxu0
      %v4493 = vadd.f32 %v4399, %v4492
      %4494 = vmatmul.f32.gmra.mxu0 %v4440
      %v4495 = vpop.f32.mrf.mxu0
      %v4496 = vadd.f32 %v4399, %v4495
      %4497 = vdwg.mxu0
      %4498 = vmatpush.msra.mxu0 0.0
      %4499 = vmatpush.msra.mxu0 0.0
      %4500 = vmatpush.msra.mxu0 0.0
      %4501 = vmatpush.msra.mxu0 0.0
      %4502 = vmatpush.msra.mxu0 0.0
      %4503 = vmatpush.msra.mxu0 0.0
      %4504 = vmatpush.msra.mxu0 0.0
      %4505 = vmatpush.msra.mxu0 0.0
      %4506 = vmatpush.msra.mxu0 %v4395
      %4507 = vmatpush.msra.mxu0 %v4393
      %4508 = vmatpush.msra.mxu0 %v4391
      %4509 = vmatpush.msra.mxu0 %v4389
      %4510 = vmatpush.msra.mxu0 %v4387
      %4511 = vmatpush.msra.mxu0 %v4385
      %4512 = vmatpush.msra.mxu0 %v4383
      %4513 = vmatpush.msra.mxu0 %v4381
      %4514 = vmatmul.f32.gmra.mxu0 %v4404
      %v4515 = vpop.f32.mrf.mxu0
      %v4516 = vadd.f32 %v4400, %v4515
      %4517 = vmatmul.f32.gmra.mxu0 %v4407
      %v4518 = vpop.f32.mrf.mxu0
      %v4519 = vadd.f32 %v4400, %v4518
      %4520 = vmatmul.f32.gmra.mxu0 %v4410
      %v4521 = vpop.f32.mrf.mxu0
      %v4522 = vadd.f32 %v4400, %v4521
      %4523 = vmatmul.f32.gmra.mxu0 %v4413
      %v4524 = vpop.f32.mrf.mxu0
      %v4525 = vadd.f32 %v4400, %v4524
      %4526 = vmatmul.f32.gmra.mxu0 %v4416
      %v4527 = vpop.f32.mrf.mxu0
      %v4528 = vadd.f32 %v4400, %v4527
      %4529 = vmatmul.f32.gmra.mxu0 %v4419
      %v4530 = vpop.f32.mrf.mxu0
      %v4531 = vadd.f32 %v4400, %v4530
      %4532 = vmatmul.f32.gmra.mxu0 %v4422
      %v4533 = vpop.f32.mrf.mxu0
      %v4534 = vadd.f32 %v4400, %v4533
      %4535 = vmatmul.f32.gmra.mxu0 %v4425
      %v4536 = vpop.f32.mrf.mxu0
      %v4537 = vadd.f32 %v4400, %v4536
      %4538 = vmatmul.f32.gmra.mxu0 %v4428
      %v4539 = vpop.f32.mrf.mxu0
      %v4540 = vadd.f32 %v4400, %v4539
      %4541 = vmatmul.f32.gmra.mxu0 %v4431
      %v4542 = vpop.f32.mrf.mxu0
      %v4543 = vadd.f32 %v4400, %v4542
      %4544 = vmatmul.f32.gmra.mxu0 %v4434
      %v4545 = vpop.f32.mrf.mxu0
      %v4546 = vadd.f32 %v4400, %v4545
      %4547 = vmatmul.f32.gmra.mxu0 %v4437
      %v4548 = vpop.f32.mrf.mxu0
      %v4549 = vadd.f32 %v4400, %v4548
      %4550 = vmatmul.f32.gmra.mxu0 %v4440
      %v4551 = vpop.f32.mrf.mxu0
      %v4552 = vadd.f32 %v4400, %v4551
      %4553 = vdwg.mxu0
      %v4554 = vmul.f32 %v4460, 0.5
      %v4555 = vmul.f32 %v4516, 0.5
      %v4556 = vmul.f32 %v4463, 0.5
      %v4557 = vmul.f32 %v4519, 0.5
      %v4558 = vmul.f32 %v4466, 0.5
      %v4559 = vmul.f32 %v4522, 0.5
      %v4560 = vmul.f32 %v4469, 0.5
      %v4561 = vmul.f32 %v4525, 0.5
      %v4562 = vmul.f32 %v4472, 0.5
      %v4563 = vmul.f32 %v4528, 0.5
      %v4564 = vmul.f32 %v4475, 0.5
      %v4565 = vmul.f32 %v4531, 0.5
      %v4566 = vmul.f32 %v4478, 0.5
      %v4567 = vmul.f32 %v4534, 0.5
      %v4568 = vmul.f32 %v4481, 0.5
      %v4569 = vmul.f32 %v4537, 0.5
      %v4570 = vmul.f32 %v4484, 0.5
      %v4571 = vmul.f32 %v4540, 0.5
      %v4572 = vmul.f32 %v4487, 0.5
      %v4573 = vmul.f32 %v4543, 0.5
      %v4574 = vmul.f32 %v4490, 0.5
      %v4575 = vmul.f32 %v4546, 0.5
      %v4576 = vmul.f32 %v4493, 0.5
      %v4577 = vmul.f32 %v4549, 0.5
      %v4578 = vmul.f32 %v4496, 0.5
      %v4579 = vmul.f32 %v4552, 0.5
      %v4580 = vmul.f32 %v4460, 0.044715
      %v4581 = vmul.f32 %v4516, 0.044715
      %v4582 = vmul.f32 %v4463, 0.044715
      %v4583 = vmul.f32 %v4519, 0.044715
      %v4584 = vmul.f32 %v4466, 0.044715
      %v4585 = vmul.f32 %v4522, 0.044715
      %v4586 = vmul.f32 %v4469, 0.044715
      %v4587 = vmul.f32 %v4525, 0.044715
      %v4588 = vmul.f32 %v4472, 0.044715
      %v4589 = vmul.f32 %v4528, 0.044715
      %v4590 = vmul.f32 %v4475, 0.044715
      %v4591 = vmul.f32 %v4531, 0.044715
      %v4592 = vmul.f32 %v4478, 0.044715
      %v4593 = vmul.f32 %v4534, 0.044715
      %v4594 = vmul.f32 %v4481, 0.044715
      %v4595 = vmul.f32 %v4537, 0.044715
      %v4596 = vmul.f32 %v4484, 0.044715
      %v4597 = vmul.f32 %v4540, 0.044715
      %v4598 = vmul.f32 %v4487, 0.044715
      %v4599 = vmul.f32 %v4543, 0.044715
      %v4600 = vmul.f32 %v4490, 0.044715
      %v4601 = vmul.f32 %v4546, 0.044715
      %v4602 = vmul.f32 %v4493, 0.044715
      %v4603 = vmul.f32 %v4549, 0.044715
      %v4604 = vmul.f32 %v4496, 0.044715
      %v4605 = vmul.f32 %v4552, 0.044715
      %v4606 = vmul.f32 %v4580, %v4460
      %v4607 = vmul.f32 %v4581, %v4516
      %v4608 = vmul.f32 %v4582, %v4463
      %v4609 = vmul.f32 %v4583, %v4519
      %v4610 = vmul.f32 %v4584, %v4466
      %v4611 = vmul.f32 %v4585, %v4522
      %v4612 = vmul.f32 %v4586, %v4469
      %v4613 = vmul.f32 %v4587, %v4525
      %v4614 = vmul.f32 %v4588, %v4472
      %v4615 = vmul.f32 %v4589, %v4528
      %v4616 = vmul.f32 %v4590, %v4475
      %v4617 = vmul.f32 %v4591, %v4531
      %v4618 = vmul.f32 %v4592, %v4478
      %v4619 = vmul.f32 %v4593, %v4534
      %v4620 = vmul.f32 %v4594, %v4481
      %v4621 = vmul.f32 %v4595, %v4537
      %v4622 = vmul.f32 %v4596, %v4484
      %v4623 = vmul.f32 %v4597, %v4540
      %v4624 = vmul.f32 %v4598, %v4487
      %v4625 = vmul.f32 %v4599, %v4543
      %v4626 = vmul.f32 %v4600, %v4490
      %v4627 = vmul.f32 %v4601, %v4546
      %v4628 = vmul.f32 %v4602, %v4493
      %v4629 = vmul.f32 %v4603, %v4549
      %v4630 = vmul.f32 %v4604, %v4496
      %v4631 = vmul.f32 %v4605, %v4552
      %v4632 = vmul.f32 %v4606, %v4460
      %v4633 = vmul.f32 %v4607, %v4516
      %v4634 = vmul.f32 %v4608, %v4463
      %v4635 = vmul.f32 %v4609, %v4519
      %v4636 = vmul.f32 %v4610, %v4466
      %v4637 = vmul.f32 %v4611, %v4522
      %v4638 = vmul.f32 %v4612, %v4469
      %v4639 = vmul.f32 %v4613, %v4525
      %v4640 = vmul.f32 %v4614, %v4472
      %v4641 = vmul.f32 %v4615, %v4528
      %v4642 = vmul.f32 %v4616, %v4475
      %v4643 = vmul.f32 %v4617, %v4531
      %v4644 = vmul.f32 %v4618, %v4478
      %v4645 = vmul.f32 %v4619, %v4534
      %v4646 = vmul.f32 %v4620, %v4481
      %v4647 = vmul.f32 %v4621, %v4537
      %v4648 = vmul.f32 %v4622, %v4484
      %v4649 = vmul.f32 %v4623, %v4540
      %v4650 = vmul.f32 %v4624, %v4487
      %v4651 = vmul.f32 %v4625, %v4543
      %v4652 = vmul.f32 %v4626, %v4490
      %v4653 = vmul.f32 %v4627, %v4546
      %v4654 = vmul.f32 %v4628, %v4493
      %v4655 = vmul.f32 %v4629, %v4549
      %v4656 = vmul.f32 %v4630, %v4496
      %v4657 = vmul.f32 %v4631, %v4552
      %v4658 = vadd.f32 %v4460, %v4632
      %v4659 = vadd.f32 %v4516, %v4633
      %v4660 = vadd.f32 %v4463, %v4634
      %v4661 = vadd.f32 %v4519, %v4635
      %v4662 = vadd.f32 %v4466, %v4636
      %v4663 = vadd.f32 %v4522, %v4637
      %v4664 = vadd.f32 %v4469, %v4638
      %v4665 = vadd.f32 %v4525, %v4639
      %v4666 = vadd.f32 %v4472, %v4640
      %v4667 = vadd.f32 %v4528, %v4641
      %v4668 = vadd.f32 %v4475, %v4642
      %v4669 = vadd.f32 %v4531, %v4643
      %v4670 = vadd.f32 %v4478, %v4644
      %v4671 = vadd.f32 %v4534, %v4645
      %v4672 = vadd.f32 %v4481, %v4646
      %v4673 = vadd.f32 %v4537, %v4647
      %v4674 = vadd.f32 %v4484, %v4648
      %v4675 = vadd.f32 %v4540, %v4649
      %v4676 = vadd.f32 %v4487, %v4650
      %v4677 = vadd.f32 %v4543, %v4651
      %v4678 = vadd.f32 %v4490, %v4652
      %v4679 = vadd.f32 %v4546, %v4653
      %v4680 = vadd.f32 %v4493, %v4654
      %v4681 = vadd.f32 %v4549, %v4655
      %v4682 = vadd.f32 %v4496, %v4656
      %v4683 = vadd.f32 %v4552, %v4657
      %v4684 = vmul.f32 %v4658, 0.7978846
      %v4685 = vmul.f32 %v4659, 0.7978846
      %v4686 = vmul.f32 %v4660, 0.7978846
      %v4687 = vmul.f32 %v4661, 0.7978846
      %v4688 = vmul.f32 %v4662, 0.7978846
      %v4689 = vmul.f32 %v4663, 0.7978846
      %v4690 = vmul.f32 %v4664, 0.7978846
      %v4691 = vmul.f32 %v4665, 0.7978846
      %v4692 = vmul.f32 %v4666, 0.7978846
      %v4693 = vmul.f32 %v4667, 0.7978846
      %v4694 = vmul.f32 %v4668, 0.7978846
      %v4695 = vmul.f32 %v4669, 0.7978846
      %v4696 = vmul.f32 %v4670, 0.7978846
      %v4697 = vmul.f32 %v4671, 0.7978846
      %v4698 = vmul.f32 %v4672, 0.7978846
      %v4699 = vmul.f32 %v4673, 0.7978846
      %v4700 = vmul.f32 %v4674, 0.7978846
      %v4701 = vmul.f32 %v4675, 0.7978846
      %v4702 = vmul.f32 %v4676, 0.7978846
      %v4703 = vmul.f32 %v4677, 0.7978846
      %v4704 = vmul.f32 %v4678, 0.7978846
      %v4705 = vmul.f32 %v4679, 0.7978846
      %v4706 = vmul.f32 %v4680, 0.7978846
      %v4707 = vmul.f32 %v4681, 0.7978846
      %v4708 = vmul.f32 %v4682, 0.7978846
      %v4709 = vmul.f32 %v4683, 0.7978846
      %v4710 = vtanh.pop %v4684
      %v4711 = vtanh.pop %v4685
      %v4712 = vtanh.pop %v4686
      %v4713 = vtanh.pop %v4687
      %v4714 = vtanh.pop %v4688
      %v4715 = vtanh.pop %v4689
      %v4716 = vtanh.pop %v4690
      %v4717 = vtanh.pop %v4691
      %v4718 = vtanh.pop %v4692
      %v4719 = vtanh.pop %v4693
      %v4720 = vtanh.pop %v4694
      %v4721 = vtanh.pop %v4695
      %v4722 = vtanh.pop %v4696
      %v4723 = vtanh.pop %v4697
      %v4724 = vtanh.pop %v4698
      %v4725 = vtanh.pop %v4699
      %v4726 = vtanh.pop %v4700
      %v4727 = vtanh.pop %v4701
      %v4728 = vtanh.pop %v4702
      %v4729 = vtanh.pop %v4703
      %v4730 = vtanh.pop %v4704
      %v4731 = vtanh.pop %v4705
      %v4732 = vtanh.pop %v4706
      %v4733 = vtanh.pop %v4707
      %v4734 = vtanh.pop %v4708
      %v4735 = vtanh.pop %v4709
      %v4736 = vadd.f32 %v4710, 1.0
      %v4737 = vadd.f32 %v4711, 1.0
      %v4738 = vadd.f32 %v4712, 1.0
      %v4739 = vadd.f32 %v4713, 1.0
      %v4740 = vadd.f32 %v4714, 1.0
      %v4741 = vadd.f32 %v4715, 1.0
      %v4742 = vadd.f32 %v4716, 1.0
      %v4743 = vadd.f32 %v4717, 1.0
      %v4744 = vadd.f32 %v4718, 1.0
      %v4745 = vadd.f32 %v4719, 1.0
      %v4746 = vadd.f32 %v4720, 1.0
      %v4747 = vadd.f32 %v4721, 1.0
      %v4748 = vadd.f32 %v4722, 1.0
      %v4749 = vadd.f32 %v4723, 1.0
      %v4750 = vadd.f32 %v4724, 1.0
      %v4751 = vadd.f32 %v4725, 1.0
      %v4752 = vadd.f32 %v4726, 1.0
      %v4753 = vadd.f32 %v4727, 1.0
      %v4754 = vadd.f32 %v4728, 1.0
      %v4755 = vadd.f32 %v4729, 1.0
      %v4756 = vadd.f32 %v4730, 1.0
      %v4757 = vadd.f32 %v4731, 1.0
      %v4758 = vadd.f32 %v4732, 1.0
      %v4759 = vadd.f32 %v4733, 1.0
      %v4760 = vadd.f32 %v4734, 1.0
      %v4761 = vadd.f32 %v4735, 1.0
      %v4762 = vmul.f32 %v4554, %v4736
      %v4763 = vmul.f32 %v4555, %v4737
      %v4764 = vmul.f32 %v4556, %v4738
      %v4765 = vmul.f32 %v4557, %v4739
      %v4766 = vmul.f32 %v4558, %v4740
      %v4767 = vmul.f32 %v4559, %v4741
      %v4768 = vmul.f32 %v4560, %v4742
      %v4769 = vmul.f32 %v4561, %v4743
      %v4770 = vmul.f32 %v4562, %v4744
      %v4771 = vmul.f32 %v4563, %v4745
      %v4772 = vmul.f32 %v4564, %v4746
      %v4773 = vmul.f32 %v4565, %v4747
      %v4774 = vmul.f32 %v4566, %v4748
      %v4775 = vmul.f32 %v4567, %v4749
      %v4776 = vmul.f32 %v4568, %v4750
      %v4777 = vmul.f32 %v4569, %v4751
      %v4778 = vmul.f32 %v4570, %v4752
      %v4779 = vmul.f32 %v4571, %v4753
      %v4780 = vmul.f32 %v4572, %v4754
      %v4781 = vmul.f32 %v4573, %v4755
      %v4782 = vmul.f32 %v4574, %v4756
      %v4783 = vmul.f32 %v4575, %v4757
      %v4784 = vmul.f32 %v4576, %v4758
      %v4785 = vmul.f32 %v4577, %v4759
      %v4786 = vmul.f32 %v4578, %v4760
      %v4787 = vmul.f32 %v4579, %v4761
      %s4788 = scalar_lea.vmem %s5, 3
      %v4789 = vld [vmem:[%s4788] sm:$0x1]
      %s4790 = scalar_lea.vmem %s6, 3
      %v4791 = vld [vmem:[%s4790] sm:$0x1]
      %4792 = vadd.xlane.f32.xlu0 %v4763
      %v4793 = vpop.xlane.xlu0 %4792
      %4794 = vadd.xlane.f32.xlu0 %v4765
      %v4795 = vpop.xlane.xlu0 %4794
      %4796 = vadd.xlane.f32.xlu0 %v4767
      %v4797 = vpop.xlane.xlu0 %4796
      %4798 = vadd.xlane.f32.xlu0 %v4769
      %v4799 = vpop.xlane.xlu0 %4798
      %4800 = vadd.xlane.f32.xlu0 %v4771
      %v4801 = vpop.xlane.xlu0 %4800
      %4802 = vadd.xlane.f32.xlu0 %v4773
      %v4803 = vpop.xlane.xlu0 %4802
      %4804 = vadd.xlane.f32.xlu0 %v4775
      %v4805 = vpop.xlane.xlu0 %4804
      %4806 = vadd.xlane.f32.xlu0 %v4777
      %v4807 = vpop.xlane.xlu0 %4806
      %4808 = vadd.xlane.f32.xlu0 %v4779
      %v4809 = vpop.xlane.xlu0 %4808
      %4810 = vadd.xlane.f32.xlu0 %v4781
      %v4811 = vpop.xlane.xlu0 %4810
      %4812 = vadd.xlane.f32.xlu0 %v4783
      %v4813 = vpop.xlane.xlu0 %4812
      %4814 = vadd.xlane.f32.xlu0 %v4785
      %v4815 = vpop.xlane.xlu0 %4814
      %4816 = vadd.xlane.f32.xlu0 %v4787
      %v4817 = vpop.xlane.xlu0 %4816
      %v4818 = vmul.f32 %v4793, %v1055
      %v4819 = vmul.f32 %v4795, %v1055
      %v4820 = vmul.f32 %v4797, %v1055
      %v4821 = vmul.f32 %v4799, %v1055
      %v4822 = vmul.f32 %v4801, %v1055
      %v4823 = vmul.f32 %v4803, %v1055
      %v4824 = vmul.f32 %v4805, %v1055
      %v4825 = vmul.f32 %v4807, %v1055
      %v4826 = vmul.f32 %v4809, %v1055
      %v4827 = vmul.f32 %v4811, %v1055
      %v4828 = vmul.f32 %v4813, %v1055
      %v4829 = vmul.f32 %v4815, %v1055
      %v4830 = vmul.f32 %v4817, %v1055
      %v4831 = vsub.f32 %v4763, %v4818
      %v4832 = vsub.f32 %v4765, %v4819
      %v4833 = vsub.f32 %v4767, %v4820
      %v4834 = vsub.f32 %v4769, %v4821
      %v4835 = vsub.f32 %v4771, %v4822
      %v4836 = vsub.f32 %v4773, %v4823
      %v4837 = vsub.f32 %v4775, %v4824
      %v4838 = vsub.f32 %v4777, %v4825
      %v4839 = vsub.f32 %v4779, %v4826
      %v4840 = vsub.f32 %v4781, %v4827
      %v4841 = vsub.f32 %v4783, %v4828
      %v4842 = vsub.f32 %v4785, %v4829
      %v4843 = vsub.f32 %v4787, %v4830
      %v4844 = vmul.f32 %v4831, %v4831
      %v4845 = vmul.f32 %v4832, %v4832
      %v4846 = vmul.f32 %v4833, %v4833
      %v4847 = vmul.f32 %v4834, %v4834
      %v4848 = vmul.f32 %v4835, %v4835
      %v4849 = vmul.f32 %v4836, %v4836
      %v4850 = vmul.f32 %v4837, %v4837
      %v4851 = vmul.f32 %v4838, %v4838
      %v4852 = vmul.f32 %v4839, %v4839
      %v4853 = vmul.f32 %v4840, %v4840
      %v4854 = vmul.f32 %v4841, %v4841
      %v4855 = vmul.f32 %v4842, %v4842
      %v4856 = vmul.f32 %v4843, %v4843
      %4857 = vadd.xlane.f32.xlu0 %v4844
      %v4858 = vpop.xlane.xlu0 %4857
      %4859 = vadd.xlane.f32.xlu0 %v4845
      %v4860 = vpop.xlane.xlu0 %4859
      %4861 = vadd.xlane.f32.xlu0 %v4846
      %v4862 = vpop.xlane.xlu0 %4861
      %4863 = vadd.xlane.f32.xlu0 %v4847
      %v4864 = vpop.xlane.xlu0 %4863
      %4865 = vadd.xlane.f32.xlu0 %v4848
      %v4866 = vpop.xlane.xlu0 %4865
      %4867 = vadd.xlane.f32.xlu0 %v4849
      %v4868 = vpop.xlane.xlu0 %4867
      %4869 = vadd.xlane.f32.xlu0 %v4850
      %v4870 = vpop.xlane.xlu0 %4869
      %4871 = vadd.xlane.f32.xlu0 %v4851
      %v4872 = vpop.xlane.xlu0 %4871
      %4873 = vadd.xlane.f32.xlu0 %v4852
      %v4874 = vpop.xlane.xlu0 %4873
      %4875 = vadd.xlane.f32.xlu0 %v4853
      %v4876 = vpop.xlane.xlu0 %4875
      %4877 = vadd.xlane.f32.xlu0 %v4854
      %v4878 = vpop.xlane.xlu0 %4877
      %4879 = vadd.xlane.f32.xlu0 %v4855
      %v4880 = vpop.xlane.xlu0 %4879
      %4881 = vadd.xlane.f32.xlu0 %v4856
      %v4882 = vpop.xlane.xlu0 %4881
      %v4883 = vmul.f32 %v4858, %v1055
      %v4884 = vmul.f32 %v4860, %v1055
      %v4885 = vmul.f32 %v4862, %v1055
      %v4886 = vmul.f32 %v4864, %v1055
      %v4887 = vmul.f32 %v4866, %v1055
      %v4888 = vmul.f32 %v4868, %v1055
      %v4889 = vmul.f32 %v4870, %v1055
      %v4890 = vmul.f32 %v4872, %v1055
      %v4891 = vmul.f32 %v4874, %v1055
      %v4892 = vmul.f32 %v4876, %v1055
      %v4893 = vmul.f32 %v4878, %v1055
      %v4894 = vmul.f32 %v4880, %v1055
      %v4895 = vmul.f32 %v4882, %v1055
      %v4896 = vadd.f32 %v4883, 1e-05
      %v4897 = vadd.f32 %v4884, 1e-05
      %v4898 = vadd.f32 %v4885, 1e-05
      %v4899 = vadd.f32 %v4886, 1e-05
      %v4900 = vadd.f32 %v4887, 1e-05
      %v4901 = vadd.f32 %v4888, 1e-05
      %v4902 = vadd.f32 %v4889, 1e-05
      %v4903 = vadd.f32 %v4890, 1e-05
      %v4904 = vadd.f32 %v4891, 1e-05
      %v4905 = vadd.f32 %v4892, 1e-05
      %v4906 = vadd.f32 %v4893, 1e-05
      %v4907 = vadd.f32 %v4894, 1e-05
      %v4908 = vadd.f32 %v4895, 1e-05
      %v4909 = vrsqrt.pop %v4896
      %v4910 = vmul.f32 %v4909, %v4896
      %v4911 = vmul.f32 %v4910, %v4909
      %v4912 = vmul.f32 0.5, %v4911
      %v4913 = vsub.f32 1.5, %v4912
      %v4914 = vmul.f32 %v4909, %v4913
      %vm4915 = vweird.f32 %v4896
      %vm4916 = vweird.f32 %v4909
      %vm4917 = vmor %vm4915, %vm4916
      %v4918 = vsel %vm4917, %v4909, %v4914
      %v4919 = vrsqrt.pop %v4897
      %v4920 = vmul.f32 %v4919, %v4897
      %v4921 = vmul.f32 %v4920, %v4919
      %v4922 = vmul.f32 0.5, %v4921
      %v4923 = vsub.f32 1.5, %v4922
      %v4924 = vmul.f32 %v4919, %v4923
      %vm4925 = vweird.f32 %v4897
      %vm4926 = vweird.f32 %v4919
      %vm4927 = vmor %vm4925, %vm4926
      %v4928 = vsel %vm4927, %v4919, %v4924
      %v4929 = vrsqrt.pop %v4898
      %v4930 = vmul.f32 %v4929, %v4898
      %v4931 = vmul.f32 %v4930, %v4929
      %v4932 = vmul.f32 0.5, %v4931
      %v4933 = vsub.f32 1.5, %v4932
      %v4934 = vmul.f32 %v4929, %v4933
      %vm4935 = vweird.f32 %v4898
      %vm4936 = vweird.f32 %v4929
      %vm4937 = vmor %vm4935, %vm4936
      %v4938 = vsel %vm4937, %v4929, %v4934
      %v4939 = vrsqrt.pop %v4899
      %v4940 = vmul.f32 %v4939, %v4899
      %v4941 = vmul.f32 %v4940, %v4939
      %v4942 = vmul.f32 0.5, %v4941
      %v4943 = vsub.f32 1.5, %v4942
      %v4944 = vmul.f32 %v4939, %v4943
      %vm4945 = vweird.f32 %v4899
      %vm4946 = vweird.f32 %v4939
      %vm4947 = vmor %vm4945, %vm4946
      %v4948 = vsel %vm4947, %v4939, %v4944
      %v4949 = vrsqrt.pop %v4900
      %v4950 = vmul.f32 %v4949, %v4900
      %v4951 = vmul.f32 %v4950, %v4949
      %v4952 = vmul.f32 0.5, %v4951
      %v4953 = vsub.f32 1.5, %v4952
      %v4954 = vmul.f32 %v4949, %v4953
      %vm4955 = vweird.f32 %v4900
      %vm4956 = vweird.f32 %v4949
      %vm4957 = vmor %vm4955, %vm4956
      %v4958 = vsel %vm4957, %v4949, %v4954
      %v4959 = vrsqrt.pop %v4901
      %v4960 = vmul.f32 %v4959, %v4901
      %v4961 = vmul.f32 %v4960, %v4959
      %v4962 = vmul.f32 0.5, %v4961
      %v4963 = vsub.f32 1.5, %v4962
      %v4964 = vmul.f32 %v4959, %v4963
      %vm4965 = vweird.f32 %v4901
      %vm4966 = vweird.f32 %v4959
      %vm4967 = vmor %vm4965, %vm4966
      %v4968 = vsel %vm4967, %v4959, %v4964
      %v4969 = vrsqrt.pop %v4902
      %v4970 = vmul.f32 %v4969, %v4902
      %v4971 = vmul.f32 %v4970, %v4969
      %v4972 = vmul.f32 0.5, %v4971
      %v4973 = vsub.f32 1.5, %v4972
      %v4974 = vmul.f32 %v4969, %v4973
      %vm4975 = vweird.f32 %v4902
      %vm4976 = vweird.f32 %v4969
      %vm4977 = vmor %vm4975, %vm4976
      %v4978 = vsel %vm4977, %v4969, %v4974
      %v4979 = vrsqrt.pop %v4903
      %v4980 = vmul.f32 %v4979, %v4903
      %v4981 = vmul.f32 %v4980, %v4979
      %v4982 = vmul.f32 0.5, %v4981
      %v4983 = vsub.f32 1.5, %v4982
      %v4984 = vmul.f32 %v4979, %v4983
      %vm4985 = vweird.f32 %v4903
      %vm4986 = vweird.f32 %v4979
      %vm4987 = vmor %vm4985, %vm4986
      %v4988 = vsel %vm4987, %v4979, %v4984
      %v4989 = vrsqrt.pop %v4904
      %v4990 = vmul.f32 %v4989, %v4904
      %v4991 = vmul.f32 %v4990, %v4989
      %v4992 = vmul.f32 0.5, %v4991
      %v4993 = vsub.f32 1.5, %v4992
      %v4994 = vmul.f32 %v4989, %v4993
      %vm4995 = vweird.f32 %v4904
      %vm4996 = vweird.f32 %v4989
      %vm4997 = vmor %vm4995, %vm4996
      %v4998 = vsel %vm4997, %v4989, %v4994
      %v4999 = vrsqrt.pop %v4905
      %v5000 = vmul.f32 %v4999, %v4905
      %v5001 = vmul.f32 %v5000, %v4999
      %v5002 = vmul.f32 0.5, %v5001
      %v5003 = vsub.f32 1.5, %v5002
      %v5004 = vmul.f32 %v4999, %v5003
      %vm5005 = vweird.f32 %v4905
      %vm5006 = vweird.f32 %v4999
      %vm5007 = vmor %vm5005, %vm5006
      %v5008 = vsel %vm5007, %v4999, %v5004
      %v5009 = vrsqrt.pop %v4906
      %v5010 = vmul.f32 %v5009, %v4906
      %v5011 = vmul.f32 %v5010, %v5009
      %v5012 = vmul.f32 0.5, %v5011
      %v5013 = vsub.f32 1.5, %v5012
      %v5014 = vmul.f32 %v5009, %v5013
      %vm5015 = vweird.f32 %v4906
      %vm5016 = vweird.f32 %v5009
      %vm5017 = vmor %vm5015, %vm5016
      %v5018 = vsel %vm5017, %v5009, %v5014
      %v5019 = vrsqrt.pop %v4907
      %v5020 = vmul.f32 %v5019, %v4907
      %v5021 = vmul.f32 %v5020, %v5019
      %v5022 = vmul.f32 0.5, %v5021
      %v5023 = vsub.f32 1.5, %v5022
      %v5024 = vmul.f32 %v5019, %v5023
      %vm5025 = vweird.f32 %v4907
      %vm5026 = vweird.f32 %v5019
      %vm5027 = vmor %vm5025, %vm5026
      %v5028 = vsel %vm5027, %v5019, %v5024
      %v5029 = vrsqrt.pop %v4908
      %v5030 = vmul.f32 %v5029, %v4908
      %v5031 = vmul.f32 %v5030, %v5029
      %v5032 = vmul.f32 0.5, %v5031
      %v5033 = vsub.f32 1.5, %v5032
      %v5034 = vmul.f32 %v5029, %v5033
      %vm5035 = vweird.f32 %v4908
      %vm5036 = vweird.f32 %v5029
      %vm5037 = vmor %vm5035, %vm5036
      %v5038 = vsel %vm5037, %v5029, %v5034
      %v5039 = vmul.f32 %v4831, %v4918
      %v5040 = vmul.f32 %v4832, %v4928
      %v5041 = vmul.f32 %v4833, %v4938
      %v5042 = vmul.f32 %v4834, %v4948
      %v5043 = vmul.f32 %v4835, %v4958
      %v5044 = vmul.f32 %v4836, %v4968
      %v5045 = vmul.f32 %v4837, %v4978
      %v5046 = vmul.f32 %v4838, %v4988
      %v5047 = vmul.f32 %v4839, %v4998
      %v5048 = vmul.f32 %v4840, %v5008
      %v5049 = vmul.f32 %v4841, %v5018
      %v5050 = vmul.f32 %v4842, %v5028
      %v5051 = vmul.f32 %v4843, %v5038
      %v5053 = vperm.slane %v4789, 0
      %v5055 = vmul.f32 %v5039, %v5053
      %v5056 = vmul.f32 %v5040, %v5053
      %v5057 = vmul.f32 %v5041, %v5053
      %v5058 = vmul.f32 %v5042, %v5053
      %v5059 = vmul.f32 %v5043, %v5053
      %v5060 = vmul.f32 %v5044, %v5053
      %v5061 = vmul.f32 %v5045, %v5053
      %v5062 = vmul.f32 %v5046, %v5053
      %v5063 = vmul.f32 %v5047, %v5053
      %v5064 = vmul.f32 %v5048, %v5053
      %v5065 = vmul.f32 %v5049, %v5053
      %v5066 = vmul.f32 %v5050, %v5053
      %v5067 = vmul.f32 %v5051, %v5053
      %v5069 = vperm.slane %v4791, 0
      %v5071 = vadd.f32 %v5055, %v5069
      %v5072 = vadd.f32 %v5056, %v5069
      %v5073 = vadd.f32 %v5057, %v5069
      %v5074 = vadd.f32 %v5058, %v5069
      %v5075 = vadd.f32 %v5059, %v5069
      %v5076 = vadd.f32 %v5060, %v5069
      %v5077 = vadd.f32 %v5061, %v5069
      %v5078 = vadd.f32 %v5062, %v5069
      %v5079 = vadd.f32 %v5063, %v5069
      %v5080 = vadd.f32 %v5064, %v5069
      %v5081 = vadd.f32 %v5065, %v5069
      %v5082 = vadd.f32 %v5066, %v5069
      %v5083 = vadd.f32 %v5067, %v5069
      %v5084 = vsel %vm600, 1.0, %v5071
      %v5085 = vsel %vm601, 1.0, %v5072
      %v5086 = vsel %vm602, 1.0, %v5073
      %v5087 = vsel %vm603, 1.0, %v5074
      %v5088 = vsel %vm604, 1.0, %v5075
      %v5089 = vsel %vm605, 1.0, %v5076
      %v5090 = vsel %vm606, 1.0, %v5077
      %v5091 = vsel %vm607, 1.0, %v5078
      %v5092 = vsel %vm608, 1.0, %v5079
      %v5093 = vsel %vm609, 1.0, %v5080
      %v5094 = vsel %vm610, 1.0, %v5081
      %v5095 = vsel %vm611, 1.0, %v5082
      %v5096 = vsel %vm612, 1.0, %v5083
      %s5097 = scalar_lea.vmem %s7, 312
      %v5098 = vld [vmem:[%s5097] sm:$0xff]
      %v5099 = vld [vmem:[%s5097 + $0x8] sm:$0xff]
      %v5100 = vld [vmem:[%s5097 + $0x10] sm:$0xff]
      %v5101 = vld [vmem:[%s5097 + $0x18] sm:$0xff]
      %v5102 = vld [vmem:[%s5097 + $0x20] sm:$0xff]
      %v5103 = vld [vmem:[%s5097 + $0x28] sm:$0xff]
      %v5104 = vld [vmem:[%s5097 + $0x30] sm:$0xff]
      %v5105 = vld [vmem:[%s5097 + $0x38] sm:$0xff]
      %v5106 = vld [vmem:[%s5097 + $0x40] sm:$0xff]
      %v5107 = vld [vmem:[%s5097 + $0x48] sm:$0xff]
      %v5108 = vld [vmem:[%s5097 + $0x50] sm:$0xff]
      %v5109 = vld [vmem:[%s5097 + $0x58] sm:$0xff]
      %v5110 = vld [vmem:[%s5097 + $0x60] sm:$0xff]
      %v5112 = vsel %vm1348, %v5098, 0
      %v5115 = vsel %vm1348, %v5099, 0
      %v5118 = vsel %vm1348, %v5100, 0
      %v5121 = vsel %vm1348, %v5101, 0
      %v5124 = vsel %vm1348, %v5102, 0
      %v5127 = vsel %vm1348, %v5103, 0
      %v5130 = vsel %vm1348, %v5104, 0
      %v5133 = vsel %vm1348, %v5105, 0
      %v5136 = vsel %vm1348, %v5106, 0
      %v5139 = vsel %vm1348, %v5107, 0
      %v5142 = vsel %vm1348, %v5108, 0
      %v5145 = vsel %vm1348, %v5109, 0
      %v5148 = vsel %vm1348, %v5110, 0
      %5150 = vmatpush.msra.mxu0 0.0
      %5151 = vmatpush.msra.mxu0 0.0
      %5152 = vmatpush.msra.mxu0 0.0
      %5153 = vmatpush.msra.mxu0 %v5096
      %5154 = vmatpush.msra.mxu0 %v5095
      %5155 = vmatpush.msra.mxu0 %v5094
      %5156 = vmatpush.msra.mxu0 %v5093
      %5157 = vmatpush.msra.mxu0 %v5092
      %5158 = vmatpush.msra.mxu0 %v5091
      %5159 = vmatpush.msra.mxu0 %v5090
      %5160 = vmatpush.msra.mxu0 %v5089
      %5161 = vmatpush.msra.mxu0 %v5088
      %5162 = vmatpush.msra.mxu0 %v5087
      %5163 = vmatpush.msra.mxu0 %v5086
      %5164 = vmatpush.msra.mxu0 %v5085
      %5165 = vmatpush.msra.mxu0 %v5084
      %5166 = vmatmul.f32.gmra.mxu0 %v5112
      %v5167 = vpop.f32.mrf.mxu0
      %v5168 = vadd.f32 0.0, %v5167
      %5169 = vmatmul.f32.gmra.mxu0 %v5115
      %v5170 = vpop.f32.mrf.mxu0
      %v5171 = vadd.f32 0.0, %v5170
      %5172 = vmatmul.f32.gmra.mxu0 %v5118
      %v5173 = vpop.f32.mrf.mxu0
      %v5174 = vadd.f32 0.0, %v5173
      %5175 = vmatmul.f32.gmra.mxu0 %v5121
      %v5176 = vpop.f32.mrf.mxu0
      %v5177 = vadd.f32 0.0, %v5176
      %5178 = vmatmul.f32.gmra.mxu0 %v5124
      %v5179 = vpop.f32.mrf.mxu0
      %v5180 = vadd.f32 0.0, %v5179
      %5181 = vmatmul.f32.gmra.mxu0 %v5127
      %v5182 = vpop.f32.mrf.mxu0
      %v5183 = vadd.f32 0.0, %v5182
      %5184 = vmatmul.f32.gmra.mxu0 %v5130
      %v5185 = vpop.f32.mrf.mxu0
      %v5186 = vadd.f32 0.0, %v5185
      %5187 = vmatmul.f32.gmra.mxu0 %v5133
      %v5188 = vpop.f32.mrf.mxu0
      %v5189 = vadd.f32 0.0, %v5188
      %5190 = vmatmul.f32.gmra.mxu0 %v5136
      %v5191 = vpop.f32.mrf.mxu0
      %v5192 = vadd.f32 0.0, %v5191
      %5193 = vmatmul.f32.gmra.mxu0 %v5139
      %v5194 = vpop.f32.mrf.mxu0
      %v5195 = vadd.f32 0.0, %v5194
      %5196 = vmatmul.f32.gmra.mxu0 %v5142
      %v5197 = vpop.f32.mrf.mxu0
      %v5198 = vadd.f32 0.0, %v5197
      %5199 = vmatmul.f32.gmra.mxu0 %v5145
      %v5200 = vpop.f32.mrf.mxu0
      %v5201 = vadd.f32 0.0, %v5200
      %5202 = vmatmul.f32.gmra.mxu0 %v5148
      %v5203 = vpop.f32.mrf.mxu0
      %v5204 = vadd.f32 0.0, %v5203
      %5205 = vdwg.mxu0
      %v5206 = vmul.f32 %v5168, %v4762
      %v5207 = vmul.f32 %v5171, %v4764
      %v5208 = vmul.f32 %v5174, %v4766
      %v5209 = vmul.f32 %v5177, %v4768
      %v5210 = vmul.f32 %v5180, %v4770
      %v5211 = vmul.f32 %v5183, %v4772
      %v5212 = vmul.f32 %v5186, %v4774
      %v5213 = vmul.f32 %v5189, %v4776
      %v5214 = vmul.f32 %v5192, %v4778
      %v5215 = vmul.f32 %v5195, %v4780
      %v5216 = vmul.f32 %v5198, %v4782
      %v5217 = vmul.f32 %v5201, %v4784
      %v5218 = vmul.f32 %v5204, %v4786
      %s5219 = scalar_lea.vmem %s8, 384
      %v5220 = vld [vmem:[%s5219] sm:$0xff]
      %v5221 = vld [vmem:[%s5219 + $0x8] sm:$0xff]
      %v5222 = vld [vmem:[%s5219 + $0x10] sm:$0xff]
      %v5223 = vld [vmem:[%s5219 + $0x18] sm:$0xff]
      %v5224 = vld [vmem:[%s5219 + $0x20] sm:$0xff]
      %v5225 = vld [vmem:[%s5219 + $0x28] sm:$0xff]
      %v5226 = vld [vmem:[%s5219 + $0x30] sm:$0xff]
      %v5227 = vld [vmem:[%s5219 + $0x38] sm:$0xff]
      %v5228 = vld [vmem:[%s5219 + $0x40] sm:$0xff]
      %v5229 = vld [vmem:[%s5219 + $0x48] sm:$0xff]
      %v5230 = vld [vmem:[%s5219 + $0x50] sm:$0xff]
      %v5231 = vld [vmem:[%s5219 + $0x58] sm:$0xff]
      %v5232 = vld [vmem:[%s5219 + $0x60] sm:$0xff]
      %v5233 = vld [vmem:[%s5219 + $0x68] sm:$0xff]
      %v5234 = vld [vmem:[%s5219 + $0x70] sm:$0xff]
      %v5235 = vld [vmem:[%s5219 + $0x78] sm:$0xff]
      %s5236 = scalar_lea.vmem %s9, 3
      %v5237 = vld [vmem:[%s5236] sm:$0x1]
      %v5239 = vperm.slane %v5237, 0
      %5241 = vmatpush.msra.mxu0 %v5235
      %5242 = vmatpush.msra.mxu0 %v5234
      %5243 = vmatpush.msra.mxu0 %v5233
      %5244 = vmatpush.msra.mxu0 %v5232
      %5245 = vmatpush.msra.mxu0 %v5231
      %5246 = vmatpush.msra.mxu0 %v5230
      %5247 = vmatpush.msra.mxu0 %v5229
      %5248 = vmatpush.msra.mxu0 %v5228
      %5249 = vmatpush.msra.mxu0 %v5227
      %5250 = vmatpush.msra.mxu0 %v5226
      %5251 = vmatpush.msra.mxu0 %v5225
      %5252 = vmatpush.msra.mxu0 %v5224
      %5253 = vmatpush.msra.mxu0 %v5223
      %5254 = vmatpush.msra.mxu0 %v5222
      %5255 = vmatpush.msra.mxu0 %v5221
      %5256 = vmatpush.msra.mxu0 %v5220
      %5257 = vmatmul.f32.gmra.mxu0 %v5206
      %v5258 = vpop.f32.mrf.mxu0
      %v5259 = vadd.f32 %v5239, %v5258
      %5260 = vmatmul.f32.gmra.mxu0 %v5207
      %v5261 = vpop.f32.mrf.mxu0
      %v5262 = vadd.f32 %v5239, %v5261
      %5263 = vmatmul.f32.gmra.mxu0 %v5208
      %v5264 = vpop.f32.mrf.mxu0
      %v5265 = vadd.f32 %v5239, %v5264
      %5266 = vmatmul.f32.gmra.mxu0 %v5209
      %v5267 = vpop.f32.mrf.mxu0
      %v5268 = vadd.f32 %v5239, %v5267
      %5269 = vmatmul.f32.gmra.mxu0 %v5210
      %v5270 = vpop.f32.mrf.mxu0
      %v5271 = vadd.f32 %v5239, %v5270
      %5272 = vmatmul.f32.gmra.mxu0 %v5211
      %v5273 = vpop.f32.mrf.mxu0
      %v5274 = vadd.f32 %v5239, %v5273
      %5275 = vmatmul.f32.gmra.mxu0 %v5212
      %v5276 = vpop.f32.mrf.mxu0
      %v5277 = vadd.f32 %v5239, %v5276
      %5278 = vmatmul.f32.gmra.mxu0 %v5213
      %v5279 = vpop.f32.mrf.mxu0
      %v5280 = vadd.f32 %v5239, %v5279
      %5281 = vmatmul.f32.gmra.mxu0 %v5214
      %v5282 = vpop.f32.mrf.mxu0
      %v5283 = vadd.f32 %v5239, %v5282
      %5284 = vmatmul.f32.gmra.mxu0 %v5215
      %v5285 = vpop.f32.mrf.mxu0
      %v5286 = vadd.f32 %v5239, %v5285
      %5287 = vmatmul.f32.gmra.mxu0 %v5216
      %v5288 = vpop.f32.mrf.mxu0
      %v5289 = vadd.f32 %v5239, %v5288
      %5290 = vmatmul.f32.gmra.mxu0 %v5217
      %v5291 = vpop.f32.mrf.mxu0
      %v5292 = vadd.f32 %v5239, %v5291
      %5293 = vmatmul.f32.gmra.mxu0 %v5218
      %v5294 = vpop.f32.mrf.mxu0
      %v5295 = vadd.f32 %v5239, %v5294
      %5296 = vdwg.mxu0
      %s5297 = scalar_lea.vmem %s10, 3
      %v5298 = vld [vmem:[%s5297] sm:$0x1]
      %s5299 = scalar_lea.vmem %s11, 3
      %v5300 = vld [vmem:[%s5299] sm:$0x1]
      %v5301 = vsel %vm635, %v5259, 0.0
      %5302 = vadd.xlane.f32.xlu0 %v5301
      %v5303 = vpop.xlane.xlu0 %5302
      %v5304 = vsel %vm635, %v5262, 0.0
      %5305 = vadd.xlane.f32.xlu0 %v5304
      %v5306 = vpop.xlane.xlu0 %5305
      %v5307 = vsel %vm635, %v5265, 0.0
      %5308 = vadd.xlane.f32.xlu0 %v5307
      %v5309 = vpop.xlane.xlu0 %5308
      %v5310 = vsel %vm635, %v5268, 0.0
      %5311 = vadd.xlane.f32.xlu0 %v5310
      %v5312 = vpop.xlane.xlu0 %5311
      %v5313 = vsel %vm635, %v5271, 0.0
      %5314 = vadd.xlane.f32.xlu0 %v5313
      %v5315 = vpop.xlane.xlu0 %5314
      %v5316 = vsel %vm635, %v5274, 0.0
      %5317 = vadd.xlane.f32.xlu0 %v5316
      %v5318 = vpop.xlane.xlu0 %5317
      %v5319 = vsel %vm635, %v5277, 0.0
      %5320 = vadd.xlane.f32.xlu0 %v5319
      %v5321 = vpop.xlane.xlu0 %5320
      %v5322 = vsel %vm635, %v5280, 0.0
      %5323 = vadd.xlane.f32.xlu0 %v5322
      %v5324 = vpop.xlane.xlu0 %5323
      %v5325 = vsel %vm635, %v5283, 0.0
      %5326 = vadd.xlane.f32.xlu0 %v5325
      %v5327 = vpop.xlane.xlu0 %5326
      %v5328 = vsel %vm635, %v5286, 0.0
      %5329 = vadd.xlane.f32.xlu0 %v5328
      %v5330 = vpop.xlane.xlu0 %5329
      %v5331 = vsel %vm635, %v5289, 0.0
      %5332 = vadd.xlane.f32.xlu0 %v5331
      %v5333 = vpop.xlane.xlu0 %5332
      %v5334 = vsel %vm635, %v5292, 0.0
      %5335 = vadd.xlane.f32.xlu0 %v5334
      %v5336 = vpop.xlane.xlu0 %5335
      %v5337 = vsel %vm635, %v5295, 0.0
      %5338 = vadd.xlane.f32.xlu0 %v5337
      %v5339 = vpop.xlane.xlu0 %5338
      %v5340 = vmul.f32 %v5303, %v1580
      %v5341 = vmul.f32 %v5306, %v1580
      %v5342 = vmul.f32 %v5309, %v1580
      %v5343 = vmul.f32 %v5312, %v1580
      %v5344 = vmul.f32 %v5315, %v1580
      %v5345 = vmul.f32 %v5318, %v1580
      %v5346 = vmul.f32 %v5321, %v1580
      %v5347 = vmul.f32 %v5324, %v1580
      %v5348 = vmul.f32 %v5327, %v1580
      %v5349 = vmul.f32 %v5330, %v1580
      %v5350 = vmul.f32 %v5333, %v1580
      %v5351 = vmul.f32 %v5336, %v1580
      %v5352 = vmul.f32 %v5339, %v1580
      %v5353 = vsub.f32 %v5259, %v5340
      %v5354 = vsub.f32 %v5262, %v5341
      %v5355 = vsub.f32 %v5265, %v5342
      %v5356 = vsub.f32 %v5268, %v5343
      %v5357 = vsub.f32 %v5271, %v5344
      %v5358 = vsub.f32 %v5274, %v5345
      %v5359 = vsub.f32 %v5277, %v5346
      %v5360 = vsub.f32 %v5280, %v5347
      %v5361 = vsub.f32 %v5283, %v5348
      %v5362 = vsub.f32 %v5286, %v5349
      %v5363 = vsub.f32 %v5289, %v5350
      %v5364 = vsub.f32 %v5292, %v5351
      %v5365 = vsub.f32 %v5295, %v5352
      %v5366 = vmul.f32 %v5353, %v5353
      %v5367 = vmul.f32 %v5354, %v5354
      %v5368 = vmul.f32 %v5355, %v5355
      %v5369 = vmul.f32 %v5356, %v5356
      %v5370 = vmul.f32 %v5357, %v5357
      %v5371 = vmul.f32 %v5358, %v5358
      %v5372 = vmul.f32 %v5359, %v5359
      %v5373 = vmul.f32 %v5360, %v5360
      %v5374 = vmul.f32 %v5361, %v5361
      %v5375 = vmul.f32 %v5362, %v5362
      %v5376 = vmul.f32 %v5363, %v5363
      %v5377 = vmul.f32 %v5364, %v5364
      %v5378 = vmul.f32 %v5365, %v5365
      %v5379 = vsel %vm635, %v5366, 0.0
      %5380 = vadd.xlane.f32.xlu0 %v5379
      %v5381 = vpop.xlane.xlu0 %5380
      %v5382 = vsel %vm635, %v5367, 0.0
      %5383 = vadd.xlane.f32.xlu0 %v5382
      %v5384 = vpop.xlane.xlu0 %5383
      %v5385 = vsel %vm635, %v5368, 0.0
      %5386 = vadd.xlane.f32.xlu0 %v5385
      %v5387 = vpop.xlane.xlu0 %5386
      %v5388 = vsel %vm635, %v5369, 0.0
      %5389 = vadd.xlane.f32.xlu0 %v5388
      %v5390 = vpop.xlane.xlu0 %5389
      %v5391 = vsel %vm635, %v5370, 0.0
      %5392 = vadd.xlane.f32.xlu0 %v5391
      %v5393 = vpop.xlane.xlu0 %5392
      %v5394 = vsel %vm635, %v5371, 0.0
      %5395 = vadd.xlane.f32.xlu0 %v5394
      %v5396 = vpop.xlane.xlu0 %5395
      %v5397 = vsel %vm635, %v5372, 0.0
      %5398 = vadd.xlane.f32.xlu0 %v5397
      %v5399 = vpop.xlane.xlu0 %5398
      %v5400 = vsel %vm635, %v5373, 0.0
      %5401 = vadd.xlane.f32.xlu0 %v5400
      %v5402 = vpop.xlane.xlu0 %5401
      %v5403 = vsel %vm635, %v5374, 0.0
      %5404 = vadd.xlane.f32.xlu0 %v5403
      %v5405 = vpop.xlane.xlu0 %5404
      %v5406 = vsel %vm635, %v5375, 0.0
      %5407 = vadd.xlane.f32.xlu0 %v5406
      %v5408 = vpop.xlane.xlu0 %5407
      %v5409 = vsel %vm635, %v5376, 0.0
      %5410 = vadd.xlane.f32.xlu0 %v5409
      %v5411 = vpop.xlane.xlu0 %5410
      %v5412 = vsel %vm635, %v5377, 0.0
      %5413 = vadd.xlane.f32.xlu0 %v5412
      %v5414 = vpop.xlane.xlu0 %5413
      %v5415 = vsel %vm635, %v5378, 0.0
      %5416 = vadd.xlane.f32.xlu0 %v5415
      %v5417 = vpop.xlane.xlu0 %5416
      %v5418 = vmul.f32 %v5381, %v1580
      %v5419 = vmul.f32 %v5384, %v1580
      %v5420 = vmul.f32 %v5387, %v1580
      %v5421 = vmul.f32 %v5390, %v1580
      %v5422 = vmul.f32 %v5393, %v1580
      %v5423 = vmul.f32 %v5396, %v1580
      %v5424 = vmul.f32 %v5399, %v1580
      %v5425 = vmul.f32 %v5402, %v1580
      %v5426 = vmul.f32 %v5405, %v1580
      %v5427 = vmul.f32 %v5408, %v1580
      %v5428 = vmul.f32 %v5411, %v1580
      %v5429 = vmul.f32 %v5414, %v1580
      %v5430 = vmul.f32 %v5417, %v1580
      %v5431 = vadd.f32 %v5418, 1e-05
      %v5432 = vadd.f32 %v5419, 1e-05
      %v5433 = vadd.f32 %v5420, 1e-05
      %v5434 = vadd.f32 %v5421, 1e-05
      %v5435 = vadd.f32 %v5422, 1e-05
      %v5436 = vadd.f32 %v5423, 1e-05
      %v5437 = vadd.f32 %v5424, 1e-05
      %v5438 = vadd.f32 %v5425, 1e-05
      %v5439 = vadd.f32 %v5426, 1e-05
      %v5440 = vadd.f32 %v5427, 1e-05
      %v5441 = vadd.f32 %v5428, 1e-05
      %v5442 = vadd.f32 %v5429, 1e-05
      %v5443 = vadd.f32 %v5430, 1e-05
      %v5444 = vrsqrt.pop %v5431
      %v5445 = vmul.f32 %v5444, %v5431
      %v5446 = vmul.f32 %v5445, %v5444
      %v5447 = vmul.f32 0.5, %v5446
      %v5448 = vsub.f32 1.5, %v5447
      %v5449 = vmul.f32 %v5444, %v5448
      %vm5450 = vweird.f32 %v5431
      %vm5451 = vweird.f32 %v5444
      %vm5452 = vmor %vm5450, %vm5451
      %v5453 = vsel %vm5452, %v5444, %v5449
      %v5454 = vrsqrt.pop %v5432
      %v5455 = vmul.f32 %v5454, %v5432
      %v5456 = vmul.f32 %v5455, %v5454
      %v5457 = vmul.f32 0.5, %v5456
      %v5458 = vsub.f32 1.5, %v5457
      %v5459 = vmul.f32 %v5454, %v5458
      %vm5460 = vweird.f32 %v5432
      %vm5461 = vweird.f32 %v5454
      %vm5462 = vmor %vm5460, %vm5461
      %v5463 = vsel %vm5462, %v5454, %v5459
      %v5464 = vrsqrt.pop %v5433
      %v5465 = vmul.f32 %v5464, %v5433
      %v5466 = vmul.f32 %v5465, %v5464
      %v5467 = vmul.f32 0.5, %v5466
      %v5468 = vsub.f32 1.5, %v5467
      %v5469 = vmul.f32 %v5464, %v5468
      %vm5470 = vweird.f32 %v5433
      %vm5471 = vweird.f32 %v5464
      %vm5472 = vmor %vm5470, %vm5471
      %v5473 = vsel %vm5472, %v5464, %v5469
      %v5474 = vrsqrt.pop %v5434
      %v5475 = vmul.f32 %v5474, %v5434
      %v5476 = vmul.f32 %v5475, %v5474
      %v5477 = vmul.f32 0.5, %v5476
      %v5478 = vsub.f32 1.5, %v5477
      %v5479 = vmul.f32 %v5474, %v5478
      %vm5480 = vweird.f32 %v5434
      %vm5481 = vweird.f32 %v5474
      %vm5482 = vmor %vm5480, %vm5481
      %v5483 = vsel %vm5482, %v5474, %v5479
      %v5484 = vrsqrt.pop %v5435
      %v5485 = vmul.f32 %v5484, %v5435
      %v5486 = vmul.f32 %v5485, %v5484
      %v5487 = vmul.f32 0.5, %v5486
      %v5488 = vsub.f32 1.5, %v5487
      %v5489 = vmul.f32 %v5484, %v5488
      %vm5490 = vweird.f32 %v5435
      %vm5491 = vweird.f32 %v5484
      %vm5492 = vmor %vm5490, %vm5491
      %v5493 = vsel %vm5492, %v5484, %v5489
      %v5494 = vrsqrt.pop %v5436
      %v5495 = vmul.f32 %v5494, %v5436
      %v5496 = vmul.f32 %v5495, %v5494
      %v5497 = vmul.f32 0.5, %v5496
      %v5498 = vsub.f32 1.5, %v5497
      %v5499 = vmul.f32 %v5494, %v5498
      %vm5500 = vweird.f32 %v5436
      %vm5501 = vweird.f32 %v5494
      %vm5502 = vmor %vm5500, %vm5501
      %v5503 = vsel %vm5502, %v5494, %v5499
      %v5504 = vrsqrt.pop %v5437
      %v5505 = vmul.f32 %v5504, %v5437
      %v5506 = vmul.f32 %v5505, %v5504
      %v5507 = vmul.f32 0.5, %v5506
      %v5508 = vsub.f32 1.5, %v5507
      %v5509 = vmul.f32 %v5504, %v5508
      %vm5510 = vweird.f32 %v5437
      %vm5511 = vweird.f32 %v5504
      %vm5512 = vmor %vm5510, %vm5511
      %v5513 = vsel %vm5512, %v5504, %v5509
      %v5514 = vrsqrt.pop %v5438
      %v5515 = vmul.f32 %v5514, %v5438
      %v5516 = vmul.f32 %v5515, %v5514
      %v5517 = vmul.f32 0.5, %v5516
      %v5518 = vsub.f32 1.5, %v5517
      %v5519 = vmul.f32 %v5514, %v5518
      %vm5520 = vweird.f32 %v5438
      %vm5521 = vweird.f32 %v5514
      %vm5522 = vmor %vm5520, %vm5521
      %v5523 = vsel %vm5522, %v5514, %v5519
      %v5524 = vrsqrt.pop %v5439
      %v5525 = vmul.f32 %v5524, %v5439
      %v5526 = vmul.f32 %v5525, %v5524
      %v5527 = vmul.f32 0.5, %v5526
      %v5528 = vsub.f32 1.5, %v5527
      %v5529 = vmul.f32 %v5524, %v5528
      %vm5530 = vweird.f32 %v5439
      %vm5531 = vweird.f32 %v5524
      %vm5532 = vmor %vm5530, %vm5531
      %v5533 = vsel %vm5532, %v5524, %v5529
      %v5534 = vrsqrt.pop %v5440
      %v5535 = vmul.f32 %v5534, %v5440
      %v5536 = vmul.f32 %v5535, %v5534
      %v5537 = vmul.f32 0.5, %v5536
      %v5538 = vsub.f32 1.5, %v5537
      %v5539 = vmul.f32 %v5534, %v5538
      %vm5540 = vweird.f32 %v5440
      %vm5541 = vweird.f32 %v5534
      %vm5542 = vmor %vm5540, %vm5541
      %v5543 = vsel %vm5542, %v5534, %v5539
      %v5544 = vrsqrt.pop %v5441
      %v5545 = vmul.f32 %v5544, %v5441
      %v5546 = vmul.f32 %v5545, %v5544
      %v5547 = vmul.f32 0.5, %v5546
      %v5548 = vsub.f32 1.5, %v5547
      %v5549 = vmul.f32 %v5544, %v5548
      %vm5550 = vweird.f32 %v5441
      %vm5551 = vweird.f32 %v5544
      %vm5552 = vmor %vm5550, %vm5551
      %v5553 = vsel %vm5552, %v5544, %v5549
      %v5554 = vrsqrt.pop %v5442
      %v5555 = vmul.f32 %v5554, %v5442
      %v5556 = vmul.f32 %v5555, %v5554
      %v5557 = vmul.f32 0.5, %v5556
      %v5558 = vsub.f32 1.5, %v5557
      %v5559 = vmul.f32 %v5554, %v5558
      %vm5560 = vweird.f32 %v5442
      %vm5561 = vweird.f32 %v5554
      %vm5562 = vmor %vm5560, %vm5561
      %v5563 = vsel %vm5562, %v5554, %v5559
      %v5564 = vrsqrt.pop %v5443
      %v5565 = vmul.f32 %v5564, %v5443
      %v5566 = vmul.f32 %v5565, %v5564
      %v5567 = vmul.f32 0.5, %v5566
      %v5568 = vsub.f32 1.5, %v5567
      %v5569 = vmul.f32 %v5564, %v5568
      %vm5570 = vweird.f32 %v5443
      %vm5571 = vweird.f32 %v5564
      %vm5572 = vmor %vm5570, %vm5571
      %v5573 = vsel %vm5572, %v5564, %v5569
      %v5574 = vmul.f32 %v5353, %v5453
      %v5575 = vmul.f32 %v5354, %v5463
      %v5576 = vmul.f32 %v5355, %v5473
      %v5577 = vmul.f32 %v5356, %v5483
      %v5578 = vmul.f32 %v5357, %v5493
      %v5579 = vmul.f32 %v5358, %v5503
      %v5580 = vmul.f32 %v5359, %v5513
      %v5581 = vmul.f32 %v5360, %v5523
      %v5582 = vmul.f32 %v5361, %v5533
      %v5583 = vmul.f32 %v5362, %v5543
      %v5584 = vmul.f32 %v5363, %v5553
      %v5585 = vmul.f32 %v5364, %v5563
      %v5586 = vmul.f32 %v5365, %v5573
      %v5588 = vperm.slane %v5298, 0
      %v5590 = vmul.f32 %v5574, %v5588
      %v5591 = vmul.f32 %v5575, %v5588
      %v5592 = vmul.f32 %v5576, %v5588
      %v5593 = vmul.f32 %v5577, %v5588
      %v5594 = vmul.f32 %v5578, %v5588
      %v5595 = vmul.f32 %v5579, %v5588
      %v5596 = vmul.f32 %v5580, %v5588
      %v5597 = vmul.f32 %v5581, %v5588
      %v5598 = vmul.f32 %v5582, %v5588
      %v5599 = vmul.f32 %v5583, %v5588
      %v5600 = vmul.f32 %v5584, %v5588
      %v5601 = vmul.f32 %v5585, %v5588
      %v5602 = vmul.f32 %v5586, %v5588
      %v5604 = vperm.slane %v5300, 0
      %v5606 = vadd.f32 %v5590, %v5604
      %v5607 = vadd.f32 %v5591, %v5604
      %v5608 = vadd.f32 %v5592, %v5604
      %v5609 = vadd.f32 %v5593, %v5604
      %v5610 = vadd.f32 %v5594, %v5604
      %v5611 = vadd.f32 %v5595, %v5604
      %v5612 = vadd.f32 %v5596, %v5604
      %v5613 = vadd.f32 %v5597, %v5604
      %v5614 = vadd.f32 %v5598, %v5604
      %v5615 = vadd.f32 %v5599, %v5604
      %v5616 = vadd.f32 %v5600, %v5604
      %v5617 = vadd.f32 %v5601, %v5604
      %v5618 = vadd.f32 %v5602, %v5604
      %v5619 = vadd.f32 %v5606, %v4366
      %v5620 = vadd.f32 %v5607, %v4367
      %v5621 = vadd.f32 %v5608, %v4368
      %v5622 = vadd.f32 %v5609, %v4369
      %v5623 = vadd.f32 %v5610, %v4370
      %v5624 = vadd.f32 %v5611, %v4371
      %v5625 = vadd.f32 %v5612, %v4372
      %v5626 = vadd.f32 %v5613, %v4373
      %v5627 = vadd.f32 %v5614, %v4374
      %v5628 = vadd.f32 %v5615, %v4375
      %v5629 = vadd.f32 %v5616, %v4376
      %v5630 = vadd.f32 %v5617, %v4377
      %v5631 = vadd.f32 %v5618, %v4378
      %s5632 = scalar_lea.vmem %s3, 512
      %v5633 = vld [vmem:[%s5632] sm:$0xff]
      %v5634 = vld [vmem:[%s5632 + $0x8] sm:$0xff]
      %v5635 = vld [vmem:[%s5632 + $0x10] sm:$0xff]
      %v5636 = vld [vmem:[%s5632 + $0x18] sm:$0xff]
      %v5637 = vld [vmem:[%s5632 + $0x20] sm:$0xff]
      %v5638 = vld [vmem:[%s5632 + $0x28] sm:$0xff]
      %v5639 = vld [vmem:[%s5632 + $0x30] sm:$0xff]
      %v5640 = vld [vmem:[%s5632 + $0x38] sm:$0xff]
      %v5641 = vld [vmem:[%s5632 + $0x40] sm:$0xff]
      %v5642 = vld [vmem:[%s5632 + $0x48] sm:$0xff]
      %v5643 = vld [vmem:[%s5632 + $0x50] sm:$0xff]
      %v5644 = vld [vmem:[%s5632 + $0x58] sm:$0xff]
      %v5645 = vld [vmem:[%s5632 + $0x60] sm:$0xff]
      %v5646 = vld [vmem:[%s5632 + $0x68] sm:$0xff]
      %v5647 = vld [vmem:[%s5632 + $0x70] sm:$0xff]
      %v5648 = vld [vmem:[%s5632 + $0x78] sm:$0xff]
      %s5649 = scalar_lea.vmem %s4, 8
      %v5650 = vld [vmem:[%s5649] sm:$0x3]
      %v5652 = vperm.slane %v5650, 0
      %v5653 = vperm.slane %v5650, 1
      %v5657 = vsel %vm635, %v5619, 0
      %v5660 = vsel %vm635, %v5620, 0
      %v5663 = vsel %vm635, %v5621, 0
      %v5666 = vsel %vm635, %v5622, 0
      %v5669 = vsel %vm635, %v5623, 0
      %v5672 = vsel %vm635, %v5624, 0
      %v5675 = vsel %vm635, %v5625, 0
      %v5678 = vsel %vm635, %v5626, 0
      %v5681 = vsel %vm635, %v5627, 0
      %v5684 = vsel %vm635, %v5628, 0
      %v5687 = vsel %vm635, %v5629, 0
      %v5690 = vsel %vm635, %v5630, 0
      %v5693 = vsel %vm635, %v5631, 0
      %5695 = vmatpush.msra.mxu0 0.0
      %5696 = vmatpush.msra.mxu0 0.0
      %5697 = vmatpush.msra.mxu0 0.0
      %5698 = vmatpush.msra.mxu0 0.0
      %5699 = vmatpush.msra.mxu0 0.0
      %5700 = vmatpush.msra.mxu0 0.0
      %5701 = vmatpush.msra.mxu0 0.0
      %5702 = vmatpush.msra.mxu0 0.0
      %5703 = vmatpush.msra.mxu0 %v5647
      %5704 = vmatpush.msra.mxu0 %v5645
      %5705 = vmatpush.msra.mxu0 %v5643
      %5706 = vmatpush.msra.mxu0 %v5641
      %5707 = vmatpush.msra.mxu0 %v5639
      %5708 = vmatpush.msra.mxu0 %v5637
      %5709 = vmatpush.msra.mxu0 %v5635
      %5710 = vmatpush.msra.mxu0 %v5633
      %5711 = vmatmul.f32.gmra.mxu0 %v5657
      %v5712 = vpop.f32.mrf.mxu0
      %v5713 = vadd.f32 %v5652, %v5712
      %5714 = vmatmul.f32.gmra.mxu0 %v5660
      %v5715 = vpop.f32.mrf.mxu0
      %v5716 = vadd.f32 %v5652, %v5715
      %5717 = vmatmul.f32.gmra.mxu0 %v5663
      %v5718 = vpop.f32.mrf.mxu0
      %v5719 = vadd.f32 %v5652, %v5718
      %5720 = vmatmul.f32.gmra.mxu0 %v5666
      %v5721 = vpop.f32.mrf.mxu0
      %v5722 = vadd.f32 %v5652, %v5721
      %5723 = vmatmul.f32.gmra.mxu0 %v5669
      %v5724 = vpop.f32.mrf.mxu0
      %v5725 = vadd.f32 %v5652, %v5724
      %5726 = vmatmul.f32.gmra.mxu0 %v5672
      %v5727 = vpop.f32.mrf.mxu0
      %v5728 = vadd.f32 %v5652, %v5727
      %5729 = vmatmul.f32.gmra.mxu0 %v5675
      %v5730 = vpop.f32.mrf.mxu0
      %v5731 = vadd.f32 %v5652, %v5730
      %5732 = vmatmul.f32.gmra.mxu0 %v5678
      %v5733 = vpop.f32.mrf.mxu0
      %v5734 = vadd.f32 %v5652, %v5733
      %5735 = vmatmul.f32.gmra.mxu0 %v5681
      %v5736 = vpop.f32.mrf.mxu0
      %v5737 = vadd.f32 %v5652, %v5736
      %5738 = vmatmul.f32.gmra.mxu0 %v5684
      %v5739 = vpop.f32.mrf.mxu0
      %v5740 = vadd.f32 %v5652, %v5739
      %5741 = vmatmul.f32.gmra.mxu0 %v5687
      %v5742 = vpop.f32.mrf.mxu0
      %v5743 = vadd.f32 %v5652, %v5742
      %5744 = vmatmul.f32.gmra.mxu0 %v5690
      %v5745 = vpop.f32.mrf.mxu0
      %v5746 = vadd.f32 %v5652, %v5745
      %5747 = vmatmul.f32.gmra.mxu0 %v5693
      %v5748 = vpop.f32.mrf.mxu0
      %v5749 = vadd.f32 %v5652, %v5748
      %5750 = vdwg.mxu0
      %5751 = vmatpush.msra.mxu0 0.0
      %5752 = vmatpush.msra.mxu0 0.0
      %5753 = vmatpush.msra.mxu0 0.0
      %5754 = vmatpush.msra.mxu0 0.0
      %5755 = vmatpush.msra.mxu0 0.0
      %5756 = vmatpush.msra.mxu0 0.0
      %5757 = vmatpush.msra.mxu0 0.0
      %5758 = vmatpush.msra.mxu0 0.0
      %5759 = vmatpush.msra.mxu0 %v5648
      %5760 = vmatpush.msra.mxu0 %v5646
      %5761 = vmatpush.msra.mxu0 %v5644
      %5762 = vmatpush.msra.mxu0 %v5642
      %5763 = vmatpush.msra.mxu0 %v5640
      %5764 = vmatpush.msra.mxu0 %v5638
      %5765 = vmatpush.msra.mxu0 %v5636
      %5766 = vmatpush.msra.mxu0 %v5634
      %5767 = vmatmul.f32.gmra.mxu0 %v5657
      %v5768 = vpop.f32.mrf.mxu0
      %v5769 = vadd.f32 %v5653, %v5768
      %5770 = vmatmul.f32.gmra.mxu0 %v5660
      %v5771 = vpop.f32.mrf.mxu0
      %v5772 = vadd.f32 %v5653, %v5771
      %5773 = vmatmul.f32.gmra.mxu0 %v5663
      %v5774 = vpop.f32.mrf.mxu0
      %v5775 = vadd.f32 %v5653, %v5774
      %5776 = vmatmul.f32.gmra.mxu0 %v5666
      %v5777 = vpop.f32.mrf.mxu0
      %v5778 = vadd.f32 %v5653, %v5777
      %5779 = vmatmul.f32.gmra.mxu0 %v5669
      %v5780 = vpop.f32.mrf.mxu0
      %v5781 = vadd.f32 %v5653, %v5780
      %5782 = vmatmul.f32.gmra.mxu0 %v5672
      %v5783 = vpop.f32.mrf.mxu0
      %v5784 = vadd.f32 %v5653, %v5783
      %5785 = vmatmul.f32.gmra.mxu0 %v5675
      %v5786 = vpop.f32.mrf.mxu0
      %v5787 = vadd.f32 %v5653, %v5786
      %5788 = vmatmul.f32.gmra.mxu0 %v5678
      %v5789 = vpop.f32.mrf.mxu0
      %v5790 = vadd.f32 %v5653, %v5789
      %5791 = vmatmul.f32.gmra.mxu0 %v5681
      %v5792 = vpop.f32.mrf.mxu0
      %v5793 = vadd.f32 %v5653, %v5792
      %5794 = vmatmul.f32.gmra.mxu0 %v5684
      %v5795 = vpop.f32.mrf.mxu0
      %v5796 = vadd.f32 %v5653, %v5795
      %5797 = vmatmul.f32.gmra.mxu0 %v5687
      %v5798 = vpop.f32.mrf.mxu0
      %v5799 = vadd.f32 %v5653, %v5798
      %5800 = vmatmul.f32.gmra.mxu0 %v5690
      %v5801 = vpop.f32.mrf.mxu0
      %v5802 = vadd.f32 %v5653, %v5801
      %5803 = vmatmul.f32.gmra.mxu0 %v5693
      %v5804 = vpop.f32.mrf.mxu0
      %v5805 = vadd.f32 %v5653, %v5804
      %5806 = vdwg.mxu0
      %v5807 = vmul.f32 %v5713, 0.5
      %v5808 = vmul.f32 %v5769, 0.5
      %v5809 = vmul.f32 %v5716, 0.5
      %v5810 = vmul.f32 %v5772, 0.5
      %v5811 = vmul.f32 %v5719, 0.5
      %v5812 = vmul.f32 %v5775, 0.5
      %v5813 = vmul.f32 %v5722, 0.5
      %v5814 = vmul.f32 %v5778, 0.5
      %v5815 = vmul.f32 %v5725, 0.5
      %v5816 = vmul.f32 %v5781, 0.5
      %v5817 = vmul.f32 %v5728, 0.5
      %v5818 = vmul.f32 %v5784, 0.5
      %v5819 = vmul.f32 %v5731, 0.5
      %v5820 = vmul.f32 %v5787, 0.5
      %v5821 = vmul.f32 %v5734, 0.5
      %v5822 = vmul.f32 %v5790, 0.5
      %v5823 = vmul.f32 %v5737, 0.5
      %v5824 = vmul.f32 %v5793, 0.5
      %v5825 = vmul.f32 %v5740, 0.5
      %v5826 = vmul.f32 %v5796, 0.5
      %v5827 = vmul.f32 %v5743, 0.5
      %v5828 = vmul.f32 %v5799, 0.5
      %v5829 = vmul.f32 %v5746, 0.5
      %v5830 = vmul.f32 %v5802, 0.5
      %v5831 = vmul.f32 %v5749, 0.5
      %v5832 = vmul.f32 %v5805, 0.5
      %v5833 = vmul.f32 %v5713, 0.044715
      %v5834 = vmul.f32 %v5769, 0.044715
      %v5835 = vmul.f32 %v5716, 0.044715
      %v5836 = vmul.f32 %v5772, 0.044715
      %v5837 = vmul.f32 %v5719, 0.044715
      %v5838 = vmul.f32 %v5775, 0.044715
      %v5839 = vmul.f32 %v5722, 0.044715
      %v5840 = vmul.f32 %v5778, 0.044715
      %v5841 = vmul.f32 %v5725, 0.044715
      %v5842 = vmul.f32 %v5781, 0.044715
      %v5843 = vmul.f32 %v5728, 0.044715
      %v5844 = vmul.f32 %v5784, 0.044715
      %v5845 = vmul.f32 %v5731, 0.044715
      %v5846 = vmul.f32 %v5787, 0.044715
      %v5847 = vmul.f32 %v5734, 0.044715
      %v5848 = vmul.f32 %v5790, 0.044715
      %v5849 = vmul.f32 %v5737, 0.044715
      %v5850 = vmul.f32 %v5793, 0.044715
      %v5851 = vmul.f32 %v5740, 0.044715
      %v5852 = vmul.f32 %v5796, 0.044715
      %v5853 = vmul.f32 %v5743, 0.044715
      %v5854 = vmul.f32 %v5799, 0.044715
      %v5855 = vmul.f32 %v5746, 0.044715
      %v5856 = vmul.f32 %v5802, 0.044715
      %v5857 = vmul.f32 %v5749, 0.044715
      %v5858 = vmul.f32 %v5805, 0.044715
      %v5859 = vmul.f32 %v5833, %v5713
      %v5860 = vmul.f32 %v5834, %v5769
      %v5861 = vmul.f32 %v5835, %v5716
      %v5862 = vmul.f32 %v5836, %v5772
      %v5863 = vmul.f32 %v5837, %v5719
      %v5864 = vmul.f32 %v5838, %v5775
      %v5865 = vmul.f32 %v5839, %v5722
      %v5866 = vmul.f32 %v5840, %v5778
      %v5867 = vmul.f32 %v5841, %v5725
      %v5868 = vmul.f32 %v5842, %v5781
      %v5869 = vmul.f32 %v5843, %v5728
      %v5870 = vmul.f32 %v5844, %v5784
      %v5871 = vmul.f32 %v5845, %v5731
      %v5872 = vmul.f32 %v5846, %v5787
      %v5873 = vmul.f32 %v5847, %v5734
      %v5874 = vmul.f32 %v5848, %v5790
      %v5875 = vmul.f32 %v5849, %v5737
      %v5876 = vmul.f32 %v5850, %v5793
      %v5877 = vmul.f32 %v5851, %v5740
      %v5878 = vmul.f32 %v5852, %v5796
      %v5879 = vmul.f32 %v5853, %v5743
      %v5880 = vmul.f32 %v5854, %v5799
      %v5881 = vmul.f32 %v5855, %v5746
      %v5882 = vmul.f32 %v5856, %v5802
      %v5883 = vmul.f32 %v5857, %v5749
      %v5884 = vmul.f32 %v5858, %v5805
      %v5885 = vmul.f32 %v5859, %v5713
      %v5886 = vmul.f32 %v5860, %v5769
      %v5887 = vmul.f32 %v5861, %v5716
      %v5888 = vmul.f32 %v5862, %v5772
      %v5889 = vmul.f32 %v5863, %v5719
      %v5890 = vmul.f32 %v5864, %v5775
      %v5891 = vmul.f32 %v5865, %v5722
      %v5892 = vmul.f32 %v5866, %v5778
      %v5893 = vmul.f32 %v5867, %v5725
      %v5894 = vmul.f32 %v5868, %v5781
      %v5895 = vmul.f32 %v5869, %v5728
      %v5896 = vmul.f32 %v5870, %v5784
      %v5897 = vmul.f32 %v5871, %v5731
      %v5898 = vmul.f32 %v5872, %v5787
      %v5899 = vmul.f32 %v5873, %v5734
      %v5900 = vmul.f32 %v5874, %v5790
      %v5901 = vmul.f32 %v5875, %v5737
      %v5902 = vmul.f32 %v5876, %v5793
      %v5903 = vmul.f32 %v5877, %v5740
      %v5904 = vmul.f32 %v5878, %v5796
      %v5905 = vmul.f32 %v5879, %v5743
      %v5906 = vmul.f32 %v5880, %v5799
      %v5907 = vmul.f32 %v5881, %v5746
      %v5908 = vmul.f32 %v5882, %v5802
      %v5909 = vmul.f32 %v5883, %v5749
      %v5910 = vmul.f32 %v5884, %v5805
      %v5911 = vadd.f32 %v5713, %v5885
      %v5912 = vadd.f32 %v5769, %v5886
      %v5913 = vadd.f32 %v5716, %v5887
      %v5914 = vadd.f32 %v5772, %v5888
      %v5915 = vadd.f32 %v5719, %v5889
      %v5916 = vadd.f32 %v5775, %v5890
      %v5917 = vadd.f32 %v5722, %v5891
      %v5918 = vadd.f32 %v5778, %v5892
      %v5919 = vadd.f32 %v5725, %v5893
      %v5920 = vadd.f32 %v5781, %v5894
      %v5921 = vadd.f32 %v5728, %v5895
      %v5922 = vadd.f32 %v5784, %v5896
      %v5923 = vadd.f32 %v5731, %v5897
      %v5924 = vadd.f32 %v5787, %v5898
      %v5925 = vadd.f32 %v5734, %v5899
      %v5926 = vadd.f32 %v5790, %v5900
      %v5927 = vadd.f32 %v5737, %v5901
      %v5928 = vadd.f32 %v5793, %v5902
      %v5929 = vadd.f32 %v5740, %v5903
      %v5930 = vadd.f32 %v5796, %v5904
      %v5931 = vadd.f32 %v5743, %v5905
      %v5932 = vadd.f32 %v5799, %v5906
      %v5933 = vadd.f32 %v5746, %v5907
      %v5934 = vadd.f32 %v5802, %v5908
      %v5935 = vadd.f32 %v5749, %v5909
      %v5936 = vadd.f32 %v5805, %v5910
      %v5937 = vmul.f32 %v5911, 0.7978846
      %v5938 = vmul.f32 %v5912, 0.7978846
      %v5939 = vmul.f32 %v5913, 0.7978846
      %v5940 = vmul.f32 %v5914, 0.7978846
      %v5941 = vmul.f32 %v5915, 0.7978846
      %v5942 = vmul.f32 %v5916, 0.7978846
      %v5943 = vmul.f32 %v5917, 0.7978846
      %v5944 = vmul.f32 %v5918, 0.7978846
      %v5945 = vmul.f32 %v5919, 0.7978846
      %v5946 = vmul.f32 %v5920, 0.7978846
      %v5947 = vmul.f32 %v5921, 0.7978846
      %v5948 = vmul.f32 %v5922, 0.7978846
      %v5949 = vmul.f32 %v5923, 0.7978846
      %v5950 = vmul.f32 %v5924, 0.7978846
      %v5951 = vmul.f32 %v5925, 0.7978846
      %v5952 = vmul.f32 %v5926, 0.7978846
      %v5953 = vmul.f32 %v5927, 0.7978846
      %v5954 = vmul.f32 %v5928, 0.7978846
      %v5955 = vmul.f32 %v5929, 0.7978846
      %v5956 = vmul.f32 %v5930, 0.7978846
      %v5957 = vmul.f32 %v5931, 0.7978846
      %v5958 = vmul.f32 %v5932, 0.7978846
      %v5959 = vmul.f32 %v5933, 0.7978846
      %v5960 = vmul.f32 %v5934, 0.7978846
      %v5961 = vmul.f32 %v5935, 0.7978846
      %v5962 = vmul.f32 %v5936, 0.7978846
      %v5963 = vtanh.pop %v5937
      %v5964 = vtanh.pop %v5938
      %v5965 = vtanh.pop %v5939
      %v5966 = vtanh.pop %v5940
      %v5967 = vtanh.pop %v5941
      %v5968 = vtanh.pop %v5942
      %v5969 = vtanh.pop %v5943
      %v5970 = vtanh.pop %v5944
      %v5971 = vtanh.pop %v5945
      %v5972 = vtanh.pop %v5946
      %v5973 = vtanh.pop %v5947
      %v5974 = vtanh.pop %v5948
      %v5975 = vtanh.pop %v5949
      %v5976 = vtanh.pop %v5950
      %v5977 = vtanh.pop %v5951
      %v5978 = vtanh.pop %v5952
      %v5979 = vtanh.pop %v5953
      %v5980 = vtanh.pop %v5954
      %v5981 = vtanh.pop %v5955
      %v5982 = vtanh.pop %v5956
      %v5983 = vtanh.pop %v5957
      %v5984 = vtanh.pop %v5958
      %v5985 = vtanh.pop %v5959
      %v5986 = vtanh.pop %v5960
      %v5987 = vtanh.pop %v5961
      %v5988 = vtanh.pop %v5962
      %v5989 = vadd.f32 %v5963, 1.0
      %v5990 = vadd.f32 %v5964, 1.0
      %v5991 = vadd.f32 %v5965, 1.0
      %v5992 = vadd.f32 %v5966, 1.0
      %v5993 = vadd.f32 %v5967, 1.0
      %v5994 = vadd.f32 %v5968, 1.0
      %v5995 = vadd.f32 %v5969, 1.0
      %v5996 = vadd.f32 %v5970, 1.0
      %v5997 = vadd.f32 %v5971, 1.0
      %v5998 = vadd.f32 %v5972, 1.0
      %v5999 = vadd.f32 %v5973, 1.0
      %v6000 = vadd.f32 %v5974, 1.0
      %v6001 = vadd.f32 %v5975, 1.0
      %v6002 = vadd.f32 %v5976, 1.0
      %v6003 = vadd.f32 %v5977, 1.0
      %v6004 = vadd.f32 %v5978, 1.0
      %v6005 = vadd.f32 %v5979, 1.0
      %v6006 = vadd.f32 %v5980, 1.0
      %v6007 = vadd.f32 %v5981, 1.0
      %v6008 = vadd.f32 %v5982, 1.0
      %v6009 = vadd.f32 %v5983, 1.0
      %v6010 = vadd.f32 %v5984, 1.0
      %v6011 = vadd.f32 %v5985, 1.0
      %v6012 = vadd.f32 %v5986, 1.0
      %v6013 = vadd.f32 %v5987, 1.0
      %v6014 = vadd.f32 %v5988, 1.0
      %v6015 = vmul.f32 %v5807, %v5989
      %v6016 = vmul.f32 %v5808, %v5990
      %v6017 = vmul.f32 %v5809, %v5991
      %v6018 = vmul.f32 %v5810, %v5992
      %v6019 = vmul.f32 %v5811, %v5993
      %v6020 = vmul.f32 %v5812, %v5994
      %v6021 = vmul.f32 %v5813, %v5995
      %v6022 = vmul.f32 %v5814, %v5996
      %v6023 = vmul.f32 %v5815, %v5997
      %v6024 = vmul.f32 %v5816, %v5998
      %v6025 = vmul.f32 %v5817, %v5999
      %v6026 = vmul.f32 %v5818, %v6000
      %v6027 = vmul.f32 %v5819, %v6001
      %v6028 = vmul.f32 %v5820, %v6002
      %v6029 = vmul.f32 %v5821, %v6003
      %v6030 = vmul.f32 %v5822, %v6004
      %v6031 = vmul.f32 %v5823, %v6005
      %v6032 = vmul.f32 %v5824, %v6006
      %v6033 = vmul.f32 %v5825, %v6007
      %v6034 = vmul.f32 %v5826, %v6008
      %v6035 = vmul.f32 %v5827, %v6009
      %v6036 = vmul.f32 %v5828, %v6010
      %v6037 = vmul.f32 %v5829, %v6011
      %v6038 = vmul.f32 %v5830, %v6012
      %v6039 = vmul.f32 %v5831, %v6013
      %v6040 = vmul.f32 %v5832, %v6014
      %s6041 = scalar_lea.vmem %s5, 4
      %v6042 = vld [vmem:[%s6041] sm:$0x1]
      %s6043 = scalar_lea.vmem %s6, 4
      %v6044 = vld [vmem:[%s6043] sm:$0x1]
      %6045 = vadd.xlane.f32.xlu0 %v6016
      %v6046 = vpop.xlane.xlu0 %6045
      %6047 = vadd.xlane.f32.xlu0 %v6018
      %v6048 = vpop.xlane.xlu0 %6047
      %6049 = vadd.xlane.f32.xlu0 %v6020
      %v6050 = vpop.xlane.xlu0 %6049
      %6051 = vadd.xlane.f32.xlu0 %v6022
      %v6052 = vpop.xlane.xlu0 %6051
      %6053 = vadd.xlane.f32.xlu0 %v6024
      %v6054 = vpop.xlane.xlu0 %6053
      %6055 = vadd.xlane.f32.xlu0 %v6026
      %v6056 = vpop.xlane.xlu0 %6055
      %6057 = vadd.xlane.f32.xlu0 %v6028
      %v6058 = vpop.xlane.xlu0 %6057
      %6059 = vadd.xlane.f32.xlu0 %v6030
      %v6060 = vpop.xlane.xlu0 %6059
      %6061 = vadd.xlane.f32.xlu0 %v6032
      %v6062 = vpop.xlane.xlu0 %6061
      %6063 = vadd.xlane.f32.xlu0 %v6034
      %v6064 = vpop.xlane.xlu0 %6063
      %6065 = vadd.xlane.f32.xlu0 %v6036
      %v6066 = vpop.xlane.xlu0 %6065
      %6067 = vadd.xlane.f32.xlu0 %v6038
      %v6068 = vpop.xlane.xlu0 %6067
      %6069 = vadd.xlane.f32.xlu0 %v6040
      %v6070 = vpop.xlane.xlu0 %6069
      %v6071 = vmul.f32 %v6046, %v1055
      %v6072 = vmul.f32 %v6048, %v1055
      %v6073 = vmul.f32 %v6050, %v1055
      %v6074 = vmul.f32 %v6052, %v1055
      %v6075 = vmul.f32 %v6054, %v1055
      %v6076 = vmul.f32 %v6056, %v1055
      %v6077 = vmul.f32 %v6058, %v1055
      %v6078 = vmul.f32 %v6060, %v1055
      %v6079 = vmul.f32 %v6062, %v1055
      %v6080 = vmul.f32 %v6064, %v1055
      %v6081 = vmul.f32 %v6066, %v1055
      %v6082 = vmul.f32 %v6068, %v1055
      %v6083 = vmul.f32 %v6070, %v1055
      %v6084 = vsub.f32 %v6016, %v6071
      %v6085 = vsub.f32 %v6018, %v6072
      %v6086 = vsub.f32 %v6020, %v6073
      %v6087 = vsub.f32 %v6022, %v6074
      %v6088 = vsub.f32 %v6024, %v6075
      %v6089 = vsub.f32 %v6026, %v6076
      %v6090 = vsub.f32 %v6028, %v6077
      %v6091 = vsub.f32 %v6030, %v6078
      %v6092 = vsub.f32 %v6032, %v6079
      %v6093 = vsub.f32 %v6034, %v6080
      %v6094 = vsub.f32 %v6036, %v6081
      %v6095 = vsub.f32 %v6038, %v6082
      %v6096 = vsub.f32 %v6040, %v6083
      %v6097 = vmul.f32 %v6084, %v6084
      %v6098 = vmul.f32 %v6085, %v6085
      %v6099 = vmul.f32 %v6086, %v6086
      %v6100 = vmul.f32 %v6087, %v6087
      %v6101 = vmul.f32 %v6088, %v6088
      %v6102 = vmul.f32 %v6089, %v6089
      %v6103 = vmul.f32 %v6090, %v6090
      %v6104 = vmul.f32 %v6091, %v6091
      %v6105 = vmul.f32 %v6092, %v6092
      %v6106 = vmul.f32 %v6093, %v6093
      %v6107 = vmul.f32 %v6094, %v6094
      %v6108 = vmul.f32 %v6095, %v6095
      %v6109 = vmul.f32 %v6096, %v6096
      %6110 = vadd.xlane.f32.xlu0 %v6097
      %v6111 = vpop.xlane.xlu0 %6110
      %6112 = vadd.xlane.f32.xlu0 %v6098
      %v6113 = vpop.xlane.xlu0 %6112
      %6114 = vadd.xlane.f32.xlu0 %v6099
      %v6115 = vpop.xlane.xlu0 %6114
      %6116 = vadd.xlane.f32.xlu0 %v6100
      %v6117 = vpop.xlane.xlu0 %6116
      %6118 = vadd.xlane.f32.xlu0 %v6101
      %v6119 = vpop.xlane.xlu0 %6118
      %6120 = vadd.xlane.f32.xlu0 %v6102
      %v6121 = vpop.xlane.xlu0 %6120
      %6122 = vadd.xlane.f32.xlu0 %v6103
      %v6123 = vpop.xlane.xlu0 %6122
      %6124 = vadd.xlane.f32.xlu0 %v6104
      %v6125 = vpop.xlane.xlu0 %6124
      %6126 = vadd.xlane.f32.xlu0 %v6105
      %v6127 = vpop.xlane.xlu0 %6126
      %6128 = vadd.xlane.f32.xlu0 %v6106
      %v6129 = vpop.xlane.xlu0 %6128
      %6130 = vadd.xlane.f32.xlu0 %v6107
      %v6131 = vpop.xlane.xlu0 %6130
      %6132 = vadd.xlane.f32.xlu0 %v6108
      %v6133 = vpop.xlane.xlu0 %6132
      %6134 = vadd.xlane.f32.xlu0 %v6109
      %v6135 = vpop.xlane.xlu0 %6134
      %v6136 = vmul.f32 %v6111, %v1055
      %v6137 = vmul.f32 %v6113, %v1055
      %v6138 = vmul.f32 %v6115, %v1055
      %v6139 = vmul.f32 %v6117, %v1055
      %v6140 = vmul.f32 %v6119, %v1055
      %v6141 = vmul.f32 %v6121, %v1055
      %v6142 = vmul.f32 %v6123, %v1055
      %v6143 = vmul.f32 %v6125, %v1055
      %v6144 = vmul.f32 %v6127, %v1055
      %v6145 = vmul.f32 %v6129, %v1055
      %v6146 = vmul.f32 %v6131, %v1055
      %v6147 = vmul.f32 %v6133, %v1055
      %v6148 = vmul.f32 %v6135, %v1055
      %v6149 = vadd.f32 %v6136, 1e-05
      %v6150 = vadd.f32 %v6137, 1e-05
      %v6151 = vadd.f32 %v6138, 1e-05
      %v6152 = vadd.f32 %v6139, 1e-05
      %v6153 = vadd.f32 %v6140, 1e-05
      %v6154 = vadd.f32 %v6141, 1e-05
      %v6155 = vadd.f32 %v6142, 1e-05
      %v6156 = vadd.f32 %v6143, 1e-05
      %v6157 = vadd.f32 %v6144, 1e-05
      %v6158 = vadd.f32 %v6145, 1e-05
      %v6159 = vadd.f32 %v6146, 1e-05
      %v6160 = vadd.f32 %v6147, 1e-05
      %v6161 = vadd.f32 %v6148, 1e-05
      %v6162 = vrsqrt.pop %v6149
      %v6163 = vmul.f32 %v6162, %v6149
      %v6164 = vmul.f32 %v6163, %v6162
      %v6165 = vmul.f32 0.5, %v6164
      %v6166 = vsub.f32 1.5, %v6165
      %v6167 = vmul.f32 %v6162, %v6166
      %vm6168 = vweird.f32 %v6149
      %vm6169 = vweird.f32 %v6162
      %vm6170 = vmor %vm6168, %vm6169
      %v6171 = vsel %vm6170, %v6162, %v6167
      %v6172 = vrsqrt.pop %v6150
      %v6173 = vmul.f32 %v6172, %v6150
      %v6174 = vmul.f32 %v6173, %v6172
      %v6175 = vmul.f32 0.5, %v6174
      %v6176 = vsub.f32 1.5, %v6175
      %v6177 = vmul.f32 %v6172, %v6176
      %vm6178 = vweird.f32 %v6150
      %vm6179 = vweird.f32 %v6172
      %vm6180 = vmor %vm6178, %vm6179
      %v6181 = vsel %vm6180, %v6172, %v6177
      %v6182 = vrsqrt.pop %v6151
      %v6183 = vmul.f32 %v6182, %v6151
      %v6184 = vmul.f32 %v6183, %v6182
      %v6185 = vmul.f32 0.5, %v6184
      %v6186 = vsub.f32 1.5, %v6185
      %v6187 = vmul.f32 %v6182, %v6186
      %vm6188 = vweird.f32 %v6151
      %vm6189 = vweird.f32 %v6182
      %vm6190 = vmor %vm6188, %vm6189
      %v6191 = vsel %vm6190, %v6182, %v6187
      %v6192 = vrsqrt.pop %v6152
      %v6193 = vmul.f32 %v6192, %v6152
      %v6194 = vmul.f32 %v6193, %v6192
      %v6195 = vmul.f32 0.5, %v6194
      %v6196 = vsub.f32 1.5, %v6195
      %v6197 = vmul.f32 %v6192, %v6196
      %vm6198 = vweird.f32 %v6152
      %vm6199 = vweird.f32 %v6192
      %vm6200 = vmor %vm6198, %vm6199
      %v6201 = vsel %vm6200, %v6192, %v6197
      %v6202 = vrsqrt.pop %v6153
      %v6203 = vmul.f32 %v6202, %v6153
      %v6204 = vmul.f32 %v6203, %v6202
      %v6205 = vmul.f32 0.5, %v6204
      %v6206 = vsub.f32 1.5, %v6205
      %v6207 = vmul.f32 %v6202, %v6206
      %vm6208 = vweird.f32 %v6153
      %vm6209 = vweird.f32 %v6202
      %vm6210 = vmor %vm6208, %vm6209
      %v6211 = vsel %vm6210, %v6202, %v6207
      %v6212 = vrsqrt.pop %v6154
      %v6213 = vmul.f32 %v6212, %v6154
      %v6214 = vmul.f32 %v6213, %v6212
      %v6215 = vmul.f32 0.5, %v6214
      %v6216 = vsub.f32 1.5, %v6215
      %v6217 = vmul.f32 %v6212, %v6216
      %vm6218 = vweird.f32 %v6154
      %vm6219 = vweird.f32 %v6212
      %vm6220 = vmor %vm6218, %vm6219
      %v6221 = vsel %vm6220, %v6212, %v6217
      %v6222 = vrsqrt.pop %v6155
      %v6223 = vmul.f32 %v6222, %v6155
      %v6224 = vmul.f32 %v6223, %v6222
      %v6225 = vmul.f32 0.5, %v6224
      %v6226 = vsub.f32 1.5, %v6225
      %v6227 = vmul.f32 %v6222, %v6226
      %vm6228 = vweird.f32 %v6155
      %vm6229 = vweird.f32 %v6222
      %vm6230 = vmor %vm6228, %vm6229
      %v6231 = vsel %vm6230, %v6222, %v6227
      %v6232 = vrsqrt.pop %v6156
      %v6233 = vmul.f32 %v6232, %v6156
      %v6234 = vmul.f32 %v6233, %v6232
      %v6235 = vmul.f32 0.5, %v6234
      %v6236 = vsub.f32 1.5, %v6235
      %v6237 = vmul.f32 %v6232, %v6236
      %vm6238 = vweird.f32 %v6156
      %vm6239 = vweird.f32 %v6232
      %vm6240 = vmor %vm6238, %vm6239
      %v6241 = vsel %vm6240, %v6232, %v6237
      %v6242 = vrsqrt.pop %v6157
      %v6243 = vmul.f32 %v6242, %v6157
      %v6244 = vmul.f32 %v6243, %v6242
      %v6245 = vmul.f32 0.5, %v6244
      %v6246 = vsub.f32 1.5, %v6245
      %v6247 = vmul.f32 %v6242, %v6246
      %vm6248 = vweird.f32 %v6157
      %vm6249 = vweird.f32 %v6242
      %vm6250 = vmor %vm6248, %vm6249
      %v6251 = vsel %vm6250, %v6242, %v6247
      %v6252 = vrsqrt.pop %v6158
      %v6253 = vmul.f32 %v6252, %v6158
      %v6254 = vmul.f32 %v6253, %v6252
      %v6255 = vmul.f32 0.5, %v6254
      %v6256 = vsub.f32 1.5, %v6255
      %v6257 = vmul.f32 %v6252, %v6256
      %vm6258 = vweird.f32 %v6158
      %vm6259 = vweird.f32 %v6252
      %vm6260 = vmor %vm6258, %vm6259
      %v6261 = vsel %vm6260, %v6252, %v6257
      %v6262 = vrsqrt.pop %v6159
      %v6263 = vmul.f32 %v6262, %v6159
      %v6264 = vmul.f32 %v6263, %v6262
      %v6265 = vmul.f32 0.5, %v6264
      %v6266 = vsub.f32 1.5, %v6265
      %v6267 = vmul.f32 %v6262, %v6266
      %vm6268 = vweird.f32 %v6159
      %vm6269 = vweird.f32 %v6262
      %vm6270 = vmor %vm6268, %vm6269
      %v6271 = vsel %vm6270, %v6262, %v6267
      %v6272 = vrsqrt.pop %v6160
      %v6273 = vmul.f32 %v6272, %v6160
      %v6274 = vmul.f32 %v6273, %v6272
      %v6275 = vmul.f32 0.5, %v6274
      %v6276 = vsub.f32 1.5, %v6275
      %v6277 = vmul.f32 %v6272, %v6276
      %vm6278 = vweird.f32 %v6160
      %vm6279 = vweird.f32 %v6272
      %vm6280 = vmor %vm6278, %vm6279
      %v6281 = vsel %vm6280, %v6272, %v6277
      %v6282 = vrsqrt.pop %v6161
      %v6283 = vmul.f32 %v6282, %v6161
      %v6284 = vmul.f32 %v6283, %v6282
      %v6285 = vmul.f32 0.5, %v6284
      %v6286 = vsub.f32 1.5, %v6285
      %v6287 = vmul.f32 %v6282, %v6286
      %vm6288 = vweird.f32 %v6161
      %vm6289 = vweird.f32 %v6282
      %vm6290 = vmor %vm6288, %vm6289
      %v6291 = vsel %vm6290, %v6282, %v6287
      %v6292 = vmul.f32 %v6084, %v6171
      %v6293 = vmul.f32 %v6085, %v6181
      %v6294 = vmul.f32 %v6086, %v6191
      %v6295 = vmul.f32 %v6087, %v6201
      %v6296 = vmul.f32 %v6088, %v6211
      %v6297 = vmul.f32 %v6089, %v6221
      %v6298 = vmul.f32 %v6090, %v6231
      %v6299 = vmul.f32 %v6091, %v6241
      %v6300 = vmul.f32 %v6092, %v6251
      %v6301 = vmul.f32 %v6093, %v6261
      %v6302 = vmul.f32 %v6094, %v6271
      %v6303 = vmul.f32 %v6095, %v6281
      %v6304 = vmul.f32 %v6096, %v6291
      %v6306 = vperm.slane %v6042, 0
      %v6308 = vmul.f32 %v6292, %v6306
      %v6309 = vmul.f32 %v6293, %v6306
      %v6310 = vmul.f32 %v6294, %v6306
      %v6311 = vmul.f32 %v6295, %v6306
      %v6312 = vmul.f32 %v6296, %v6306
      %v6313 = vmul.f32 %v6297, %v6306
      %v6314 = vmul.f32 %v6298, %v6306
      %v6315 = vmul.f32 %v6299, %v6306
      %v6316 = vmul.f32 %v6300, %v6306
      %v6317 = vmul.f32 %v6301, %v6306
      %v6318 = vmul.f32 %v6302, %v6306
      %v6319 = vmul.f32 %v6303, %v6306
      %v6320 = vmul.f32 %v6304, %v6306
      %v6322 = vperm.slane %v6044, 0
      %v6324 = vadd.f32 %v6308, %v6322
      %v6325 = vadd.f32 %v6309, %v6322
      %v6326 = vadd.f32 %v6310, %v6322
      %v6327 = vadd.f32 %v6311, %v6322
      %v6328 = vadd.f32 %v6312, %v6322
      %v6329 = vadd.f32 %v6313, %v6322
      %v6330 = vadd.f32 %v6314, %v6322
      %v6331 = vadd.f32 %v6315, %v6322
      %v6332 = vadd.f32 %v6316, %v6322
      %v6333 = vadd.f32 %v6317, %v6322
      %v6334 = vadd.f32 %v6318, %v6322
      %v6335 = vadd.f32 %v6319, %v6322
      %v6336 = vadd.f32 %v6320, %v6322
      %v6337 = vsel %vm600, 1.0, %v6324
      %v6338 = vsel %vm601, 1.0, %v6325
      %v6339 = vsel %vm602, 1.0, %v6326
      %v6340 = vsel %vm603, 1.0, %v6327
      %v6341 = vsel %vm604, 1.0, %v6328
      %v6342 = vsel %vm605, 1.0, %v6329
      %v6343 = vsel %vm606, 1.0, %v6330
      %v6344 = vsel %vm607, 1.0, %v6331
      %v6345 = vsel %vm608, 1.0, %v6332
      %v6346 = vsel %vm609, 1.0, %v6333
      %v6347 = vsel %vm610, 1.0, %v6334
      %v6348 = vsel %vm611, 1.0, %v6335
      %v6349 = vsel %vm612, 1.0, %v6336
      %s6350 = scalar_lea.vmem %s7, 416
      %v6351 = vld [vmem:[%s6350] sm:$0xff]
      %v6352 = vld [vmem:[%s6350 + $0x8] sm:$0xff]
      %v6353 = vld [vmem:[%s6350 + $0x10] sm:$0xff]
      %v6354 = vld [vmem:[%s6350 + $0x18] sm:$0xff]
      %v6355 = vld [vmem:[%s6350 + $0x20] sm:$0xff]
      %v6356 = vld [vmem:[%s6350 + $0x28] sm:$0xff]
      %v6357 = vld [vmem:[%s6350 + $0x30] sm:$0xff]
      %v6358 = vld [vmem:[%s6350 + $0x38] sm:$0xff]
      %v6359 = vld [vmem:[%s6350 + $0x40] sm:$0xff]
      %v6360 = vld [vmem:[%s6350 + $0x48] sm:$0xff]
      %v6361 = vld [vmem:[%s6350 + $0x50] sm:$0xff]
      %v6362 = vld [vmem:[%s6350 + $0x58] sm:$0xff]
      %v6363 = vld [vmem:[%s6350 + $0x60] sm:$0xff]
      %v6365 = vsel %vm1348, %v6351, 0
      %v6368 = vsel %vm1348, %v6352, 0
      %v6371 = vsel %vm1348, %v6353, 0
      %v6374 = vsel %vm1348, %v6354, 0
      %v6377 = vsel %vm1348, %v6355, 0
      %v6380 = vsel %vm1348, %v6356, 0
      %v6383 = vsel %vm1348, %v6357, 0
      %v6386 = vsel %vm1348, %v6358, 0
      %v6389 = vsel %vm1348, %v6359, 0
      %v6392 = vsel %vm1348, %v6360, 0
      %v6395 = vsel %vm1348, %v6361, 0
      %v6398 = vsel %vm1348, %v6362, 0
      %v6401 = vsel %vm1348, %v6363, 0
      %6403 = vmatpush.msra.mxu0 0.0
      %6404 = vmatpush.msra.mxu0 0.0
      %6405 = vmatpush.msra.mxu0 0.0
      %6406 = vmatpush.msra.mxu0 %v6349
      %6407 = vmatpush.msra.mxu0 %v6348
      %6408 = vmatpush.msra.mxu0 %v6347
      %6409 = vmatpush.msra.mxu0 %v6346
      %6410 = vmatpush.msra.mxu0 %v6345
      %6411 = vmatpush.msra.mxu0 %v6344
      %6412 = vmatpush.msra.mxu0 %v6343
      %6413 = vmatpush.msra.mxu0 %v6342
      %6414 = vmatpush.msra.mxu0 %v6341
      %6415 = vmatpush.msra.mxu0 %v6340
      %6416 = vmatpush.msra.mxu0 %v6339
      %6417 = vmatpush.msra.mxu0 %v6338
      %6418 = vmatpush.msra.mxu0 %v6337
      %6419 = vmatmul.f32.gmra.mxu0 %v6365
      %v6420 = vpop.f32.mrf.mxu0
      %v6421 = vadd.f32 0.0, %v6420
      %6422 = vmatmul.f32.gmra.mxu0 %v6368
      %v6423 = vpop.f32.mrf.mxu0
      %v6424 = vadd.f32 0.0, %v6423
      %6425 = vmatmul.f32.gmra.mxu0 %v6371
      %v6426 = vpop.f32.mrf.mxu0
      %v6427 = vadd.f32 0.0, %v6426
      %6428 = vmatmul.f32.gmra.mxu0 %v6374
      %v6429 = vpop.f32.mrf.mxu0
      %v6430 = vadd.f32 0.0, %v6429
      %6431 = vmatmul.f32.gmra.mxu0 %v6377
      %v6432 = vpop.f32.mrf.mxu0
      %v6433 = vadd.f32 0.0, %v6432
      %6434 = vmatmul.f32.gmra.mxu0 %v6380
      %v6435 = vpop.f32.mrf.mxu0
      %v6436 = vadd.f32 0.0, %v6435
      %6437 = vmatmul.f32.gmra.mxu0 %v6383
      %v6438 = vpop.f32.mrf.mxu0
      %v6439 = vadd.f32 0.0, %v6438
      %6440 = vmatmul.f32.gmra.mxu0 %v6386
      %v6441 = vpop.f32.mrf.mxu0
      %v6442 = vadd.f32 0.0, %v6441
      %6443 = vmatmul.f32.gmra.mxu0 %v6389
      %v6444 = vpop.f32.mrf.mxu0
      %v6445 = vadd.f32 0.0, %v6444
      %6446 = vmatmul.f32.gmra.mxu0 %v6392
      %v6447 = vpop.f32.mrf.mxu0
      %v6448 = vadd.f32 0.0, %v6447
      %6449 = vmatmul.f32.gmra.mxu0 %v6395
      %v6450 = vpop.f32.mrf.mxu0
      %v6451 = vadd.f32 0.0, %v6450
      %6452 = vmatmul.f32.gmra.mxu0 %v6398
      %v6453 = vpop.f32.mrf.mxu0
      %v6454 = vadd.f32 0.0, %v6453
      %6455 = vmatmul.f32.gmra.mxu0 %v6401
      %v6456 = vpop.f32.mrf.mxu0
      %v6457 = vadd.f32 0.0, %v6456
      %6458 = vdwg.mxu0
      %v6459 = vmul.f32 %v6421, %v6015
      %v6460 = vmul.f32 %v6424, %v6017
      %v6461 = vmul.f32 %v6427, %v6019
      %v6462 = vmul.f32 %v6430, %v6021
      %v6463 = vmul.f32 %v6433, %v6023
      %v6464 = vmul.f32 %v6436, %v6025
      %v6465 = vmul.f32 %v6439, %v6027
      %v6466 = vmul.f32 %v6442, %v6029
      %v6467 = vmul.f32 %v6445, %v6031
      %v6468 = vmul.f32 %v6448, %v6033
      %v6469 = vmul.f32 %v6451, %v6035
      %v6470 = vmul.f32 %v6454, %v6037
      %v6471 = vmul.f32 %v6457, %v6039
      %s6472 = scalar_lea.vmem %s8, 512
      %v6473 = vld [vmem:[%s6472] sm:$0xff]
      %v6474 = vld [vmem:[%s6472 + $0x8] sm:$0xff]
      %v6475 = vld [vmem:[%s6472 + $0x10] sm:$0xff]
      %v6476 = vld [vmem:[%s6472 + $0x18] sm:$0xff]
      %v6477 = vld [vmem:[%s6472 + $0x20] sm:$0xff]
      %v6478 = vld [vmem:[%s6472 + $0x28] sm:$0xff]
      %v6479 = vld [vmem:[%s6472 + $0x30] sm:$0xff]
      %v6480 = vld [vmem:[%s6472 + $0x38] sm:$0xff]
      %v6481 = vld [vmem:[%s6472 + $0x40] sm:$0xff]
      %v6482 = vld [vmem:[%s6472 + $0x48] sm:$0xff]
      %v6483 = vld [vmem:[%s6472 + $0x50] sm:$0xff]
      %v6484 = vld [vmem:[%s6472 + $0x58] sm:$0xff]
      %v6485 = vld [vmem:[%s6472 + $0x60] sm:$0xff]
      %v6486 = vld [vmem:[%s6472 + $0x68] sm:$0xff]
      %v6487 = vld [vmem:[%s6472 + $0x70] sm:$0xff]
      %v6488 = vld [vmem:[%s6472 + $0x78] sm:$0xff]
      %s6489 = scalar_lea.vmem %s9, 4
      %v6490 = vld [vmem:[%s6489] sm:$0x1]
      %v6492 = vperm.slane %v6490, 0
      %6494 = vmatpush.msra.mxu0 %v6488
      %6495 = vmatpush.msra.mxu0 %v6487
      %6496 = vmatpush.msra.mxu0 %v6486
      %6497 = vmatpush.msra.mxu0 %v6485
      %6498 = vmatpush.msra.mxu0 %v6484
      %6499 = vmatpush.msra.mxu0 %v6483
      %6500 = vmatpush.msra.mxu0 %v6482
      %6501 = vmatpush.msra.mxu0 %v6481
      %6502 = vmatpush.msra.mxu0 %v6480
      %6503 = vmatpush.msra.mxu0 %v6479
      %6504 = vmatpush.msra.mxu0 %v6478
      %6505 = vmatpush.msra.mxu0 %v6477
      %6506 = vmatpush.msra.mxu0 %v6476
      %6507 = vmatpush.msra.mxu0 %v6475
      %6508 = vmatpush.msra.mxu0 %v6474
      %6509 = vmatpush.msra.mxu0 %v6473
      %6510 = vmatmul.f32.gmra.mxu0 %v6459
      %v6511 = vpop.f32.mrf.mxu0
      %v6512 = vadd.f32 %v6492, %v6511
      %6513 = vmatmul.f32.gmra.mxu0 %v6460
      %v6514 = vpop.f32.mrf.mxu0
      %v6515 = vadd.f32 %v6492, %v6514
      %6516 = vmatmul.f32.gmra.mxu0 %v6461
      %v6517 = vpop.f32.mrf.mxu0
      %v6518 = vadd.f32 %v6492, %v6517
      %6519 = vmatmul.f32.gmra.mxu0 %v6462
      %v6520 = vpop.f32.mrf.mxu0
      %v6521 = vadd.f32 %v6492, %v6520
      %6522 = vmatmul.f32.gmra.mxu0 %v6463
      %v6523 = vpop.f32.mrf.mxu0
      %v6524 = vadd.f32 %v6492, %v6523
      %6525 = vmatmul.f32.gmra.mxu0 %v6464
      %v6526 = vpop.f32.mrf.mxu0
      %v6527 = vadd.f32 %v6492, %v6526
      %6528 = vmatmul.f32.gmra.mxu0 %v6465
      %v6529 = vpop.f32.mrf.mxu0
      %v6530 = vadd.f32 %v6492, %v6529
      %6531 = vmatmul.f32.gmra.mxu0 %v6466
      %v6532 = vpop.f32.mrf.mxu0
      %v6533 = vadd.f32 %v6492, %v6532
      %6534 = vmatmul.f32.gmra.mxu0 %v6467
      %v6535 = vpop.f32.mrf.mxu0
      %v6536 = vadd.f32 %v6492, %v6535
      %6537 = vmatmul.f32.gmra.mxu0 %v6468
      %v6538 = vpop.f32.mrf.mxu0
      %v6539 = vadd.f32 %v6492, %v6538
      %6540 = vmatmul.f32.gmra.mxu0 %v6469
      %v6541 = vpop.f32.mrf.mxu0
      %v6542 = vadd.f32 %v6492, %v6541
      %6543 = vmatmul.f32.gmra.mxu0 %v6470
      %v6544 = vpop.f32.mrf.mxu0
      %v6545 = vadd.f32 %v6492, %v6544
      %6546 = vmatmul.f32.gmra.mxu0 %v6471
      %v6547 = vpop.f32.mrf.mxu0
      %v6548 = vadd.f32 %v6492, %v6547
      %6549 = vdwg.mxu0
      %s6550 = scalar_lea.vmem %s10, 4
      %v6551 = vld [vmem:[%s6550] sm:$0x1]
      %s6552 = scalar_lea.vmem %s11, 4
      %v6553 = vld [vmem:[%s6552] sm:$0x1]
      %v6554 = vsel %vm635, %v6512, 0.0
      %6555 = vadd.xlane.f32.xlu0 %v6554
      %v6556 = vpop.xlane.xlu0 %6555
      %v6557 = vsel %vm635, %v6515, 0.0
      %6558 = vadd.xlane.f32.xlu0 %v6557
      %v6559 = vpop.xlane.xlu0 %6558
      %v6560 = vsel %vm635, %v6518, 0.0
      %6561 = vadd.xlane.f32.xlu0 %v6560
      %v6562 = vpop.xlane.xlu0 %6561
      %v6563 = vsel %vm635, %v6521, 0.0
      %6564 = vadd.xlane.f32.xlu0 %v6563
      %v6565 = vpop.xlane.xlu0 %6564
      %v6566 = vsel %vm635, %v6524, 0.0
      %6567 = vadd.xlane.f32.xlu0 %v6566
      %v6568 = vpop.xlane.xlu0 %6567
      %v6569 = vsel %vm635, %v6527, 0.0
      %6570 = vadd.xlane.f32.xlu0 %v6569
      %v6571 = vpop.xlane.xlu0 %6570
      %v6572 = vsel %vm635, %v6530, 0.0
      %6573 = vadd.xlane.f32.xlu0 %v6572
      %v6574 = vpop.xlane.xlu0 %6573
      %v6575 = vsel %vm635, %v6533, 0.0
      %6576 = vadd.xlane.f32.xlu0 %v6575
      %v6577 = vpop.xlane.xlu0 %6576
      %v6578 = vsel %vm635, %v6536, 0.0
      %6579 = vadd.xlane.f32.xlu0 %v6578
      %v6580 = vpop.xlane.xlu0 %6579
      %v6581 = vsel %vm635, %v6539, 0.0
      %6582 = vadd.xlane.f32.xlu0 %v6581
      %v6583 = vpop.xlane.xlu0 %6582
      %v6584 = vsel %vm635, %v6542, 0.0
      %6585 = vadd.xlane.f32.xlu0 %v6584
      %v6586 = vpop.xlane.xlu0 %6585
      %v6587 = vsel %vm635, %v6545, 0.0
      %6588 = vadd.xlane.f32.xlu0 %v6587
      %v6589 = vpop.xlane.xlu0 %6588
      %v6590 = vsel %vm635, %v6548, 0.0
      %6591 = vadd.xlane.f32.xlu0 %v6590
      %v6592 = vpop.xlane.xlu0 %6591
      %v6593 = vmul.f32 %v6556, %v1580
      %v6594 = vmul.f32 %v6559, %v1580
      %v6595 = vmul.f32 %v6562, %v1580
      %v6596 = vmul.f32 %v6565, %v1580
      %v6597 = vmul.f32 %v6568, %v1580
      %v6598 = vmul.f32 %v6571, %v1580
      %v6599 = vmul.f32 %v6574, %v1580
      %v6600 = vmul.f32 %v6577, %v1580
      %v6601 = vmul.f32 %v6580, %v1580
      %v6602 = vmul.f32 %v6583, %v1580
      %v6603 = vmul.f32 %v6586, %v1580
      %v6604 = vmul.f32 %v6589, %v1580
      %v6605 = vmul.f32 %v6592, %v1580
      %v6606 = vsub.f32 %v6512, %v6593
      %v6607 = vsub.f32 %v6515, %v6594
      %v6608 = vsub.f32 %v6518, %v6595
      %v6609 = vsub.f32 %v6521, %v6596
      %v6610 = vsub.f32 %v6524, %v6597
      %v6611 = vsub.f32 %v6527, %v6598
      %v6612 = vsub.f32 %v6530, %v6599
      %v6613 = vsub.f32 %v6533, %v6600
      %v6614 = vsub.f32 %v6536, %v6601
      %v6615 = vsub.f32 %v6539, %v6602
      %v6616 = vsub.f32 %v6542, %v6603
      %v6617 = vsub.f32 %v6545, %v6604
      %v6618 = vsub.f32 %v6548, %v6605
      %v6619 = vmul.f32 %v6606, %v6606
      %v6620 = vmul.f32 %v6607, %v6607
      %v6621 = vmul.f32 %v6608, %v6608
      %v6622 = vmul.f32 %v6609, %v6609
      %v6623 = vmul.f32 %v6610, %v6610
      %v6624 = vmul.f32 %v6611, %v6611
      %v6625 = vmul.f32 %v6612, %v6612
      %v6626 = vmul.f32 %v6613, %v6613
      %v6627 = vmul.f32 %v6614, %v6614
      %v6628 = vmul.f32 %v6615, %v6615
      %v6629 = vmul.f32 %v6616, %v6616
      %v6630 = vmul.f32 %v6617, %v6617
      %v6631 = vmul.f32 %v6618, %v6618
      %v6632 = vsel %vm635, %v6619, 0.0
      %6633 = vadd.xlane.f32.xlu0 %v6632
      %v6634 = vpop.xlane.xlu0 %6633
      %v6635 = vsel %vm635, %v6620, 0.0
      %6636 = vadd.xlane.f32.xlu0 %v6635
      %v6637 = vpop.xlane.xlu0 %6636
      %v6638 = vsel %vm635, %v6621, 0.0
      %6639 = vadd.xlane.f32.xlu0 %v6638
      %v6640 = vpop.xlane.xlu0 %6639
      %v6641 = vsel %vm635, %v6622, 0.0
      %6642 = vadd.xlane.f32.xlu0 %v6641
      %v6643 = vpop.xlane.xlu0 %6642
      %v6644 = vsel %vm635, %v6623, 0.0
      %6645 = vadd.xlane.f32.xlu0 %v6644
      %v6646 = vpop.xlane.xlu0 %6645
      %v6647 = vsel %vm635, %v6624, 0.0
      %6648 = vadd.xlane.f32.xlu0 %v6647
      %v6649 = vpop.xlane.xlu0 %6648
      %v6650 = vsel %vm635, %v6625, 0.0
      %6651 = vadd.xlane.f32.xlu0 %v6650
      %v6652 = vpop.xlane.xlu0 %6651
      %v6653 = vsel %vm635, %v6626, 0.0
      %6654 = vadd.xlane.f32.xlu0 %v6653
      %v6655 = vpop.xlane.xlu0 %6654
      %v6656 = vsel %vm635, %v6627, 0.0
      %6657 = vadd.xlane.f32.xlu0 %v6656
      %v6658 = vpop.xlane.xlu0 %6657
      %v6659 = vsel %vm635, %v6628, 0.0
      %6660 = vadd.xlane.f32.xlu0 %v6659
      %v6661 = vpop.xlane.xlu0 %6660
      %v6662 = vsel %vm635, %v6629, 0.0
      %6663 = vadd.xlane.f32.xlu0 %v6662
      %v6664 = vpop.xlane.xlu0 %6663
      %v6665 = vsel %vm635, %v6630, 0.0
      %6666 = vadd.xlane.f32.xlu0 %v6665
      %v6667 = vpop.xlane.xlu0 %6666
      %v6668 = vsel %vm635, %v6631, 0.0
      %6669 = vadd.xlane.f32.xlu0 %v6668
      %v6670 = vpop.xlane.xlu0 %6669
      %v6671 = vmul.f32 %v6634, %v1580
      %v6672 = vmul.f32 %v6637, %v1580
      %v6673 = vmul.f32 %v6640, %v1580
      %v6674 = vmul.f32 %v6643, %v1580
      %v6675 = vmul.f32 %v6646, %v1580
      %v6676 = vmul.f32 %v6649, %v1580
      %v6677 = vmul.f32 %v6652, %v1580
      %v6678 = vmul.f32 %v6655, %v1580
      %v6679 = vmul.f32 %v6658, %v1580
      %v6680 = vmul.f32 %v6661, %v1580
      %v6681 = vmul.f32 %v6664, %v1580
      %v6682 = vmul.f32 %v6667, %v1580
      %v6683 = vmul.f32 %v6670, %v1580
      %v6684 = vadd.f32 %v6671, 1e-05
      %v6685 = vadd.f32 %v6672, 1e-05
      %v6686 = vadd.f32 %v6673, 1e-05
      %v6687 = vadd.f32 %v6674, 1e-05
      %v6688 = vadd.f32 %v6675, 1e-05
      %v6689 = vadd.f32 %v6676, 1e-05
      %v6690 = vadd.f32 %v6677, 1e-05
      %v6691 = vadd.f32 %v6678, 1e-05
      %v6692 = vadd.f32 %v6679, 1e-05
      %v6693 = vadd.f32 %v6680, 1e-05
      %v6694 = vadd.f32 %v6681, 1e-05
      %v6695 = vadd.f32 %v6682, 1e-05
      %v6696 = vadd.f32 %v6683, 1e-05
      %v6697 = vrsqrt.pop %v6684
      %v6698 = vmul.f32 %v6697, %v6684
      %v6699 = vmul.f32 %v6698, %v6697
      %v6700 = vmul.f32 0.5, %v6699
      %v6701 = vsub.f32 1.5, %v6700
      %v6702 = vmul.f32 %v6697, %v6701
      %vm6703 = vweird.f32 %v6684
      %vm6704 = vweird.f32 %v6697
      %vm6705 = vmor %vm6703, %vm6704
      %v6706 = vsel %vm6705, %v6697, %v6702
      %v6707 = vrsqrt.pop %v6685
      %v6708 = vmul.f32 %v6707, %v6685
      %v6709 = vmul.f32 %v6708, %v6707
      %v6710 = vmul.f32 0.5, %v6709
      %v6711 = vsub.f32 1.5, %v6710
      %v6712 = vmul.f32 %v6707, %v6711
      %vm6713 = vweird.f32 %v6685
      %vm6714 = vweird.f32 %v6707
      %vm6715 = vmor %vm6713, %vm6714
      %v6716 = vsel %vm6715, %v6707, %v6712
      %v6717 = vrsqrt.pop %v6686
      %v6718 = vmul.f32 %v6717, %v6686
      %v6719 = vmul.f32 %v6718, %v6717
      %v6720 = vmul.f32 0.5, %v6719
      %v6721 = vsub.f32 1.5, %v6720
      %v6722 = vmul.f32 %v6717, %v6721
      %vm6723 = vweird.f32 %v6686
      %vm6724 = vweird.f32 %v6717
      %vm6725 = vmor %vm6723, %vm6724
      %v6726 = vsel %vm6725, %v6717, %v6722
      %v6727 = vrsqrt.pop %v6687
      %v6728 = vmul.f32 %v6727, %v6687
      %v6729 = vmul.f32 %v6728, %v6727
      %v6730 = vmul.f32 0.5, %v6729
      %v6731 = vsub.f32 1.5, %v6730
      %v6732 = vmul.f32 %v6727, %v6731
      %vm6733 = vweird.f32 %v6687
      %vm6734 = vweird.f32 %v6727
      %vm6735 = vmor %vm6733, %vm6734
      %v6736 = vsel %vm6735, %v6727, %v6732
      %v6737 = vrsqrt.pop %v6688
      %v6738 = vmul.f32 %v6737, %v6688
      %v6739 = vmul.f32 %v6738, %v6737
      %v6740 = vmul.f32 0.5, %v6739
      %v6741 = vsub.f32 1.5, %v6740
      %v6742 = vmul.f32 %v6737, %v6741
      %vm6743 = vweird.f32 %v6688
      %vm6744 = vweird.f32 %v6737
      %vm6745 = vmor %vm6743, %vm6744
      %v6746 = vsel %vm6745, %v6737, %v6742
      %v6747 = vrsqrt.pop %v6689
      %v6748 = vmul.f32 %v6747, %v6689
      %v6749 = vmul.f32 %v6748, %v6747
      %v6750 = vmul.f32 0.5, %v6749
      %v6751 = vsub.f32 1.5, %v6750
      %v6752 = vmul.f32 %v6747, %v6751
      %vm6753 = vweird.f32 %v6689
      %vm6754 = vweird.f32 %v6747
      %vm6755 = vmor %vm6753, %vm6754
      %v6756 = vsel %vm6755, %v6747, %v6752
      %v6757 = vrsqrt.pop %v6690
      %v6758 = vmul.f32 %v6757, %v6690
      %v6759 = vmul.f32 %v6758, %v6757
      %v6760 = vmul.f32 0.5, %v6759
      %v6761 = vsub.f32 1.5, %v6760
      %v6762 = vmul.f32 %v6757, %v6761
      %vm6763 = vweird.f32 %v6690
      %vm6764 = vweird.f32 %v6757
      %vm6765 = vmor %vm6763, %vm6764
      %v6766 = vsel %vm6765, %v6757, %v6762
      %v6767 = vrsqrt.pop %v6691
      %v6768 = vmul.f32 %v6767, %v6691
      %v6769 = vmul.f32 %v6768, %v6767
      %v6770 = vmul.f32 0.5, %v6769
      %v6771 = vsub.f32 1.5, %v6770
      %v6772 = vmul.f32 %v6767, %v6771
      %vm6773 = vweird.f32 %v6691
      %vm6774 = vweird.f32 %v6767
      %vm6775 = vmor %vm6773, %vm6774
      %v6776 = vsel %vm6775, %v6767, %v6772
      %v6777 = vrsqrt.pop %v6692
      %v6778 = vmul.f32 %v6777, %v6692
      %v6779 = vmul.f32 %v6778, %v6777
      %v6780 = vmul.f32 0.5, %v6779
      %v6781 = vsub.f32 1.5, %v6780
      %v6782 = vmul.f32 %v6777, %v6781
      %vm6783 = vweird.f32 %v6692
      %vm6784 = vweird.f32 %v6777
      %vm6785 = vmor %vm6783, %vm6784
      %v6786 = vsel %vm6785, %v6777, %v6782
      %v6787 = vrsqrt.pop %v6693
      %v6788 = vmul.f32 %v6787, %v6693
      %v6789 = vmul.f32 %v6788, %v6787
      %v6790 = vmul.f32 0.5, %v6789
      %v6791 = vsub.f32 1.5, %v6790
      %v6792 = vmul.f32 %v6787, %v6791
      %vm6793 = vweird.f32 %v6693
      %vm6794 = vweird.f32 %v6787
      %vm6795 = vmor %vm6793, %vm6794
      %v6796 = vsel %vm6795, %v6787, %v6792
      %v6797 = vrsqrt.pop %v6694
      %v6798 = vmul.f32 %v6797, %v6694
      %v6799 = vmul.f32 %v6798, %v6797
      %v6800 = vmul.f32 0.5, %v6799
      %v6801 = vsub.f32 1.5, %v6800
      %v6802 = vmul.f32 %v6797, %v6801
      %vm6803 = vweird.f32 %v6694
      %vm6804 = vweird.f32 %v6797
      %vm6805 = vmor %vm6803, %vm6804
      %v6806 = vsel %vm6805, %v6797, %v6802
      %v6807 = vrsqrt.pop %v6695
      %v6808 = vmul.f32 %v6807, %v6695
      %v6809 = vmul.f32 %v6808, %v6807
      %v6810 = vmul.f32 0.5, %v6809
      %v6811 = vsub.f32 1.5, %v6810
      %v6812 = vmul.f32 %v6807, %v6811
      %vm6813 = vweird.f32 %v6695
      %vm6814 = vweird.f32 %v6807
      %vm6815 = vmor %vm6813, %vm6814
      %v6816 = vsel %vm6815, %v6807, %v6812
      %v6817 = vrsqrt.pop %v6696
      %v6818 = vmul.f32 %v6817, %v6696
      %v6819 = vmul.f32 %v6818, %v6817
      %v6820 = vmul.f32 0.5, %v6819
      %v6821 = vsub.f32 1.5, %v6820
      %v6822 = vmul.f32 %v6817, %v6821
      %vm6823 = vweird.f32 %v6696
      %vm6824 = vweird.f32 %v6817
      %vm6825 = vmor %vm6823, %vm6824
      %v6826 = vsel %vm6825, %v6817, %v6822
      %v6827 = vmul.f32 %v6606, %v6706
      %v6828 = vmul.f32 %v6607, %v6716
      %v6829 = vmul.f32 %v6608, %v6726
      %v6830 = vmul.f32 %v6609, %v6736
      %v6831 = vmul.f32 %v6610, %v6746
      %v6832 = vmul.f32 %v6611, %v6756
      %v6833 = vmul.f32 %v6612, %v6766
      %v6834 = vmul.f32 %v6613, %v6776
      %v6835 = vmul.f32 %v6614, %v6786
      %v6836 = vmul.f32 %v6615, %v6796
      %v6837 = vmul.f32 %v6616, %v6806
      %v6838 = vmul.f32 %v6617, %v6816
      %v6839 = vmul.f32 %v6618, %v6826
      %v6841 = vperm.slane %v6551, 0
      %v6843 = vmul.f32 %v6827, %v6841
      %v6844 = vmul.f32 %v6828, %v6841
      %v6845 = vmul.f32 %v6829, %v6841
      %v6846 = vmul.f32 %v6830, %v6841
      %v6847 = vmul.f32 %v6831, %v6841
      %v6848 = vmul.f32 %v6832, %v6841
      %v6849 = vmul.f32 %v6833, %v6841
      %v6850 = vmul.f32 %v6834, %v6841
      %v6851 = vmul.f32 %v6835, %v6841
      %v6852 = vmul.f32 %v6836, %v6841
      %v6853 = vmul.f32 %v6837, %v6841
      %v6854 = vmul.f32 %v6838, %v6841
      %v6855 = vmul.f32 %v6839, %v6841
      %v6857 = vperm.slane %v6553, 0
      %v6859 = vadd.f32 %v6843, %v6857
      %v6860 = vadd.f32 %v6844, %v6857
      %v6861 = vadd.f32 %v6845, %v6857
      %v6862 = vadd.f32 %v6846, %v6857
      %v6863 = vadd.f32 %v6847, %v6857
      %v6864 = vadd.f32 %v6848, %v6857
      %v6865 = vadd.f32 %v6849, %v6857
      %v6866 = vadd.f32 %v6850, %v6857
      %v6867 = vadd.f32 %v6851, %v6857
      %v6868 = vadd.f32 %v6852, %v6857
      %v6869 = vadd.f32 %v6853, %v6857
      %v6870 = vadd.f32 %v6854, %v6857
      %v6871 = vadd.f32 %v6855, %v6857
      %v6872 = vadd.f32 %v6859, %v5619
      %v6873 = vadd.f32 %v6860, %v5620
      %v6874 = vadd.f32 %v6861, %v5621
      %v6875 = vadd.f32 %v6862, %v5622
      %v6876 = vadd.f32 %v6863, %v5623
      %v6877 = vadd.f32 %v6864, %v5624
      %v6878 = vadd.f32 %v6865, %v5625
      %v6879 = vadd.f32 %v6866, %v5626
      %v6880 = vadd.f32 %v6867, %v5627
      %v6881 = vadd.f32 %v6868, %v5628
      %v6882 = vadd.f32 %v6869, %v5629
      %v6883 = vadd.f32 %v6870, %v5630
      %v6884 = vadd.f32 %v6871, %v5631
      %s6885 = scalar_lea.vmem %s3, 640
      %v6886 = vld [vmem:[%s6885] sm:$0xff]
      %v6887 = vld [vmem:[%s6885 + $0x8] sm:$0xff]
      %v6888 = vld [vmem:[%s6885 + $0x10] sm:$0xff]
      %v6889 = vld [vmem:[%s6885 + $0x18] sm:$0xff]
      %v6890 = vld [vmem:[%s6885 + $0x20] sm:$0xff]
      %v6891 = vld [vmem:[%s6885 + $0x28] sm:$0xff]
      %v6892 = vld [vmem:[%s6885 + $0x30] sm:$0xff]
      %v6893 = vld [vmem:[%s6885 + $0x38] sm:$0xff]
      %v6894 = vld [vmem:[%s6885 + $0x40] sm:$0xff]
      %v6895 = vld [vmem:[%s6885 + $0x48] sm:$0xff]
      %v6896 = vld [vmem:[%s6885 + $0x50] sm:$0xff]
      %v6897 = vld [vmem:[%s6885 + $0x58] sm:$0xff]
      %v6898 = vld [vmem:[%s6885 + $0x60] sm:$0xff]
      %v6899 = vld [vmem:[%s6885 + $0x68] sm:$0xff]
      %v6900 = vld [vmem:[%s6885 + $0x70] sm:$0xff]
      %v6901 = vld [vmem:[%s6885 + $0x78] sm:$0xff]
      %s6902 = scalar_lea.vmem %s4, 10
      %v6903 = vld [vmem:[%s6902] sm:$0x3]
      %v6905 = vperm.slane %v6903, 0
      %v6906 = vperm.slane %v6903, 1
      %v6910 = vsel %vm635, %v6872, 0
      %v6913 = vsel %vm635, %v6873, 0
      %v6916 = vsel %vm635, %v6874, 0
      %v6919 = vsel %vm635, %v6875, 0
      %v6922 = vsel %vm635, %v6876, 0
      %v6925 = vsel %vm635, %v6877, 0
      %v6928 = vsel %vm635, %v6878, 0
      %v6931 = vsel %vm635, %v6879, 0
      %v6934 = vsel %vm635, %v6880, 0
      %v6937 = vsel %vm635, %v6881, 0
      %v6940 = vsel %vm635, %v6882, 0
      %v6943 = vsel %vm635, %v6883, 0
      %v6946 = vsel %vm635, %v6884, 0
      %6948 = vmatpush.msra.mxu0 0.0
      %6949 = vmatpush.msra.mxu0 0.0
      %6950 = vmatpush.msra.mxu0 0.0
      %6951 = vmatpush.msra.mxu0 0.0
      %6952 = vmatpush.msra.mxu0 0.0
      %6953 = vmatpush.msra.mxu0 0.0
      %6954 = vmatpush.msra.mxu0 0.0
      %6955 = vmatpush.msra.mxu0 0.0
      %6956 = vmatpush.msra.mxu0 %v6900
      %6957 = vmatpush.msra.mxu0 %v6898
      %6958 = vmatpush.msra.mxu0 %v6896
      %6959 = vmatpush.msra.mxu0 %v6894
      %6960 = vmatpush.msra.mxu0 %v6892
      %6961 = vmatpush.msra.mxu0 %v6890
      %6962 = vmatpush.msra.mxu0 %v6888
      %6963 = vmatpush.msra.mxu0 %v6886
      %6964 = vmatmul.f32.gmra.mxu0 %v6910
      %v6965 = vpop.f32.mrf.mxu0
      %v6966 = vadd.f32 %v6905, %v6965
      %6967 = vmatmul.f32.gmra.mxu0 %v6913
      %v6968 = vpop.f32.mrf.mxu0
      %v6969 = vadd.f32 %v6905, %v6968
      %6970 = vmatmul.f32.gmra.mxu0 %v6916
      %v6971 = vpop.f32.mrf.mxu0
      %v6972 = vadd.f32 %v6905, %v6971
      %6973 = vmatmul.f32.gmra.mxu0 %v6919
      %v6974 = vpop.f32.mrf.mxu0
      %v6975 = vadd.f32 %v6905, %v6974
      %6976 = vmatmul.f32.gmra.mxu0 %v6922
      %v6977 = vpop.f32.mrf.mxu0
      %v6978 = vadd.f32 %v6905, %v6977
      %6979 = vmatmul.f32.gmra.mxu0 %v6925
      %v6980 = vpop.f32.mrf.mxu0
      %v6981 = vadd.f32 %v6905, %v6980
      %6982 = vmatmul.f32.gmra.mxu0 %v6928
      %v6983 = vpop.f32.mrf.mxu0
      %v6984 = vadd.f32 %v6905, %v6983
      %6985 = vmatmul.f32.gmra.mxu0 %v6931
      %v6986 = vpop.f32.mrf.mxu0
      %v6987 = vadd.f32 %v6905, %v6986
      %6988 = vmatmul.f32.gmra.mxu0 %v6934
      %v6989 = vpop.f32.mrf.mxu0
      %v6990 = vadd.f32 %v6905, %v6989
      %6991 = vmatmul.f32.gmra.mxu0 %v6937
      %v6992 = vpop.f32.mrf.mxu0
      %v6993 = vadd.f32 %v6905, %v6992
      %6994 = vmatmul.f32.gmra.mxu0 %v6940
      %v6995 = vpop.f32.mrf.mxu0
      %v6996 = vadd.f32 %v6905, %v6995
      %6997 = vmatmul.f32.gmra.mxu0 %v6943
      %v6998 = vpop.f32.mrf.mxu0
      %v6999 = vadd.f32 %v6905, %v6998
      %7000 = vmatmul.f32.gmra.mxu0 %v6946
      %v7001 = vpop.f32.mrf.mxu0
      %v7002 = vadd.f32 %v6905, %v7001
      %7003 = vdwg.mxu0
      %7004 = vmatpush.msra.mxu0 0.0
      %7005 = vmatpush.msra.mxu0 0.0
      %7006 = vmatpush.msra.mxu0 0.0
      %7007 = vmatpush.msra.mxu0 0.0
      %7008 = vmatpush.msra.mxu0 0.0
      %7009 = vmatpush.msra.mxu0 0.0
      %7010 = vmatpush.msra.mxu0 0.0
      %7011 = vmatpush.msra.mxu0 0.0
      %7012 = vmatpush.msra.mxu0 %v6901
      %7013 = vmatpush.msra.mxu0 %v6899
      %7014 = vmatpush.msra.mxu0 %v6897
      %7015 = vmatpush.msra.mxu0 %v6895
      %7016 = vmatpush.msra.mxu0 %v6893
      %7017 = vmatpush.msra.mxu0 %v6891
      %7018 = vmatpush.msra.mxu0 %v6889
      %7019 = vmatpush.msra.mxu0 %v6887
      %7020 = vmatmul.f32.gmra.mxu0 %v6910
      %v7021 = vpop.f32.mrf.mxu0
      %v7022 = vadd.f32 %v6906, %v7021
      %7023 = vmatmul.f32.gmra.mxu0 %v6913
      %v7024 = vpop.f32.mrf.mxu0
      %v7025 = vadd.f32 %v6906, %v7024
      %7026 = vmatmul.f32.gmra.mxu0 %v6916
      %v7027 = vpop.f32.mrf.mxu0
      %v7028 = vadd.f32 %v6906, %v7027
      %7029 = vmatmul.f32.gmra.mxu0 %v6919
      %v7030 = vpop.f32.mrf.mxu0
      %v7031 = vadd.f32 %v6906, %v7030
      %7032 = vmatmul.f32.gmra.mxu0 %v6922
      %v7033 = vpop.f32.mrf.mxu0
      %v7034 = vadd.f32 %v6906, %v7033
      %7035 = vmatmul.f32.gmra.mxu0 %v6925
      %v7036 = vpop.f32.mrf.mxu0
      %v7037 = vadd.f32 %v6906, %v7036
      %7038 = vmatmul.f32.gmra.mxu0 %v6928
      %v7039 = vpop.f32.mrf.mxu0
      %v7040 = vadd.f32 %v6906, %v7039
      %7041 = vmatmul.f32.gmra.mxu0 %v6931
      %v7042 = vpop.f32.mrf.mxu0
      %v7043 = vadd.f32 %v6906, %v7042
      %7044 = vmatmul.f32.gmra.mxu0 %v6934
      %v7045 = vpop.f32.mrf.mxu0
      %v7046 = vadd.f32 %v6906, %v7045
      %7047 = vmatmul.f32.gmra.mxu0 %v6937
      %v7048 = vpop.f32.mrf.mxu0
      %v7049 = vadd.f32 %v6906, %v7048
      %7050 = vmatmul.f32.gmra.mxu0 %v6940
      %v7051 = vpop.f32.mrf.mxu0
      %v7052 = vadd.f32 %v6906, %v7051
      %7053 = vmatmul.f32.gmra.mxu0 %v6943
      %v7054 = vpop.f32.mrf.mxu0
      %v7055 = vadd.f32 %v6906, %v7054
      %7056 = vmatmul.f32.gmra.mxu0 %v6946
      %v7057 = vpop.f32.mrf.mxu0
      %v7058 = vadd.f32 %v6906, %v7057
      %7059 = vdwg.mxu0
      %v7060 = vmul.f32 %v6966, 0.5
      %v7061 = vmul.f32 %v7022, 0.5
      %v7062 = vmul.f32 %v6969, 0.5
      %v7063 = vmul.f32 %v7025, 0.5
      %v7064 = vmul.f32 %v6972, 0.5
      %v7065 = vmul.f32 %v7028, 0.5
      %v7066 = vmul.f32 %v6975, 0.5
      %v7067 = vmul.f32 %v7031, 0.5
      %v7068 = vmul.f32 %v6978, 0.5
      %v7069 = vmul.f32 %v7034, 0.5
      %v7070 = vmul.f32 %v6981, 0.5
      %v7071 = vmul.f32 %v7037, 0.5
      %v7072 = vmul.f32 %v6984, 0.5
      %v7073 = vmul.f32 %v7040, 0.5
      %v7074 = vmul.f32 %v6987, 0.5
      %v7075 = vmul.f32 %v7043, 0.5
      %v7076 = vmul.f32 %v6990, 0.5
      %v7077 = vmul.f32 %v7046, 0.5
      %v7078 = vmul.f32 %v6993, 0.5
      %v7079 = vmul.f32 %v7049, 0.5
      %v7080 = vmul.f32 %v6996, 0.5
      %v7081 = vmul.f32 %v7052, 0.5
      %v7082 = vmul.f32 %v6999, 0.5
      %v7083 = vmul.f32 %v7055, 0.5
      %v7084 = vmul.f32 %v7002, 0.5
      %v7085 = vmul.f32 %v7058, 0.5
      %v7086 = vmul.f32 %v6966, 0.044715
      %v7087 = vmul.f32 %v7022, 0.044715
      %v7088 = vmul.f32 %v6969, 0.044715
      %v7089 = vmul.f32 %v7025, 0.044715
      %v7090 = vmul.f32 %v6972, 0.044715
      %v7091 = vmul.f32 %v7028, 0.044715
      %v7092 = vmul.f32 %v6975, 0.044715
      %v7093 = vmul.f32 %v7031, 0.044715
      %v7094 = vmul.f32 %v6978, 0.044715
      %v7095 = vmul.f32 %v7034, 0.044715
      %v7096 = vmul.f32 %v6981, 0.044715
      %v7097 = vmul.f32 %v7037, 0.044715
      %v7098 = vmul.f32 %v6984, 0.044715
      %v7099 = vmul.f32 %v7040, 0.044715
      %v7100 = vmul.f32 %v6987, 0.044715
      %v7101 = vmul.f32 %v7043, 0.044715
      %v7102 = vmul.f32 %v6990, 0.044715
      %v7103 = vmul.f32 %v7046, 0.044715
      %v7104 = vmul.f32 %v6993, 0.044715
      %v7105 = vmul.f32 %v7049, 0.044715
      %v7106 = vmul.f32 %v6996, 0.044715
      %v7107 = vmul.f32 %v7052, 0.044715
      %v7108 = vmul.f32 %v6999, 0.044715
      %v7109 = vmul.f32 %v7055, 0.044715
      %v7110 = vmul.f32 %v7002, 0.044715
      %v7111 = vmul.f32 %v7058, 0.044715
      %v7112 = vmul.f32 %v7086, %v6966
      %v7113 = vmul.f32 %v7087, %v7022
      %v7114 = vmul.f32 %v7088, %v6969
      %v7115 = vmul.f32 %v7089, %v7025
      %v7116 = vmul.f32 %v7090, %v6972
      %v7117 = vmul.f32 %v7091, %v7028
      %v7118 = vmul.f32 %v7092, %v6975
      %v7119 = vmul.f32 %v7093, %v7031
      %v7120 = vmul.f32 %v7094, %v6978
      %v7121 = vmul.f32 %v7095, %v7034
      %v7122 = vmul.f32 %v7096, %v6981
      %v7123 = vmul.f32 %v7097, %v7037
      %v7124 = vmul.f32 %v7098, %v6984
      %v7125 = vmul.f32 %v7099, %v7040
      %v7126 = vmul.f32 %v7100, %v6987
      %v7127 = vmul.f32 %v7101, %v7043
      %v7128 = vmul.f32 %v7102, %v6990
      %v7129 = vmul.f32 %v7103, %v7046
      %v7130 = vmul.f32 %v7104, %v6993
      %v7131 = vmul.f32 %v7105, %v7049
      %v7132 = vmul.f32 %v7106, %v6996
      %v7133 = vmul.f32 %v7107, %v7052
      %v7134 = vmul.f32 %v7108, %v6999
      %v7135 = vmul.f32 %v7109, %v7055
      %v7136 = vmul.f32 %v7110, %v7002
      %v7137 = vmul.f32 %v7111, %v7058
      %v7138 = vmul.f32 %v7112, %v6966
      %v7139 = vmul.f32 %v7113, %v7022
      %v7140 = vmul.f32 %v7114, %v6969
      %v7141 = vmul.f32 %v7115, %v7025
      %v7142 = vmul.f32 %v7116, %v6972
      %v7143 = vmul.f32 %v7117, %v7028
      %v7144 = vmul.f32 %v7118, %v6975
      %v7145 = vmul.f32 %v7119, %v7031
      %v7146 = vmul.f32 %v7120, %v6978
      %v7147 = vmul.f32 %v7121, %v7034
      %v7148 = vmul.f32 %v7122, %v6981
      %v7149 = vmul.f32 %v7123, %v7037
      %v7150 = vmul.f32 %v7124, %v6984
      %v7151 = vmul.f32 %v7125, %v7040
      %v7152 = vmul.f32 %v7126, %v6987
      %v7153 = vmul.f32 %v7127, %v7043
      %v7154 = vmul.f32 %v7128, %v6990
      %v7155 = vmul.f32 %v7129, %v7046
      %v7156 = vmul.f32 %v7130, %v6993
      %v7157 = vmul.f32 %v7131, %v7049
      %v7158 = vmul.f32 %v7132, %v6996
      %v7159 = vmul.f32 %v7133, %v7052
      %v7160 = vmul.f32 %v7134, %v6999
      %v7161 = vmul.f32 %v7135, %v7055
      %v7162 = vmul.f32 %v7136, %v7002
      %v7163 = vmul.f32 %v7137, %v7058
      %v7164 = vadd.f32 %v6966, %v7138
      %v7165 = vadd.f32 %v7022, %v7139
      %v7166 = vadd.f32 %v6969, %v7140
      %v7167 = vadd.f32 %v7025, %v7141
      %v7168 = vadd.f32 %v6972, %v7142
      %v7169 = vadd.f32 %v7028, %v7143
      %v7170 = vadd.f32 %v6975, %v7144
      %v7171 = vadd.f32 %v7031, %v7145
      %v7172 = vadd.f32 %v6978, %v7146
      %v7173 = vadd.f32 %v7034, %v7147
      %v7174 = vadd.f32 %v6981, %v7148
      %v7175 = vadd.f32 %v7037, %v7149
      %v7176 = vadd.f32 %v6984, %v7150
      %v7177 = vadd.f32 %v7040, %v7151
      %v7178 = vadd.f32 %v6987, %v7152
      %v7179 = vadd.f32 %v7043, %v7153
      %v7180 = vadd.f32 %v6990, %v7154
      %v7181 = vadd.f32 %v7046, %v7155
      %v7182 = vadd.f32 %v6993, %v7156
      %v7183 = vadd.f32 %v7049, %v7157
      %v7184 = vadd.f32 %v6996, %v7158
      %v7185 = vadd.f32 %v7052, %v7159
      %v7186 = vadd.f32 %v6999, %v7160
      %v7187 = vadd.f32 %v7055, %v7161
      %v7188 = vadd.f32 %v7002, %v7162
      %v7189 = vadd.f32 %v7058, %v7163
      %v7190 = vmul.f32 %v7164, 0.7978846
      %v7191 = vmul.f32 %v7165, 0.7978846
      %v7192 = vmul.f32 %v7166, 0.7978846
      %v7193 = vmul.f32 %v7167, 0.7978846
      %v7194 = vmul.f32 %v7168, 0.7978846
      %v7195 = vmul.f32 %v7169, 0.7978846
      %v7196 = vmul.f32 %v7170, 0.7978846
      %v7197 = vmul.f32 %v7171, 0.7978846
      %v7198 = vmul.f32 %v7172, 0.7978846
      %v7199 = vmul.f32 %v7173, 0.7978846
      %v7200 = vmul.f32 %v7174, 0.7978846
      %v7201 = vmul.f32 %v7175, 0.7978846
      %v7202 = vmul.f32 %v7176, 0.7978846
      %v7203 = vmul.f32 %v7177, 0.7978846
      %v7204 = vmul.f32 %v7178, 0.7978846
      %v7205 = vmul.f32 %v7179, 0.7978846
      %v7206 = vmul.f32 %v7180, 0.7978846
      %v7207 = vmul.f32 %v7181, 0.7978846
      %v7208 = vmul.f32 %v7182, 0.7978846
      %v7209 = vmul.f32 %v7183, 0.7978846
      %v7210 = vmul.f32 %v7184, 0.7978846
      %v7211 = vmul.f32 %v7185, 0.7978846
      %v7212 = vmul.f32 %v7186, 0.7978846
      %v7213 = vmul.f32 %v7187, 0.7978846
      %v7214 = vmul.f32 %v7188, 0.7978846
      %v7215 = vmul.f32 %v7189, 0.7978846
      %v7216 = vtanh.pop %v7190
      %v7217 = vtanh.pop %v7191
      %v7218 = vtanh.pop %v7192
      %v7219 = vtanh.pop %v7193
      %v7220 = vtanh.pop %v7194
      %v7221 = vtanh.pop %v7195
      %v7222 = vtanh.pop %v7196
      %v7223 = vtanh.pop %v7197
      %v7224 = vtanh.pop %v7198
      %v7225 = vtanh.pop %v7199
      %v7226 = vtanh.pop %v7200
      %v7227 = vtanh.pop %v7201
      %v7228 = vtanh.pop %v7202
      %v7229 = vtanh.pop %v7203
      %v7230 = vtanh.pop %v7204
      %v7231 = vtanh.pop %v7205
      %v7232 = vtanh.pop %v7206
      %v7233 = vtanh.pop %v7207
      %v7234 = vtanh.pop %v7208
      %v7235 = vtanh.pop %v7209
      %v7236 = vtanh.pop %v7210
      %v7237 = vtanh.pop %v7211
      %v7238 = vtanh.pop %v7212
      %v7239 = vtanh.pop %v7213
      %v7240 = vtanh.pop %v7214
      %v7241 = vtanh.pop %v7215
      %v7242 = vadd.f32 %v7216, 1.0
      %v7243 = vadd.f32 %v7217, 1.0
      %v7244 = vadd.f32 %v7218, 1.0
      %v7245 = vadd.f32 %v7219, 1.0
      %v7246 = vadd.f32 %v7220, 1.0
      %v7247 = vadd.f32 %v7221, 1.0
      %v7248 = vadd.f32 %v7222, 1.0
      %v7249 = vadd.f32 %v7223, 1.0
      %v7250 = vadd.f32 %v7224, 1.0
      %v7251 = vadd.f32 %v7225, 1.0
      %v7252 = vadd.f32 %v7226, 1.0
      %v7253 = vadd.f32 %v7227, 1.0
      %v7254 = vadd.f32 %v7228, 1.0
      %v7255 = vadd.f32 %v7229, 1.0
      %v7256 = vadd.f32 %v7230, 1.0
      %v7257 = vadd.f32 %v7231, 1.0
      %v7258 = vadd.f32 %v7232, 1.0
      %v7259 = vadd.f32 %v7233, 1.0
      %v7260 = vadd.f32 %v7234, 1.0
      %v7261 = vadd.f32 %v7235, 1.0
      %v7262 = vadd.f32 %v7236, 1.0
      %v7263 = vadd.f32 %v7237, 1.0
      %v7264 = vadd.f32 %v7238, 1.0
      %v7265 = vadd.f32 %v7239, 1.0
      %v7266 = vadd.f32 %v7240, 1.0
      %v7267 = vadd.f32 %v7241, 1.0
      %v7268 = vmul.f32 %v7060, %v7242
      %v7269 = vmul.f32 %v7061, %v7243
      %v7270 = vmul.f32 %v7062, %v7244
      %v7271 = vmul.f32 %v7063, %v7245
      %v7272 = vmul.f32 %v7064, %v7246
      %v7273 = vmul.f32 %v7065, %v7247
      %v7274 = vmul.f32 %v7066, %v7248
      %v7275 = vmul.f32 %v7067, %v7249
      %v7276 = vmul.f32 %v7068, %v7250
      %v7277 = vmul.f32 %v7069, %v7251
      %v7278 = vmul.f32 %v7070, %v7252
      %v7279 = vmul.f32 %v7071, %v7253
      %v7280 = vmul.f32 %v7072, %v7254
      %v7281 = vmul.f32 %v7073, %v7255
      %v7282 = vmul.f32 %v7074, %v7256
      %v7283 = vmul.f32 %v7075, %v7257
      %v7284 = vmul.f32 %v7076, %v7258
      %v7285 = vmul.f32 %v7077, %v7259
      %v7286 = vmul.f32 %v7078, %v7260
      %v7287 = vmul.f32 %v7079, %v7261
      %v7288 = vmul.f32 %v7080, %v7262
      %v7289 = vmul.f32 %v7081, %v7263
      %v7290 = vmul.f32 %v7082, %v7264
      %v7291 = vmul.f32 %v7083, %v7265
      %v7292 = vmul.f32 %v7084, %v7266
      %v7293 = vmul.f32 %v7085, %v7267
      %s7294 = scalar_lea.vmem %s5, 5
      %v7295 = vld [vmem:[%s7294] sm:$0x1]
      %s7296 = scalar_lea.vmem %s6, 5
      %v7297 = vld [vmem:[%s7296] sm:$0x1]
      %7298 = vadd.xlane.f32.xlu0 %v7269
      %v7299 = vpop.xlane.xlu0 %7298
      %7300 = vadd.xlane.f32.xlu0 %v7271
      %v7301 = vpop.xlane.xlu0 %7300
      %7302 = vadd.xlane.f32.xlu0 %v7273
      %v7303 = vpop.xlane.xlu0 %7302
      %7304 = vadd.xlane.f32.xlu0 %v7275
      %v7305 = vpop.xlane.xlu0 %7304
      %7306 = vadd.xlane.f32.xlu0 %v7277
      %v7307 = vpop.xlane.xlu0 %7306
      %7308 = vadd.xlane.f32.xlu0 %v7279
      %v7309 = vpop.xlane.xlu0 %7308
      %7310 = vadd.xlane.f32.xlu0 %v7281
      %v7311 = vpop.xlane.xlu0 %7310
      %7312 = vadd.xlane.f32.xlu0 %v7283
      %v7313 = vpop.xlane.xlu0 %7312
      %7314 = vadd.xlane.f32.xlu0 %v7285
      %v7315 = vpop.xlane.xlu0 %7314
      %7316 = vadd.xlane.f32.xlu0 %v7287
      %v7317 = vpop.xlane.xlu0 %7316
      %7318 = vadd.xlane.f32.xlu0 %v7289
      %v7319 = vpop.xlane.xlu0 %7318
      %7320 = vadd.xlane.f32.xlu0 %v7291
      %v7321 = vpop.xlane.xlu0 %7320
      %7322 = vadd.xlane.f32.xlu0 %v7293
      %v7323 = vpop.xlane.xlu0 %7322
      %v7324 = vmul.f32 %v7299, %v1055
      %v7325 = vmul.f32 %v7301, %v1055
      %v7326 = vmul.f32 %v7303, %v1055
      %v7327 = vmul.f32 %v7305, %v1055
      %v7328 = vmul.f32 %v7307, %v1055
      %v7329 = vmul.f32 %v7309, %v1055
      %v7330 = vmul.f32 %v7311, %v1055
      %v7331 = vmul.f32 %v7313, %v1055
      %v7332 = vmul.f32 %v7315, %v1055
      %v7333 = vmul.f32 %v7317, %v1055
      %v7334 = vmul.f32 %v7319, %v1055
      %v7335 = vmul.f32 %v7321, %v1055
      %v7336 = vmul.f32 %v7323, %v1055
      %v7337 = vsub.f32 %v7269, %v7324
      %v7338 = vsub.f32 %v7271, %v7325
      %v7339 = vsub.f32 %v7273, %v7326
      %v7340 = vsub.f32 %v7275, %v7327
      %v7341 = vsub.f32 %v7277, %v7328
      %v7342 = vsub.f32 %v7279, %v7329
      %v7343 = vsub.f32 %v7281, %v7330
      %v7344 = vsub.f32 %v7283, %v7331
      %v7345 = vsub.f32 %v7285, %v7332
      %v7346 = vsub.f32 %v7287, %v7333
      %v7347 = vsub.f32 %v7289, %v7334
      %v7348 = vsub.f32 %v7291, %v7335
      %v7349 = vsub.f32 %v7293, %v7336
      %v7350 = vmul.f32 %v7337, %v7337
      %v7351 = vmul.f32 %v7338, %v7338
      %v7352 = vmul.f32 %v7339, %v7339
      %v7353 = vmul.f32 %v7340, %v7340
      %v7354 = vmul.f32 %v7341, %v7341
      %v7355 = vmul.f32 %v7342, %v7342
      %v7356 = vmul.f32 %v7343, %v7343
      %v7357 = vmul.f32 %v7344, %v7344
      %v7358 = vmul.f32 %v7345, %v7345
      %v7359 = vmul.f32 %v7346, %v7346
      %v7360 = vmul.f32 %v7347, %v7347
      %v7361 = vmul.f32 %v7348, %v7348
      %v7362 = vmul.f32 %v7349, %v7349
      %7363 = vadd.xlane.f32.xlu0 %v7350
      %v7364 = vpop.xlane.xlu0 %7363
      %7365 = vadd.xlane.f32.xlu0 %v7351
      %v7366 = vpop.xlane.xlu0 %7365
      %7367 = vadd.xlane.f32.xlu0 %v7352
      %v7368 = vpop.xlane.xlu0 %7367
      %7369 = vadd.xlane.f32.xlu0 %v7353
      %v7370 = vpop.xlane.xlu0 %7369
      %7371 = vadd.xlane.f32.xlu0 %v7354
      %v7372 = vpop.xlane.xlu0 %7371
      %7373 = vadd.xlane.f32.xlu0 %v7355
      %v7374 = vpop.xlane.xlu0 %7373
      %7375 = vadd.xlane.f32.xlu0 %v7356
      %v7376 = vpop.xlane.xlu0 %7375
      %7377 = vadd.xlane.f32.xlu0 %v7357
      %v7378 = vpop.xlane.xlu0 %7377
      %7379 = vadd.xlane.f32.xlu0 %v7358
      %v7380 = vpop.xlane.xlu0 %7379
      %7381 = vadd.xlane.f32.xlu0 %v7359
      %v7382 = vpop.xlane.xlu0 %7381
      %7383 = vadd.xlane.f32.xlu0 %v7360
      %v7384 = vpop.xlane.xlu0 %7383
      %7385 = vadd.xlane.f32.xlu0 %v7361
      %v7386 = vpop.xlane.xlu0 %7385
      %7387 = vadd.xlane.f32.xlu0 %v7362
      %v7388 = vpop.xlane.xlu0 %7387
      %v7389 = vmul.f32 %v7364, %v1055
      %v7390 = vmul.f32 %v7366, %v1055
      %v7391 = vmul.f32 %v7368, %v1055
      %v7392 = vmul.f32 %v7370, %v1055
      %v7393 = vmul.f32 %v7372, %v1055
      %v7394 = vmul.f32 %v7374, %v1055
      %v7395 = vmul.f32 %v7376, %v1055
      %v7396 = vmul.f32 %v7378, %v1055
      %v7397 = vmul.f32 %v7380, %v1055
      %v7398 = vmul.f32 %v7382, %v1055
      %v7399 = vmul.f32 %v7384, %v1055
      %v7400 = vmul.f32 %v7386, %v1055
      %v7401 = vmul.f32 %v7388, %v1055
      %v7402 = vadd.f32 %v7389, 1e-05
      %v7403 = vadd.f32 %v7390, 1e-05
      %v7404 = vadd.f32 %v7391, 1e-05
      %v7405 = vadd.f32 %v7392, 1e-05
      %v7406 = vadd.f32 %v7393, 1e-05
      %v7407 = vadd.f32 %v7394, 1e-05
      %v7408 = vadd.f32 %v7395, 1e-05
      %v7409 = vadd.f32 %v7396, 1e-05
      %v7410 = vadd.f32 %v7397, 1e-05
      %v7411 = vadd.f32 %v7398, 1e-05
      %v7412 = vadd.f32 %v7399, 1e-05
      %v7413 = vadd.f32 %v7400, 1e-05
      %v7414 = vadd.f32 %v7401, 1e-05
      %v7415 = vrsqrt.pop %v7402
      %v7416 = vmul.f32 %v7415, %v7402
      %v7417 = vmul.f32 %v7416, %v7415
      %v7418 = vmul.f32 0.5, %v7417
      %v7419 = vsub.f32 1.5, %v7418
      %v7420 = vmul.f32 %v7415, %v7419
      %vm7421 = vweird.f32 %v7402
      %vm7422 = vweird.f32 %v7415
      %vm7423 = vmor %vm7421, %vm7422
      %v7424 = vsel %vm7423, %v7415, %v7420
      %v7425 = vrsqrt.pop %v7403
      %v7426 = vmul.f32 %v7425, %v7403
      %v7427 = vmul.f32 %v7426, %v7425
      %v7428 = vmul.f32 0.5, %v7427
      %v7429 = vsub.f32 1.5, %v7428
      %v7430 = vmul.f32 %v7425, %v7429
      %vm7431 = vweird.f32 %v7403
      %vm7432 = vweird.f32 %v7425
      %vm7433 = vmor %vm7431, %vm7432
      %v7434 = vsel %vm7433, %v7425, %v7430
      %v7435 = vrsqrt.pop %v7404
      %v7436 = vmul.f32 %v7435, %v7404
      %v7437 = vmul.f32 %v7436, %v7435
      %v7438 = vmul.f32 0.5, %v7437
      %v7439 = vsub.f32 1.5, %v7438
      %v7440 = vmul.f32 %v7435, %v7439
      %vm7441 = vweird.f32 %v7404
      %vm7442 = vweird.f32 %v7435
      %vm7443 = vmor %vm7441, %vm7442
      %v7444 = vsel %vm7443, %v7435, %v7440
      %v7445 = vrsqrt.pop %v7405
      %v7446 = vmul.f32 %v7445, %v7405
      %v7447 = vmul.f32 %v7446, %v7445
      %v7448 = vmul.f32 0.5, %v7447
      %v7449 = vsub.f32 1.5, %v7448
      %v7450 = vmul.f32 %v7445, %v7449
      %vm7451 = vweird.f32 %v7405
      %vm7452 = vweird.f32 %v7445
      %vm7453 = vmor %vm7451, %vm7452
      %v7454 = vsel %vm7453, %v7445, %v7450
      %v7455 = vrsqrt.pop %v7406
      %v7456 = vmul.f32 %v7455, %v7406
      %v7457 = vmul.f32 %v7456, %v7455
      %v7458 = vmul.f32 0.5, %v7457
      %v7459 = vsub.f32 1.5, %v7458
      %v7460 = vmul.f32 %v7455, %v7459
      %vm7461 = vweird.f32 %v7406
      %vm7462 = vweird.f32 %v7455
      %vm7463 = vmor %vm7461, %vm7462
      %v7464 = vsel %vm7463, %v7455, %v7460
      %v7465 = vrsqrt.pop %v7407
      %v7466 = vmul.f32 %v7465, %v7407
      %v7467 = vmul.f32 %v7466, %v7465
      %v7468 = vmul.f32 0.5, %v7467
      %v7469 = vsub.f32 1.5, %v7468
      %v7470 = vmul.f32 %v7465, %v7469
      %vm7471 = vweird.f32 %v7407
      %vm7472 = vweird.f32 %v7465
      %vm7473 = vmor %vm7471, %vm7472
      %v7474 = vsel %vm7473, %v7465, %v7470
      %v7475 = vrsqrt.pop %v7408
      %v7476 = vmul.f32 %v7475, %v7408
      %v7477 = vmul.f32 %v7476, %v7475
      %v7478 = vmul.f32 0.5, %v7477
      %v7479 = vsub.f32 1.5, %v7478
      %v7480 = vmul.f32 %v7475, %v7479
      %vm7481 = vweird.f32 %v7408
      %vm7482 = vweird.f32 %v7475
      %vm7483 = vmor %vm7481, %vm7482
      %v7484 = vsel %vm7483, %v7475, %v7480
      %v7485 = vrsqrt.pop %v7409
      %v7486 = vmul.f32 %v7485, %v7409
      %v7487 = vmul.f32 %v7486, %v7485
      %v7488 = vmul.f32 0.5, %v7487
      %v7489 = vsub.f32 1.5, %v7488
      %v7490 = vmul.f32 %v7485, %v7489
      %vm7491 = vweird.f32 %v7409
      %vm7492 = vweird.f32 %v7485
      %vm7493 = vmor %vm7491, %vm7492
      %v7494 = vsel %vm7493, %v7485, %v7490
      %v7495 = vrsqrt.pop %v7410
      %v7496 = vmul.f32 %v7495, %v7410
      %v7497 = vmul.f32 %v7496, %v7495
      %v7498 = vmul.f32 0.5, %v7497
      %v7499 = vsub.f32 1.5, %v7498
      %v7500 = vmul.f32 %v7495, %v7499
      %vm7501 = vweird.f32 %v7410
      %vm7502 = vweird.f32 %v7495
      %vm7503 = vmor %vm7501, %vm7502
      %v7504 = vsel %vm7503, %v7495, %v7500
      %v7505 = vrsqrt.pop %v7411
      %v7506 = vmul.f32 %v7505, %v7411
      %v7507 = vmul.f32 %v7506, %v7505
      %v7508 = vmul.f32 0.5, %v7507
      %v7509 = vsub.f32 1.5, %v7508
      %v7510 = vmul.f32 %v7505, %v7509
      %vm7511 = vweird.f32 %v7411
      %vm7512 = vweird.f32 %v7505
      %vm7513 = vmor %vm7511, %vm7512
      %v7514 = vsel %vm7513, %v7505, %v7510
      %v7515 = vrsqrt.pop %v7412
      %v7516 = vmul.f32 %v7515, %v7412
      %v7517 = vmul.f32 %v7516, %v7515
      %v7518 = vmul.f32 0.5, %v7517
      %v7519 = vsub.f32 1.5, %v7518
      %v7520 = vmul.f32 %v7515, %v7519
      %vm7521 = vweird.f32 %v7412
      %vm7522 = vweird.f32 %v7515
      %vm7523 = vmor %vm7521, %vm7522
      %v7524 = vsel %vm7523, %v7515, %v7520
      %v7525 = vrsqrt.pop %v7413
      %v7526 = vmul.f32 %v7525, %v7413
      %v7527 = vmul.f32 %v7526, %v7525
      %v7528 = vmul.f32 0.5, %v7527
      %v7529 = vsub.f32 1.5, %v7528
      %v7530 = vmul.f32 %v7525, %v7529
      %vm7531 = vweird.f32 %v7413
      %vm7532 = vweird.f32 %v7525
      %vm7533 = vmor %vm7531, %vm7532
      %v7534 = vsel %vm7533, %v7525, %v7530
      %v7535 = vrsqrt.pop %v7414
      %v7536 = vmul.f32 %v7535, %v7414
      %v7537 = vmul.f32 %v7536, %v7535
      %v7538 = vmul.f32 0.5, %v7537
      %v7539 = vsub.f32 1.5, %v7538
      %v7540 = vmul.f32 %v7535, %v7539
      %vm7541 = vweird.f32 %v7414
      %vm7542 = vweird.f32 %v7535
      %vm7543 = vmor %vm7541, %vm7542
      %v7544 = vsel %vm7543, %v7535, %v7540
      %v7545 = vmul.f32 %v7337, %v7424
      %v7546 = vmul.f32 %v7338, %v7434
      %v7547 = vmul.f32 %v7339, %v7444
      %v7548 = vmul.f32 %v7340, %v7454
      %v7549 = vmul.f32 %v7341, %v7464
      %v7550 = vmul.f32 %v7342, %v7474
      %v7551 = vmul.f32 %v7343, %v7484
      %v7552 = vmul.f32 %v7344, %v7494
      %v7553 = vmul.f32 %v7345, %v7504
      %v7554 = vmul.f32 %v7346, %v7514
      %v7555 = vmul.f32 %v7347, %v7524
      %v7556 = vmul.f32 %v7348, %v7534
      %v7557 = vmul.f32 %v7349, %v7544
      %v7559 = vperm.slane %v7295, 0
      %v7561 = vmul.f32 %v7545, %v7559
      %v7562 = vmul.f32 %v7546, %v7559
      %v7563 = vmul.f32 %v7547, %v7559
      %v7564 = vmul.f32 %v7548, %v7559
      %v7565 = vmul.f32 %v7549, %v7559
      %v7566 = vmul.f32 %v7550, %v7559
      %v7567 = vmul.f32 %v7551, %v7559
      %v7568 = vmul.f32 %v7552, %v7559
      %v7569 = vmul.f32 %v7553, %v7559
      %v7570 = vmul.f32 %v7554, %v7559
      %v7571 = vmul.f32 %v7555, %v7559
      %v7572 = vmul.f32 %v7556, %v7559
      %v7573 = vmul.f32 %v7557, %v7559
      %v7575 = vperm.slane %v7297, 0
      %v7577 = vadd.f32 %v7561, %v7575
      %v7578 = vadd.f32 %v7562, %v7575
      %v7579 = vadd.f32 %v7563, %v7575
      %v7580 = vadd.f32 %v7564, %v7575
      %v7581 = vadd.f32 %v7565, %v7575
      %v7582 = vadd.f32 %v7566, %v7575
      %v7583 = vadd.f32 %v7567, %v7575
      %v7584 = vadd.f32 %v7568, %v7575
      %v7585 = vadd.f32 %v7569, %v7575
      %v7586 = vadd.f32 %v7570, %v7575
      %v7587 = vadd.f32 %v7571, %v7575
      %v7588 = vadd.f32 %v7572, %v7575
      %v7589 = vadd.f32 %v7573, %v7575
      %v7590 = vsel %vm600, 1.0, %v7577
      %v7591 = vsel %vm601, 1.0, %v7578
      %v7592 = vsel %vm602, 1.0, %v7579
      %v7593 = vsel %vm603, 1.0, %v7580
      %v7594 = vsel %vm604, 1.0, %v7581
      %v7595 = vsel %vm605, 1.0, %v7582
      %v7596 = vsel %vm606, 1.0, %v7583
      %v7597 = vsel %vm607, 1.0, %v7584
      %v7598 = vsel %vm608, 1.0, %v7585
      %v7599 = vsel %vm609, 1.0, %v7586
      %v7600 = vsel %vm610, 1.0, %v7587
      %v7601 = vsel %vm611, 1.0, %v7588
      %v7602 = vsel %vm612, 1.0, %v7589
      %s7603 = scalar_lea.vmem %s7, 520
      %v7604 = vld [vmem:[%s7603] sm:$0xff]
      %v7605 = vld [vmem:[%s7603 + $0x8] sm:$0xff]
      %v7606 = vld [vmem:[%s7603 + $0x10] sm:$0xff]
      %v7607 = vld [vmem:[%s7603 + $0x18] sm:$0xff]
      %v7608 = vld [vmem:[%s7603 + $0x20] sm:$0xff]
      %v7609 = vld [vmem:[%s7603 + $0x28] sm:$0xff]
      %v7610 = vld [vmem:[%s7603 + $0x30] sm:$0xff]
      %v7611 = vld [vmem:[%s7603 + $0x38] sm:$0xff]
      %v7612 = vld [vmem:[%s7603 + $0x40] sm:$0xff]
      %v7613 = vld [vmem:[%s7603 + $0x48] sm:$0xff]
      %v7614 = vld [vmem:[%s7603 + $0x50] sm:$0xff]
      %v7615 = vld [vmem:[%s7603 + $0x58] sm:$0xff]
      %v7616 = vld [vmem:[%s7603 + $0x60] sm:$0xff]
      %v7618 = vsel %vm1348, %v7604, 0
      %v7621 = vsel %vm1348, %v7605, 0
      %v7624 = vsel %vm1348, %v7606, 0
      %v7627 = vsel %vm1348, %v7607, 0
      %v7630 = vsel %vm1348, %v7608, 0
      %v7633 = vsel %vm1348, %v7609, 0
      %v7636 = vsel %vm1348, %v7610, 0
      %v7639 = vsel %vm1348, %v7611, 0
      %v7642 = vsel %vm1348, %v7612, 0
      %v7645 = vsel %vm1348, %v7613, 0
      %v7648 = vsel %vm1348, %v7614, 0
      %v7651 = vsel %vm1348, %v7615, 0
      %v7654 = vsel %vm1348, %v7616, 0
      %7656 = vmatpush.msra.mxu0 0.0
      %7657 = vmatpush.msra.mxu0 0.0
      %7658 = vmatpush.msra.mxu0 0.0
      %7659 = vmatpush.msra.mxu0 %v7602
      %7660 = vmatpush.msra.mxu0 %v7601
      %7661 = vmatpush.msra.mxu0 %v7600
      %7662 = vmatpush.msra.mxu0 %v7599
      %7663 = vmatpush.msra.mxu0 %v7598
      %7664 = vmatpush.msra.mxu0 %v7597
      %7665 = vmatpush.msra.mxu0 %v7596
      %7666 = vmatpush.msra.mxu0 %v7595
      %7667 = vmatpush.msra.mxu0 %v7594
      %7668 = vmatpush.msra.mxu0 %v7593
      %7669 = vmatpush.msra.mxu0 %v7592
      %7670 = vmatpush.msra.mxu0 %v7591
      %7671 = vmatpush.msra.mxu0 %v7590
      %7672 = vmatmul.f32.gmra.mxu0 %v7618
      %v7673 = vpop.f32.mrf.mxu0
      %v7674 = vadd.f32 0.0, %v7673
      %7675 = vmatmul.f32.gmra.mxu0 %v7621
      %v7676 = vpop.f32.mrf.mxu0
      %v7677 = vadd.f32 0.0, %v7676
      %7678 = vmatmul.f32.gmra.mxu0 %v7624
      %v7679 = vpop.f32.mrf.mxu0
      %v7680 = vadd.f32 0.0, %v7679
      %7681 = vmatmul.f32.gmra.mxu0 %v7627
      %v7682 = vpop.f32.mrf.mxu0
      %v7683 = vadd.f32 0.0, %v7682
      %7684 = vmatmul.f32.gmra.mxu0 %v7630
      %v7685 = vpop.f32.mrf.mxu0
      %v7686 = vadd.f32 0.0, %v7685
      %7687 = vmatmul.f32.gmra.mxu0 %v7633
      %v7688 = vpop.f32.mrf.mxu0
      %v7689 = vadd.f32 0.0, %v7688
      %7690 = vmatmul.f32.gmra.mxu0 %v7636
      %v7691 = vpop.f32.mrf.mxu0
      %v7692 = vadd.f32 0.0, %v7691
      %7693 = vmatmul.f32.gmra.mxu0 %v7639
      %v7694 = vpop.f32.mrf.mxu0
      %v7695 = vadd.f32 0.0, %v7694
      %7696 = vmatmul.f32.gmra.mxu0 %v7642
      %v7697 = vpop.f32.mrf.mxu0
      %v7698 = vadd.f32 0.0, %v7697
      %7699 = vmatmul.f32.gmra.mxu0 %v7645
      %v7700 = vpop.f32.mrf.mxu0
      %v7701 = vadd.f32 0.0, %v7700
      %7702 = vmatmul.f32.gmra.mxu0 %v7648
      %v7703 = vpop.f32.mrf.mxu0
      %v7704 = vadd.f32 0.0, %v7703
      %7705 = vmatmul.f32.gmra.mxu0 %v7651
      %v7706 = vpop.f32.mrf.mxu0
      %v7707 = vadd.f32 0.0, %v7706
      %7708 = vmatmul.f32.gmra.mxu0 %v7654
      %v7709 = vpop.f32.mrf.mxu0
      %v7710 = vadd.f32 0.0, %v7709
      %7711 = vdwg.mxu0
      %v7712 = vmul.f32 %v7674, %v7268
      %v7713 = vmul.f32 %v7677, %v7270
      %v7714 = vmul.f32 %v7680, %v7272
      %v7715 = vmul.f32 %v7683, %v7274
      %v7716 = vmul.f32 %v7686, %v7276
      %v7717 = vmul.f32 %v7689, %v7278
      %v7718 = vmul.f32 %v7692, %v7280
      %v7719 = vmul.f32 %v7695, %v7282
      %v7720 = vmul.f32 %v7698, %v7284
      %v7721 = vmul.f32 %v7701, %v7286
      %v7722 = vmul.f32 %v7704, %v7288
      %v7723 = vmul.f32 %v7707, %v7290
      %v7724 = vmul.f32 %v7710, %v7292
      %s7725 = scalar_lea.vmem %s8, 640
      %v7726 = vld [vmem:[%s7725] sm:$0xff]
      %v7727 = vld [vmem:[%s7725 + $0x8] sm:$0xff]
      %v7728 = vld [vmem:[%s7725 + $0x10] sm:$0xff]
      %v7729 = vld [vmem:[%s7725 + $0x18] sm:$0xff]
      %v7730 = vld [vmem:[%s7725 + $0x20] sm:$0xff]
      %v7731 = vld [vmem:[%s7725 + $0x28] sm:$0xff]
      %v7732 = vld [vmem:[%s7725 + $0x30] sm:$0xff]
      %v7733 = vld [vmem:[%s7725 + $0x38] sm:$0xff]
      %v7734 = vld [vmem:[%s7725 + $0x40] sm:$0xff]
      %v7735 = vld [vmem:[%s7725 + $0x48] sm:$0xff]
      %v7736 = vld [vmem:[%s7725 + $0x50] sm:$0xff]
      %v7737 = vld [vmem:[%s7725 + $0x58] sm:$0xff]
      %v7738 = vld [vmem:[%s7725 + $0x60] sm:$0xff]
      %v7739 = vld [vmem:[%s7725 + $0x68] sm:$0xff]
      %v7740 = vld [vmem:[%s7725 + $0x70] sm:$0xff]
      %v7741 = vld [vmem:[%s7725 + $0x78] sm:$0xff]
      %s7742 = scalar_lea.vmem %s9, 5
      %v7743 = vld [vmem:[%s7742] sm:$0x1]
      %v7745 = vperm.slane %v7743, 0
      %7747 = vmatpush.msra.mxu0 %v7741
      %7748 = vmatpush.msra.mxu0 %v7740
      %7749 = vmatpush.msra.mxu0 %v7739
      %7750 = vmatpush.msra.mxu0 %v7738
      %7751 = vmatpush.msra.mxu0 %v7737
      %7752 = vmatpush.msra.mxu0 %v7736
      %7753 = vmatpush.msra.mxu0 %v7735
      %7754 = vmatpush.msra.mxu0 %v7734
      %7755 = vmatpush.msra.mxu0 %v7733
      %7756 = vmatpush.msra.mxu0 %v7732
      %7757 = vmatpush.msra.mxu0 %v7731
      %7758 = vmatpush.msra.mxu0 %v7730
      %7759 = vmatpush.msra.mxu0 %v7729
      %7760 = vmatpush.msra.mxu0 %v7728
      %7761 = vmatpush.msra.mxu0 %v7727
      %7762 = vmatpush.msra.mxu0 %v7726
      %7763 = vmatmul.f32.gmra.mxu0 %v7712
      %v7764 = vpop.f32.mrf.mxu0
      %v7765 = vadd.f32 %v7745, %v7764
      %7766 = vmatmul.f32.gmra.mxu0 %v7713
      %v7767 = vpop.f32.mrf.mxu0
      %v7768 = vadd.f32 %v7745, %v7767
      %7769 = vmatmul.f32.gmra.mxu0 %v7714
      %v7770 = vpop.f32.mrf.mxu0
      %v7771 = vadd.f32 %v7745, %v7770
      %7772 = vmatmul.f32.gmra.mxu0 %v7715
      %v7773 = vpop.f32.mrf.mxu0
      %v7774 = vadd.f32 %v7745, %v7773
      %7775 = vmatmul.f32.gmra.mxu0 %v7716
      %v7776 = vpop.f32.mrf.mxu0
      %v7777 = vadd.f32 %v7745, %v7776
      %7778 = vmatmul.f32.gmra.mxu0 %v7717
      %v7779 = vpop.f32.mrf.mxu0
      %v7780 = vadd.f32 %v7745, %v7779
      %7781 = vmatmul.f32.gmra.mxu0 %v7718
      %v7782 = vpop.f32.mrf.mxu0
      %v7783 = vadd.f32 %v7745, %v7782
      %7784 = vmatmul.f32.gmra.mxu0 %v7719
      %v7785 = vpop.f32.mrf.mxu0
      %v7786 = vadd.f32 %v7745, %v7785
      %7787 = vmatmul.f32.gmra.mxu0 %v7720
      %v7788 = vpop.f32.mrf.mxu0
      %v7789 = vadd.f32 %v7745, %v7788
      %7790 = vmatmul.f32.gmra.mxu0 %v7721
      %v7791 = vpop.f32.mrf.mxu0
      %v7792 = vadd.f32 %v7745, %v7791
      %7793 = vmatmul.f32.gmra.mxu0 %v7722
      %v7794 = vpop.f32.mrf.mxu0
      %v7795 = vadd.f32 %v7745, %v7794
      %7796 = vmatmul.f32.gmra.mxu0 %v7723
      %v7797 = vpop.f32.mrf.mxu0
      %v7798 = vadd.f32 %v7745, %v7797
      %7799 = vmatmul.f32.gmra.mxu0 %v7724
      %v7800 = vpop.f32.mrf.mxu0
      %v7801 = vadd.f32 %v7745, %v7800
      %7802 = vdwg.mxu0
      %s7803 = scalar_lea.vmem %s10, 5
      %v7804 = vld [vmem:[%s7803] sm:$0x1]
      %s7805 = scalar_lea.vmem %s11, 5
      %v7806 = vld [vmem:[%s7805] sm:$0x1]
      %v7807 = vsel %vm635, %v7765, 0.0
      %7808 = vadd.xlane.f32.xlu0 %v7807
      %v7809 = vpop.xlane.xlu0 %7808
      %v7810 = vsel %vm635, %v7768, 0.0
      %7811 = vadd.xlane.f32.xlu0 %v7810
      %v7812 = vpop.xlane.xlu0 %7811
      %v7813 = vsel %vm635, %v7771, 0.0
      %7814 = vadd.xlane.f32.xlu0 %v7813
      %v7815 = vpop.xlane.xlu0 %7814
      %v7816 = vsel %vm635, %v7774, 0.0
      %7817 = vadd.xlane.f32.xlu0 %v7816
      %v7818 = vpop.xlane.xlu0 %7817
      %v7819 = vsel %vm635, %v7777, 0.0
      %7820 = vadd.xlane.f32.xlu0 %v7819
      %v7821 = vpop.xlane.xlu0 %7820
      %v7822 = vsel %vm635, %v7780, 0.0
      %7823 = vadd.xlane.f32.xlu0 %v7822
      %v7824 = vpop.xlane.xlu0 %7823
      %v7825 = vsel %vm635, %v7783, 0.0
      %7826 = vadd.xlane.f32.xlu0 %v7825
      %v7827 = vpop.xlane.xlu0 %7826
      %v7828 = vsel %vm635, %v7786, 0.0
      %7829 = vadd.xlane.f32.xlu0 %v7828
      %v7830 = vpop.xlane.xlu0 %7829
      %v7831 = vsel %vm635, %v7789, 0.0
      %7832 = vadd.xlane.f32.xlu0 %v7831
      %v7833 = vpop.xlane.xlu0 %7832
      %v7834 = vsel %vm635, %v7792, 0.0
      %7835 = vadd.xlane.f32.xlu0 %v7834
      %v7836 = vpop.xlane.xlu0 %7835
      %v7837 = vsel %vm635, %v7795, 0.0
      %7838 = vadd.xlane.f32.xlu0 %v7837
      %v7839 = vpop.xlane.xlu0 %7838
      %v7840 = vsel %vm635, %v7798, 0.0
      %7841 = vadd.xlane.f32.xlu0 %v7840
      %v7842 = vpop.xlane.xlu0 %7841
      %v7843 = vsel %vm635, %v7801, 0.0
      %7844 = vadd.xlane.f32.xlu0 %v7843
      %v7845 = vpop.xlane.xlu0 %7844
      %v7846 = vmul.f32 %v7809, %v1580
      %v7847 = vmul.f32 %v7812, %v1580
      %v7848 = vmul.f32 %v7815, %v1580
      %v7849 = vmul.f32 %v7818, %v1580
      %v7850 = vmul.f32 %v7821, %v1580
      %v7851 = vmul.f32 %v7824, %v1580
      %v7852 = vmul.f32 %v7827, %v1580
      %v7853 = vmul.f32 %v7830, %v1580
      %v7854 = vmul.f32 %v7833, %v1580
      %v7855 = vmul.f32 %v7836, %v1580
      %v7856 = vmul.f32 %v7839, %v1580
      %v7857 = vmul.f32 %v7842, %v1580
      %v7858 = vmul.f32 %v7845, %v1580
      %v7859 = vsub.f32 %v7765, %v7846
      %v7860 = vsub.f32 %v7768, %v7847
      %v7861 = vsub.f32 %v7771, %v7848
      %v7862 = vsub.f32 %v7774, %v7849
      %v7863 = vsub.f32 %v7777, %v7850
      %v7864 = vsub.f32 %v7780, %v7851
      %v7865 = vsub.f32 %v7783, %v7852
      %v7866 = vsub.f32 %v7786, %v7853
      %v7867 = vsub.f32 %v7789, %v7854
      %v7868 = vsub.f32 %v7792, %v7855
      %v7869 = vsub.f32 %v7795, %v7856
      %v7870 = vsub.f32 %v7798, %v7857
      %v7871 = vsub.f32 %v7801, %v7858
      %v7872 = vmul.f32 %v7859, %v7859
      %v7873 = vmul.f32 %v7860, %v7860
      %v7874 = vmul.f32 %v7861, %v7861
      %v7875 = vmul.f32 %v7862, %v7862
      %v7876 = vmul.f32 %v7863, %v7863
      %v7877 = vmul.f32 %v7864, %v7864
      %v7878 = vmul.f32 %v7865, %v7865
      %v7879 = vmul.f32 %v7866, %v7866
      %v7880 = vmul.f32 %v7867, %v7867
      %v7881 = vmul.f32 %v7868, %v7868
      %v7882 = vmul.f32 %v7869, %v7869
      %v7883 = vmul.f32 %v7870, %v7870
      %v7884 = vmul.f32 %v7871, %v7871
      %v7885 = vsel %vm635, %v7872, 0.0
      %7886 = vadd.xlane.f32.xlu0 %v7885
      %v7887 = vpop.xlane.xlu0 %7886
      %v7888 = vsel %vm635, %v7873, 0.0
      %7889 = vadd.xlane.f32.xlu0 %v7888
      %v7890 = vpop.xlane.xlu0 %7889
      %v7891 = vsel %vm635, %v7874, 0.0
      %7892 = vadd.xlane.f32.xlu0 %v7891
      %v7893 = vpop.xlane.xlu0 %7892
      %v7894 = vsel %vm635, %v7875, 0.0
      %7895 = vadd.xlane.f32.xlu0 %v7894
      %v7896 = vpop.xlane.xlu0 %7895
      %v7897 = vsel %vm635, %v7876, 0.0
      %7898 = vadd.xlane.f32.xlu0 %v7897
      %v7899 = vpop.xlane.xlu0 %7898
      %v7900 = vsel %vm635, %v7877, 0.0
      %7901 = vadd.xlane.f32.xlu0 %v7900
      %v7902 = vpop.xlane.xlu0 %7901
      %v7903 = vsel %vm635, %v7878, 0.0
      %7904 = vadd.xlane.f32.xlu0 %v7903
      %v7905 = vpop.xlane.xlu0 %7904
      %v7906 = vsel %vm635, %v7879, 0.0
      %7907 = vadd.xlane.f32.xlu0 %v7906
      %v7908 = vpop.xlane.xlu0 %7907
      %v7909 = vsel %vm635, %v7880, 0.0
      %7910 = vadd.xlane.f32.xlu0 %v7909
      %v7911 = vpop.xlane.xlu0 %7910
      %v7912 = vsel %vm635, %v7881, 0.0
      %7913 = vadd.xlane.f32.xlu0 %v7912
      %v7914 = vpop.xlane.xlu0 %7913
      %v7915 = vsel %vm635, %v7882, 0.0
      %7916 = vadd.xlane.f32.xlu0 %v7915
      %v7917 = vpop.xlane.xlu0 %7916
      %v7918 = vsel %vm635, %v7883, 0.0
      %7919 = vadd.xlane.f32.xlu0 %v7918
      %v7920 = vpop.xlane.xlu0 %7919
      %v7921 = vsel %vm635, %v7884, 0.0
      %7922 = vadd.xlane.f32.xlu0 %v7921
      %v7923 = vpop.xlane.xlu0 %7922
      %v7924 = vmul.f32 %v7887, %v1580
      %v7925 = vmul.f32 %v7890, %v1580
      %v7926 = vmul.f32 %v7893, %v1580
      %v7927 = vmul.f32 %v7896, %v1580
      %v7928 = vmul.f32 %v7899, %v1580
      %v7929 = vmul.f32 %v7902, %v1580
      %v7930 = vmul.f32 %v7905, %v1580
      %v7931 = vmul.f32 %v7908, %v1580
      %v7932 = vmul.f32 %v7911, %v1580
      %v7933 = vmul.f32 %v7914, %v1580
      %v7934 = vmul.f32 %v7917, %v1580
      %v7935 = vmul.f32 %v7920, %v1580
      %v7936 = vmul.f32 %v7923, %v1580
      %v7937 = vadd.f32 %v7924, 1e-05
      %v7938 = vadd.f32 %v7925, 1e-05
      %v7939 = vadd.f32 %v7926, 1e-05
      %v7940 = vadd.f32 %v7927, 1e-05
      %v7941 = vadd.f32 %v7928, 1e-05
      %v7942 = vadd.f32 %v7929, 1e-05
      %v7943 = vadd.f32 %v7930, 1e-05
      %v7944 = vadd.f32 %v7931, 1e-05
      %v7945 = vadd.f32 %v7932, 1e-05
      %v7946 = vadd.f32 %v7933, 1e-05
      %v7947 = vadd.f32 %v7934, 1e-05
      %v7948 = vadd.f32 %v7935, 1e-05
      %v7949 = vadd.f32 %v7936, 1e-05
      %v7950 = vrsqrt.pop %v7937
      %v7951 = vmul.f32 %v7950, %v7937
      %v7952 = vmul.f32 %v7951, %v7950
      %v7953 = vmul.f32 0.5, %v7952
      %v7954 = vsub.f32 1.5, %v7953
      %v7955 = vmul.f32 %v7950, %v7954
      %vm7956 = vweird.f32 %v7937
      %vm7957 = vweird.f32 %v7950
      %vm7958 = vmor %vm7956, %vm7957
      %v7959 = vsel %vm7958, %v7950, %v7955
      %v7960 = vrsqrt.pop %v7938
      %v7961 = vmul.f32 %v7960, %v7938
      %v7962 = vmul.f32 %v7961, %v7960
      %v7963 = vmul.f32 0.5, %v7962
      %v7964 = vsub.f32 1.5, %v7963
      %v7965 = vmul.f32 %v7960, %v7964
      %vm7966 = vweird.f32 %v7938
      %vm7967 = vweird.f32 %v7960
      %vm7968 = vmor %vm7966, %vm7967
      %v7969 = vsel %vm7968, %v7960, %v7965
      %v7970 = vrsqrt.pop %v7939
      %v7971 = vmul.f32 %v7970, %v7939
      %v7972 = vmul.f32 %v7971, %v7970
      %v7973 = vmul.f32 0.5, %v7972
      %v7974 = vsub.f32 1.5, %v7973
      %v7975 = vmul.f32 %v7970, %v7974
      %vm7976 = vweird.f32 %v7939
      %vm7977 = vweird.f32 %v7970
      %vm7978 = vmor %vm7976, %vm7977
      %v7979 = vsel %vm7978, %v7970, %v7975
      %v7980 = vrsqrt.pop %v7940
      %v7981 = vmul.f32 %v7980, %v7940
      %v7982 = vmul.f32 %v7981, %v7980
      %v7983 = vmul.f32 0.5, %v7982
      %v7984 = vsub.f32 1.5, %v7983
      %v7985 = vmul.f32 %v7980, %v7984
      %vm7986 = vweird.f32 %v7940
      %vm7987 = vweird.f32 %v7980
      %vm7988 = vmor %vm7986, %vm7987
      %v7989 = vsel %vm7988, %v7980, %v7985
      %v7990 = vrsqrt.pop %v7941
      %v7991 = vmul.f32 %v7990, %v7941
      %v7992 = vmul.f32 %v7991, %v7990
      %v7993 = vmul.f32 0.5, %v7992
      %v7994 = vsub.f32 1.5, %v7993
      %v7995 = vmul.f32 %v7990, %v7994
      %vm7996 = vweird.f32 %v7941
      %vm7997 = vweird.f32 %v7990
      %vm7998 = vmor %vm7996, %vm7997
      %v7999 = vsel %vm7998, %v7990, %v7995
      %v8000 = vrsqrt.pop %v7942
      %v8001 = vmul.f32 %v8000, %v7942
      %v8002 = vmul.f32 %v8001, %v8000
      %v8003 = vmul.f32 0.5, %v8002
      %v8004 = vsub.f32 1.5, %v8003
      %v8005 = vmul.f32 %v8000, %v8004
      %vm8006 = vweird.f32 %v7942
      %vm8007 = vweird.f32 %v8000
      %vm8008 = vmor %vm8006, %vm8007
      %v8009 = vsel %vm8008, %v8000, %v8005
      %v8010 = vrsqrt.pop %v7943
      %v8011 = vmul.f32 %v8010, %v7943
      %v8012 = vmul.f32 %v8011, %v8010
      %v8013 = vmul.f32 0.5, %v8012
      %v8014 = vsub.f32 1.5, %v8013
      %v8015 = vmul.f32 %v8010, %v8014
      %vm8016 = vweird.f32 %v7943
      %vm8017 = vweird.f32 %v8010
      %vm8018 = vmor %vm8016, %vm8017
      %v8019 = vsel %vm8018, %v8010, %v8015
      %v8020 = vrsqrt.pop %v7944
      %v8021 = vmul.f32 %v8020, %v7944
      %v8022 = vmul.f32 %v8021, %v8020
      %v8023 = vmul.f32 0.5, %v8022
      %v8024 = vsub.f32 1.5, %v8023
      %v8025 = vmul.f32 %v8020, %v8024
      %vm8026 = vweird.f32 %v7944
      %vm8027 = vweird.f32 %v8020
      %vm8028 = vmor %vm8026, %vm8027
      %v8029 = vsel %vm8028, %v8020, %v8025
      %v8030 = vrsqrt.pop %v7945
      %v8031 = vmul.f32 %v8030, %v7945
      %v8032 = vmul.f32 %v8031, %v8030
      %v8033 = vmul.f32 0.5, %v8032
      %v8034 = vsub.f32 1.5, %v8033
      %v8035 = vmul.f32 %v8030, %v8034
      %vm8036 = vweird.f32 %v7945
      %vm8037 = vweird.f32 %v8030
      %vm8038 = vmor %vm8036, %vm8037
      %v8039 = vsel %vm8038, %v8030, %v8035
      %v8040 = vrsqrt.pop %v7946
      %v8041 = vmul.f32 %v8040, %v7946
      %v8042 = vmul.f32 %v8041, %v8040
      %v8043 = vmul.f32 0.5, %v8042
      %v8044 = vsub.f32 1.5, %v8043
      %v8045 = vmul.f32 %v8040, %v8044
      %vm8046 = vweird.f32 %v7946
      %vm8047 = vweird.f32 %v8040
      %vm8048 = vmor %vm8046, %vm8047
      %v8049 = vsel %vm8048, %v8040, %v8045
      %v8050 = vrsqrt.pop %v7947
      %v8051 = vmul.f32 %v8050, %v7947
      %v8052 = vmul.f32 %v8051, %v8050
      %v8053 = vmul.f32 0.5, %v8052
      %v8054 = vsub.f32 1.5, %v8053
      %v8055 = vmul.f32 %v8050, %v8054
      %vm8056 = vweird.f32 %v7947
      %vm8057 = vweird.f32 %v8050
      %vm8058 = vmor %vm8056, %vm8057
      %v8059 = vsel %vm8058, %v8050, %v8055
      %v8060 = vrsqrt.pop %v7948
      %v8061 = vmul.f32 %v8060, %v7948
      %v8062 = vmul.f32 %v8061, %v8060
      %v8063 = vmul.f32 0.5, %v8062
      %v8064 = vsub.f32 1.5, %v8063
      %v8065 = vmul.f32 %v8060, %v8064
      %vm8066 = vweird.f32 %v7948
      %vm8067 = vweird.f32 %v8060
      %vm8068 = vmor %vm8066, %vm8067
      %v8069 = vsel %vm8068, %v8060, %v8065
      %v8070 = vrsqrt.pop %v7949
      %v8071 = vmul.f32 %v8070, %v7949
      %v8072 = vmul.f32 %v8071, %v8070
      %v8073 = vmul.f32 0.5, %v8072
      %v8074 = vsub.f32 1.5, %v8073
      %v8075 = vmul.f32 %v8070, %v8074
      %vm8076 = vweird.f32 %v7949
      %vm8077 = vweird.f32 %v8070
      %vm8078 = vmor %vm8076, %vm8077
      %v8079 = vsel %vm8078, %v8070, %v8075
      %v8080 = vmul.f32 %v7859, %v7959
      %v8081 = vmul.f32 %v7860, %v7969
      %v8082 = vmul.f32 %v7861, %v7979
      %v8083 = vmul.f32 %v7862, %v7989
      %v8084 = vmul.f32 %v7863, %v7999
      %v8085 = vmul.f32 %v7864, %v8009
      %v8086 = vmul.f32 %v7865, %v8019
      %v8087 = vmul.f32 %v7866, %v8029
      %v8088 = vmul.f32 %v7867, %v8039
      %v8089 = vmul.f32 %v7868, %v8049
      %v8090 = vmul.f32 %v7869, %v8059
      %v8091 = vmul.f32 %v7870, %v8069
      %v8092 = vmul.f32 %v7871, %v8079
      %v8094 = vperm.slane %v7804, 0
      %v8096 = vmul.f32 %v8080, %v8094
      %v8097 = vmul.f32 %v8081, %v8094
      %v8098 = vmul.f32 %v8082, %v8094
      %v8099 = vmul.f32 %v8083, %v8094
      %v8100 = vmul.f32 %v8084, %v8094
      %v8101 = vmul.f32 %v8085, %v8094
      %v8102 = vmul.f32 %v8086, %v8094
      %v8103 = vmul.f32 %v8087, %v8094
      %v8104 = vmul.f32 %v8088, %v8094
      %v8105 = vmul.f32 %v8089, %v8094
      %v8106 = vmul.f32 %v8090, %v8094
      %v8107 = vmul.f32 %v8091, %v8094
      %v8108 = vmul.f32 %v8092, %v8094
      %v8110 = vperm.slane %v7806, 0
      %v8112 = vadd.f32 %v8096, %v8110
      %v8113 = vadd.f32 %v8097, %v8110
      %v8114 = vadd.f32 %v8098, %v8110
      %v8115 = vadd.f32 %v8099, %v8110
      %v8116 = vadd.f32 %v8100, %v8110
      %v8117 = vadd.f32 %v8101, %v8110
      %v8118 = vadd.f32 %v8102, %v8110
      %v8119 = vadd.f32 %v8103, %v8110
      %v8120 = vadd.f32 %v8104, %v8110
      %v8121 = vadd.f32 %v8105, %v8110
      %v8122 = vadd.f32 %v8106, %v8110
      %v8123 = vadd.f32 %v8107, %v8110
      %v8124 = vadd.f32 %v8108, %v8110
      %v8125 = vadd.f32 %v8112, %v6872
      %v8126 = vadd.f32 %v8113, %v6873
      %v8127 = vadd.f32 %v8114, %v6874
      %v8128 = vadd.f32 %v8115, %v6875
      %v8129 = vadd.f32 %v8116, %v6876
      %v8130 = vadd.f32 %v8117, %v6877
      %v8131 = vadd.f32 %v8118, %v6878
      %v8132 = vadd.f32 %v8119, %v6879
      %v8133 = vadd.f32 %v8120, %v6880
      %v8134 = vadd.f32 %v8121, %v6881
      %v8135 = vadd.f32 %v8122, %v6882
      %v8136 = vadd.f32 %v8123, %v6883
      %v8137 = vadd.f32 %v8124, %v6884
      %v8138 = vld [vmem:[%s12] sm:$0xff]
      %v8139 = vld [vmem:[%s12 + $0x8] sm:$0xff]
      %v8140 = vld [vmem:[%s12 + $0x10] sm:$0xff]
      %v8141 = vld [vmem:[%s12 + $0x18] sm:$0xff]
      %v8142 = vld [vmem:[%s12 + $0x20] sm:$0xff]
      %v8143 = vld [vmem:[%s12 + $0x28] sm:$0xff]
      %v8144 = vld [vmem:[%s12 + $0x30] sm:$0xff]
      %v8145 = vld [vmem:[%s12 + $0x38] sm:$0xff]
      %v8146 = vld [vmem:[%s13] sm:$0x1]
      %v8148 = vperm.slane %v8146, 0
      %v8151 = vsel %vm635, %v8125, 0
      %v8154 = vsel %vm635, %v8126, 0
      %v8157 = vsel %vm635, %v8127, 0
      %v8160 = vsel %vm635, %v8128, 0
      %v8163 = vsel %vm635, %v8129, 0
      %v8166 = vsel %vm635, %v8130, 0
      %v8169 = vsel %vm635, %v8131, 0
      %v8172 = vsel %vm635, %v8132, 0
      %v8175 = vsel %vm635, %v8133, 0
      %v8178 = vsel %vm635, %v8134, 0
      %v8181 = vsel %vm635, %v8135, 0
      %v8184 = vsel %vm635, %v8136, 0
      %v8187 = vsel %vm635, %v8137, 0
      %8189 = vmatpush.msra.mxu0 0.0
      %8190 = vmatpush.msra.mxu0 0.0
      %8191 = vmatpush.msra.mxu0 0.0
      %8192 = vmatpush.msra.mxu0 0.0
      %8193 = vmatpush.msra.mxu0 0.0
      %8194 = vmatpush.msra.mxu0 0.0
      %8195 = vmatpush.msra.mxu0 0.0
      %8196 = vmatpush.msra.mxu0 0.0
      %8197 = vmatpush.msra.mxu0 %v8145
      %8198 = vmatpush.msra.mxu0 %v8144
      %8199 = vmatpush.msra.mxu0 %v8143
      %8200 = vmatpush.msra.mxu0 %v8142
      %8201 = vmatpush.msra.mxu0 %v8141
      %8202 = vmatpush.msra.mxu0 %v8140
      %8203 = vmatpush.msra.mxu0 %v8139
      %8204 = vmatpush.msra.mxu0 %v8138
      %8205 = vmatmul.f32.gmra.mxu0 %v8151
      %v8206 = vpop.f32.mrf.mxu0
      %v8207 = vadd.f32 %v8148, %v8206
      %8208 = vmatmul.f32.gmra.mxu0 %v8154
      %v8209 = vpop.f32.mrf.mxu0
      %v8210 = vadd.f32 %v8148, %v8209
      %8211 = vmatmul.f32.gmra.mxu0 %v8157
      %v8212 = vpop.f32.mrf.mxu0
      %v8213 = vadd.f32 %v8148, %v8212
      %8214 = vmatmul.f32.gmra.mxu0 %v8160
      %v8215 = vpop.f32.mrf.mxu0
      %v8216 = vadd.f32 %v8148, %v8215
      %8217 = vmatmul.f32.gmra.mxu0 %v8163
      %v8218 = vpop.f32.mrf.mxu0
      %v8219 = vadd.f32 %v8148, %v8218
      %8220 = vmatmul.f32.gmra.mxu0 %v8166
      %v8221 = vpop.f32.mrf.mxu0
      %v8222 = vadd.f32 %v8148, %v8221
      %8223 = vmatmul.f32.gmra.mxu0 %v8169
      %v8224 = vpop.f32.mrf.mxu0
      %v8225 = vadd.f32 %v8148, %v8224
      %8226 = vmatmul.f32.gmra.mxu0 %v8172
      %v8227 = vpop.f32.mrf.mxu0
      %v8228 = vadd.f32 %v8148, %v8227
      %8229 = vmatmul.f32.gmra.mxu0 %v8175
      %v8230 = vpop.f32.mrf.mxu0
      %v8231 = vadd.f32 %v8148, %v8230
      %8232 = vmatmul.f32.gmra.mxu0 %v8178
      %v8233 = vpop.f32.mrf.mxu0
      %v8234 = vadd.f32 %v8148, %v8233
      %8235 = vmatmul.f32.gmra.mxu0 %v8181
      %v8236 = vpop.f32.mrf.mxu0
      %v8237 = vadd.f32 %v8148, %v8236
      %8238 = vmatmul.f32.gmra.mxu0 %v8184
      %v8239 = vpop.f32.mrf.mxu0
      %v8240 = vadd.f32 %v8148, %v8239
      %8241 = vmatmul.f32.gmra.mxu0 %v8187
      %v8242 = vpop.f32.mrf.mxu0
      %v8243 = vadd.f32 %v8148, %v8242
      %8244 = vdwg.mxu0
      %v8245 = vmul.f32 %v8207, 0.5
      %v8246 = vmul.f32 %v8210, 0.5
      %v8247 = vmul.f32 %v8213, 0.5
      %v8248 = vmul.f32 %v8216, 0.5
      %v8249 = vmul.f32 %v8219, 0.5
      %v8250 = vmul.f32 %v8222, 0.5
      %v8251 = vmul.f32 %v8225, 0.5
      %v8252 = vmul.f32 %v8228, 0.5
      %v8253 = vmul.f32 %v8231, 0.5
      %v8254 = vmul.f32 %v8234, 0.5
      %v8255 = vmul.f32 %v8237, 0.5
      %v8256 = vmul.f32 %v8240, 0.5
      %v8257 = vmul.f32 %v8243, 0.5
      %v8258 = vmul.f32 %v8207, 0.044715
      %v8259 = vmul.f32 %v8210, 0.044715
      %v8260 = vmul.f32 %v8213, 0.044715
      %v8261 = vmul.f32 %v8216, 0.044715
      %v8262 = vmul.f32 %v8219, 0.044715
      %v8263 = vmul.f32 %v8222, 0.044715
      %v8264 = vmul.f32 %v8225, 0.044715
      %v8265 = vmul.f32 %v8228, 0.044715
      %v8266 = vmul.f32 %v8231, 0.044715
      %v8267 = vmul.f32 %v8234, 0.044715
      %v8268 = vmul.f32 %v8237, 0.044715
      %v8269 = vmul.f32 %v8240, 0.044715
      %v8270 = vmul.f32 %v8243, 0.044715
      %v8271 = vmul.f32 %v8258, %v8207
      %v8272 = vmul.f32 %v8259, %v8210
      %v8273 = vmul.f32 %v8260, %v8213
      %v8274 = vmul.f32 %v8261, %v8216
      %v8275 = vmul.f32 %v8262, %v8219
      %v8276 = vmul.f32 %v8263, %v8222
      %v8277 = vmul.f32 %v8264, %v8225
      %v8278 = vmul.f32 %v8265, %v8228
      %v8279 = vmul.f32 %v8266, %v8231
      %v8280 = vmul.f32 %v8267, %v8234
      %v8281 = vmul.f32 %v8268, %v8237
      %v8282 = vmul.f32 %v8269, %v8240
      %v8283 = vmul.f32 %v8270, %v8243
      %v8284 = vmul.f32 %v8271, %v8207
      %v8285 = vmul.f32 %v8272, %v8210
      %v8286 = vmul.f32 %v8273, %v8213
      %v8287 = vmul.f32 %v8274, %v8216
      %v8288 = vmul.f32 %v8275, %v8219
      %v8289 = vmul.f32 %v8276, %v8222
      %v8290 = vmul.f32 %v8277, %v8225
      %v8291 = vmul.f32 %v8278, %v8228
      %v8292 = vmul.f32 %v8279, %v8231
      %v8293 = vmul.f32 %v8280, %v8234
      %v8294 = vmul.f32 %v8281, %v8237
      %v8295 = vmul.f32 %v8282, %v8240
      %v8296 = vmul.f32 %v8283, %v8243
      %v8297 = vadd.f32 %v8207, %v8284
      %v8298 = vadd.f32 %v8210, %v8285
      %v8299 = vadd.f32 %v8213, %v8286
      %v8300 = vadd.f32 %v8216, %v8287
      %v8301 = vadd.f32 %v8219, %v8288
      %v8302 = vadd.f32 %v8222, %v8289
      %v8303 = vadd.f32 %v8225, %v8290
      %v8304 = vadd.f32 %v8228, %v8291
      %v8305 = vadd.f32 %v8231, %v8292
      %v8306 = vadd.f32 %v8234, %v8293
      %v8307 = vadd.f32 %v8237, %v8294
      %v8308 = vadd.f32 %v8240, %v8295
      %v8309 = vadd.f32 %v8243, %v8296
      %v8310 = vmul.f32 %v8297, 0.7978846
      %v8311 = vmul.f32 %v8298, 0.7978846
      %v8312 = vmul.f32 %v8299, 0.7978846
      %v8313 = vmul.f32 %v8300, 0.7978846
      %v8314 = vmul.f32 %v8301, 0.7978846
      %v8315 = vmul.f32 %v8302, 0.7978846
      %v8316 = vmul.f32 %v8303, 0.7978846
      %v8317 = vmul.f32 %v8304, 0.7978846
      %v8318 = vmul.f32 %v8305, 0.7978846
      %v8319 = vmul.f32 %v8306, 0.7978846
      %v8320 = vmul.f32 %v8307, 0.7978846
      %v8321 = vmul.f32 %v8308, 0.7978846
      %v8322 = vmul.f32 %v8309, 0.7978846
      %v8323 = vtanh.pop %v8310
      %v8324 = vtanh.pop %v8311
      %v8325 = vtanh.pop %v8312
      %v8326 = vtanh.pop %v8313
      %v8327 = vtanh.pop %v8314
      %v8328 = vtanh.pop %v8315
      %v8329 = vtanh.pop %v8316
      %v8330 = vtanh.pop %v8317
      %v8331 = vtanh.pop %v8318
      %v8332 = vtanh.pop %v8319
      %v8333 = vtanh.pop %v8320
      %v8334 = vtanh.pop %v8321
      %v8335 = vtanh.pop %v8322
      %v8336 = vadd.f32 %v8323, 1.0
      %v8337 = vadd.f32 %v8324, 1.0
      %v8338 = vadd.f32 %v8325, 1.0
      %v8339 = vadd.f32 %v8326, 1.0
      %v8340 = vadd.f32 %v8327, 1.0
      %v8341 = vadd.f32 %v8328, 1.0
      %v8342 = vadd.f32 %v8329, 1.0
      %v8343 = vadd.f32 %v8330, 1.0
      %v8344 = vadd.f32 %v8331, 1.0
      %v8345 = vadd.f32 %v8332, 1.0
      %v8346 = vadd.f32 %v8333, 1.0
      %v8347 = vadd.f32 %v8334, 1.0
      %v8348 = vadd.f32 %v8335, 1.0
      %v8349 = vmul.f32 %v8245, %v8336
      %v8350 = vmul.f32 %v8246, %v8337
      %v8351 = vmul.f32 %v8247, %v8338
      %v8352 = vmul.f32 %v8248, %v8339
      %v8353 = vmul.f32 %v8249, %v8340
      %v8354 = vmul.f32 %v8250, %v8341
      %v8355 = vmul.f32 %v8251, %v8342
      %v8356 = vmul.f32 %v8252, %v8343
      %v8357 = vmul.f32 %v8253, %v8344
      %v8358 = vmul.f32 %v8254, %v8345
      %v8359 = vmul.f32 %v8255, %v8346
      %v8360 = vmul.f32 %v8256, %v8347
      %v8361 = vmul.f32 %v8257, %v8348
      %vm8362 = vcmask 31744
      %8363 = vst.msk [vmem:[%s467] sm:$0xff] %vm8362, %v8349
      %8364 = vst.msk [vmem:[%s467 + $0x8] sm:$0xff] %vm8362, %v8350
      %8365 = vst.msk [vmem:[%s467 + $0x10] sm:$0xff] %vm8362, %v8351
      %8366 = vst.msk [vmem:[%s467 + $0x18] sm:$0xff] %vm8362, %v8352
      %8367 = vst.msk [vmem:[%s467 + $0x20] sm:$0xff] %vm8362, %v8353
      %8368 = vst.msk [vmem:[%s467 + $0x28] sm:$0xff] %vm8362, %v8354
      %8369 = vst.msk [vmem:[%s467 + $0x30] sm:$0xff] %vm8362, %v8355
      %8370 = vst.msk [vmem:[%s467 + $0x38] sm:$0xff] %vm8362, %v8356
      %8371 = vst.msk [vmem:[%s467 + $0x40] sm:$0xff] %vm8362, %v8357
      %8372 = vst.msk [vmem:[%s467 + $0x48] sm:$0xff] %vm8362, %v8358
      %8373 = vst.msk [vmem:[%s467 + $0x50] sm:$0xff] %vm8362, %v8359
      %8374 = vst.msk [vmem:[%s467 + $0x58] sm:$0xff] %vm8362, %v8360
      %8375 = vst.msk [vmem:[%s467 + $0x60] sm:$0xff] %vm8362, %v8361
      %p8376 = scmp.lt.s32.totalorder %s25, 1
      %s8377 = scalar_select %p8376, %s25, 1
      %s8378 = smul.addr %s8377, 13
      %s8379 = smul.addr %s8378, 8
      %s8380 = scalar_lea.vmem %s14, %s8379
      // Predicated region
      $region77: #{gmlp_encoder_forward.1} parent=75 // pred_check
        %p8381 = pneg %p342
      $region78: #{gmlp_encoder_forward.1} parent=75 // pred_check_branch
        %8383 = sbr.rel (%p8381) target = $region80
      $region79: #{gmlp_encoder_forward.1} parent=75 // pred_region
        _
      $region80: #{gmlp_encoder_forward.1} parent=75 // pred_fallthru
        _
    $region76: #{gmlp_encoder_forward.1} parent=5 // pred_fallthru
      _
    %p8384 = scmp.le.s32.totalorder 2, %s20
    // Predicated region
    $region81: #{gmlp_encoder_forward.1} parent=5 // pred_check
      %p8385 = pneg %p8384
    $region82: #{gmlp_encoder_forward.1} parent=5 // pred_check_branch
      %8387 = sbr.rel (%p8385) target = $region84
    $region83: #{gmlp_encoder_forward.1} parent=5 // pred_region
      %s8388 = ssub.s32 %s20, 2
      // Predicated region
      $region85: #{gmlp_encoder_forward.1} parent=83 // pred_check
        %p8389 = pneg %p348
      $region86: #{gmlp_encoder_forward.1} parent=83 // pred_check_branch
        %8391 = sbr.rel (%p8389) target = $region88
      $region87: #{gmlp_encoder_forward.1} parent=83 // pred_region
        %p8392 = scmp.lt.s32.totalorder %s26, 1
        %s8393 = scalar_select %p8392, %s26, 1
        %s8394 = smul.addr %s8393, 13
        %s8395 = smul.addr %s8394, 8
        %s8396 = scalar_lea.vmem %s14, %s8395
      $region88: #{gmlp_encoder_forward.1} parent=83 // pred_fallthru
        _
    $region84: #{gmlp_encoder_forward.1} parent=5 // pred_fallthru
      _
  $region6: #{gmlp_encoder_forward.1} parent=0 // loop_footer
    %s24 = sadd.s32 1, %s20
  $region7: #{gmlp_encoder_forward.1} parent=0 // loop_footer_branch
    %19 = sbr.rel target = $region3
  $region8: #{gmlp_encoder_forward.1} parent=0 // loop_exit
    _

</llo_original>
